<compile_context>
chip_gen: v7x
topology: tpu7x:2x2x1
jax: 0.10.0
libtpu: 0.0.40
codegen_flags: <defaults>
</compile_context>

<pallas_src>
import functools

import jax
import jax.numpy as jnp
from jax.experimental import pallas as pl
from jax.experimental.pallas import tpu as pltpu

_LANE = 128                       # keep every channel axis a multiple of the lane width
_VMEM_LIMIT = 48 * 1024 * 1024    # explicit scoped-VMEM budget (headroom on v7x 64 MiB)
_BN_EPS = 1e-5


def _round_up(x, m=_LANE):
    return ((x + m - 1) // m) * m


# ---------------------------------------------------------------------------
# Pallas kernels
# ---------------------------------------------------------------------------
def _matmul_bias_kernel(a_ref, b_ref, bias_ref, o_ref):
    """(tm, K) bf16 @ (K, N) bf16 -> f32 accumulate -> + bias (f32) -> bf16 out."""
    acc = jnp.dot(a_ref[...], b_ref[...], preferred_element_type=jnp.float32)
    o_ref[...] = (acc + bias_ref[...]).astype(o_ref.dtype)


def _conv3x3_bias_stats_kernel(*refs, n_in, wp):
    """Fused Conv3x3(+bias) + BN partial-statistics.  One output image row / step.

    refs layout:
      [3*n_in row slabs]  -- kh = 0,1,2 shifted views of each spatially padded input
      [n_in weights]      -- (3, 3, Cin_p, Cout_p) bf16
      [bias]              -- (1, Cout_p) f32
      [y_out]             -- (wp, Cout_p) f32  (pre-BN activation row)
      [stats_out]         -- (2, Cout_p) f32  (per-row sum, sum of squares)
    """
    rows = refs[: 3 * n_in]
    wts = refs[3 * n_in: 4 * n_in]
    bias_ref = refs[4 * n_in]
    y_ref = refs[4 * n_in + 1]
    st_ref = refs[4 * n_in + 2]

    cout = y_ref.shape[-1]
    acc = jnp.zeros((wp, cout), jnp.float32)
    for f in range(n_in):
        for kh in range(3):
            slab = rows[3 * f + kh][...]                    # (wp + 2, Cin_p) bf16
            for kw in range(3):
                acc = acc + jnp.dot(slab[kw: kw + wp, :],
                                    wts[f][kh, kw, :, :],
                                    preferred_element_type=jnp.float32)
    y = acc + bias_ref[...]
    y_ref[...] = y
    st_ref[...] = jnp.concatenate(
        [jnp.sum(y, axis=0, keepdims=True),
         jnp.sum(y * y, axis=0, keepdims=True)], axis=0)


def _affine_relu_pad_kernel(y_ref, sc_ref, sh_ref, o_ref, *, hp):
    """BN affine + ReLU; writes one *spatially padded* bf16 row for the next conv."""
    r = jnp.maximum(y_ref[...] * sc_ref[...] + sh_ref[...], 0.0)       # (wp, C) f32
    z = jnp.zeros((1, r.shape[-1]), r.dtype)
    row = jnp.concatenate([z, r, z], axis=0)                           # (wp + 2, C)
    h = pl.program_id(1)
    valid = jnp.logical_and(h >= 1, h <= hp).astype(row.dtype)         # zero halo rows
    o_ref[...] = (row * valid).astype(o_ref.dtype)


def _affine_relu_kernel(y_ref, sc_ref, sh_ref, o_ref):
    """BN affine + ReLU (final, unpadded f32 output)."""
    o_ref[...] = jnp.maximum(y_ref[...] * sc_ref[...] + sh_ref[...], 0.0)


# ---------------------------------------------------------------------------
# Pallas wrappers
# ---------------------------------------------------------------------------
def matmul_bias(a, b, bias, tm=256):
    """a: (M, K) bf16, b: (K, N) bf16, bias: (N,) f32 -> (M, N) bf16, tiled over M.

    Used only for the 2x2/stride-2 deconv where K = Cin_p is small, so K/N stay
    as single (lane-dense) blocks; M is padded to a multiple of tm (ragged M is
    handled by zero-padding + slicing, never by collapsing to grid=(1,))."""
    m, k = a.shape
    nn = b.shape[1]
    mp = _round_up(m, tm)
    if mp != m:
        a = jnp.pad(a, ((0, mp - m), (0, 0)))
    out = pl.pallas_call(
        _matmul_bias_kernel,
        out_shape=jax.ShapeDtypeStruct((mp, nn), jnp.bfloat16),
        grid=(mp // tm,),
        in_specs=[pl.BlockSpec((tm, k), lambda i: (i, 0)),
                  pl.BlockSpec((k, nn), lambda i: (0, 0)),
                  pl.BlockSpec((1, nn), lambda i: (0, 0))],
        out_specs=pl.BlockSpec((tm, nn), lambda i: (i, 0)),
        compiler_params=pltpu.CompilerParams(
            dimension_semantics=("parallel",),
            vmem_limit_bytes=_VMEM_LIMIT),
    )(a, b, bias.reshape(1, nn))
    return out[:m] if mp != m else out


def conv3x3_bias_stats(feats, weights, bias, cp_out):
    """Conv3x3 + bias + BN partial stats over a list of spatially padded inputs.

    feats[i]:  (N, Hp+2, Wp+2, Ci_p) bf16   weights[i]: (3, 3, Ci_p, Cout_p) bf16
    Returns  y: (N, Hp, Wp, Cout_p) f32,  stats: (N, Hp, 2, Cout_p) f32."""
    n = feats[0].shape[0]
    hp = feats[0].shape[1] - 2
    wp = feats[0].shape[2] - 2
    n_in = len(feats)

    in_specs, args = [], []
    for f in feats:
        cf = f.shape[-1]
        for kh in range(3):
            # Same array passed 3x with kh-shifted row index maps = the conv halo.
            in_specs.append(pl.BlockSpec(
                (None, None, wp + 2, cf),
                lambda i, r, kh=kh: (i, r + kh, 0, 0)))
            args.append(f)
    for wt in weights:
        in_specs.append(pl.BlockSpec(wt.shape, lambda i, r: (0, 0, 0, 0)))
        args.append(wt)
    in_specs.append(pl.BlockSpec((1, cp_out), lambda i, r: (0, 0)))
    args.append(bias)

    kernel = functools.partial(_conv3x3_bias_stats_kernel, n_in=n_in, wp=wp)
    return pl.pallas_call(
        kernel,
        out_shape=(jax.ShapeDtypeStruct((n, hp, wp, cp_out), jnp.float32),
                   jax.ShapeDtypeStruct((n, hp, 2, cp_out), jnp.float32)),
        grid=(n, hp),
        in_specs=in_specs,
        out_specs=(pl.BlockSpec((None, None, wp, cp_out), lambda i, r: (i, r, 0, 0)),
                   pl.BlockSpec((None, None, 2, cp_out), lambda i, r: (i, r, 0, 0))),
        compiler_params=pltpu.CompilerParams(
            dimension_semantics=("parallel", "parallel"),
            vmem_limit_bytes=_VMEM_LIMIT),
    )(*args)


def affine_relu_pad(y, scale, shift):
    """(N, Hp, Wp, C) f32 -> (N, Hp+2, Wp+2, C) bf16 (padded input of the next conv)."""
    n, hp, wp, c = y.shape
    kernel = functools.partial(_affine_relu_pad_kernel, hp=hp)
    return pl.pallas_call(
        kernel,
        out_shape=jax.ShapeDtypeStruct((n, hp + 2, wp + 2, c), jnp.bfloat16),
        grid=(n, hp + 2),
        in_specs=[pl.BlockSpec((None, None, wp, c),
                               lambda i, r: (i, jnp.clip(r - 1, 0, hp - 1), 0, 0)),
                  pl.BlockSpec((1, c), lambda i, r: (0, 0)),
                  pl.BlockSpec((1, c), lambda i, r: (0, 0))],
        out_specs=pl.BlockSpec((None, None, wp + 2, c), lambda i, r: (i, r, 0, 0)),
        compiler_params=pltpu.CompilerParams(
            dimension_semantics=("parallel", "parallel"),
            vmem_limit_bytes=_VMEM_LIMIT),
    )(y, scale, shift)


def affine_relu(y, scale, shift):
    """(N, Hp, Wp, C) f32 -> (N, Hp, Wp, C) f32 (final BN affine + ReLU)."""
    n, hp, wp, c = y.shape
    return pl.pallas_call(
        _affine_relu_kernel,
        out_shape=jax.ShapeDtypeStruct((n, hp, wp, c), jnp.float32),
        grid=(n, hp),
        in_specs=[pl.BlockSpec((None, None, wp, c), lambda i, r: (i, r, 0, 0)),
                  pl.BlockSpec((1, c), lambda i, r: (0, 0)),
                  pl.BlockSpec((1, c), lambda i, r: (0, 0))],
        out_specs=pl.BlockSpec((None, None, wp, c), lambda i, r: (i, r, 0, 0)),
        compiler_params=pltpu.CompilerParams(
            dimension_semantics=("parallel", "parallel"),
            vmem_limit_bytes=_VMEM_LIMIT),
    )(y, scale, shift)


# ---------------------------------------------------------------------------
# Layout / parameter helpers (cheap, per-call JAX glue)
# ---------------------------------------------------------------------------
def _to_nhwc_padded(x_nchw, cp, spatial_pad=0):
    x = jnp.transpose(x_nchw, (0, 2, 3, 1)).astype(jnp.bfloat16)
    c = x.shape[-1]
    p = spatial_pad
    return jnp.pad(x, ((0, 0), (p, p), (p, p), (0, cp - c)))


def _pad_vec(v, cp):
    return jnp.pad(v.astype(jnp.float32), (0, cp - v.shape[0]))


def _prep_conv_w(w, cp_in, cp_out):
    # PyTorch (Cout, Cin, 3, 3) -> (3, 3, Cin_p, Cout_p) bf16 (zero padded channels).
    co, ci = w.shape[0], w.shape[1]
    w = jnp.transpose(w, (2, 3, 1, 0))
    w = jnp.pad(w, ((0, 0), (0, 0), (0, cp_in - ci), (0, cp_out - co)))
    return w.astype(jnp.bfloat16)


def _prep_deconv_w(w, cp_in, cp_out):
    # PyTorch (Cin, Cout, 2, 2) -> (Cin_p, 4*Cout_p) bf16, columns = (kh, kw, co).
    ci, co = w.shape[0], w.shape[1]
    w = jnp.transpose(w, (0, 2, 3, 1))
    w = jnp.pad(w, ((0, cp_in - ci), (0, 0), (0, 0), (0, cp_out - co)))
    return w.reshape(cp_in, 4 * cp_out).astype(jnp.bfloat16)


def _bn_finalize(stats, gamma_p, beta_p, count):
    """Global (PyTorch training-mode) BN stats from the fused per-row partials."""
    s = jnp.sum(stats, axis=(0, 1))                     # (2, Cp)
    mean = s[0] / count
    var = jnp.maximum(s[1] / count - mean * mean, 0.0)  # biased variance
    inv = jax.lax.rsqrt(var + _BN_EPS)
    scale = gamma_p * inv
    shift = beta_p - mean * scale
    return scale.reshape(1, -1), shift.reshape(1, -1)


# ---------------------------------------------------------------------------
# Module forward
# ---------------------------------------------------------------------------
def init_params(key, in_channels, conv_input_channels=None):
    out_channels = in_channels // 2
    cic = in_channels if conv_input_channels is None else conv_input_channels
    ks = jax.random.split(key, 6)
    return {
        "deconv_w": jax.random.normal(ks[0], (in_channels, out_channels, 2, 2), jnp.float32) * 0.1,
        "deconv_b": jax.random.normal(ks[1], (out_channels,), jnp.float32) * 0.1,
        "conv1_w": jax.random.normal(ks[2], (out_channels, cic, 3, 3), jnp.float32) * 0.1,
        "conv1_b": jax.random.normal(ks[3], (out_channels,), jnp.float32) * 0.1,
        "bn1_g": jnp.ones((out_channels,), jnp.float32),
        "bn1_b": jnp.zeros((out_channels,), jnp.float32),
        "conv2_w": jax.random.normal(ks[4], (out_channels, out_channels, 3, 3), jnp.float32) * 0.1,
        "conv2_b": jax.random.normal(ks[5], (out_channels,), jnp.float32) * 0.1,
        "bn2_g": jnp.ones((out_channels,), jnp.float32),
        "bn2_b": jnp.zeros((out_channels,), jnp.float32),
    }


def unet_decoder_block_forward(params, x_nchw, encoder_output_nchw=None):
    """Forward pass matching UNetDecoderBlock.forward. I/O is NCHW like PyTorch."""
    n, c_in, h, w = x_nchw.shape
    c_out = c_in // 2
    cp_in = _round_up(c_in)
    cp_out = _round_up(c_out)

    # ---- ConvTranspose2d(k=2, s=2) as a lane-dense (M, Cin_p) @ (Cin_p, 4*Cout_p) matmul
    x = _to_nhwc_padded(x_nchw, cp_in)                                  # (n,h,w,Cin_p) bf16
    w_de = _prep_deconv_w(params["deconv_w"], cp_in, cp_out)
    b_de = jnp.tile(_pad_vec(params["deconv_b"], cp_out), 4)
    y = matmul_bias(x.reshape(n * h * w, cp_in), w_de, b_de)            # (M, 4*Cout_p) bf16
    y = y.reshape(n, h, w, 2, 2, cp_out)
    # TODO(synk): this (kh,kw) tap interleave is a single plain-XLA relayout pass over
    # `up` (bf16); a fully fused version would scatter the 4 taps from the kernel
    # straight into the padded NHWC buffer.
    up = jnp.transpose(y, (0, 1, 3, 2, 4, 5)).reshape(n, 2 * h, 2 * w, cp_out)

    hp, wp = 2 * h, 2 * w
    up_p = jnp.pad(up, ((0, 0), (1, 1), (1, 1), (0, 0)))                # spatial halo

    # ---- conv1 inputs: no channel concat — the contraction is split per tensor
    if encoder_output_nchw is not None:
        c_enc = encoder_output_nchw.shape[1]
        cp_enc = _round_up(c_enc)
        enc_p = _to_nhwc_padded(encoder_output_nchw, cp_enc, spatial_pad=1)
        w1 = params["conv1_w"]                       # (c_out, c_enc + c_out, 3, 3)
        feats = [enc_p, up_p]
        weights = [_prep_conv_w(w1[:, :c_enc], cp_enc, cp_out),
                   _prep_conv_w(w1[:, c_enc:], cp_out, cp_out)]
    else:
        feats = [up_p]
        weights = [_prep_conv_w(params["conv1_w"], cp_out, cp_out)]

    count = n * hp * wp

    # ---- conv1 (+bias, +BN partial stats) -> BN finalize -> affine+ReLU (padded out)
    b1 = _pad_vec(params["conv1_b"], cp_out).reshape(1, cp_out)
    y1, st1 = conv3x3_bias_stats(feats, weights, b1, cp_out)
    sc1, sh1 = _bn_finalize(st1, _pad_vec(params["bn1_g"], cp_out),
                            _pad_vec(params["bn1_b"], cp_out), count)
    h1_p = affine_relu_pad(y1, sc1, sh1)             # (n, hp+2, wp+2, Cout_p) bf16

    # ---- conv2 (+bias, +BN partial stats) -> BN finalize -> affine+ReLU (final f32)
    b2 = _pad_vec(params["conv2_b"], cp_out).reshape(1, cp_out)
    w2 = _prep_conv_w(params["conv2_w"], cp_out, cp_out)
    y2, st2 = conv3x3_bias_stats([h1_p], [w2], b2, cp_out)
    sc2, sh2 = _bn_finalize(st2, _pad_vec(params["bn2_g"], cp_out),
                            _pad_vec(params["bn2_b"], cp_out), count)
    out = affine_relu(y2, sc2, sh2)                  # (n, hp, wp, Cout_p) f32

    return jnp.transpose(out[..., :c_out], (0, 3, 1, 2))  # -> NCHW, drop pad channels


# ---------------------------------------------------------------------------
# Pure-JAX f32 reference (for a loose numerical sanity check against PyTorch semantics)
# ---------------------------------------------------------------------------
def _ref_conv3x3(x, w, b):          # x: (n,hh,ww,ci), w: (co,ci,3,3)
    n, hh, ww, ci = x.shape
    xp = jnp.pad(x, ((0, 0), (1, 1), (1, 1), (0, 0)))
    acc = 0.0
    for kh in range(3):
        for kw in range(3):
            acc = acc + jnp.einsum("nhwc,oc->nhwo",
                                   xp[:, kh:kh + hh, kw:kw + ww, :], w[:, :, kh, kw])
    return acc + b


def _ref_bn_relu(y, g, bta):
    mean = jnp.mean(y, axis=(0, 1, 2))
    var = jnp.mean((y - mean) ** 2, axis=(0, 1, 2))
    return jnp.maximum((y - mean) * jax.lax.rsqrt(var + _BN_EPS) * g + bta, 0.0)


def _ref_forward(params, x_nchw, enc_nchw=None):
    x = jnp.transpose(x_nchw, (0, 2, 3, 1))
    n, h, w, _ = x.shape
    wde = params["deconv_w"]
    co = wde.shape[1]
    y = jnp.einsum("nhwc,cokl->nhwklo", x, wde) + params["deconv_b"]
    up = jnp.transpose(y, (0, 1, 3, 2, 4, 5)).reshape(n, 2 * h, 2 * w, co)
    feat = up
    if enc_nchw is not None:
        enc = jnp.transpose(enc_nchw, (0, 2, 3, 1))
        feat = jnp.concatenate([enc, up], axis=-1)
    h1 = _ref_bn_relu(_ref_conv3x3(feat, params["conv1_w"], params["conv1_b"]),
                      params["bn1_g"], params["bn1_b"])
    h2 = _ref_bn_relu(_ref_conv3x3(h1, params["conv2_w"], params["conv2_b"]),
                      params["bn2_g"], params["bn2_b"])
    return jnp.transpose(h2, (0, 3, 1, 2))


# ---------------------------------------------------------------------------
if __name__ == "__main__":
    key = jax.random.PRNGKey(0)
    k_x, k_enc, k_p1, k_p2 = jax.random.split(key, 4)

    N, Cin, H, W = 2, 4, 16, 16
    Cout = Cin // 2

    x = jax.random.normal(k_x, (N, Cin, H, W), jnp.float32)
    encoder_output = jax.random.normal(k_enc, (N, Cout, 2 * H, 2 * W), jnp.float32)

    fwd = jax.jit(unet_decoder_block_forward)

    # Path 1: with skip connection (conv_input_channels = None -> in_channels)
    params1 = init_params(k_p1, Cin, conv_input_channels=None)
    out1 = jax.block_until_ready(fwd(params1, x, encoder_output))
    assert out1.shape == (N, Cout, 2 * H, 2 * W), out1.shape

    # Path 2: no skip connection (conv_input_channels = out_channels)
    params2 = init_params(k_p2, Cin, conv_input_channels=Cout)
    out2 = jax.block_until_ready(fwd(params2, x, None))
    assert out2.shape == (N, Cout, 2 * H, 2 * W), out2.shape

    assert bool(jnp.all(jnp.isfinite(out1))) and bool(jnp.all(jnp.isfinite(out2)))

    # Loose numerical check vs. an f32 reference (kernel path uses bf16 matmuls).
    ref1 = _ref_forward(params1, x, encoder_output)
    ref2 = _ref_forward(params2, x, None)
    err1 = float(jnp.max(jnp.abs(out1 - ref1)))
    err2 = float(jnp.max(jnp.abs(out2 - ref2)))
    assert err1 < 0.25 and err2 < 0.25, (err1, err2)

    print("KERNEL_OK")
</pallas_src>

<mosaic_0001>
module attributes {stable_mosaic.version = 11 : i64} {
  func.func @_matmul_bias_kernel(%arg0: i32, %arg1: memref<256x128xbf16, #tpu.memory_space<vmem>>, %arg2: memref<128x512xbf16, #tpu.memory_space<vmem>>, %arg3: memref<1x512xf32, #tpu.memory_space<vmem>>, %arg4: memref<256x512xbf16, #tpu.memory_space<vmem>>) attributes {dimension_semantics = [#tpu.dimension_semantics<parallel>], iteration_bounds = array<i64: 2>, scalar_prefetch = 0 : i64, scratch_operands = 0 : i64, tpu.core_type = #tpu.core_type<tc>, window_params = [{transform_indices = @transform_0, window_bounds = array<i64: 256, 128>}, {pipeline_mode = #tpu.pipeline_mode<synchronous>, transform_indices = @transform_1, window_bounds = array<i64: 128, 512>}, {pipeline_mode = #tpu.pipeline_mode<synchronous>, transform_indices = @transform_2, window_bounds = array<i64: 1, 512>}, {transform_indices = @transform_3, window_bounds = array<i64: 256, 512>}]} {
    %c0 = arith.constant 0 : index
    %c0_0 = arith.constant 0 : index
    %0 = vector.load %arg1[%c0, %c0_0] : memref<256x128xbf16, #tpu.memory_space<vmem>>, vector<256x128xbf16>
    %c0_1 = arith.constant 0 : index
    %c0_2 = arith.constant 0 : index
    %1 = vector.load %arg2[%c0_1, %c0_2] : memref<128x512xbf16, #tpu.memory_space<vmem>>, vector<128x512xbf16>
    %cst = arith.constant dense<0.000000e+00> : vector<256x512xf32>
    %2 = tpu.matmul %0, %1, %cst {dimension_numbers = #tpu.dot_dimension_numbers<[1], [0], [0], [1], [0, 0, 1, 1], [], []>} : vector<256x128xbf16>, vector<128x512xbf16>, vector<256x512xf32> -> vector<256x512xf32>
    %c0_3 = arith.constant 0 : index
    %c0_4 = arith.constant 0 : index
    %3 = vector.load %arg3[%c0_3, %c0_4] : memref<1x512xf32, #tpu.memory_space<vmem>>, vector<1x512xf32>
    %4 = vector.broadcast %3 : vector<1x512xf32> to vector<256x512xf32>
    %5 = arith.addf %2, %4 : vector<256x512xf32>
    %6 = arith.truncf %5 : vector<256x512xf32> to vector<256x512xbf16>
    %c0_5 = arith.constant 0 : index
    %c0_6 = arith.constant 0 : index
    %7 = vector.load %arg4[%c0_5, %c0_6] : memref<256x512xbf16, #tpu.memory_space<vmem>>, vector<256x512xbf16>
    tpu.vector_store %arg4[%c0_5, %c0_6], %6 {strides = array<i32>} : memref<256x512xbf16, #tpu.memory_space<vmem>>, vector<256x512xbf16>,
    return
  }
  func.func @transform_0(%arg0: i32) -> (i32, i32) {
    %c0_i32 = arith.constant 0 : i32
    %c0_i32_0 = arith.constant 0 : i32
    return %arg0, %c0_i32 : i32, i32
  }
  func.func @transform_1(%arg0: i32) -> (i32, i32) {
    %c0_i32 = arith.constant 0 : i32
    %c0_i32_0 = arith.constant 0 : i32
    %c0_i32_1 = arith.constant 0 : i32
    return %c0_i32, %c0_i32_0 : i32, i32
  }
  func.func @transform_2(%arg0: i32) -> (i32, i32) {
    %c0_i32 = arith.constant 0 : i32
    %c0_i32_0 = arith.constant 0 : i32
    %c0_i32_1 = arith.constant 0 : i32
    return %c0_i32, %c0_i32_0 : i32, i32
  }
  func.func @transform_3(%arg0: i32) -> (i32, i32) {
    %c0_i32 = arith.constant 0 : i32
    %c0_i32_0 = arith.constant 0 : i32
    return %arg0, %c0_i32 : i32, i32
  }
}

module attributes {stable_mosaic.version = 11 : i64} {
  func.func @_conv3x3_bias_stats_kernel(%arg0: i32, %arg1: i32, %arg2: memref<1x1x34x128xbf16, #tpu.memory_space<vmem>>, %arg3: memref<1x1x34x128xbf16, #tpu.memory_space<vmem>>, %arg4: memref<1x1x34x128xbf16, #tpu.memory_space<vmem>>, %arg5: memref<1x1x34x128xbf16, #tpu.memory_space<vmem>>, %arg6: memref<1x1x34x128xbf16, #tpu.memory_space<vmem>>, %arg7: memref<1x1x34x128xbf16, #tpu.memory_space<vmem>>, %arg8: memref<3x3x128x128xbf16, #tpu.memory_space<vmem>>, %arg9: memref<3x3x128x128xbf16, #tpu.memory_space<vmem>>, %arg10: memref<1x128xf32, #tpu.memory_space<vmem>>, %arg11: memref<1x1x32x128xf32, #tpu.memory_space<vmem>>, %arg12: memref<1x1x2x128xf32, #tpu.memory_space<vmem>>) attributes {dimension_semantics = [#tpu.dimension_semantics<parallel>, #tpu.dimension_semantics<parallel>], iteration_bounds = array<i64: 2, 32>, scalar_prefetch = 0 : i64, scratch_operands = 0 : i64, tpu.core_type = #tpu.core_type<tc>, window_params = [{transform_indices = @transform_0, window_bounds = array<i64: 1, 1, 34, 128>}, {transform_indices = @transform_1, window_bounds = array<i64: 1, 1, 34, 128>}, {transform_indices = @transform_2, window_bounds = array<i64: 1, 1, 34, 128>}, {transform_indices = @transform_3, window_bounds = array<i64: 1, 1, 34, 128>}, {transform_indices = @transform_4, window_bounds = array<i64: 1, 1, 34, 128>}, {transform_indices = @transform_5, window_bounds = array<i64: 1, 1, 34, 128>}, {pipeline_mode = #tpu.pipeline_mode<synchronous>, transform_indices = @transform_6, window_bounds = array<i64: 3, 3, 128, 128>}, {pipeline_mode = #tpu.pipeline_mode<synchronous>, transform_indices = @transform_7, window_bounds = array<i64: 3, 3, 128, 128>}, {pipeline_mode = #tpu.pipeline_mode<synchronous>, transform_indices = @transform_8, window_bounds = array<i64: 1, 128>}, {transform_indices = @transform_9, window_bounds = array<i64: 1, 1, 32, 128>}, {transform_indices = @transform_10, window_bounds = array<i64: 1, 1, 2, 128>}]} {
    %cst = arith.constant 0.000000e+00 : f32
    %0 = vector.broadcast %cst : f32 to vector<32x128xf32>
    %c0 = arith.constant 0 : index
    %c0_0 = arith.constant 0 : index
    %c0_1 = arith.constant 0 : index
    %c0_2 = arith.constant 0 : index
    %1 = vector.load %arg2[%c0, %c0_0, %c0_1, %c0_2] : memref<1x1x34x128xbf16, #tpu.memory_space<vmem>>, vector<1x1x34x128xbf16>
    %2 = vector.shape_cast %1 : vector<1x1x34x128xbf16> to vector<34x128xbf16>
    %3 = vector.extract_strided_slice %2 {offsets = [0, 0], sizes = [32, 128], strides = [1, 1]} : vector<34x128xbf16> to vector<32x128xbf16>
    %c0_3 = arith.constant 0 : index
    %c0_4 = arith.constant 0 : index
    %c0_5 = arith.constant 0 : index
    %c0_6 = arith.constant 0 : index
    %4 = vector.load %arg8[%c0_3, %c0_4, %c0_5, %c0_6] : memref<3x3x128x128xbf16, #tpu.memory_space<vmem>>, vector<1x1x128x128xbf16>
    %5 = vector.shape_cast %4 : vector<1x1x128x128xbf16> to vector<128x128xbf16>
    %cst_7 = arith.constant dense<0.000000e+00> : vector<32x128xf32>
    %6 = tpu.matmul %3, %5, %cst_7 {dimension_numbers = #tpu.dot_dimension_numbers<[1], [0], [0], [1], [0, 0, 1, 1], [], []>} : vector<32x128xbf16>, vector<128x128xbf16>, vector<32x128xf32> -> vector<32x128xf32>
    %7 = arith.addf %0, %6 : vector<32x128xf32>
    %8 = vector.extract_strided_slice %2 {offsets = [1, 0], sizes = [32, 128], strides = [1, 1]} : vector<34x128xbf16> to vector<32x128xbf16>
    %c0_8 = arith.constant 0 : index
    %c1 = arith.constant 1 : index
    %c0_9 = arith.constant 0 : index
    %c0_10 = arith.constant 0 : index
    %9 = vector.load %arg8[%c0_8, %c1, %c0_9, %c0_10] : memref<3x3x128x128xbf16, #tpu.memory_space<vmem>>, vector<1x1x128x128xbf16>
    %10 = vector.shape_cast %9 : vector<1x1x128x128xbf16> to vector<128x128xbf16>
    %cst_11 = arith.constant dense<0.000000e+00> : vector<32x128xf32>
    %11 = tpu.matmul %8, %10, %cst_11 {dimension_numbers = #tpu.dot_dimension_numbers<[1], [0], [0], [1], [0, 0, 1, 1], [], []>} : vector<32x128xbf16>, vector<128x128xbf16>, vector<32x128xf32> -> vector<32x128xf32>
    %12 = arith.addf %7, %11 : vector<32x128xf32>
    %13 = vector.extract_strided_slice %2 {offsets = [2, 0], sizes = [32, 128], strides = [1, 1]} : vector<34x128xbf16> to vector<32x128xbf16>
    %c0_12 = arith.constant 0 : index
    %c2 = arith.constant 2 : index
    %c0_13 = arith.constant 0 : index
    %c0_14 = arith.constant 0 : index
    %14 = vector.load %arg8[%c0_12, %c2, %c0_13, %c0_14] : memref<3x3x128x128xbf16, #tpu.memory_space<vmem>>, vector<1x1x128x128xbf16>
    %15 = vector.shape_cast %14 : vector<1x1x128x128xbf16> to vector<128x128xbf16>
    %cst_15 = arith.constant dense<0.000000e+00> : vector<32x128xf32>
    %16 = tpu.matmul %13, %15, %cst_15 {dimension_numbers = #tpu.dot_dimension_numbers<[1], [0], [0], [1], [0, 0, 1, 1], [], []>} : vector<32x128xbf16>, vector<128x128xbf16>, vector<32x128xf32> -> vector<32x128xf32>
    %17 = arith.addf %12, %16 : vector<32x128xf32>
    %c0_16 = arith.constant 0 : index
    %c0_17 = arith.constant 0 : index
    %c0_18 = arith.constant 0 : index
    %c0_19 = arith.constant 0 : index
    %18 = vector.load %arg3[%c0_16, %c0_17, %c0_18, %c0_19] : memref<1x1x34x128xbf16, #tpu.memory_space<vmem>>, vector<1x1x34x128xbf16>
    %19 = vector.shape_cast %18 : vector<1x1x34x128xbf16> to vector<34x128xbf16>
    %20 = vector.extract_strided_slice %19 {offsets = [0, 0], sizes = [32, 128], strides = [1, 1]} : vector<34x128xbf16> to vector<32x128xbf16>
    %c1_20 = arith.constant 1 : index
    %c0_21 = arith.constant 0 : index
    %c0_22 = arith.constant 0 : index
    %c0_23 = arith.constant 0 : index
    %21 = vector.load %arg8[%c1_20, %c0_21, %c0_22, %c0_23] : memref<3x3x128x128xbf16, #tpu.memory_space<vmem>>, vector<1x1x128x128xbf16>
    %22 = vector.shape_cast %21 : vector<1x1x128x128xbf16> to vector<128x128xbf16>
    %cst_24 = arith.constant dense<0.000000e+00> : vector<32x128xf32>
    %23 = tpu.matmul %20, %22, %cst_24 {dimension_numbers = #tpu.dot_dimension_numbers<[1], [0], [0], [1], [0, 0, 1, 1], [], []>} : vector<32x128xbf16>, vector<128x128xbf16>, vector<32x128xf32> -> vector<32x128xf32>
    %24 = arith.addf %17, %23 : vector<32x128xf32>
    %25 = vector.extract_strided_slice %19 {offsets = [1, 0], sizes = [32, 128], strides = [1, 1]} : vector<34x128xbf16> to vector<32x128xbf16>
    %c1_25 = arith.constant 1 : index
    %c1_26 = arith.constant 1 : index
    %c0_27 = arith.constant 0 : index
    %c0_28 = arith.constant 0 : index
    %26 = vector.load %arg8[%c1_25, %c1_26, %c0_27, %c0_28] : memref<3x3x128x128xbf16, #tpu.memory_space<vmem>>, vector<1x1x128x128xbf16>
    %27 = vector.shape_cast %26 : vector<1x1x128x128xbf16> to vector<128x128xbf16>
    %cst_29 = arith.constant dense<0.000000e+00> : vector<32x128xf32>
    %28 = tpu.matmul %25, %27, %cst_29 {dimension_numbers = #tpu.dot_dimension_numbers<[1], [0], [0], [1], [0, 0, 1, 1], [], []>} : vector<32x128xbf16>, vector<128x128xbf16>, vector<32x128xf32> -> vector<32x128xf32>
    %29 = arith.addf %24, %28 : vector<32x128xf32>
    %30 = vector.extract_strided_slice %19 {offsets = [2, 0], sizes = [32, 128], strides = [1, 1]} : vector<34x128xbf16> to vector<32x128xbf16>
    %c1_30 = arith.constant 1 : index
    %c2_31 = arith.constant 2 : index
    %c0_32 = arith.constant 0 : index
    %c0_33 = arith.constant 0 : index
    %31 = vector.load %arg8[%c1_30, %c2_31, %c0_32, %c0_33] : memref<3x3x128x128xbf16, #tpu.memory_space<vmem>>, vector<1x1x128x128xbf16>
    %32 = vector.shape_cast %31 : vector<1x1x128x128xbf16> to vector<128x128xbf16>
    %cst_34 = arith.constant dense<0.000000e+00> : vector<32x128xf32>
    %33 = tpu.matmul %30, %32, %cst_34 {dimension_numbers = #tpu.dot_dimension_numbers<[1], [0], [0], [1], [0, 0, 1, 1], [], []>} : vector<32x128xbf16>, vector<128x128xbf16>, vector<32x128xf32> -> vector<32x128xf32>
    %34 = arith.addf %29, %33 : vector<32x128xf32>
    %c0_35 = arith.constant 0 : index
    %c0_36 = arith.constant 0 : index
    %c0_37 = arith.constant 0 : index
    %c0_38 = arith.constant 0 : index
    %35 = vector.load %arg4[%c0_35, %c0_36, %c0_37, %c0_38] : memref<1x1x34x128xbf16, #tpu.memory_space<vmem>>, vector<1x1x34x128xbf16>
    %36 = vector.shape_cast %35 : vector<1x1x34x128xbf16> to vector<34x128xbf16>
    %37 = vector.extract_strided_slice %36 {offsets = [0, 0], sizes = [32, 128], strides = [1, 1]} : vector<34x128xbf16> to vector<32x128xbf16>
    %c2_39 = arith.constant 2 : index
    %c0_40 = arith.constant 0 : index
    %c0_41 = arith.constant 0 : index
    %c0_42 = arith.constant 0 : index
    %38 = vector.load %arg8[%c2_39, %c0_40, %c0_41, %c0_42] : memref<3x3x128x128xbf16, #tpu.memory_space<vmem>>, vector<1x1x128x128xbf16>
    %39 = vector.shape_cast %38 : vector<1x1x128x128xbf16> to vector<128x128xbf16>
    %cst_43 = arith.constant dense<0.000000e+00> : vector<32x128xf32>
    %40 = tpu.matmul %37, %39, %cst_43 {dimension_numbers = #tpu.dot_dimension_numbers<[1], [0], [0], [1], [0, 0, 1, 1], [], []>} : vector<32x128xbf16>, vector<128x128xbf16>, vector<32x128xf32> -> vector<32x128xf32>
    %41 = arith.addf %34, %40 : vector<32x128xf32>
    %42 = vector.extract_strided_slice %36 {offsets = [1, 0], sizes = [32, 128], strides = [1, 1]} : vector<34x128xbf16> to vector<32x128xbf16>
    %c2_44 = arith.constant 2 : index
    %c1_45 = arith.constant 1 : index
    %c0_46 = arith.constant 0 : index
    %c0_47 = arith.constant 0 : index
    %43 = vector.load %arg8[%c2_44, %c1_45, %c0_46, %c0_47] : memref<3x3x128x128xbf16, #tpu.memory_space<vmem>>, vector<1x1x128x128xbf16>
    %44 = vector.shape_cast %43 : vector<1x1x128x128xbf16> to vector<128x128xbf16>
    %cst_48 = arith.constant dense<0.000000e+00> : vector<32x128xf32>
    %45 = tpu.matmul %42, %44, %cst_48 {dimension_numbers = #tpu.dot_dimension_numbers<[1], [0], [0], [1], [0, 0, 1, 1], [], []>} : vector<32x128xbf16>, vector<128x128xbf16>, vector<32x128xf32> -> vector<32x128xf32>
    %46 = arith.addf %41, %45 : vector<32x128xf32>
    %47 = vector.extract_strided_slice %36 {offsets = [2, 0], sizes = [32, 128], strides = [1, 1]} : vector<34x128xbf16> to vector<32x128xbf16>
    %c2_49 = arith.constant 2 : index
    %c2_50 = arith.constant 2 : index
    %c0_51 = arith.constant 0 : index
    %c0_52 = arith.constant 0 : index
    %48 = vector.load %arg8[%c2_49, %c2_50, %c0_51, %c0_52] : memref<3x3x128x128xbf16, #tpu.memory_space<vmem>>, vector<1x1x128x128xbf16>
    %49 = vector.shape_cast %48 : vector<1x1x128x128xbf16> to vector<128x128xbf16>
    %cst_53 = arith.constant dense<0.000000e+00> : vector<32x128xf32>
    %50 = tpu.matmul %47, %49, %cst_53 {dimension_numbers = #tpu.dot_dimension_numbers<[1], [0], [0], [1], [0, 0, 1, 1], [], []>} : vector<32x128xbf16>, vector<128x128xbf16>, vector<32x128xf32> -> vector<32x128xf32>
    %51 = arith.addf %46, %50 : vector<32x128xf32>
    %c0_54 = arith.constant 0 : index
    %c0_55 = arith.constant 0 : index
    %c0_56 = arith.constant 0 : index
    %c0_57 = arith.constant 0 : index
    %52 = vector.load %arg5[%c0_54, %c0_55, %c0_56, %c0_57] : memref<1x1x34x128xbf16, #tpu.memory_space<vmem>>, vector<1x1x34x128xbf16>
    %53 = vector.shape_cast %52 : vector<1x1x34x128xbf16> to vector<34x128xbf16>
    %54 = vector.extract_strided_slice %53 {offsets = [0, 0], sizes = [32, 128], strides = [1, 1]} : vector<34x128xbf16> to vector<32x128xbf16>
    %c0_58 = arith.constant 0 : index
    %c0_59 = arith.constant 0 : index
    %c0_60 = arith.constant 0 : index
    %c0_61 = arith.constant 0 : index
    %55 = vector.load %arg9[%c0_58, %c0_59, %c0_60, %c0_61] : memref<3x3x128x128xbf16, #tpu.memory_space<vmem>>, vector<1x1x128x128xbf16>
    %56 = vector.shape_cast %55 : vector<1x1x128x128xbf16> to vector<128x128xbf16>
    %cst_62 = arith.constant dense<0.000000e+00> : vector<32x128xf32>
    %57 = tpu.matmul %54, %56, %cst_62 {dimension_numbers = #tpu.dot_dimension_numbers<[1], [0], [0], [1], [0, 0, 1, 1], [], []>} : vector<32x128xbf16>, vector<128x128xbf16>, vector<32x128xf32> -> vector<32x128xf32>
    %58 = arith.addf %51, %57 : vector<32x128xf32>
    %59 = vector.extract_strided_slice %53 {offsets = [1, 0], sizes = [32, 128], strides = [1, 1]} : vector<34x128xbf16> to vector<32x128xbf16>
    %c0_63 = arith.constant 0 : index
    %c1_64 = arith.constant 1 : index
    %c0_65 = arith.constant 0 : index
    %c0_66 = arith.constant 0 : index
    %60 = vector.load %arg9[%c0_63, %c1_64, %c0_65, %c0_66] : memref<3x3x128x128xbf16, #tpu.memory_space<vmem>>, vector<1x1x128x128xbf16>
    %61 = vector.shape_cast %60 : vector<1x1x128x128xbf16> to vector<128x128xbf16>
    %cst_67 = arith.constant dense<0.000000e+00> : vector<32x128xf32>
    %62 = tpu.matmul %59, %61, %cst_67 {dimension_numbers = #tpu.dot_dimension_numbers<[1], [0], [0], [1], [0, 0, 1, 1], [], []>} : vector<32x128xbf16>, vector<128x128xbf16>, vector<32x128xf32> -> vector<32x128xf32>
    %63 = arith.addf %58, %62 : vector<32x128xf32>
    %64 = vector.extract_strided_slice %53 {offsets = [2, 0], sizes = [32, 128], strides = [1, 1]} : vector<34x128xbf16> to vector<32x128xbf16>
    %c0_68 = arith.constant 0 : index
    %c2_69 = arith.constant 2 : index
    %c0_70 = arith.constant 0 : index
    %c0_71 = arith.constant 0 : index
    %65 = vector.load %arg9[%c0_68, %c2_69, %c0_70, %c0_71] : memref<3x3x128x128xbf16, #tpu.memory_space<vmem>>, vector<1x1x128x128xbf16>
    %66 = vector.shape_cast %65 : vector<1x1x128x128xbf16> to vector<128x128xbf16>
    %cst_72 = arith.constant dense<0.000000e+00> : vector<32x128xf32>
    %67 = tpu.matmul %64, %66, %cst_72 {dimension_numbers = #tpu.dot_dimension_numbers<[1], [0], [0], [1], [0, 0, 1, 1], [], []>} : vector<32x128xbf16>, vector<128x128xbf16>, vector<32x128xf32> -> vector<32x128xf32>
    %68 = arith.addf %63, %67 : vector<32x128xf32>
    %c0_73 = arith.constant 0 : index
    %c0_74 = arith.constant 0 : index
    %c0_75 = arith.constant 0 : index
    %c0_76 = arith.constant 0 : index
    %69 = vector.load %arg6[%c0_73, %c0_74, %c0_75, %c0_76] : memref<1x1x34x128xbf16, #tpu.memory_space<vmem>>, vector<1x1x34x128xbf16>
    %70 = vector.shape_cast %69 : vector<1x1x34x128xbf16> to vector<34x128xbf16>
    %71 = vector.extract_strided_slice %70 {offsets = [0, 0], sizes = [32, 128], strides = [1, 1]} : vector<34x128xbf16> to vector<32x128xbf16>
    %c1_77 = arith.constant 1 : index
    %c0_78 = arith.constant 0 : index
    %c0_79 = arith.constant 0 : index
    %c0_80 = arith.constant 0 : index
    %72 = vector.load %arg9[%c1_77, %c0_78, %c0_79, %c0_80] : memref<3x3x128x128xbf16, #tpu.memory_space<vmem>>, vector<1x1x128x128xbf16>
    %73 = vector.shape_cast %72 : vector<1x1x128x128xbf16> to vector<128x128xbf16>
    %cst_81 = arith.constant dense<0.000000e+00> : vector<32x128xf32>
    %74 = tpu.matmul %71, %73, %cst_81 {dimension_numbers = #tpu.dot_dimension_numbers<[1], [0], [0], [1], [0, 0, 1, 1], [], []>} : vector<32x128xbf16>, vector<128x128xbf16>, vector<32x128xf32> -> vector<32x128xf32>
    %75 = arith.addf %68, %74 : vector<32x128xf32>
    %76 = vector.extract_strided_slice %70 {offsets = [1, 0], sizes = [32, 128], strides = [1, 1]} : vector<34x128xbf16> to vector<32x128xbf16>
    %c1_82 = arith.constant 1 : index
    %c1_83 = arith.constant 1 : index
    %c0_84 = arith.constant 0 : index
    %c0_85 = arith.constant 0 : index
    %77 = vector.load %arg9[%c1_82, %c1_83, %c0_84, %c0_85] : memref<3x3x128x128xbf16, #tpu.memory_space<vmem>>, vector<1x1x128x128xbf16>
    %78 = vector.shape_cast %77 : vector<1x1x128x128xbf16> to vector<128x128xbf16>
    %cst_86 = arith.constant dense<0.000000e+00> : vector<32x128xf32>
    %79 = tpu.matmul %76, %78, %cst_86 {dimension_numbers = #tpu.dot_dimension_numbers<[1], [0], [0], [1], [0, 0, 1, 1], [], []>} : vector<32x128xbf16>, vector<128x128xbf16>, vector<32x128xf32> -> vector<32x128xf32>
    %80 = arith.addf %75, %79 : vector<32x128xf32>
    %81 = vector.extract_strided_slice %70 {offsets = [2, 0], sizes = [32, 128], strides = [1, 1]} : vector<34x128xbf16> to vector<32x128xbf16>
    %c1_87 = arith.constant 1 : index
    %c2_88 = arith.constant 2 : index
    %c0_89 = arith.constant 0 : index
    %c0_90 = arith.constant 0 : index
    %82 = vector.load %arg9[%c1_87, %c2_88, %c0_89, %c0_90] : memref<3x3x128x128xbf16, #tpu.memory_space<vmem>>, vector<1x1x128x128xbf16>
    %83 = vector.shape_cast %82 : vector<1x1x128x128xbf16> to vector<128x128xbf16>
    %cst_91 = arith.constant dense<0.000000e+00> : vector<32x128xf32>
    %84 = tpu.matmul %81, %83, %cst_91 {dimension_numbers = #tpu.dot_dimension_numbers<[1], [0], [0], [1], [0, 0, 1, 1], [], []>} : vector<32x128xbf16>, vector<128x128xbf16>, vector<32x128xf32> -> vector<32x128xf32>
    %85 = arith.addf %80, %84 : vector<32x128xf32>
    %c0_92 = arith.constant 0 : index
    %c0_93 = arith.constant 0 : index
    %c0_94 = arith.constant 0 : index
    %c0_95 = arith.constant 0 : index
    %86 = vector.load %arg7[%c0_92, %c0_93, %c0_94, %c0_95] : memref<1x1x34x128xbf16, #tpu.memory_space<vmem>>, vector<1x1x34x128xbf16>
    %87 = vector.shape_cast %86 : vector<1x1x34x128xbf16> to vector<34x128xbf16>
    %88 = vector.extract_strided_slice %87 {offsets = [0, 0], sizes = [32, 128], strides = [1, 1]} : vector<34x128xbf16> to vector<32x128xbf16>
    %c2_96 = arith.constant 2 : index
    %c0_97 = arith.constant 0 : index
    %c0_98 = arith.constant 0 : index
    %c0_99 = arith.constant 0 : index
    %89 = vector.load %arg9[%c2_96, %c0_97, %c0_98, %c0_99] : memref<3x3x128x128xbf16, #tpu.memory_space<vmem>>, vector<1x1x128x128xbf16>
    %90 = vector.shape_cast %89 : vector<1x1x128x128xbf16> to vector<128x128xbf16>
    %cst_100 = arith.constant dense<0.000000e+00> : vector<32x128xf32>
    %91 = tpu.matmul %88, %90, %cst_100 {dimension_numbers = #tpu.dot_dimension_numbers<[1], [0], [0], [1], [0, 0, 1, 1], [], []>} : vector<32x128xbf16>, vector<128x128xbf16>, vector<32x128xf32> -> vector<32x128xf32>
    %92 = arith.addf %85, %91 : vector<32x128xf32>
    %93 = vector.extract_strided_slice %87 {offsets = [1, 0], sizes = [32, 128], strides = [1, 1]} : vector<34x128xbf16> to vector<32x128xbf16>
    %c2_101 = arith.constant 2 : index
    %c1_102 = arith.constant 1 : index
    %c0_103 = arith.constant 0 : index
    %c0_104 = arith.constant 0 : index
    %94 = vector.load %arg9[%c2_101, %c1_102, %c0_103, %c0_104] : memref<3x3x128x128xbf16, #tpu.memory_space<vmem>>, vector<1x1x128x128xbf16>
    %95 = vector.shape_cast %94 : vector<1x1x128x128xbf16> to vector<128x128xbf16>
    %cst_105 = arith.constant dense<0.000000e+00> : vector<32x128xf32>
    %96 = tpu.matmul %93, %95, %cst_105 {dimension_numbers = #tpu.dot_dimension_numbers<[1], [0], [0], [1], [0, 0, 1, 1], [], []>} : vector<32x128xbf16>, vector<128x128xbf16>, vector<32x128xf32> -> vector<32x128xf32>
    %97 = arith.addf %92, %96 : vector<32x128xf32>
    %98 = vector.extract_strided_slice %87 {offsets = [2, 0], sizes = [32, 128], strides = [1, 1]} : vector<34x128xbf16> to vector<32x128xbf16>
    %c2_106 = arith.constant 2 : index
    %c2_107 = arith.constant 2 : index
    %c0_108 = arith.constant 0 : index
    %c0_109 = arith.constant 0 : index
    %99 = vector.load %arg9[%c2_106, %c2_107, %c0_108, %c0_109] : memref<3x3x128x128xbf16, #tpu.memory_space<vmem>>, vector<1x1x128x128xbf16>
    %100 = vector.shape_cast %99 : vector<1x1x128x128xbf16> to vector<128x128xbf16>
    %cst_110 = arith.constant dense<0.000000e+00> : vector<32x128xf32>
    %101 = tpu.matmul %98, %100, %cst_110 {dimension_numbers = #tpu.dot_dimension_numbers<[1], [0], [0], [1], [0, 0, 1, 1], [], []>} : vector<32x128xbf16>, vector<128x128xbf16>, vector<32x128xf32> -> vector<32x128xf32>
    %102 = arith.addf %97, %101 : vector<32x128xf32>
    %c0_111 = arith.constant 0 : index
    %c0_112 = arith.constant 0 : index
    %103 = vector.load %arg10[%c0_111, %c0_112] : memref<1x128xf32, #tpu.memory_space<vmem>>, vector<1x128xf32>
    %104 = vector.broadcast %103 : vector<1x128xf32> to vector<32x128xf32>
    %105 = arith.addf %102, %104 : vector<32x128xf32>
    %c0_113 = arith.constant 0 : index
    %c0_114 = arith.constant 0 : index
    %c0_115 = arith.constant 0 : index
    %c0_116 = arith.constant 0 : index
    %106 = vector.load %arg11[%c0_113, %c0_114, %c0_115, %c0_116] : memref<1x1x32x128xf32, #tpu.memory_space<vmem>>, vector<1x1x32x128xf32>
    %107 = vector.shape_cast %106 : vector<1x1x32x128xf32> to vector<32x128xf32>
    %108 = vector.shape_cast %105 : vector<32x128xf32> to vector<1x1x32x128xf32>
    tpu.vector_store %arg11[%c0_113, %c0_114, %c0_115, %c0_116], %108 {strides = array<i32>} : memref<1x1x32x128xf32, #tpu.memory_space<vmem>>, vector<1x1x32x128xf32>,
    %cst_117 = arith.constant dense<0.000000e+00> : vector<128xf32>
    %109 = vector.multi_reduction <add>, %105, %cst_117 [0] : vector<32x128xf32> to vector<128xf32>
    %110 = vector.shape_cast %109 : vector<128xf32> to vector<1x128xf32>
    %111 = arith.mulf %105, %105 : vector<32x128xf32>
    %cst_118 = arith.constant dense<0.000000e+00> : vector<128xf32>
    %112 = vector.multi_reduction <add>, %111, %cst_118 [0] : vector<32x128xf32> to vector<128xf32>
    %113 = vector.shape_cast %112 : vector<128xf32> to vector<1x128xf32>
    %114 = tpu.concatenate %110, %113 in 0 : vector<1x128xf32>, vector<1x128xf32> -> vector<2x128xf32>
    %c0_119 = arith.constant 0 : index
    %c0_120 = arith.constant 0 : index
    %c0_121 = arith.constant 0 : index
    %c0_122 = arith.constant 0 : index
    %115 = vector.load %arg12[%c0_119, %c0_120, %c0_121, %c0_122] : memref<1x1x2x128xf32, #tpu.memory_space<vmem>>, vector<1x1x2x128xf32>
    %116 = vector.shape_cast %115 : vector<1x1x2x128xf32> to vector<2x128xf32>
    %117 = vector.shape_cast %114 : vector<2x128xf32> to vector<1x1x2x128xf32>
    tpu.vector_store %arg12[%c0_119, %c0_120, %c0_121, %c0_122], %117 {strides = array<i32>} : memref<1x1x2x128xf32, #tpu.memory_space<vmem>>, vector<1x1x2x128xf32>,
    return
  }
  func.func @transform_0(%arg0: i32, %arg1: i32) -> (i32, i32, i32, i32) {
    %c0_i32 = arith.constant 0 : i32
    %0 = arith.addi %arg1, %c0_i32 : i32
    %c0_i32_0 = arith.constant 0 : i32
    %c0_i32_1 = arith.constant 0 : i32
    %c0_i32_2 = arith.constant 0 : i32
    return %arg0, %0, %c0_i32_0, %c0_i32_1 : i32, i32, i32, i32
  }
  func.func @transform_1(%arg0: i32, %arg1: i32) -> (i32, i32, i32, i32) {
    %c1_i32 = arith.constant 1 : i32
    %0 = arith.addi %arg1, %c1_i32 : i32
    %c0_i32 = arith.constant 0 : i32
    %c0_i32_0 = arith.constant 0 : i32
    %c0_i32_1 = arith.constant 0 : i32
    return %arg0, %0, %c0_i32, %c0_i32_0 : i32, i32, i32, i32
  }
  func.func @transform_2(%arg0: i32, %arg1: i32) -> (i32, i32, i32, i32) {
    %c2_i32 = arith.constant 2 : i32
    %0 = arith.addi %arg1, %c2_i32 : i32
    %c0_i32 = arith.constant 0 : i32
    %c0_i32_0 = arith.constant 0 : i32
    %c0_i32_1 = arith.constant 0 : i32
    return %arg0, %0, %c0_i32, %c0_i32_0 : i32, i32, i32, i32
  }
  func.func @transform_3(%arg0: i32, %arg1: i32) -> (i32, i32, i32, i32) {
    %c0_i32 = arith.constant 0 : i32
    %0 = arith.addi %arg1, %c0_i32 : i32
    %c0_i32_0 = arith.constant 0 : i32
    %c0_i32_1 = arith.constant 0 : i32
    %c0_i32_2 = arith.constant 0 : i32
    return %arg0, %0, %c0_i32_0, %c0_i32_1 : i32, i32, i32, i32
  }
  func.func @transform_4(%arg0: i32, %arg1: i32) -> (i32, i32, i32, i32) {
    %c1_i32 = arith.constant 1 : i32
    %0 = arith.addi %arg1, %c1_i32 : i32
    %c0_i32 = arith.constant 0 : i32
    %c0_i32_0 = arith.constant 0 : i32
    %c0_i32_1 = arith.constant 0 : i32
    return %arg0, %0, %c0_i32, %c0_i32_0 : i32, i32, i32, i32
  }
  func.func @transform_5(%arg0: i32, %arg1: i32) -> (i32, i32, i32, i32) {
    %c2_i32 = arith.constant 2 : i32
    %0 = arith.addi %arg1, %c2_i32 : i32
    %c0_i32 = arith.constant 0 : i32
    %c0_i32_0 = arith.constant 0 : i32
    %c0_i32_1 = arith.constant 0 : i32
    return %arg0, %0, %c0_i32, %c0_i32_0 : i32, i32, i32, i32
  }
  func.func @transform_6(%arg0: i32, %arg1: i32) -> (i32, i32, i32, i32) {
    %c0_i32 = arith.constant 0 : i32
    %c0_i32_0 = arith.constant 0 : i32
    %c0_i32_1 = arith.constant 0 : i32
    %c0_i32_2 = arith.constant 0 : i32
    %c0_i32_3 = arith.constant 0 : i32
    return %c0_i32, %c0_i32_0, %c0_i32_1, %c0_i32_2 : i32, i32, i32, i32
  }
  func.func @transform_7(%arg0: i32, %arg1: i32) -> (i32, i32, i32, i32) {
    %c0_i32 = arith.constant 0 : i32
    %c0_i32_0 = arith.constant 0 : i32
    %c0_i32_1 = arith.constant 0 : i32
    %c0_i32_2 = arith.constant 0 : i32
    %c0_i32_3 = arith.constant 0 : i32
    return %c0_i32, %c0_i32_0, %c0_i32_1, %c0_i32_2 : i32, i32, i32, i32
  }
  func.func @transform_8(%arg0: i32, %arg1: i32) -> (i32, i32) {
    %c0_i32 = arith.constant 0 : i32
    %c0_i32_0 = arith.constant 0 : i32
    %c0_i32_1 = arith.constant 0 : i32
    return %c0_i32, %c0_i32_0 : i32, i32
  }
  func.func @transform_9(%arg0: i32, %arg1: i32) -> (i32, i32, i32, i32) {
    %c0_i32 = arith.constant 0 : i32
    %c0_i32_0 = arith.constant 0 : i32
    %c0_i32_1 = arith.constant 0 : i32
    return %arg0, %arg1, %c0_i32, %c0_i32_0 : i32, i32, i32, i32
  }
  func.func @transform_10(%arg0: i32, %arg1: i32) -> (i32, i32, i32, i32) {
    %c0_i32 = arith.constant 0 : i32
    %c0_i32_0 = arith.constant 0 : i32
    %c0_i32_1 = arith.constant 0 : i32
    return %arg0, %arg1, %c0_i32, %c0_i32_0 : i32, i32, i32, i32
  }
}

module attributes {stable_mosaic.version = 11 : i64} {
  func.func @_affine_relu_pad_kernel(%arg0: i32, %arg1: i32, %arg2: memref<1x1x32x128xf32, #tpu.memory_space<vmem>>, %arg3: memref<1x128xf32, #tpu.memory_space<vmem>>, %arg4: memref<1x128xf32, #tpu.memory_space<vmem>>, %arg5: memref<1x1x34x128xbf16, #tpu.memory_space<vmem>>) attributes {dimension_semantics = [#tpu.dimension_semantics<parallel>, #tpu.dimension_semantics<parallel>], iteration_bounds = array<i64: 2, 34>, scalar_prefetch = 0 : i64, scratch_operands = 0 : i64, tpu.core_type = #tpu.core_type<tc>, window_params = [{transform_indices = @transform_0, window_bounds = array<i64: 1, 1, 32, 128>}, {pipeline_mode = #tpu.pipeline_mode<synchronous>, transform_indices = @transform_1, window_bounds = array<i64: 1, 128>}, {pipeline_mode = #tpu.pipeline_mode<synchronous>, transform_indices = @transform_2, window_bounds = array<i64: 1, 128>}, {transform_indices = @transform_3, window_bounds = array<i64: 1, 1, 34, 128>}]} {
    %c0 = arith.constant 0 : index
    %c0_0 = arith.constant 0 : index
    %c0_1 = arith.constant 0 : index
    %c0_2 = arith.constant 0 : index
    %0 = vector.load %arg2[%c0, %c0_0, %c0_1, %c0_2] : memref<1x1x32x128xf32, #tpu.memory_space<vmem>>, vector<1x1x32x128xf32>
    %1 = vector.shape_cast %0 : vector<1x1x32x128xf32> to vector<32x128xf32>
    %c0_3 = arith.constant 0 : index
    %c0_4 = arith.constant 0 : index
    %2 = vector.load %arg3[%c0_3, %c0_4] : memref<1x128xf32, #tpu.memory_space<vmem>>, vector<1x128xf32>
    %3 = vector.broadcast %2 : vector<1x128xf32> to vector<32x128xf32>
    %4 = arith.mulf %1, %3 : vector<32x128xf32>
    %c0_5 = arith.constant 0 : index
    %c0_6 = arith.constant 0 : index
    %5 = vector.load %arg4[%c0_5, %c0_6] : memref<1x128xf32, #tpu.memory_space<vmem>>, vector<1x128xf32>
    %6 = vector.broadcast %5 : vector<1x128xf32> to vector<32x128xf32>
    %7 = arith.addf %4, %6 : vector<32x128xf32>
    %cst = arith.constant 0.000000e+00 : f32
    %8 = vector.broadcast %cst : f32 to vector<32x128xf32>
    %9 = arith.maximumf %7, %8 : vector<32x128xf32>
    %cst_7 = arith.constant 0.000000e+00 : f32
    %10 = vector.broadcast %cst_7 : f32 to vector<1x128xf32>
    %11 = tpu.concatenate %10, %9, %10 in 0 : vector<1x128xf32>, vector<32x128xf32>, vector<1x128xf32> -> vector<34x128xf32>
    %c1_i32 = arith.constant 1 : i32
    %12 = arith.cmpi sge, %arg1, %c1_i32 : i32
    %c32_i32 = arith.constant 32 : i32
    %13 = arith.cmpi sle, %arg1, %c32_i32 : i32
    %14 = arith.andi %12, %13 : i1
    %15 = arith.extui %14 : i1 to i32
    %16 = arith.sitofp %15 : i32 to f32
    %17 = vector.broadcast %16 : f32 to vector<34x128xf32>
    %18 = arith.mulf %11, %17 : vector<34x128xf32>
    %19 = arith.truncf %18 : vector<34x128xf32> to vector<34x128xbf16>
    %c0_8 = arith.constant 0 : index
    %c0_9 = arith.constant 0 : index
    %c0_10 = arith.constant 0 : index
    %c0_11 = arith.constant 0 : index
    %20 = vector.load %arg5[%c0_8, %c0_9, %c0_10, %c0_11] : memref<1x1x34x128xbf16, #tpu.memory_space<vmem>>, vector<1x1x34x128xbf16>
    %21 = vector.shape_cast %20 : vector<1x1x34x128xbf16> to vector<34x128xbf16>
    %22 = vector.shape_cast %19 : vector<34x128xbf16> to vector<1x1x34x128xbf16>
    tpu.vector_store %arg5[%c0_8, %c0_9, %c0_10, %c0_11], %22 {strides = array<i32>} : memref<1x1x34x128xbf16, #tpu.memory_space<vmem>>, vector<1x1x34x128xbf16>,
    return
  }
  func.func @transform_0(%arg0: i32, %arg1: i32) -> (i32, i32, i32, i32) {
    %c1_i32 = arith.constant 1 : i32
    %0 = arith.subi %arg1, %c1_i32 : i32
    %c0_i32 = arith.constant 0 : i32
    %c31_i32 = arith.constant 31 : i32
    %1 = arith.maxsi %c0_i32, %0 : i32
    %2 = arith.minsi %c31_i32, %1 : i32
    %c0_i32_0 = arith.constant 0 : i32
    %c0_i32_1 = arith.constant 0 : i32
    %c0_i32_2 = arith.constant 0 : i32
    return %arg0, %2, %c0_i32_0, %c0_i32_1 : i32, i32, i32, i32
  }
  func.func @transform_1(%arg0: i32, %arg1: i32) -> (i32, i32) {
    %c0_i32 = arith.constant 0 : i32
    %c0_i32_0 = arith.constant 0 : i32
    %c0_i32_1 = arith.constant 0 : i32
    return %c0_i32, %c0_i32_0 : i32, i32
  }
  func.func @transform_2(%arg0: i32, %arg1: i32) -> (i32, i32) {
    %c0_i32 = arith.constant 0 : i32
    %c0_i32_0 = arith.constant 0 : i32
    %c0_i32_1 = arith.constant 0 : i32
    return %c0_i32, %c0_i32_0 : i32, i32
  }
  func.func @transform_3(%arg0: i32, %arg1: i32) -> (i32, i32, i32, i32) {
    %c0_i32 = arith.constant 0 : i32
    %c0_i32_0 = arith.constant 0 : i32
    %c0_i32_1 = arith.constant 0 : i32
    return %arg0, %arg1, %c0_i32, %c0_i32_0 : i32, i32, i32, i32
  }
}

module attributes {stable_mosaic.version = 11 : i64} {
  func.func @_conv3x3_bias_stats_kernel(%arg0: i32, %arg1: i32, %arg2: memref<1x1x34x128xbf16, #tpu.memory_space<vmem>>, %arg3: memref<1x1x34x128xbf16, #tpu.memory_space<vmem>>, %arg4: memref<1x1x34x128xbf16, #tpu.memory_space<vmem>>, %arg5: memref<3x3x128x128xbf16, #tpu.memory_space<vmem>>, %arg6: memref<1x128xf32, #tpu.memory_space<vmem>>, %arg7: memref<1x1x32x128xf32, #tpu.memory_space<vmem>>, %arg8: memref<1x1x2x128xf32, #tpu.memory_space<vmem>>) attributes {dimension_semantics = [#tpu.dimension_semantics<parallel>, #tpu.dimension_semantics<parallel>], iteration_bounds = array<i64: 2, 32>, scalar_prefetch = 0 : i64, scratch_operands = 0 : i64, tpu.core_type = #tpu.core_type<tc>, window_params = [{transform_indices = @transform_0, window_bounds = array<i64: 1, 1, 34, 128>}, {transform_indices = @transform_1, window_bounds = array<i64: 1, 1, 34, 128>}, {transform_indices = @transform_2, window_bounds = array<i64: 1, 1, 34, 128>}, {pipeline_mode = #tpu.pipeline_mode<synchronous>, transform_indices = @transform_3, window_bounds = array<i64: 3, 3, 128, 128>}, {pipeline_mode = #tpu.pipeline_mode<synchronous>, transform_indices = @transform_4, window_bounds = array<i64: 1, 128>}, {transform_indices = @transform_5, window_bounds = array<i64: 1, 1, 32, 128>}, {transform_indices = @transform_6, window_bounds = array<i64: 1, 1, 2, 128>}]} {
    %cst = arith.constant 0.000000e+00 : f32
    %0 = vector.broadcast %cst : f32 to vector<32x128xf32>
    %c0 = arith.constant 0 : index
    %c0_0 = arith.constant 0 : index
    %c0_1 = arith.constant 0 : index
    %c0_2 = arith.constant 0 : index
    %1 = vector.load %arg2[%c0, %c0_0, %c0_1, %c0_2] : memref<1x1x34x128xbf16, #tpu.memory_space<vmem>>, vector<1x1x34x128xbf16>
    %2 = vector.shape_cast %1 : vector<1x1x34x128xbf16> to vector<34x128xbf16>
    %3 = vector.extract_strided_slice %2 {offsets = [0, 0], sizes = [32, 128], strides = [1, 1]} : vector<34x128xbf16> to vector<32x128xbf16>
    %c0_3 = arith.constant 0 : index
    %c0_4 = arith.constant 0 : index
    %c0_5 = arith.constant 0 : index
    %c0_6 = arith.constant 0 : index
    %4 = vector.load %arg5[%c0_3, %c0_4, %c0_5, %c0_6] : memref<3x3x128x128xbf16, #tpu.memory_space<vmem>>, vector<1x1x128x128xbf16>
    %5 = vector.shape_cast %4 : vector<1x1x128x128xbf16> to vector<128x128xbf16>
    %cst_7 = arith.constant dense<0.000000e+00> : vector<32x128xf32>
    %6 = tpu.matmul %3, %5, %cst_7 {dimension_numbers = #tpu.dot_dimension_numbers<[1], [0], [0], [1], [0, 0, 1, 1], [], []>} : vector<32x128xbf16>, vector<128x128xbf16>, vector<32x128xf32> -> vector<32x128xf32>
    %7 = arith.addf %0, %6 : vector<32x128xf32>
    %8 = vector.extract_strided_slice %2 {offsets = [1, 0], sizes = [32, 128], strides = [1, 1]} : vector<34x128xbf16> to vector<32x128xbf16>
    %c0_8 = arith.constant 0 : index
    %c1 = arith.constant 1 : index
    %c0_9 = arith.constant 0 : index
    %c0_10 = arith.constant 0 : index
    %9 = vector.load %arg5[%c0_8, %c1, %c0_9, %c0_10] : memref<3x3x128x128xbf16, #tpu.memory_space<vmem>>, vector<1x1x128x128xbf16>
    %10 = vector.shape_cast %9 : vector<1x1x128x128xbf16> to vector<128x128xbf16>
    %cst_11 = arith.constant dense<0.000000e+00> : vector<32x128xf32>
    %11 = tpu.matmul %8, %10, %cst_11 {dimension_numbers = #tpu.dot_dimension_numbers<[1], [0], [0], [1], [0, 0, 1, 1], [], []>} : vector<32x128xbf16>, vector<128x128xbf16>, vector<32x128xf32> -> vector<32x128xf32>
    %12 = arith.addf %7, %11 : vector<32x128xf32>
    %13 = vector.extract_strided_slice %2 {offsets = [2, 0], sizes = [32, 128], strides = [1, 1]} : vector<34x128xbf16> to vector<32x128xbf16>
    %c0_12 = arith.constant 0 : index
    %c2 = arith.constant 2 : index
    %c0_13 = arith.constant 0 : index
    %c0_14 = arith.constant 0 : index
    %14 = vector.load %arg5[%c0_12, %c2, %c0_13, %c0_14] : memref<3x3x128x128xbf16, #tpu.memory_space<vmem>>, vector<1x1x128x128xbf16>
    %15 = vector.shape_cast %14 : vector<1x1x128x128xbf16> to vector<128x128xbf16>
    %cst_15 = arith.constant dense<0.000000e+00> : vector<32x128xf32>
    %16 = tpu.matmul %13, %15, %cst_15 {dimension_numbers = #tpu.dot_dimension_numbers<[1], [0], [0], [1], [0, 0, 1, 1], [], []>} : vector<32x128xbf16>, vector<128x128xbf16>, vector<32x128xf32> -> vector<32x128xf32>
    %17 = arith.addf %12, %16 : vector<32x128xf32>
    %c0_16 = arith.constant 0 : index
    %c0_17 = arith.constant 0 : index
    %c0_18 = arith.constant 0 : index
    %c0_19 = arith.constant 0 : index
    %18 = vector.load %arg3[%c0_16, %c0_17, %c0_18, %c0_19] : memref<1x1x34x128xbf16, #tpu.memory_space<vmem>>, vector<1x1x34x128xbf16>
    %19 = vector.shape_cast %18 : vector<1x1x34x128xbf16> to vector<34x128xbf16>
    %20 = vector.extract_strided_slice %19 {offsets = [0, 0], sizes = [32, 128], strides = [1, 1]} : vector<34x128xbf16> to vector<32x128xbf16>
    %c1_20 = arith.constant 1 : index
    %c0_21 = arith.constant 0 : index
    %c0_22 = arith.constant 0 : index
    %c0_23 = arith.constant 0 : index
    %21 = vector.load %arg5[%c1_20, %c0_21, %c0_22, %c0_23] : memref<3x3x128x128xbf16, #tpu.memory_space<vmem>>, vector<1x1x128x128xbf16>
    %22 = vector.shape_cast %21 : vector<1x1x128x128xbf16> to vector<128x128xbf16>
    %cst_24 = arith.constant dense<0.000000e+00> : vector<32x128xf32>
    %23 = tpu.matmul %20, %22, %cst_24 {dimension_numbers = #tpu.dot_dimension_numbers<[1], [0], [0], [1], [0, 0, 1, 1], [], []>} : vector<32x128xbf16>, vector<128x128xbf16>, vector<32x128xf32> -> vector<32x128xf32>
    %24 = arith.addf %17, %23 : vector<32x128xf32>
    %25 = vector.extract_strided_slice %19 {offsets = [1, 0], sizes = [32, 128], strides = [1, 1]} : vector<34x128xbf16> to vector<32x128xbf16>
    %c1_25 = arith.constant 1 : index
    %c1_26 = arith.constant 1 : index
    %c0_27 = arith.constant 0 : index
    %c0_28 = arith.constant 0 : index
    %26 = vector.load %arg5[%c1_25, %c1_26, %c0_27, %c0_28] : memref<3x3x128x128xbf16, #tpu.memory_space<vmem>>, vector<1x1x128x128xbf16>
    %27 = vector.shape_cast %26 : vector<1x1x128x128xbf16> to vector<128x128xbf16>
    %cst_29 = arith.constant dense<0.000000e+00> : vector<32x128xf32>
    %28 = tpu.matmul %25, %27, %cst_29 {dimension_numbers = #tpu.dot_dimension_numbers<[1], [0], [0], [1], [0, 0, 1, 1], [], []>} : vector<32x128xbf16>, vector<128x128xbf16>, vector<32x128xf32> -> vector<32x128xf32>
    %29 = arith.addf %24, %28 : vector<32x128xf32>
    %30 = vector.extract_strided_slice %19 {offsets = [2, 0], sizes = [32, 128], strides = [1, 1]} : vector<34x128xbf16> to vector<32x128xbf16>
    %c1_30 = arith.constant 1 : index
    %c2_31 = arith.constant 2 : index
    %c0_32 = arith.constant 0 : index
    %c0_33 = arith.constant 0 : index
    %31 = vector.load %arg5[%c1_30, %c2_31, %c0_32, %c0_33] : memref<3x3x128x128xbf16, #tpu.memory_space<vmem>>, vector<1x1x128x128xbf16>
    %32 = vector.shape_cast %31 : vector<1x1x128x128xbf16> to vector<128x128xbf16>
    %cst_34 = arith.constant dense<0.000000e+00> : vector<32x128xf32>
    %33 = tpu.matmul %30, %32, %cst_34 {dimension_numbers = #tpu.dot_dimension_numbers<[1], [0], [0], [1], [0, 0, 1, 1], [], []>} : vector<32x128xbf16>, vector<128x128xbf16>, vector<32x128xf32> -> vector<32x128xf32>
    %34 = arith.addf %29, %33 : vector<32x128xf32>
    %c0_35 = arith.constant 0 : index
    %c0_36 = arith.constant 0 : index
    %c0_37 = arith.constant 0 : index
    %c0_38 = arith.constant 0 : index
    %35 = vector.load %arg4[%c0_35, %c0_36, %c0_37, %c0_38] : memref<1x1x34x128xbf16, #tpu.memory_space<vmem>>, vector<1x1x34x128xbf16>
    %36 = vector.shape_cast %35 : vector<1x1x34x128xbf16> to vector<34x128xbf16>
    %37 = vector.extract_strided_slice %36 {offsets = [0, 0], sizes = [32, 128], strides = [1, 1]} : vector<34x128xbf16> to vector<32x128xbf16>
    %c2_39 = arith.constant 2 : index
    %c0_40 = arith.constant 0 : index
    %c0_41 = arith.constant 0 : index
    %c0_42 = arith.constant 0 : index
    %38 = vector.load %arg5[%c2_39, %c0_40, %c0_41, %c0_42] : memref<3x3x128x128xbf16, #tpu.memory_space<vmem>>, vector<1x1x128x128xbf16>
    %39 = vector.shape_cast %38 : vector<1x1x128x128xbf16> to vector<128x128xbf16>
    %cst_43 = arith.constant dense<0.000000e+00> : vector<32x128xf32>
    %40 = tpu.matmul %37, %39, %cst_43 {dimension_numbers = #tpu.dot_dimension_numbers<[1], [0], [0], [1], [0, 0, 1, 1], [], []>} : vector<32x128xbf16>, vector<128x128xbf16>, vector<32x128xf32> -> vector<32x128xf32>
    %41 = arith.addf %34, %40 : vector<32x128xf32>
    %42 = vector.extract_strided_slice %36 {offsets = [1, 0], sizes = [32, 128], strides = [1, 1]} : vector<34x128xbf16> to vector<32x128xbf16>
    %c2_44 = arith.constant 2 : index
    %c1_45 = arith.constant 1 : index
    %c0_46 = arith.constant 0 : index
    %c0_47 = arith.constant 0 : index
    %43 = vector.load %arg5[%c2_44, %c1_45, %c0_46, %c0_47] : memref<3x3x128x128xbf16, #tpu.memory_space<vmem>>, vector<1x1x128x128xbf16>
    %44 = vector.shape_cast %43 : vector<1x1x128x128xbf16> to vector<128x128xbf16>
    %cst_48 = arith.constant dense<0.000000e+00> : vector<32x128xf32>
    %45 = tpu.matmul %42, %44, %cst_48 {dimension_numbers = #tpu.dot_dimension_numbers<[1], [0], [0], [1], [0, 0, 1, 1], [], []>} : vector<32x128xbf16>, vector<128x128xbf16>, vector<32x128xf32> -> vector<32x128xf32>
    %46 = arith.addf %41, %45 : vector<32x128xf32>
    %47 = vector.extract_strided_slice %36 {offsets = [2, 0], sizes = [32, 128], strides = [1, 1]} : vector<34x128xbf16> to vector<32x128xbf16>
    %c2_49 = arith.constant 2 : index
    %c2_50 = arith.constant 2 : index
    %c0_51 = arith.constant 0 : index
    %c0_52 = arith.constant 0 : index
    %48 = vector.load %arg5[%c2_49, %c2_50, %c0_51, %c0_52] : memref<3x3x128x128xbf16, #tpu.memory_space<vmem>>, vector<1x1x128x128xbf16>
    %49 = vector.shape_cast %48 : vector<1x1x128x128xbf16> to vector<128x128xbf16>
    %cst_53 = arith.constant dense<0.000000e+00> : vector<32x128xf32>
    %50 = tpu.matmul %47, %49, %cst_53 {dimension_numbers = #tpu.dot_dimension_numbers<[1], [0], [0], [1], [0, 0, 1, 1], [], []>} : vector<32x128xbf16>, vector<128x128xbf16>, vector<32x128xf32> -> vector<32x128xf32>
    %51 = arith.addf %46, %50 : vector<32x128xf32>
    %c0_54 = arith.constant 0 : index
    %c0_55 = arith.constant 0 : index
    %52 = vector.load %arg6[%c0_54, %c0_55] : memref<1x128xf32, #tpu.memory_space<vmem>>, vector<1x128xf32>
    %53 = vector.broadcast %52 : vector<1x128xf32> to vector<32x128xf32>
    %54 = arith.addf %51, %53 : vector<32x128xf32>
    %c0_56 = arith.constant 0 : index
    %c0_57 = arith.constant 0 : index
    %c0_58 = arith.constant 0 : index
    %c0_59 = arith.constant 0 : index
    %55 = vector.load %arg7[%c0_56, %c0_57, %c0_58, %c0_59] : memref<1x1x32x128xf32, #tpu.memory_space<vmem>>, vector<1x1x32x128xf32>
    %56 = vector.shape_cast %55 : vector<1x1x32x128xf32> to vector<32x128xf32>
    %57 = vector.shape_cast %54 : vector<32x128xf32> to vector<1x1x32x128xf32>
    tpu.vector_store %arg7[%c0_56, %c0_57, %c0_58, %c0_59], %57 {strides = array<i32>} : memref<1x1x32x128xf32, #tpu.memory_space<vmem>>, vector<1x1x32x128xf32>,
    %cst_60 = arith.constant dense<0.000000e+00> : vector<128xf32>
    %58 = vector.multi_reduction <add>, %54, %cst_60 [0] : vector<32x128xf32> to vector<128xf32>
    %59 = vector.shape_cast %58 : vector<128xf32> to vector<1x128xf32>
    %60 = arith.mulf %54, %54 : vector<32x128xf32>
    %cst_61 = arith.constant dense<0.000000e+00> : vector<128xf32>
    %61 = vector.multi_reduction <add>, %60, %cst_61 [0] : vector<32x128xf32> to vector<128xf32>
    %62 = vector.shape_cast %61 : vector<128xf32> to vector<1x128xf32>
    %63 = tpu.concatenate %59, %62 in 0 : vector<1x128xf32>, vector<1x128xf32> -> vector<2x128xf32>
    %c0_62 = arith.constant 0 : index
    %c0_63 = arith.constant 0 : index
    %c0_64 = arith.constant 0 : index
    %c0_65 = arith.constant 0 : index
    %64 = vector.load %arg8[%c0_62, %c0_63, %c0_64, %c0_65] : memref<1x1x2x128xf32, #tpu.memory_space<vmem>>, vector<1x1x2x128xf32>
    %65 = vector.shape_cast %64 : vector<1x1x2x128xf32> to vector<2x128xf32>
    %66 = vector.shape_cast %63 : vector<2x128xf32> to vector<1x1x2x128xf32>
    tpu.vector_store %arg8[%c0_62, %c0_63, %c0_64, %c0_65], %66 {strides = array<i32>} : memref<1x1x2x128xf32, #tpu.memory_space<vmem>>, vector<1x1x2x128xf32>,
    return
  }
  func.func @transform_0(%arg0: i32, %arg1: i32) -> (i32, i32, i32, i32) {
    %c0_i32 = arith.constant 0 : i32
    %0 = arith.addi %arg1, %c0_i32 : i32
    %c0_i32_0 = arith.constant 0 : i32
    %c0_i32_1 = arith.constant 0 : i32
    %c0_i32_2 = arith.constant 0 : i32
    return %arg0, %0, %c0_i32_0, %c0_i32_1 : i32, i32, i32, i32
  }
  func.func @transform_1(%arg0: i32, %arg1: i32) -> (i32, i32, i32, i32) {
    %c1_i32 = arith.constant 1 : i32
    %0 = arith.addi %arg1, %c1_i32 : i32
    %c0_i32 = arith.constant 0 : i32
    %c0_i32_0 = arith.constant 0 : i32
    %c0_i32_1 = arith.constant 0 : i32
    return %arg0, %0, %c0_i32, %c0_i32_0 : i32, i32, i32, i32
  }
  func.func @transform_2(%arg0: i32, %arg1: i32) -> (i32, i32, i32, i32) {
    %c2_i32 = arith.constant 2 : i32
    %0 = arith.addi %arg1, %c2_i32 : i32
    %c0_i32 = arith.constant 0 : i32
    %c0_i32_0 = arith.constant 0 : i32
    %c0_i32_1 = arith.constant 0 : i32
    return %arg0, %0, %c0_i32, %c0_i32_0 : i32, i32, i32, i32
  }
  func.func @transform_3(%arg0: i32, %arg1: i32) -> (i32, i32, i32, i32) {
    %c0_i32 = arith.constant 0 : i32
    %c0_i32_0 = arith.constant 0 : i32
    %c0_i32_1 = arith.constant 0 : i32
    %c0_i32_2 = arith.constant 0 : i32
    %c0_i32_3 = arith.constant 0 : i32
    return %c0_i32, %c0_i32_0, %c0_i32_1, %c0_i32_2 : i32, i32, i32, i32
  }
  func.func @transform_4(%arg0: i32, %arg1: i32) -> (i32, i32) {
    %c0_i32 = arith.constant 0 : i32
    %c0_i32_0 = arith.constant 0 : i32
    %c0_i32_1 = arith.constant 0 : i32
    return %c0_i32, %c0_i32_0 : i32, i32
  }
  func.func @transform_5(%arg0: i32, %arg1: i32) -> (i32, i32, i32, i32) {
    %c0_i32 = arith.constant 0 : i32
    %c0_i32_0 = arith.constant 0 : i32
    %c0_i32_1 = arith.constant 0 : i32
    return %arg0, %arg1, %c0_i32, %c0_i32_0 : i32, i32, i32, i32
  }
  func.func @transform_6(%arg0: i32, %arg1: i32) -> (i32, i32, i32, i32) {
    %c0_i32 = arith.constant 0 : i32
    %c0_i32_0 = arith.constant 0 : i32
    %c0_i32_1 = arith.constant 0 : i32
    return %arg0, %arg1, %c0_i32, %c0_i32_0 : i32, i32, i32, i32
  }
}

module attributes {stable_mosaic.version = 11 : i64} {
  func.func @_affine_relu_kernel(%arg0: i32, %arg1: i32, %arg2: memref<1x1x32x128xf32, #tpu.memory_space<vmem>>, %arg3: memref<1x128xf32, #tpu.memory_space<vmem>>, %arg4: memref<1x128xf32, #tpu.memory_space<vmem>>, %arg5: memref<1x1x32x128xf32, #tpu.memory_space<vmem>>) attributes {dimension_semantics = [#tpu.dimension_semantics<parallel>, #tpu.dimension_semantics<parallel>], iteration_bounds = array<i64: 2, 32>, scalar_prefetch = 0 : i64, scratch_operands = 0 : i64, tpu.core_type = #tpu.core_type<tc>, window_params = [{transform_indices = @transform_0, window_bounds = array<i64: 1, 1, 32, 128>}, {pipeline_mode = #tpu.pipeline_mode<synchronous>, transform_indices = @transform_1, window_bounds = array<i64: 1, 128>}, {pipeline_mode = #tpu.pipeline_mode<synchronous>, transform_indices = @transform_2, window_bounds = array<i64: 1, 128>}, {transform_indices = @transform_3, window_bounds = array<i64: 1, 1, 32, 128>}]} {
    %c0 = arith.constant 0 : index
    %c0_0 = arith.constant 0 : index
    %c0_1 = arith.constant 0 : index
    %c0_2 = arith.constant 0 : index
    %0 = vector.load %arg2[%c0, %c0_0, %c0_1, %c0_2] : memref<1x1x32x128xf32, #tpu.memory_space<vmem>>, vector<1x1x32x128xf32>
    %1 = vector.shape_cast %0 : vector<1x1x32x128xf32> to vector<32x128xf32>
    %c0_3 = arith.constant 0 : index
    %c0_4 = arith.constant 0 : index
    %2 = vector.load %arg3[%c0_3, %c0_4] : memref<1x128xf32, #tpu.memory_space<vmem>>, vector<1x128xf32>
    %3 = vector.broadcast %2 : vector<1x128xf32> to vector<32x128xf32>
    %4 = arith.mulf %1, %3 : vector<32x128xf32>
    %c0_5 = arith.constant 0 : index
    %c0_6 = arith.constant 0 : index
    %5 = vector.load %arg4[%c0_5, %c0_6] : memref<1x128xf32, #tpu.memory_space<vmem>>, vector<1x128xf32>
    %6 = vector.broadcast %5 : vector<1x128xf32> to vector<32x128xf32>
    %7 = arith.addf %4, %6 : vector<32x128xf32>
    %cst = arith.constant 0.000000e+00 : f32
    %8 = vector.broadcast %cst : f32 to vector<32x128xf32>
    %9 = arith.maximumf %7, %8 : vector<32x128xf32>
    %c0_7 = arith.constant 0 : index
    %c0_8 = arith.constant 0 : index
    %c0_9 = arith.constant 0 : index
    %c0_10 = arith.constant 0 : index
    %10 = vector.load %arg5[%c0_7, %c0_8, %c0_9, %c0_10] : memref<1x1x32x128xf32, #tpu.memory_space<vmem>>, vector<1x1x32x128xf32>
    %11 = vector.shape_cast %10 : vector<1x1x32x128xf32> to vector<32x128xf32>
    %12 = vector.shape_cast %9 : vector<32x128xf32> to vector<1x1x32x128xf32>
    tpu.vector_store %arg5[%c0_7, %c0_8, %c0_9, %c0_10], %12 {strides = array<i32>} : memref<1x1x32x128xf32, #tpu.memory_space<vmem>>, vector<1x1x32x128xf32>,
    return
  }
  func.func @transform_0(%arg0: i32, %arg1: i32) -> (i32, i32, i32, i32) {
    %c0_i32 = arith.constant 0 : i32
    %c0_i32_0 = arith.constant 0 : i32
    %c0_i32_1 = arith.constant 0 : i32
    return %arg0, %arg1, %c0_i32, %c0_i32_0 : i32, i32, i32, i32
  }
  func.func @transform_1(%arg0: i32, %arg1: i32) -> (i32, i32) {
    %c0_i32 = arith.constant 0 : i32
    %c0_i32_0 = arith.constant 0 : i32
    %c0_i32_1 = arith.constant 0 : i32
    return %c0_i32, %c0_i32_0 : i32, i32
  }
  func.func @transform_2(%arg0: i32, %arg1: i32) -> (i32, i32) {
    %c0_i32 = arith.constant 0 : i32
    %c0_i32_0 = arith.constant 0 : i32
    %c0_i32_1 = arith.constant 0 : i32
    return %c0_i32, %c0_i32_0 : i32, i32
  }
  func.func @transform_3(%arg0: i32, %arg1: i32) -> (i32, i32, i32, i32) {
    %c0_i32 = arith.constant 0 : i32
    %c0_i32_0 = arith.constant 0 : i32
    %c0_i32_1 = arith.constant 0 : i32
    return %arg0, %arg1, %c0_i32, %c0_i32_0 : i32, i32, i32, i32
  }
}

</mosaic_0001>

<llo_original>
// kernel: tile.8
$region0: #{tile.8}
  #allocation0 [shape = 's32[1]{0}', space=sflag, size = 0x4, scoped, tag = 'scoped memory for tile.8']
  %s0 = inlined_call_operand.vmem [shape: f32[128], index: 0, kind: input, shape index: {}]
  %s1 = inlined_call_operand.vmem [shape: f32[4,128], index: 1, kind: output, shape index: {}]
  // Predicated region
  $region2: #{tile.8} parent=0 // pred_check
    _
  $region3: #{tile.8} parent=0 // pred_check_branch
    %3 = sbr.rel (0) target = $region5
  $region4: #{tile.8} parent=0 // pred_region
    _
  $region5: #{tile.8} parent=0 // pred_fallthru
    _
  %v4 = vld [vmem:[%s0] ss:$0 sm:$0xff]
  %5 = vst [vmem:[%s1] sm:$0xf] %v4

// kernel: unet_decoder_block_forward.5
$region0: #{unet_decoder_block_forward.5}
  #allocation0 [shape = 'u32[]', space=smem, size = 0x4, offset = 0x4, fixed_abs, tag = 'smem constant byte address 0x4 - core index']
  #allocation1 [shape = 'u32[144,128]{1,0:T(1,128)}', space=vmem, size = 0x12000, scoped, tag = 'internal scratch']
  %s0 = inlined_call_operand.vmem [shape: bf16[512,128], index: 0, kind: input, shape index: {}]
  %s1 = inlined_call_operand.vmem [shape: bf16[128,512], index: 1, kind: input, shape index: {}]
  %s2 = inlined_call_operand.vmem [shape: f32[1,512], index: 2, kind: input, shape index: {}]
  %s3 = inlined_call_operand.vmem [shape: bf16[512,512], index: 3, kind: output, shape index: {}]
  %s4 = sld [smem:[#allocation0]]
  $region45: #{unet_decoder_block_forward.5} parent=0
    _
  %s6 = ssub.s32 1, %s4
  %s7 = scalar_select 0, %s6, %s4
  loop: start=0, step=1, limit=4
  $region2: #{unet_decoder_block_forward.5} parent=0 // loop_pre_header
    _
  $region3: #{unet_decoder_block_forward.5} parent=0 // loop_header
    %s9 = sphi 0, %s13
    %p10 = scmp.ge.s32.totalorder %s9, 4
    %s19 = sphi 0, %s21
    %s22 = sphi 0, %s19
    %s23 = sphi 0, %s22
    %s39 = sphi 0, %s23
    %s43 = sphi 0, %s43
    %s45 = sphi 0, %s43
    %s46 = sphi 0, %s45
    %s60 = sphi 0, %s46
    %s64 = sphi 0, %s64
    %s66 = sphi 0, %s64
    %s67 = sphi 0, %s66
    %s81 = sphi 0, %s67
    %s87 = sphi 0, %s89
    %s90 = sphi 0, %s87
    %s91 = sphi 0, %s90
    %s107 = sphi 0, %s91
  $region4: #{unet_decoder_block_forward.5} parent=0 // loop_header_branch
    %12 = sbr.rel (%p10) target = $region8
  $region5: #{unet_decoder_block_forward.5} parent=0 // loop_body
    %s14 = ssub.s32 %s9, 1
    %s15 = ssub.s32 %s9, 2
    %s16 = sadd.s32 %s9, 1
    %s17 = ssub.s32 %s9, %s16
    %p18 = scmp.eq.s32.totalorder %s17, 0
    %s20 = sadd.s32 %s19, 1
    %s21 = scalar_select %p18, %s19, %s20
    %p24 = pneg %p18
    %p25 = scmp.eq.s32.totalorder %s9, 1
    %p26 = por %p24, %p25
    %p27 = scmp.ne.s32.totalorder %s19, %s22
    %p28 = scmp.eq.s32.totalorder %s9, 0
    %p29 = por %p27, %p28
    %p30 = scmp.ne.s32.totalorder %s19, %s22
    %p31 = scmp.eq.s32.totalorder %s14, 1
    %p32 = por %p30, %p31
    %p33 = scmp.ne.s32.totalorder %s22, %s23
    %p34 = scmp.eq.s32.totalorder %s14, 0
    %p35 = por %p33, %p34
    %p36 = scmp.ne.s32.totalorder %s22, %s23
    %p37 = scmp.eq.s32.totalorder %s15, 1
    %p38 = por %p36, %p37
    %p40 = scmp.ne.s32.totalorder %s23, %s39
    %p41 = scmp.eq.s32.totalorder %s15, 0
    %p42 = por %p40, %p41
    %s44 = sadd.s32 %s43, 1
    %p47 = scmp.eq.s32.totalorder %s9, 1
    %p48 = scmp.ne.s32.totalorder %s43, %s45
    %p49 = scmp.eq.s32.totalorder %s9, 0
    %p50 = por %p48, %p49
    %p51 = scmp.ne.s32.totalorder %s43, %s45
    %p52 = scmp.eq.s32.totalorder %s14, 1
    %p53 = por %p51, %p52
    %p54 = scmp.ne.s32.totalorder %s45, %s46
    %p55 = scmp.eq.s32.totalorder %s14, 0
    %p56 = por %p54, %p55
    %p57 = scmp.ne.s32.totalorder %s45, %s46
    %p58 = scmp.eq.s32.totalorder %s15, 1
    %p59 = por %p57, %p58
    %p61 = scmp.ne.s32.totalorder %s46, %s60
    %p62 = scmp.eq.s32.totalorder %s15, 0
    %p63 = por %p61, %p62
    %s65 = sadd.s32 %s64, 1
    %p68 = scmp.eq.s32.totalorder %s9, 1
    %p69 = scmp.ne.s32.totalorder %s64, %s66
    %p70 = scmp.eq.s32.totalorder %s9, 0
    %p71 = por %p69, %p70
    %p72 = scmp.ne.s32.totalorder %s64, %s66
    %p73 = scmp.eq.s32.totalorder %s14, 1
    %p74 = por %p72, %p73
    %p75 = scmp.ne.s32.totalorder %s66, %s67
    %p76 = scmp.eq.s32.totalorder %s14, 0
    %p77 = por %p75, %p76
    %p78 = scmp.ne.s32.totalorder %s66, %s67
    %p79 = scmp.eq.s32.totalorder %s15, 1
    %p80 = por %p78, %p79
    %p82 = scmp.ne.s32.totalorder %s67, %s81
    %p83 = scmp.eq.s32.totalorder %s15, 0
    %p84 = por %p82, %p83
    %s85 = ssub.s32 %s9, %s16
    %p86 = scmp.eq.s32.totalorder %s85, 0
    %s88 = sadd.s32 %s87, 1
    %s89 = scalar_select %p86, %s87, %s88
    %p92 = pneg %p86
    %p93 = scmp.eq.s32.totalorder %s9, 1
    %p94 = por %p92, %p93
    %p95 = scmp.ne.s32.totalorder %s87, %s90
    %p96 = scmp.eq.s32.totalorder %s9, 0
    %p97 = por %p95, %p96
    %p98 = scmp.ne.s32.totalorder %s87, %s90
    %p99 = scmp.eq.s32.totalorder %s14, 1
    %p100 = por %p98, %p99
    %p101 = scmp.ne.s32.totalorder %s90, %s91
    %p102 = scmp.eq.s32.totalorder %s14, 0
    %p103 = por %p101, %p102
    %p104 = scmp.ne.s32.totalorder %s90, %s91
    %p105 = scmp.eq.s32.totalorder %s15, 1
    %p106 = por %p104, %p105
    %p108 = scmp.ne.s32.totalorder %s91, %s107
    %p109 = scmp.eq.s32.totalorder %s15, 0
    %p110 = por %p108, %p109
    %p111 = scmp.le.s32.totalorder 1, %s9
    %p112 = scmp.lt.s32.totalorder %s9, 3
    %p113 = pnand %p111, %p112
    %p114 = pneg %p113
    // Predicated region
    $region9: #{unet_decoder_block_forward.5} parent=5 // pred_check
      _
    $region10: #{unet_decoder_block_forward.5} parent=5 // pred_check_branch
      %116 = sbr.rel (%p113) target = $region12
    $region11: #{unet_decoder_block_forward.5} parent=5 // pred_region
      %s117 = ssub.s32 %s9, 1
      // Predicated region
      $region13: #{unet_decoder_block_forward.5} parent=11 // pred_check
        %p118 = pneg %p56
      $region14: #{unet_decoder_block_forward.5} parent=11 // pred_check_branch
        %120 = sbr.rel (%p118) target = $region16
      $region15: #{unet_decoder_block_forward.5} parent=11 // pred_region
        _
      $region16: #{unet_decoder_block_forward.5} parent=11 // pred_fallthru
        _
      // Predicated region
      $region17: #{unet_decoder_block_forward.5} parent=11 // pred_check
        %p121 = pneg %p77
      $region18: #{unet_decoder_block_forward.5} parent=11 // pred_check_branch
        %123 = sbr.rel (%p121) target = $region20
      $region19: #{unet_decoder_block_forward.5} parent=11 // pred_region
        _
      $region20: #{unet_decoder_block_forward.5} parent=11 // pred_fallthru
        _
    $region12: #{unet_decoder_block_forward.5} parent=5 // pred_fallthru
      _
    %p124 = scmp.lt.s32.totalorder %s9, 2
    // Predicated region
    $region21: #{unet_decoder_block_forward.5} parent=5 // pred_check
      %p125 = pneg %p124
    $region22: #{unet_decoder_block_forward.5} parent=5 // pred_check_branch
      %127 = sbr.rel (%p125) target = $region24
    $region23: #{unet_decoder_block_forward.5} parent=5 // pred_region
      // Predicated region
      $region25: #{unet_decoder_block_forward.5} parent=23 // pred_check
        %p128 = pneg %p29
      $region26: #{unet_decoder_block_forward.5} parent=23 // pred_check_branch
        %130 = sbr.rel (%p128) target = $region28
      $region27: #{unet_decoder_block_forward.5} parent=23 // pred_region
        %s131 = smul.u32 32, %s9
        %p132 = scmp.lt.s32.totalorder %s131, 63
        %s133 = scalar_select %p132, %s131, 63
        %s134 = smul.addr %s133, 4
        %s135 = scalar_lea.vmem %s0, %s134
        %s136 = smul.u32 32, %s9
      $region28: #{unet_decoder_block_forward.5} parent=23 // pred_fallthru
        _
    $region24: #{unet_decoder_block_forward.5} parent=5 // pred_fallthru
      _
    %p137 = scmp.le.s32.totalorder 1, %s9
    %p138 = scmp.lt.s32.totalorder %s9, 3
    %p139 = pnand %p137, %p138
    %p140 = pneg %p139
    // Predicated region
    $region29: #{unet_decoder_block_forward.5} parent=5 // pred_check
      _
    $region30: #{unet_decoder_block_forward.5} parent=5 // pred_check_branch
      %142 = sbr.rel (%p139) target = $region32
    $region31: #{unet_decoder_block_forward.5} parent=5 // pred_region
      %s143 = ssub.s32 %s9, 1
      %s144 = smul.u32 32, %s14
      %p145 = scmp.lt.s32.totalorder %s144, 63
      %s146 = scalar_select %p145, %s144, 63
      %s147 = smul.addr %s146, 4
      %s148 = scalar_lea.vmem %s0, %s147
      %p149 = pneg %p35
      %p150 = pneg %p32
      %p151 = pneg %p56
      %p152 = pneg %p53
      %p153 = pneg %p77
      %p154 = pneg %p74
      %p155 = pneg %p103
      %p156 = pneg %p100
      %s157 = smul.u32 32, %s14
      %p158 = scmp.lt.s32.totalorder %s157, 63
      %s159 = scalar_select %p158, %s157, 63
      %s160 = smul.addr %s159, 4
      %s161 = smul.addr %s160, 4
      %s162 = scalar_lea.vmem %s3, %s161
      %s163 = smul.u32 32, %s14
      %p164 = scmp.lt.s32.totalorder %s163, 63
      %s165 = scalar_select %p164, %s163, 63
      %s166 = smul.addr %s165, 4
      %s167 = scalar_lea.vmem %s0, %s166
      %s168 = smul.u32 32, %s14
      %s169 = smul.u32 32, %s14
      %p170 = scmp.lt.s32.totalorder %s169, 63
      %s171 = scalar_select %p170, %s169, 63
      %s172 = smul.addr %s171, 4
      %s173 = smul.addr %s172, 4
      %s174 = scalar_lea.vmem %s3, %s173
      %s175 = smul.u32 32, %s14
      %v177 = vld [vmem:[%s167] sm:$0xf]
      %v178 = vld [vmem:[%s167 + $0x4] sm:$0xf]
      %v179 = vld [vmem:[%s167 + $0x8] sm:$0xf]
      %v180 = vld [vmem:[%s167 + $0xc] sm:$0xf]
      %v181 = vld [vmem:[%s167 + $0x10] sm:$0xf]
      %v182 = vld [vmem:[%s167 + $0x14] sm:$0xf]
      %v183 = vld [vmem:[%s167 + $0x18] sm:$0xf]
      %v184 = vld [vmem:[%s167 + $0x1c] sm:$0xf]
      %v185 = vld [vmem:[%s167 + $0x20] sm:$0xf]
      %v186 = vld [vmem:[%s167 + $0x24] sm:$0xf]
      %v187 = vld [vmem:[%s167 + $0x28] sm:$0xf]
      %v188 = vld [vmem:[%s167 + $0x2c] sm:$0xf]
      %v189 = vld [vmem:[%s167 + $0x30] sm:$0xf]
      %v190 = vld [vmem:[%s167 + $0x34] sm:$0xf]
      %v191 = vld [vmem:[%s167 + $0x38] sm:$0xf]
      %v192 = vld [vmem:[%s167 + $0x3c] sm:$0xf]
      %v193 = vld [vmem:[%s167 + $0x40] sm:$0xf]
      %v194 = vld [vmem:[%s167 + $0x44] sm:$0xf]
      %v195 = vld [vmem:[%s167 + $0x48] sm:$0xf]
      %v196 = vld [vmem:[%s167 + $0x4c] sm:$0xf]
      %v197 = vld [vmem:[%s167 + $0x50] sm:$0xf]
      %v198 = vld [vmem:[%s167 + $0x54] sm:$0xf]
      %v199 = vld [vmem:[%s167 + $0x58] sm:$0xf]
      %v200 = vld [vmem:[%s167 + $0x5c] sm:$0xf]
      %v201 = vld [vmem:[%s167 + $0x60] sm:$0xf]
      %v202 = vld [vmem:[%s167 + $0x64] sm:$0xf]
      %v203 = vld [vmem:[%s167 + $0x68] sm:$0xf]
      %v204 = vld [vmem:[%s167 + $0x6c] sm:$0xf]
      %v205 = vld [vmem:[%s167 + $0x70] sm:$0xf]
      %v206 = vld [vmem:[%s167 + $0x74] sm:$0xf]
      %v207 = vld [vmem:[%s167 + $0x78] sm:$0xf]
      %v208 = vld [vmem:[%s167 + $0x7c] sm:$0xf]
      %v209 = vld [vmem:[%s1] sm:$0xff]
      %v210 = vld [vmem:[%s1 + $0x8] sm:$0xff]
      %v211 = vld [vmem:[%s1 + $0x10] sm:$0xff]
      %v212 = vld [vmem:[%s1 + $0x18] sm:$0xff]
      %v213 = vld [vmem:[%s1 + $0x20] sm:$0xff]
      %v214 = vld [vmem:[%s1 + $0x28] sm:$0xff]
      %v215 = vld [vmem:[%s1 + $0x30] sm:$0xff]
      %v216 = vld [vmem:[%s1 + $0x38] sm:$0xff]
      %v217 = vld [vmem:[%s1 + $0x40] sm:$0xff]
      %v218 = vld [vmem:[%s1 + $0x48] sm:$0xff]
      %v219 = vld [vmem:[%s1 + $0x50] sm:$0xff]
      %v220 = vld [vmem:[%s1 + $0x58] sm:$0xff]
      %v221 = vld [vmem:[%s1 + $0x60] sm:$0xff]
      %v222 = vld [vmem:[%s1 + $0x68] sm:$0xff]
      %v223 = vld [vmem:[%s1 + $0x70] sm:$0xff]
      %v224 = vld [vmem:[%s1 + $0x78] sm:$0xff]
      %v225 = vld [vmem:[%s1 + $0x80] sm:$0xff]
      %v226 = vld [vmem:[%s1 + $0x88] sm:$0xff]
      %v227 = vld [vmem:[%s1 + $0x90] sm:$0xff]
      %v228 = vld [vmem:[%s1 + $0x98] sm:$0xff]
      %v229 = vld [vmem:[%s1 + $0xa0] sm:$0xff]
      %v230 = vld [vmem:[%s1 + $0xa8] sm:$0xff]
      %v231 = vld [vmem:[%s1 + $0xb0] sm:$0xff]
      %v232 = vld [vmem:[%s1 + $0xb8] sm:$0xff]
      %v233 = vld [vmem:[%s1 + $0xc0] sm:$0xff]
      %v234 = vld [vmem:[%s1 + $0xc8] sm:$0xff]
      %v235 = vld [vmem:[%s1 + $0xd0] sm:$0xff]
      %v236 = vld [vmem:[%s1 + $0xd8] sm:$0xff]
      %v237 = vld [vmem:[%s1 + $0xe0] sm:$0xff]
      %v238 = vld [vmem:[%s1 + $0xe8] sm:$0xff]
      %v239 = vld [vmem:[%s1 + $0xf0] sm:$0xff]
      %v240 = vld [vmem:[%s1 + $0xf8] sm:$0xff]
      %v241 = vld [vmem:[%s2] sm:$0xf]
      %v243 = vlaneseq
      %v244 = vshrl.u32 %v243, 7
      %v245 = vsub.s32 0, %v244
      %v246 = vrot.slane %v241, %v245
      %v247 = vlaneseq
      %v248 = vshrl.u32 %v247, 7
      %v249 = vsub.s32 1, %v248
      %v250 = vrot.slane %v241, %v249
      %v251 = vlaneseq
      %v252 = vshrl.u32 %v251, 7
      %v253 = vsub.s32 2, %v252
      %v254 = vrot.slane %v241, %v253
      %v255 = vlaneseq
      %v256 = vshrl.u32 %v255, 7
      %v257 = vsub.s32 3, %v256
      %v258 = vrot.slane %v241, %v257
      %v295 = vunpack.c.l.b16 %v177
      %v296 = vunpack.c.l.b16 %v178
      %v297 = vunpack.c.l.b16 %v179
      %v298 = vunpack.c.l.b16 %v180
      %v299 = vunpack.c.l.b16 %v181
      %v300 = vunpack.c.l.b16 %v182
      %v301 = vunpack.c.l.b16 %v183
      %v302 = vunpack.c.l.b16 %v184
      %v303 = vunpack.c.l.b16 %v185
      %v304 = vunpack.c.l.b16 %v186
      %v305 = vunpack.c.l.b16 %v187
      %v306 = vunpack.c.l.b16 %v188
      %v307 = vunpack.c.l.b16 %v189
      %v308 = vunpack.c.l.b16 %v190
      %v309 = vunpack.c.l.b16 %v191
      %v310 = vunpack.c.l.b16 %v192
      %v311 = vunpack.c.l.b16 %v193
      %v312 = vunpack.c.l.b16 %v194
      %v313 = vunpack.c.l.b16 %v195
      %v314 = vunpack.c.l.b16 %v196
      %v315 = vunpack.c.l.b16 %v197
      %v316 = vunpack.c.l.b16 %v198
      %v317 = vunpack.c.l.b16 %v199
      %v318 = vunpack.c.l.b16 %v200
      %v319 = vunpack.c.l.b16 %v201
      %v320 = vunpack.c.l.b16 %v202
      %v321 = vunpack.c.l.b16 %v203
      %v322 = vunpack.c.l.b16 %v204
      %v323 = vunpack.c.l.b16 %v205
      %v324 = vunpack.c.l.b16 %v206
      %v325 = vunpack.c.l.b16 %v207
      %v326 = vunpack.c.l.b16 %v208
      %v327 = vpack.c.b16 %v296, %v295
      %v328 = vpack.c.b16 %v298, %v297
      %v329 = vpack.c.b16 %v300, %v299
      %v330 = vpack.c.b16 %v302, %v301
      %v331 = vpack.c.b16 %v304, %v303
      %v332 = vpack.c.b16 %v306, %v305
      %v333 = vpack.c.b16 %v308, %v307
      %v334 = vpack.c.b16 %v310, %v309
      %v335 = vpack.c.b16 %v312, %v311
      %v336 = vpack.c.b16 %v314, %v313
      %v337 = vpack.c.b16 %v316, %v315
      %v338 = vpack.c.b16 %v318, %v317
      %v339 = vpack.c.b16 %v320, %v319
      %v340 = vpack.c.b16 %v322, %v321
      %v341 = vpack.c.b16 %v324, %v323
      %v342 = vpack.c.b16 %v326, %v325
      %v391 = vunpack.c.l.b16 %v209
      %v392 = vunpack.c.h.b16 %v209
      %v393 = vunpack.c.l.b16 %v210
      %v394 = vunpack.c.h.b16 %v210
      %v395 = vunpack.c.l.b16 %v211
      %v396 = vunpack.c.h.b16 %v211
      %v397 = vunpack.c.l.b16 %v212
      %v398 = vunpack.c.h.b16 %v212
      %v399 = vunpack.c.l.b16 %v213
      %v400 = vunpack.c.h.b16 %v213
      %v401 = vunpack.c.l.b16 %v214
      %v402 = vunpack.c.h.b16 %v214
      %v403 = vunpack.c.l.b16 %v215
      %v404 = vunpack.c.h.b16 %v215
      %v405 = vunpack.c.l.b16 %v216
      %v406 = vunpack.c.h.b16 %v216
      %v407 = vunpack.c.l.b16 %v217
      %v408 = vunpack.c.h.b16 %v217
      %v409 = vunpack.c.l.b16 %v218
      %v410 = vunpack.c.h.b16 %v218
      %v411 = vunpack.c.l.b16 %v219
      %v412 = vunpack.c.h.b16 %v219
      %v413 = vunpack.c.l.b16 %v220
      %v414 = vunpack.c.h.b16 %v220
      %v415 = vunpack.c.l.b16 %v221
      %v416 = vunpack.c.h.b16 %v221
      %v417 = vunpack.c.l.b16 %v222
      %v418 = vunpack.c.h.b16 %v222
      %v419 = vunpack.c.l.b16 %v223
      %v420 = vunpack.c.h.b16 %v223
      %v421 = vunpack.c.l.b16 %v224
      %v422 = vunpack.c.h.b16 %v224
      %v423 = vunpack.c.l.b16 %v225
      %v424 = vunpack.c.h.b16 %v225
      %v425 = vunpack.c.l.b16 %v226
      %v426 = vunpack.c.h.b16 %v226
      %v427 = vunpack.c.l.b16 %v227
      %v428 = vunpack.c.h.b16 %v227
      %v429 = vunpack.c.l.b16 %v228
      %v430 = vunpack.c.h.b16 %v228
      %v431 = vunpack.c.l.b16 %v229
      %v432 = vunpack.c.h.b16 %v229
      %v433 = vunpack.c.l.b16 %v230
      %v434 = vunpack.c.h.b16 %v230
      %v435 = vunpack.c.l.b16 %v231
      %v436 = vunpack.c.h.b16 %v231
      %v437 = vunpack.c.l.b16 %v232
      %v438 = vunpack.c.h.b16 %v232
      %v439 = vunpack.c.l.b16 %v233
      %v440 = vunpack.c.h.b16 %v233
      %v441 = vunpack.c.l.b16 %v234
      %v442 = vunpack.c.h.b16 %v234
      %v443 = vunpack.c.l.b16 %v235
      %v444 = vunpack.c.h.b16 %v235
      %v445 = vunpack.c.l.b16 %v236
      %v446 = vunpack.c.h.b16 %v236
      %v447 = vunpack.c.l.b16 %v237
      %v448 = vunpack.c.h.b16 %v237
      %v449 = vunpack.c.l.b16 %v238
      %v450 = vunpack.c.h.b16 %v238
      %v451 = vunpack.c.l.b16 %v239
      %v452 = vunpack.c.h.b16 %v239
      %v453 = vunpack.c.l.b16 %v240
      %v454 = vunpack.c.h.b16 %v240
      %v455 = vpack.c.b16 %v395, %v391
      %v456 = vpack.c.b16 %v396, %v392
      %v457 = vpack.c.b16 %v397, %v393
      %v458 = vpack.c.b16 %v398, %v394
      %v459 = vpack.c.b16 %v403, %v399
      %v460 = vpack.c.b16 %v404, %v400
      %v461 = vpack.c.b16 %v405, %v401
      %v462 = vpack.c.b16 %v406, %v402
      %v463 = vpack.c.b16 %v411, %v407
      %v464 = vpack.c.b16 %v412, %v408
      %v465 = vpack.c.b16 %v413, %v409
      %v466 = vpack.c.b16 %v414, %v410
      %v467 = vpack.c.b16 %v419, %v415
      %v468 = vpack.c.b16 %v420, %v416
      %v469 = vpack.c.b16 %v421, %v417
      %v470 = vpack.c.b16 %v422, %v418
      %v471 = vpack.c.b16 %v427, %v423
      %v472 = vpack.c.b16 %v428, %v424
      %v473 = vpack.c.b16 %v429, %v425
      %v474 = vpack.c.b16 %v430, %v426
      %v475 = vpack.c.b16 %v435, %v431
      %v476 = vpack.c.b16 %v436, %v432
      %v477 = vpack.c.b16 %v437, %v433
      %v478 = vpack.c.b16 %v438, %v434
      %v479 = vpack.c.b16 %v443, %v439
      %v480 = vpack.c.b16 %v444, %v440
      %v481 = vpack.c.b16 %v445, %v441
      %v482 = vpack.c.b16 %v446, %v442
      %v483 = vpack.c.b16 %v451, %v447
      %v484 = vpack.c.b16 %v452, %v448
      %v485 = vpack.c.b16 %v453, %v449
      %v486 = vpack.c.b16 %v454, %v450
      %519 = vmatprep.subr.bf16.mxu0 %v456
      %520 = vmatpush1.bf16.msra.mxu0 %v455
      %521 = vmatprep.subr.bf16.mxu0 %v460
      %522 = vmatpush1.bf16.msra.mxu0 %v459
      %523 = vmatprep.subr.bf16.mxu0 %v464
      %524 = vmatpush1.bf16.msra.mxu0 %v463
      %525 = vmatprep.subr.bf16.mxu0 %v468
      %526 = vmatpush1.bf16.msra.mxu0 %v467
      %527 = vmatprep.subr.bf16.mxu0 %v472
      %528 = vmatpush1.bf16.msra.mxu0 %v471
      %529 = vmatprep.subr.bf16.mxu0 %v476
      %530 = vmatpush1.bf16.msra.mxu0 %v475
      %531 = vmatprep.subr.bf16.mxu0 %v480
      %532 = vmatpush1.bf16.msra.mxu0 %v479
      %533 = vmatprep.subr.bf16.mxu0 %v484
      %534 = vmatpush1.bf16.msra.mxu0 %v483
      %535 = vmatprep.subr.bf16.mxu0 0
      %536 = vmatpush1.bf16.msra.mxu0 0
      %537 = vmatprep.subr.bf16.mxu0 0
      %538 = vmatpush1.bf16.msra.mxu0 0
      %539 = vmatprep.subr.bf16.mxu0 0
      %540 = vmatpush1.bf16.msra.mxu0 0
      %541 = vmatprep.subr.bf16.mxu0 0
      %542 = vmatpush1.bf16.msra.mxu0 0
      %543 = vmatprep.subr.bf16.mxu0 0
      %544 = vmatpush1.bf16.msra.mxu0 0
      %545 = vmatprep.subr.bf16.mxu0 0
      %546 = vmatpush1.bf16.msra.mxu0 0
      %547 = vmatprep.subr.bf16.mxu0 0
      %548 = vmatpush1.bf16.msra.mxu0 0
      %549 = vmatprep.subr.bf16.mxu0 0
      %550 = vmatpush1.bf16.msra.mxu0 0
      %551 = vmatprep.mubr.bf16.mxu0 0
      %552 = vmatmul.mubr.bf16.gmra.mrb[0].mxu0 %v327
      %v553 = vpop.f32.mrb[0].mxu0
      %v554 = vadd.f32 %v246, %v553
      %v555 = vpop.f32.mrb[0].mxu0
      %v556 = vadd.f32 %v250, %v555
      %v557 = vpop.f32.mrb[0].mxu0
      %v558 = vadd.f32 %v246, %v557
      %v559 = vpop.f32.mrb[0].mxu0
      %v560 = vadd.f32 %v250, %v559
      %561 = vmatprep.mubr.bf16.mxu0 0
      %562 = vmatmul.mubr.bf16.gmra.mrb[0].mxu0 %v328
      %v563 = vpop.f32.mrb[0].mxu0
      %v564 = vadd.f32 %v246, %v563
      %v565 = vpop.f32.mrb[0].mxu0
      %v566 = vadd.f32 %v250, %v565
      %v567 = vpop.f32.mrb[0].mxu0
      %v568 = vadd.f32 %v246, %v567
      %v569 = vpop.f32.mrb[0].mxu0
      %v570 = vadd.f32 %v250, %v569
      %571 = vmatprep.mubr.bf16.mxu0 0
      %572 = vmatmul.mubr.bf16.gmra.mrb[0].mxu0 %v329
      %v573 = vpop.f32.mrb[0].mxu0
      %v574 = vadd.f32 %v246, %v573
      %v575 = vpop.f32.mrb[0].mxu0
      %v576 = vadd.f32 %v250, %v575
      %v577 = vpop.f32.mrb[0].mxu0
      %v578 = vadd.f32 %v246, %v577
      %v579 = vpop.f32.mrb[0].mxu0
      %v580 = vadd.f32 %v250, %v579
      %581 = vmatprep.mubr.bf16.mxu0 0
      %582 = vmatmul.mubr.bf16.gmra.mrb[0].mxu0 %v330
      %v583 = vpop.f32.mrb[0].mxu0
      %v584 = vadd.f32 %v246, %v583
      %v585 = vpop.f32.mrb[0].mxu0
      %v586 = vadd.f32 %v250, %v585
      %v587 = vpop.f32.mrb[0].mxu0
      %v588 = vadd.f32 %v246, %v587
      %v589 = vpop.f32.mrb[0].mxu0
      %v590 = vadd.f32 %v250, %v589
      %591 = vmatprep.mubr.bf16.mxu0 0
      %592 = vmatmul.mubr.bf16.gmra.mrb[0].mxu0 %v331
      %v593 = vpop.f32.mrb[0].mxu0
      %v594 = vadd.f32 %v246, %v593
      %v595 = vpop.f32.mrb[0].mxu0
      %v596 = vadd.f32 %v250, %v595
      %v597 = vpop.f32.mrb[0].mxu0
      %v598 = vadd.f32 %v246, %v597
      %v599 = vpop.f32.mrb[0].mxu0
      %v600 = vadd.f32 %v250, %v599
      %601 = vmatprep.mubr.bf16.mxu0 0
      %602 = vmatmul.mubr.bf16.gmra.mrb[0].mxu0 %v332
      %v603 = vpop.f32.mrb[0].mxu0
      %v604 = vadd.f32 %v246, %v603
      %v605 = vpop.f32.mrb[0].mxu0
      %v606 = vadd.f32 %v250, %v605
      %v607 = vpop.f32.mrb[0].mxu0
      %v608 = vadd.f32 %v246, %v607
      %v609 = vpop.f32.mrb[0].mxu0
      %v610 = vadd.f32 %v250, %v609
      %611 = vmatprep.mubr.bf16.mxu0 0
      %612 = vmatmul.mubr.bf16.gmra.mrb[0].mxu0 %v333
      %v613 = vpop.f32.mrb[0].mxu0
      %v614 = vadd.f32 %v246, %v613
      %v615 = vpop.f32.mrb[0].mxu0
      %v616 = vadd.f32 %v250, %v615
      %v617 = vpop.f32.mrb[0].mxu0
      %v618 = vadd.f32 %v246, %v617
      %v619 = vpop.f32.mrb[0].mxu0
      %v620 = vadd.f32 %v250, %v619
      %621 = vmatprep.mubr.bf16.mxu0 0
      %622 = vmatmul.mubr.bf16.gmra.mrb[0].mxu0 %v334
      %v623 = vpop.f32.mrb[0].mxu0
      %v624 = vadd.f32 %v246, %v623
      %v625 = vpop.f32.mrb[0].mxu0
      %v626 = vadd.f32 %v250, %v625
      %v627 = vpop.f32.mrb[0].mxu0
      %v628 = vadd.f32 %v246, %v627
      %v629 = vpop.f32.mrb[0].mxu0
      %v630 = vadd.f32 %v250, %v629
      %631 = vmatprep.mubr.bf16.mxu0 0
      %632 = vmatmul.mubr.bf16.gmra.mrb[0].mxu0 %v335
      %v633 = vpop.f32.mrb[0].mxu0
      %v634 = vadd.f32 %v246, %v633
      %v635 = vpop.f32.mrb[0].mxu0
      %v636 = vadd.f32 %v250, %v635
      %v637 = vpop.f32.mrb[0].mxu0
      %v638 = vadd.f32 %v246, %v637
      %v639 = vpop.f32.mrb[0].mxu0
      %v640 = vadd.f32 %v250, %v639
      %641 = vmatprep.mubr.bf16.mxu0 0
      %642 = vmatmul.mubr.bf16.gmra.mrb[0].mxu0 %v336
      %v643 = vpop.f32.mrb[0].mxu0
      %v644 = vadd.f32 %v246, %v643
      %v645 = vpop.f32.mrb[0].mxu0
      %v646 = vadd.f32 %v250, %v645
      %v647 = vpop.f32.mrb[0].mxu0
      %v648 = vadd.f32 %v246, %v647
      %v649 = vpop.f32.mrb[0].mxu0
      %v650 = vadd.f32 %v250, %v649
      %651 = vmatprep.mubr.bf16.mxu0 0
      %652 = vmatmul.mubr.bf16.gmra.mrb[0].mxu0 %v337
      %v653 = vpop.f32.mrb[0].mxu0
      %v654 = vadd.f32 %v246, %v653
      %v655 = vpop.f32.mrb[0].mxu0
      %v656 = vadd.f32 %v250, %v655
      %v657 = vpop.f32.mrb[0].mxu0
      %v658 = vadd.f32 %v246, %v657
      %v659 = vpop.f32.mrb[0].mxu0
      %v660 = vadd.f32 %v250, %v659
      %661 = vmatprep.mubr.bf16.mxu0 0
      %662 = vmatmul.mubr.bf16.gmra.mrb[0].mxu0 %v338
      %v663 = vpop.f32.mrb[0].mxu0
      %v664 = vadd.f32 %v246, %v663
      %v665 = vpop.f32.mrb[0].mxu0
      %v666 = vadd.f32 %v250, %v665
      %v667 = vpop.f32.mrb[0].mxu0
      %v668 = vadd.f32 %v246, %v667
      %v669 = vpop.f32.mrb[0].mxu0
      %v670 = vadd.f32 %v250, %v669
      %671 = vmatprep.mubr.bf16.mxu0 0
      %672 = vmatmul.mubr.bf16.gmra.mrb[0].mxu0 %v339
      %v673 = vpop.f32.mrb[0].mxu0
      %v674 = vadd.f32 %v246, %v673
      %v675 = vpop.f32.mrb[0].mxu0
      %v676 = vadd.f32 %v250, %v675
      %v677 = vpop.f32.mrb[0].mxu0
      %v678 = vadd.f32 %v246, %v677
      %v679 = vpop.f32.mrb[0].mxu0
      %v680 = vadd.f32 %v250, %v679
      %681 = vmatprep.mubr.bf16.mxu0 0
      %682 = vmatmul.mubr.bf16.gmra.mrb[0].mxu0 %v340
      %v683 = vpop.f32.mrb[0].mxu0
      %v684 = vadd.f32 %v246, %v683
      %v685 = vpop.f32.mrb[0].mxu0
      %v686 = vadd.f32 %v250, %v685
      %v687 = vpop.f32.mrb[0].mxu0
      %v688 = vadd.f32 %v246, %v687
      %v689 = vpop.f32.mrb[0].mxu0
      %v690 = vadd.f32 %v250, %v689
      %691 = vmatprep.mubr.bf16.mxu0 0
      %692 = vmatmul.mubr.bf16.gmra.mrb[0].mxu0 %v341
      %v693 = vpop.f32.mrb[0].mxu0
      %v694 = vadd.f32 %v246, %v693
      %v695 = vpop.f32.mrb[0].mxu0
      %v696 = vadd.f32 %v250, %v695
      %v697 = vpop.f32.mrb[0].mxu0
      %v698 = vadd.f32 %v246, %v697
      %v699 = vpop.f32.mrb[0].mxu0
      %v700 = vadd.f32 %v250, %v699
      %701 = vmatprep.mubr.bf16.mxu0 0
      %702 = vmatmul.mubr.bf16.gmra.mrb[0].mxu0 %v342
      %v703 = vpop.f32.mrb[0].mxu0
      %v704 = vadd.f32 %v246, %v703
      %v705 = vpop.f32.mrb[0].mxu0
      %v706 = vadd.f32 %v250, %v705
      %v707 = vpop.f32.mrb[0].mxu0
      %v708 = vadd.f32 %v246, %v707
      %v709 = vpop.f32.mrb[0].mxu0
      %v710 = vadd.f32 %v250, %v709
      %711 = vdwg.mxu0
      %712 = vmatprep.subr.bf16.mxu0 %v458
      %713 = vmatpush1.bf16.msra.mxu0 %v457
      %714 = vmatprep.subr.bf16.mxu0 %v462
      %715 = vmatpush1.bf16.msra.mxu0 %v461
      %716 = vmatprep.subr.bf16.mxu0 %v466
      %717 = vmatpush1.bf16.msra.mxu0 %v465
      %718 = vmatprep.subr.bf16.mxu0 %v470
      %719 = vmatpush1.bf16.msra.mxu0 %v469
      %720 = vmatprep.subr.bf16.mxu0 %v474
      %721 = vmatpush1.bf16.msra.mxu0 %v473
      %722 = vmatprep.subr.bf16.mxu0 %v478
      %723 = vmatpush1.bf16.msra.mxu0 %v477
      %724 = vmatprep.subr.bf16.mxu0 %v482
      %725 = vmatpush1.bf16.msra.mxu0 %v481
      %726 = vmatprep.subr.bf16.mxu0 %v486
      %727 = vmatpush1.bf16.msra.mxu0 %v485
      %728 = vmatprep.subr.bf16.mxu0 0
      %729 = vmatpush1.bf16.msra.mxu0 0
      %730 = vmatprep.subr.bf16.mxu0 0
      %731 = vmatpush1.bf16.msra.mxu0 0
      %732 = vmatprep.subr.bf16.mxu0 0
      %733 = vmatpush1.bf16.msra.mxu0 0
      %734 = vmatprep.subr.bf16.mxu0 0
      %735 = vmatpush1.bf16.msra.mxu0 0
      %736 = vmatprep.subr.bf16.mxu0 0
      %737 = vmatpush1.bf16.msra.mxu0 0
      %738 = vmatprep.subr.bf16.mxu0 0
      %739 = vmatpush1.bf16.msra.mxu0 0
      %740 = vmatprep.subr.bf16.mxu0 0
      %741 = vmatpush1.bf16.msra.mxu0 0
      %742 = vmatprep.subr.bf16.mxu0 0
      %743 = vmatpush1.bf16.msra.mxu0 0
      %744 = vmatprep.mubr.bf16.mxu0 0
      %745 = vmatmul.mubr.bf16.gmra.mrb[0].mxu0 %v327
      %v746 = vpop.f32.mrb[0].mxu0
      %v747 = vadd.f32 %v254, %v746
      %v748 = vpop.f32.mrb[0].mxu0
      %v749 = vadd.f32 %v258, %v748
      %v750 = vpop.f32.mrb[0].mxu0
      %v751 = vadd.f32 %v254, %v750
      %v752 = vpop.f32.mrb[0].mxu0
      %v753 = vadd.f32 %v258, %v752
      %754 = vmatprep.mubr.bf16.mxu0 0
      %755 = vmatmul.mubr.bf16.gmra.mrb[0].mxu0 %v328
      %v756 = vpop.f32.mrb[0].mxu0
      %v757 = vadd.f32 %v254, %v756
      %v758 = vpop.f32.mrb[0].mxu0
      %v759 = vadd.f32 %v258, %v758
      %v760 = vpop.f32.mrb[0].mxu0
      %v761 = vadd.f32 %v254, %v760
      %v762 = vpop.f32.mrb[0].mxu0
      %v763 = vadd.f32 %v258, %v762
      %764 = vmatprep.mubr.bf16.mxu0 0
      %765 = vmatmul.mubr.bf16.gmra.mrb[0].mxu0 %v329
      %v766 = vpop.f32.mrb[0].mxu0
      %v767 = vadd.f32 %v254, %v766
      %v768 = vpop.f32.mrb[0].mxu0
      %v769 = vadd.f32 %v258, %v768
      %v770 = vpop.f32.mrb[0].mxu0
      %v771 = vadd.f32 %v254, %v770
      %v772 = vpop.f32.mrb[0].mxu0
      %v773 = vadd.f32 %v258, %v772
      %774 = vmatprep.mubr.bf16.mxu0 0
      %775 = vmatmul.mubr.bf16.gmra.mrb[0].mxu0 %v330
      %v776 = vpop.f32.mrb[0].mxu0
      %v777 = vadd.f32 %v254, %v776
      %v778 = vpop.f32.mrb[0].mxu0
      %v779 = vadd.f32 %v258, %v778
      %v780 = vpop.f32.mrb[0].mxu0
      %v781 = vadd.f32 %v254, %v780
      %v782 = vpop.f32.mrb[0].mxu0
      %v783 = vadd.f32 %v258, %v782
      %784 = vmatprep.mubr.bf16.mxu0 0
      %785 = vmatmul.mubr.bf16.gmra.mrb[0].mxu0 %v331
      %v786 = vpop.f32.mrb[0].mxu0
      %v787 = vadd.f32 %v254, %v786
      %v788 = vpop.f32.mrb[0].mxu0
      %v789 = vadd.f32 %v258, %v788
      %v790 = vpop.f32.mrb[0].mxu0
      %v791 = vadd.f32 %v254, %v790
      %v792 = vpop.f32.mrb[0].mxu0
      %v793 = vadd.f32 %v258, %v792
      %794 = vmatprep.mubr.bf16.mxu0 0
      %795 = vmatmul.mubr.bf16.gmra.mrb[0].mxu0 %v332
      %v796 = vpop.f32.mrb[0].mxu0
      %v797 = vadd.f32 %v254, %v796
      %v798 = vpop.f32.mrb[0].mxu0
      %v799 = vadd.f32 %v258, %v798
      %v800 = vpop.f32.mrb[0].mxu0
      %v801 = vadd.f32 %v254, %v800
      %v802 = vpop.f32.mrb[0].mxu0
      %v803 = vadd.f32 %v258, %v802
      %804 = vmatprep.mubr.bf16.mxu0 0
      %805 = vmatmul.mubr.bf16.gmra.mrb[0].mxu0 %v333
      %v806 = vpop.f32.mrb[0].mxu0
      %v807 = vadd.f32 %v254, %v806
      %v808 = vpop.f32.mrb[0].mxu0
      %v809 = vadd.f32 %v258, %v808
      %v810 = vpop.f32.mrb[0].mxu0
      %v811 = vadd.f32 %v254, %v810
      %v812 = vpop.f32.mrb[0].mxu0
      %v813 = vadd.f32 %v258, %v812
      %814 = vmatprep.mubr.bf16.mxu0 0
      %815 = vmatmul.mubr.bf16.gmra.mrb[0].mxu0 %v334
      %v816 = vpop.f32.mrb[0].mxu0
      %v817 = vadd.f32 %v254, %v816
      %v818 = vpop.f32.mrb[0].mxu0
      %v819 = vadd.f32 %v258, %v818
      %v820 = vpop.f32.mrb[0].mxu0
      %v821 = vadd.f32 %v254, %v820
      %v822 = vpop.f32.mrb[0].mxu0
      %v823 = vadd.f32 %v258, %v822
      %824 = vmatprep.mubr.bf16.mxu0 0
      %825 = vmatmul.mubr.bf16.gmra.mrb[0].mxu0 %v335
      %v826 = vpop.f32.mrb[0].mxu0
      %v827 = vadd.f32 %v254, %v826
      %v828 = vpop.f32.mrb[0].mxu0
      %v829 = vadd.f32 %v258, %v828
      %v830 = vpop.f32.mrb[0].mxu0
      %v831 = vadd.f32 %v254, %v830
      %v832 = vpop.f32.mrb[0].mxu0
      %v833 = vadd.f32 %v258, %v832
      %834 = vmatprep.mubr.bf16.mxu0 0
      %835 = vmatmul.mubr.bf16.gmra.mrb[0].mxu0 %v336
      %v836 = vpop.f32.mrb[0].mxu0
      %v837 = vadd.f32 %v254, %v836
      %v838 = vpop.f32.mrb[0].mxu0
      %v839 = vadd.f32 %v258, %v838
      %v840 = vpop.f32.mrb[0].mxu0
      %v841 = vadd.f32 %v254, %v840
      %v842 = vpop.f32.mrb[0].mxu0
      %v843 = vadd.f32 %v258, %v842
      %844 = vmatprep.mubr.bf16.mxu0 0
      %845 = vmatmul.mubr.bf16.gmra.mrb[0].mxu0 %v337
      %v846 = vpop.f32.mrb[0].mxu0
      %v847 = vadd.f32 %v254, %v846
      %v848 = vpop.f32.mrb[0].mxu0
      %v849 = vadd.f32 %v258, %v848
      %v850 = vpop.f32.mrb[0].mxu0
      %v851 = vadd.f32 %v254, %v850
      %v852 = vpop.f32.mrb[0].mxu0
      %v853 = vadd.f32 %v258, %v852
      %854 = vmatprep.mubr.bf16.mxu0 0
      %855 = vmatmul.mubr.bf16.gmra.mrb[0].mxu0 %v338
      %v856 = vpop.f32.mrb[0].mxu0
      %v857 = vadd.f32 %v254, %v856
      %v858 = vpop.f32.mrb[0].mxu0
      %v859 = vadd.f32 %v258, %v858
      %v860 = vpop.f32.mrb[0].mxu0
      %v861 = vadd.f32 %v254, %v860
      %v862 = vpop.f32.mrb[0].mxu0
      %v863 = vadd.f32 %v258, %v862
      %864 = vmatprep.mubr.bf16.mxu0 0
      %865 = vmatmul.mubr.bf16.gmra.mrb[0].mxu0 %v339
      %v866 = vpop.f32.mrb[0].mxu0
      %v867 = vadd.f32 %v254, %v866
      %v868 = vpop.f32.mrb[0].mxu0
      %v869 = vadd.f32 %v258, %v868
      %v870 = vpop.f32.mrb[0].mxu0
      %v871 = vadd.f32 %v254, %v870
      %v872 = vpop.f32.mrb[0].mxu0
      %v873 = vadd.f32 %v258, %v872
      %874 = vmatprep.mubr.bf16.mxu0 0
      %875 = vmatmul.mubr.bf16.gmra.mrb[0].mxu0 %v340
      %v876 = vpop.f32.mrb[0].mxu0
      %v877 = vadd.f32 %v254, %v876
      %v878 = vpop.f32.mrb[0].mxu0
      %v879 = vadd.f32 %v258, %v878
      %v880 = vpop.f32.mrb[0].mxu0
      %v881 = vadd.f32 %v254, %v880
      %v882 = vpop.f32.mrb[0].mxu0
      %v883 = vadd.f32 %v258, %v882
      %884 = vmatprep.mubr.bf16.mxu0 0
      %885 = vmatmul.mubr.bf16.gmra.mrb[0].mxu0 %v341
      %v886 = vpop.f32.mrb[0].mxu0
      %v887 = vadd.f32 %v254, %v886
      %v888 = vpop.f32.mrb[0].mxu0
      %v889 = vadd.f32 %v258, %v888
      %v890 = vpop.f32.mrb[0].mxu0
      %v891 = vadd.f32 %v254, %v890
      %v892 = vpop.f32.mrb[0].mxu0
      %v893 = vadd.f32 %v258, %v892
      %894 = vmatprep.mubr.bf16.mxu0 0
      %895 = vmatmul.mubr.bf16.gmra.mrb[0].mxu0 %v342
      %v896 = vpop.f32.mrb[0].mxu0
      %v897 = vadd.f32 %v254, %v896
      %v898 = vpop.f32.mrb[0].mxu0
      %v899 = vadd.f32 %v258, %v898
      %v900 = vpop.f32.mrb[0].mxu0
      %v901 = vadd.f32 %v254, %v900
      %v902 = vpop.f32.mrb[0].mxu0
      %v903 = vadd.f32 %v258, %v902
      %904 = vdwg.mxu0
      %v905 = vpack.c.bf16 %v558, %v554
      %v906 = vpack.c.bf16 %v560, %v556
      %v907 = vpack.c.bf16 %v751, %v747
      %v908 = vpack.c.bf16 %v753, %v749
      %v909 = vpack.c.bf16 %v568, %v564
      %v910 = vpack.c.bf16 %v570, %v566
      %v911 = vpack.c.bf16 %v761, %v757
      %v912 = vpack.c.bf16 %v763, %v759
      %v913 = vpack.c.bf16 %v578, %v574
      %v914 = vpack.c.bf16 %v580, %v576
      %v915 = vpack.c.bf16 %v771, %v767
      %v916 = vpack.c.bf16 %v773, %v769
      %v917 = vpack.c.bf16 %v588, %v584
      %v918 = vpack.c.bf16 %v590, %v586
      %v919 = vpack.c.bf16 %v781, %v777
      %v920 = vpack.c.bf16 %v783, %v779
      %v921 = vpack.c.bf16 %v598, %v594
      %v922 = vpack.c.bf16 %v600, %v596
      %v923 = vpack.c.bf16 %v791, %v787
      %v924 = vpack.c.bf16 %v793, %v789
      %v925 = vpack.c.bf16 %v608, %v604
      %v926 = vpack.c.bf16 %v610, %v606
      %v927 = vpack.c.bf16 %v801, %v797
      %v928 = vpack.c.bf16 %v803, %v799
      %v929 = vpack.c.bf16 %v618, %v614
      %v930 = vpack.c.bf16 %v620, %v616
      %v931 = vpack.c.bf16 %v811, %v807
      %v932 = vpack.c.bf16 %v813, %v809
      %v933 = vpack.c.bf16 %v628, %v624
      %v934 = vpack.c.bf16 %v630, %v626
      %v935 = vpack.c.bf16 %v821, %v817
      %v936 = vpack.c.bf16 %v823, %v819
      %v937 = vpack.c.bf16 %v638, %v634
      %v938 = vpack.c.bf16 %v640, %v636
      %v939 = vpack.c.bf16 %v831, %v827
      %v940 = vpack.c.bf16 %v833, %v829
      %v941 = vpack.c.bf16 %v648, %v644
      %v942 = vpack.c.bf16 %v650, %v646
      %v943 = vpack.c.bf16 %v841, %v837
      %v944 = vpack.c.bf16 %v843, %v839
      %v945 = vpack.c.bf16 %v658, %v654
      %v946 = vpack.c.bf16 %v660, %v656
      %v947 = vpack.c.bf16 %v851, %v847
      %v948 = vpack.c.bf16 %v853, %v849
      %v949 = vpack.c.bf16 %v668, %v664
      %v950 = vpack.c.bf16 %v670, %v666
      %v951 = vpack.c.bf16 %v861, %v857
      %v952 = vpack.c.bf16 %v863, %v859
      %v953 = vpack.c.bf16 %v678, %v674
      %v954 = vpack.c.bf16 %v680, %v676
      %v955 = vpack.c.bf16 %v871, %v867
      %v956 = vpack.c.bf16 %v873, %v869
      %v957 = vpack.c.bf16 %v688, %v684
      %v958 = vpack.c.bf16 %v690, %v686
      %v959 = vpack.c.bf16 %v881, %v877
      %v960 = vpack.c.bf16 %v883, %v879
      %v961 = vpack.c.bf16 %v698, %v694
      %v962 = vpack.c.bf16 %v700, %v696
      %v963 = vpack.c.bf16 %v891, %v887
      %v964 = vpack.c.bf16 %v893, %v889
      %v965 = vpack.c.bf16 %v708, %v704
      %v966 = vpack.c.bf16 %v710, %v706
      %v967 = vpack.c.bf16 %v901, %v897
      %v968 = vpack.c.bf16 %v903, %v899
      %v1033 = vunpack.c.l.b16 %v905
      %v1034 = vunpack.c.l.b16 %v906
      %v1035 = vunpack.c.l.b16 %v907
      %v1036 = vunpack.c.l.b16 %v908
      %v1037 = vunpack.c.h.b16 %v905
      %v1038 = vunpack.c.h.b16 %v906
      %v1039 = vunpack.c.h.b16 %v907
      %v1040 = vunpack.c.h.b16 %v908
      %v1041 = vunpack.c.l.b16 %v909
      %v1042 = vunpack.c.l.b16 %v910
      %v1043 = vunpack.c.l.b16 %v911
      %v1044 = vunpack.c.l.b16 %v912
      %v1045 = vunpack.c.h.b16 %v909
      %v1046 = vunpack.c.h.b16 %v910
      %v1047 = vunpack.c.h.b16 %v911
      %v1048 = vunpack.c.h.b16 %v912
      %v1049 = vunpack.c.l.b16 %v913
      %v1050 = vunpack.c.l.b16 %v914
      %v1051 = vunpack.c.l.b16 %v915
      %v1052 = vunpack.c.l.b16 %v916
      %v1053 = vunpack.c.h.b16 %v913
      %v1054 = vunpack.c.h.b16 %v914
      %v1055 = vunpack.c.h.b16 %v915
      %v1056 = vunpack.c.h.b16 %v916
      %v1057 = vunpack.c.l.b16 %v917
      %v1058 = vunpack.c.l.b16 %v918
      %v1059 = vunpack.c.l.b16 %v919
      %v1060 = vunpack.c.l.b16 %v920
      %v1061 = vunpack.c.h.b16 %v917
      %v1062 = vunpack.c.h.b16 %v918
      %v1063 = vunpack.c.h.b16 %v919
      %v1064 = vunpack.c.h.b16 %v920
      %v1065 = vunpack.c.l.b16 %v921
      %v1066 = vunpack.c.l.b16 %v922
      %v1067 = vunpack.c.l.b16 %v923
      %v1068 = vunpack.c.l.b16 %v924
      %v1069 = vunpack.c.h.b16 %v921
      %v1070 = vunpack.c.h.b16 %v922
      %v1071 = vunpack.c.h.b16 %v923
      %v1072 = vunpack.c.h.b16 %v924
      %v1073 = vunpack.c.l.b16 %v925
      %v1074 = vunpack.c.l.b16 %v926
      %v1075 = vunpack.c.l.b16 %v927
      %v1076 = vunpack.c.l.b16 %v928
      %v1077 = vunpack.c.h.b16 %v925
      %v1078 = vunpack.c.h.b16 %v926
      %v1079 = vunpack.c.h.b16 %v927
      %v1080 = vunpack.c.h.b16 %v928
      %v1081 = vunpack.c.l.b16 %v929
      %v1082 = vunpack.c.l.b16 %v930
      %v1083 = vunpack.c.l.b16 %v931
      %v1084 = vunpack.c.l.b16 %v932
      %v1085 = vunpack.c.h.b16 %v929
      %v1086 = vunpack.c.h.b16 %v930
      %v1087 = vunpack.c.h.b16 %v931
      %v1088 = vunpack.c.h.b16 %v932
      %v1089 = vunpack.c.l.b16 %v933
      %v1090 = vunpack.c.l.b16 %v934
      %v1091 = vunpack.c.l.b16 %v935
      %v1092 = vunpack.c.l.b16 %v936
      %v1093 = vunpack.c.h.b16 %v933
      %v1094 = vunpack.c.h.b16 %v934
      %v1095 = vunpack.c.h.b16 %v935
      %v1096 = vunpack.c.h.b16 %v936
      %v1097 = vunpack.c.l.b16 %v937
      %v1098 = vunpack.c.l.b16 %v938
      %v1099 = vunpack.c.l.b16 %v939
      %v1100 = vunpack.c.l.b16 %v940
      %v1101 = vunpack.c.h.b16 %v937
      %v1102 = vunpack.c.h.b16 %v938
      %v1103 = vunpack.c.h.b16 %v939
      %v1104 = vunpack.c.h.b16 %v940
      %v1105 = vunpack.c.l.b16 %v941
      %v1106 = vunpack.c.l.b16 %v942
      %v1107 = vunpack.c.l.b16 %v943
      %v1108 = vunpack.c.l.b16 %v944
      %v1109 = vunpack.c.h.b16 %v941
      %v1110 = vunpack.c.h.b16 %v942
      %v1111 = vunpack.c.h.b16 %v943
      %v1112 = vunpack.c.h.b16 %v944
      %v1113 = vunpack.c.l.b16 %v945
      %v1114 = vunpack.c.l.b16 %v946
      %v1115 = vunpack.c.l.b16 %v947
      %v1116 = vunpack.c.l.b16 %v948
      %v1117 = vunpack.c.h.b16 %v945
      %v1118 = vunpack.c.h.b16 %v946
      %v1119 = vunpack.c.h.b16 %v947
      %v1120 = vunpack.c.h.b16 %v948
      %v1121 = vunpack.c.l.b16 %v949
      %v1122 = vunpack.c.l.b16 %v950
      %v1123 = vunpack.c.l.b16 %v951
      %v1124 = vunpack.c.l.b16 %v952
      %v1125 = vunpack.c.h.b16 %v949
      %v1126 = vunpack.c.h.b16 %v950
      %v1127 = vunpack.c.h.b16 %v951
      %v1128 = vunpack.c.h.b16 %v952
      %v1129 = vunpack.c.l.b16 %v953
      %v1130 = vunpack.c.l.b16 %v954
      %v1131 = vunpack.c.l.b16 %v955
      %v1132 = vunpack.c.l.b16 %v956
      %v1133 = vunpack.c.h.b16 %v953
      %v1134 = vunpack.c.h.b16 %v954
      %v1135 = vunpack.c.h.b16 %v955
      %v1136 = vunpack.c.h.b16 %v956
      %v1137 = vunpack.c.l.b16 %v957
      %v1138 = vunpack.c.l.b16 %v958
      %v1139 = vunpack.c.l.b16 %v959
      %v1140 = vunpack.c.l.b16 %v960
      %v1141 = vunpack.c.h.b16 %v957
      %v1142 = vunpack.c.h.b16 %v958
      %v1143 = vunpack.c.h.b16 %v959
      %v1144 = vunpack.c.h.b16 %v960
      %v1145 = vunpack.c.l.b16 %v961
      %v1146 = vunpack.c.l.b16 %v962
      %v1147 = vunpack.c.l.b16 %v963
      %v1148 = vunpack.c.l.b16 %v964
      %v1149 = vunpack.c.h.b16 %v961
      %v1150 = vunpack.c.h.b16 %v962
      %v1151 = vunpack.c.h.b16 %v963
      %v1152 = vunpack.c.h.b16 %v964
      %v1153 = vunpack.c.l.b16 %v965
      %v1154 = vunpack.c.l.b16 %v966
      %v1155 = vunpack.c.l.b16 %v967
      %v1156 = vunpack.c.l.b16 %v968
      %v1157 = vunpack.c.h.b16 %v965
      %v1158 = vunpack.c.h.b16 %v966
      %v1159 = vunpack.c.h.b16 %v967
      %v1160 = vunpack.c.h.b16 %v968
      %v1161 = vpack.c.b16 %v1034, %v1033
      %v1162 = vpack.c.b16 %v1036, %v1035
      %v1163 = vpack.c.b16 %v1038, %v1037
      %v1164 = vpack.c.b16 %v1040, %v1039
      %v1165 = vpack.c.b16 %v1042, %v1041
      %v1166 = vpack.c.b16 %v1044, %v1043
      %v1167 = vpack.c.b16 %v1046, %v1045
      %v1168 = vpack.c.b16 %v1048, %v1047
      %v1169 = vpack.c.b16 %v1050, %v1049
      %v1170 = vpack.c.b16 %v1052, %v1051
      %v1171 = vpack.c.b16 %v1054, %v1053
      %v1172 = vpack.c.b16 %v1056, %v1055
      %v1173 = vpack.c.b16 %v1058, %v1057
      %v1174 = vpack.c.b16 %v1060, %v1059
      %v1175 = vpack.c.b16 %v1062, %v1061
      %v1176 = vpack.c.b16 %v1064, %v1063
      %v1177 = vpack.c.b16 %v1066, %v1065
      %v1178 = vpack.c.b16 %v1068, %v1067
      %v1179 = vpack.c.b16 %v1070, %v1069
      %v1180 = vpack.c.b16 %v1072, %v1071
      %v1181 = vpack.c.b16 %v1074, %v1073
      %v1182 = vpack.c.b16 %v1076, %v1075
      %v1183 = vpack.c.b16 %v1078, %v1077
      %v1184 = vpack.c.b16 %v1080, %v1079
      %v1185 = vpack.c.b16 %v1082, %v1081
      %v1186 = vpack.c.b16 %v1084, %v1083
      %v1187 = vpack.c.b16 %v1086, %v1085
      %v1188 = vpack.c.b16 %v1088, %v1087
      %v1189 = vpack.c.b16 %v1090, %v1089
      %v1190 = vpack.c.b16 %v1092, %v1091
      %v1191 = vpack.c.b16 %v1094, %v1093
      %v1192 = vpack.c.b16 %v1096, %v1095
      %v1193 = vpack.c.b16 %v1098, %v1097
      %v1194 = vpack.c.b16 %v1100, %v1099
      %v1195 = vpack.c.b16 %v1102, %v1101
      %v1196 = vpack.c.b16 %v1104, %v1103
      %v1197 = vpack.c.b16 %v1106, %v1105
      %v1198 = vpack.c.b16 %v1108, %v1107
      %v1199 = vpack.c.b16 %v1110, %v1109
      %v1200 = vpack.c.b16 %v1112, %v1111
      %v1201 = vpack.c.b16 %v1114, %v1113
      %v1202 = vpack.c.b16 %v1116, %v1115
      %v1203 = vpack.c.b16 %v1118, %v1117
      %v1204 = vpack.c.b16 %v1120, %v1119
      %v1205 = vpack.c.b16 %v1122, %v1121
      %v1206 = vpack.c.b16 %v1124, %v1123
      %v1207 = vpack.c.b16 %v1126, %v1125
      %v1208 = vpack.c.b16 %v1128, %v1127
      %v1209 = vpack.c.b16 %v1130, %v1129
      %v1210 = vpack.c.b16 %v1132, %v1131
      %v1211 = vpack.c.b16 %v1134, %v1133
      %v1212 = vpack.c.b16 %v1136, %v1135
      %v1213 = vpack.c.b16 %v1138, %v1137
      %v1214 = vpack.c.b16 %v1140, %v1139
      %v1215 = vpack.c.b16 %v1142, %v1141
      %v1216 = vpack.c.b16 %v1144, %v1143
      %v1217 = vpack.c.b16 %v1146, %v1145
      %v1218 = vpack.c.b16 %v1148, %v1147
      %v1219 = vpack.c.b16 %v1150, %v1149
      %v1220 = vpack.c.b16 %v1152, %v1151
      %v1221 = vpack.c.b16 %v1154, %v1153
      %v1222 = vpack.c.b16 %v1156, %v1155
      %v1223 = vpack.c.b16 %v1158, %v1157
      %v1224 = vpack.c.b16 %v1160, %v1159
      %1289 = vst [vmem:[%s174] sm:$0xff] %v1161
      %1290 = vst [vmem:[%s174 + $0x8] sm:$0xff] %v1162
      %1291 = vst [vmem:[%s174 + $0x10] sm:$0xff] %v1163
      %1292 = vst [vmem:[%s174 + $0x18] sm:$0xff] %v1164
      %1293 = vst [vmem:[%s174 + $0x20] sm:$0xff] %v1165
      %1294 = vst [vmem:[%s174 + $0x28] sm:$0xff] %v1166
      %1295 = vst [vmem:[%s174 + $0x30] sm:$0xff] %v1167
      %1296 = vst [vmem:[%s174 + $0x38] sm:$0xff] %v1168
      %1297 = vst [vmem:[%s174 + $0x40] sm:$0xff] %v1169
      %1298 = vst [vmem:[%s174 + $0x48] sm:$0xff] %v1170
      %1299 = vst [vmem:[%s174 + $0x50] sm:$0xff] %v1171
      %1300 = vst [vmem:[%s174 + $0x58] sm:$0xff] %v1172
      %1301 = vst [vmem:[%s174 + $0x60] sm:$0xff] %v1173
      %1302 = vst [vmem:[%s174 + $0x68] sm:$0xff] %v1174
      %1303 = vst [vmem:[%s174 + $0x70] sm:$0xff] %v1175
      %1304 = vst [vmem:[%s174 + $0x78] sm:$0xff] %v1176
      %1305 = vst [vmem:[%s174 + $0x80] sm:$0xff] %v1177
      %1306 = vst [vmem:[%s174 + $0x88] sm:$0xff] %v1178
      %1307 = vst [vmem:[%s174 + $0x90] sm:$0xff] %v1179
      %1308 = vst [vmem:[%s174 + $0x98] sm:$0xff] %v1180
      %1309 = vst [vmem:[%s174 + $0xa0] sm:$0xff] %v1181
      %1310 = vst [vmem:[%s174 + $0xa8] sm:$0xff] %v1182
      %1311 = vst [vmem:[%s174 + $0xb0] sm:$0xff] %v1183
      %1312 = vst [vmem:[%s174 + $0xb8] sm:$0xff] %v1184
      %1313 = vst [vmem:[%s174 + $0xc0] sm:$0xff] %v1185
      %1314 = vst [vmem:[%s174 + $0xc8] sm:$0xff] %v1186
      %1315 = vst [vmem:[%s174 + $0xd0] sm:$0xff] %v1187
      %1316 = vst [vmem:[%s174 + $0xd8] sm:$0xff] %v1188
      %1317 = vst [vmem:[%s174 + $0xe0] sm:$0xff] %v1189
      %1318 = vst [vmem:[%s174 + $0xe8] sm:$0xff] %v1190
      %1319 = vst [vmem:[%s174 + $0xf0] sm:$0xff] %v1191
      %1320 = vst [vmem:[%s174 + $0xf8] sm:$0xff] %v1192
      %1321 = vst [vmem:[%s174 + $0x100] sm:$0xff] %v1193
      %1322 = vst [vmem:[%s174 + $0x108] sm:$0xff] %v1194
      %1323 = vst [vmem:[%s174 + $0x110] sm:$0xff] %v1195
      %1324 = vst [vmem:[%s174 + $0x118] sm:$0xff] %v1196
      %1325 = vst [vmem:[%s174 + $0x120] sm:$0xff] %v1197
      %1326 = vst [vmem:[%s174 + $0x128] sm:$0xff] %v1198
      %1327 = vst [vmem:[%s174 + $0x130] sm:$0xff] %v1199
      %1328 = vst [vmem:[%s174 + $0x138] sm:$0xff] %v1200
      %1329 = vst [vmem:[%s174 + $0x140] sm:$0xff] %v1201
      %1330 = vst [vmem:[%s174 + $0x148] sm:$0xff] %v1202
      %1331 = vst [vmem:[%s174 + $0x150] sm:$0xff] %v1203
      %1332 = vst [vmem:[%s174 + $0x158] sm:$0xff] %v1204
      %1333 = vst [vmem:[%s174 + $0x160] sm:$0xff] %v1205
      %1334 = vst [vmem:[%s174 + $0x168] sm:$0xff] %v1206
      %1335 = vst [vmem:[%s174 + $0x170] sm:$0xff] %v1207
      %1336 = vst [vmem:[%s174 + $0x178] sm:$0xff] %v1208
      %1337 = vst [vmem:[%s174 + $0x180] sm:$0xff] %v1209
      %1338 = vst [vmem:[%s174 + $0x188] sm:$0xff] %v1210
      %1339 = vst [vmem:[%s174 + $0x190] sm:$0xff] %v1211
      %1340 = vst [vmem:[%s174 + $0x198] sm:$0xff] %v1212
      %1341 = vst [vmem:[%s174 + $0x1a0] sm:$0xff] %v1213
      %1342 = vst [vmem:[%s174 + $0x1a8] sm:$0xff] %v1214
      %1343 = vst [vmem:[%s174 + $0x1b0] sm:$0xff] %v1215
      %1344 = vst [vmem:[%s174 + $0x1b8] sm:$0xff] %v1216
      %1345 = vst [vmem:[%s174 + $0x1c0] sm:$0xff] %v1217
      %1346 = vst [vmem:[%s174 + $0x1c8] sm:$0xff] %v1218
      %1347 = vst [vmem:[%s174 + $0x1d0] sm:$0xff] %v1219
      %1348 = vst [vmem:[%s174 + $0x1d8] sm:$0xff] %v1220
      %1349 = vst [vmem:[%s174 + $0x1e0] sm:$0xff] %v1221
      %1350 = vst [vmem:[%s174 + $0x1e8] sm:$0xff] %v1222
      %1351 = vst [vmem:[%s174 + $0x1f0] sm:$0xff] %v1223
      %1352 = vst [vmem:[%s174 + $0x1f8] sm:$0xff] %v1224
      %s1353 = smul.u32 32, %s14
      %p1354 = scmp.lt.s32.totalorder %s1353, 63
      %s1355 = scalar_select %p1354, %s1353, 63
      %s1356 = smul.addr %s1355, 4
      %s1357 = smul.addr %s1356, 4
      %s1358 = scalar_lea.vmem %s3, %s1357
      // Predicated region
      $region33: #{unet_decoder_block_forward.5} parent=31 // pred_check
        %p1359 = pneg %p100
      $region34: #{unet_decoder_block_forward.5} parent=31 // pred_check_branch
        %1361 = sbr.rel (%p1359) target = $region36
      $region35: #{unet_decoder_block_forward.5} parent=31 // pred_region
        %s1362 = smul.u32 32, %s14
      $region36: #{unet_decoder_block_forward.5} parent=31 // pred_fallthru
        _
    $region32: #{unet_decoder_block_forward.5} parent=5 // pred_fallthru
      _
    %p1363 = scmp.le.s32.totalorder 2, %s9
    // Predicated region
    $region37: #{unet_decoder_block_forward.5} parent=5 // pred_check
      %p1364 = pneg %p1363
    $region38: #{unet_decoder_block_forward.5} parent=5 // pred_check_branch
      %1366 = sbr.rel (%p1364) target = $region40
    $region39: #{unet_decoder_block_forward.5} parent=5 // pred_region
      %s1367 = ssub.s32 %s9, 2
      // Predicated region
      $region41: #{unet_decoder_block_forward.5} parent=39 // pred_check
        %p1368 = pneg %p106
      $region42: #{unet_decoder_block_forward.5} parent=39 // pred_check_branch
        %1370 = sbr.rel (%p1368) target = $region44
      $region43: #{unet_decoder_block_forward.5} parent=39 // pred_region
        %s1371 = smul.u32 32, %s15
        %p1372 = scmp.lt.s32.totalorder %s1371, 63
        %s1373 = scalar_select %p1372, %s1371, 63
        %s1374 = smul.addr %s1373, 4
        %s1375 = smul.addr %s1374, 4
        %s1376 = scalar_lea.vmem %s3, %s1375
      $region44: #{unet_decoder_block_forward.5} parent=39 // pred_fallthru
        _
    $region40: #{unet_decoder_block_forward.5} parent=5 // pred_fallthru
      _
  $region6: #{unet_decoder_block_forward.5} parent=0 // loop_footer
    %s13 = sadd.s32 1, %s9
  $region7: #{unet_decoder_block_forward.5} parent=0 // loop_footer_branch
    %8 = sbr.rel target = $region3
  $region8: #{unet_decoder_block_forward.5} parent=0 // loop_exit
    _

// kernel: unet_decoder_block_forward.7
$region0: #{unet_decoder_block_forward.7}
  #allocation0 [shape = 'u32[]', space=smem, size = 0x4, offset = 0x4, fixed_abs, tag = 'smem constant byte address 0x4 - core index']
  #allocation1 [shape = 'u32[144,128]{1,0:T(1,128)}', space=vmem, size = 0x12000, scoped, tag = 'internal scratch']
  %s0 = inlined_call_operand.vmem [shape: f32[2,32,32,128], index: 0, kind: input, shape index: {}]
  %s1 = inlined_call_operand.vmem [shape: f32[1,128], index: 1, kind: input, shape index: {}]
  %s2 = inlined_call_operand.vmem [shape: f32[1,128], index: 2, kind: input, shape index: {}]
  %s3 = inlined_call_operand.vmem [shape: bf16[2,34,34,128], index: 3, kind: output, shape index: {}]
  %s4 = sld [smem:[#allocation0]]
  $region45: #{unet_decoder_block_forward.7} parent=0
    _
  %s6 = ssub.s32 1, %s4
  %s7 = scalar_select 0, %s6, %s4
  loop: start=0, step=1, limit=70
  $region2: #{unet_decoder_block_forward.7} parent=0 // loop_pre_header
    _
  $region3: #{unet_decoder_block_forward.7} parent=0 // loop_header
    %s9 = sphi 0, %s13
    %p10 = scmp.ge.s32.totalorder %s9, 70
    %s16 = sphi 0, %s28
    %s17 = sphi 0, %s24
    %s18 = sphi 0, %s16
    %s19 = sphi 0, %s17
    %s20 = sphi 0, %s18
    %s21 = sphi 0, %s19
    %s43 = sphi 0, %s45
    %s46 = sphi 0, %s43
    %s47 = sphi 0, %s46
    %s63 = sphi 0, %s47
    %s67 = sphi 0, %s67
    %s69 = sphi 0, %s67
    %s70 = sphi 0, %s69
    %s84 = sphi 0, %s70
    %s88 = sphi 0, %s88
    %s90 = sphi 0, %s88
    %s91 = sphi 0, %s90
    %s105 = sphi 0, %s91
    %s113 = sphi 0, %s115
    %s116 = sphi 0, %s113
    %s117 = sphi 0, %s116
    %s133 = sphi 0, %s117
  $region4: #{unet_decoder_block_forward.7} parent=0 // loop_header_branch
    %12 = sbr.rel (%p10) target = $region8
  $region5: #{unet_decoder_block_forward.7} parent=0 // loop_body
    %s14 = ssub.s32 %s9, 1
    %s15 = ssub.s32 %s9, 2
    %s22 = sadd.s32 1, %s17
    %p23 = scmp.ge.s32.totalorder %s22, 34
    %s24 = scalar_select %p23, 0, %s22
    %s25 = sadd.s32 1, %s16
    %s26 = scalar_select %p23, %s25, %s16
    %p27 = scmp.ge.s32.totalorder %s26, 2
    %s28 = scalar_select %p27, 0, %s26
    %s29 = ssub.s32 %s17, 1
    %p30 = scmp.gt.s32.totalorder %s29, 0
    %s31 = scalar_select %p30, %s29, 0
    %p32 = scmp.lt.s32.totalorder %s31, 31
    %s33 = scalar_select %p32, %s31, 31
    %s34 = ssub.s32 %s24, 1
    %p35 = scmp.gt.s32.totalorder %s34, 0
    %s36 = scalar_select %p35, %s34, 0
    %p37 = scmp.lt.s32.totalorder %s36, 31
    %s38 = scalar_select %p37, %s36, 31
    %s39 = ssub.s32 %s16, %s28
    %s40 = ssub.s32 %s33, %s38
    %s41 = sor.u32 %s39, %s40
    %p42 = scmp.eq.s32.totalorder %s41, 0
    %s44 = sadd.s32 %s43, 1
    %s45 = scalar_select %p42, %s43, %s44
    %p48 = pneg %p42
    %p49 = scmp.eq.s32.totalorder %s9, 67
    %p50 = por %p48, %p49
    %p51 = scmp.ne.s32.totalorder %s43, %s46
    %p52 = scmp.eq.s32.totalorder %s9, 0
    %p53 = por %p51, %p52
    %p54 = scmp.ne.s32.totalorder %s43, %s46
    %p55 = scmp.eq.s32.totalorder %s14, 67
    %p56 = por %p54, %p55
    %p57 = scmp.ne.s32.totalorder %s46, %s47
    %p58 = scmp.eq.s32.totalorder %s14, 0
    %p59 = por %p57, %p58
    %p60 = scmp.ne.s32.totalorder %s46, %s47
    %p61 = scmp.eq.s32.totalorder %s15, 67
    %p62 = por %p60, %p61
    %p64 = scmp.ne.s32.totalorder %s47, %s63
    %p65 = scmp.eq.s32.totalorder %s15, 0
    %p66 = por %p64, %p65
    %s68 = sadd.s32 %s67, 1
    %p71 = scmp.eq.s32.totalorder %s9, 67
    %p72 = scmp.ne.s32.totalorder %s67, %s69
    %p73 = scmp.eq.s32.totalorder %s9, 0
    %p74 = por %p72, %p73
    %p75 = scmp.ne.s32.totalorder %s67, %s69
    %p76 = scmp.eq.s32.totalorder %s14, 67
    %p77 = por %p75, %p76
    %p78 = scmp.ne.s32.totalorder %s69, %s70
    %p79 = scmp.eq.s32.totalorder %s14, 0
    %p80 = por %p78, %p79
    %p81 = scmp.ne.s32.totalorder %s69, %s70
    %p82 = scmp.eq.s32.totalorder %s15, 67
    %p83 = por %p81, %p82
    %p85 = scmp.ne.s32.totalorder %s70, %s84
    %p86 = scmp.eq.s32.totalorder %s15, 0
    %p87 = por %p85, %p86
    %s89 = sadd.s32 %s88, 1
    %p92 = scmp.eq.s32.totalorder %s9, 67
    %p93 = scmp.ne.s32.totalorder %s88, %s90
    %p94 = scmp.eq.s32.totalorder %s9, 0
    %p95 = por %p93, %p94
    %p96 = scmp.ne.s32.totalorder %s88, %s90
    %p97 = scmp.eq.s32.totalorder %s14, 67
    %p98 = por %p96, %p97
    %p99 = scmp.ne.s32.totalorder %s90, %s91
    %p100 = scmp.eq.s32.totalorder %s14, 0
    %p101 = por %p99, %p100
    %p102 = scmp.ne.s32.totalorder %s90, %s91
    %p103 = scmp.eq.s32.totalorder %s15, 67
    %p104 = por %p102, %p103
    %p106 = scmp.ne.s32.totalorder %s91, %s105
    %p107 = scmp.eq.s32.totalorder %s15, 0
    %p108 = por %p106, %p107
    %s109 = ssub.s32 %s16, %s28
    %s110 = ssub.s32 %s17, %s24
    %s111 = sor.u32 %s109, %s110
    %p112 = scmp.eq.s32.totalorder %s111, 0
    %s114 = sadd.s32 %s113, 1
    %s115 = scalar_select %p112, %s113, %s114
    %p118 = pneg %p112
    %p119 = scmp.eq.s32.totalorder %s9, 67
    %p120 = por %p118, %p119
    %p121 = scmp.ne.s32.totalorder %s113, %s116
    %p122 = scmp.eq.s32.totalorder %s9, 0
    %p123 = por %p121, %p122
    %p124 = scmp.ne.s32.totalorder %s113, %s116
    %p125 = scmp.eq.s32.totalorder %s14, 67
    %p126 = por %p124, %p125
    %p127 = scmp.ne.s32.totalorder %s116, %s117
    %p128 = scmp.eq.s32.totalorder %s14, 0
    %p129 = por %p127, %p128
    %p130 = scmp.ne.s32.totalorder %s116, %s117
    %p131 = scmp.eq.s32.totalorder %s15, 67
    %p132 = por %p130, %p131
    %p134 = scmp.ne.s32.totalorder %s117, %s133
    %p135 = scmp.eq.s32.totalorder %s15, 0
    %p136 = por %p134, %p135
    %p137 = scmp.le.s32.totalorder 1, %s9
    %p138 = scmp.lt.s32.totalorder %s9, 69
    %p139 = pnand %p137, %p138
    %p140 = pneg %p139
    // Predicated region
    $region9: #{unet_decoder_block_forward.7} parent=5 // pred_check
      _
    $region10: #{unet_decoder_block_forward.7} parent=5 // pred_check_branch
      %142 = sbr.rel (%p139) target = $region12
    $region11: #{unet_decoder_block_forward.7} parent=5 // pred_region
      %s143 = ssub.s32 %s9, 1
      // Predicated region
      $region13: #{unet_decoder_block_forward.7} parent=11 // pred_check
        %p144 = pneg %p80
      $region14: #{unet_decoder_block_forward.7} parent=11 // pred_check_branch
        %146 = sbr.rel (%p144) target = $region16
      $region15: #{unet_decoder_block_forward.7} parent=11 // pred_region
        _
      $region16: #{unet_decoder_block_forward.7} parent=11 // pred_fallthru
        _
      // Predicated region
      $region17: #{unet_decoder_block_forward.7} parent=11 // pred_check
        %p147 = pneg %p101
      $region18: #{unet_decoder_block_forward.7} parent=11 // pred_check_branch
        %149 = sbr.rel (%p147) target = $region20
      $region19: #{unet_decoder_block_forward.7} parent=11 // pred_region
        _
      $region20: #{unet_decoder_block_forward.7} parent=11 // pred_fallthru
        _
    $region12: #{unet_decoder_block_forward.7} parent=5 // pred_fallthru
      _
    %p150 = scmp.lt.s32.totalorder %s9, 68
    // Predicated region
    $region21: #{unet_decoder_block_forward.7} parent=5 // pred_check
      %p151 = pneg %p150
    $region22: #{unet_decoder_block_forward.7} parent=5 // pred_check_branch
      %153 = sbr.rel (%p151) target = $region24
    $region23: #{unet_decoder_block_forward.7} parent=5 // pred_region
      // Predicated region
      $region25: #{unet_decoder_block_forward.7} parent=23 // pred_check
        %p154 = pneg %p53
      $region26: #{unet_decoder_block_forward.7} parent=23 // pred_check_branch
        %156 = sbr.rel (%p154) target = $region28
      $region27: #{unet_decoder_block_forward.7} parent=23 // pred_region
        %s157 = ssub.s32 %s17, 1
        %p158 = scmp.gt.s32.totalorder %s157, 0
        %s159 = scalar_select %p158, %s157, 0
        %p160 = scmp.lt.s32.totalorder %s159, 31
        %s161 = scalar_select %p160, %s159, 31
        %p162 = scmp.lt.s32.totalorder %s16, 1
        %s163 = scalar_select %p162, %s16, 1
        %p164 = scmp.lt.s32.totalorder %s161, 31
        %s165 = scalar_select %p164, %s161, 31
        %s166 = smul.addr %s165, 4
        %s167 = smul.addr %s163, 128
        %s168 = sadd.s32 %s166, %s167
        %s169 = smul.addr %s168, 8
        %s170 = scalar_lea.vmem %s0, %s169
        %s171 = ssub.s32 %s17, 1
        %p172 = scmp.gt.s32.totalorder %s171, 0
        %s173 = scalar_select %p172, %s171, 0
        %p174 = scmp.lt.s32.totalorder %s173, 31
        %s175 = scalar_select %p174, %s173, 31
      $region28: #{unet_decoder_block_forward.7} parent=23 // pred_fallthru
        _
    $region24: #{unet_decoder_block_forward.7} parent=5 // pred_fallthru
      _
    %p176 = scmp.le.s32.totalorder 1, %s9
    %p177 = scmp.lt.s32.totalorder %s9, 69
    %p178 = pnand %p176, %p177
    %p179 = pneg %p178
    // Predicated region
    $region29: #{unet_decoder_block_forward.7} parent=5 // pred_check
      _
    $region30: #{unet_decoder_block_forward.7} parent=5 // pred_check_branch
      %181 = sbr.rel (%p178) target = $region32
    $region31: #{unet_decoder_block_forward.7} parent=5 // pred_region
      %s182 = ssub.s32 %s9, 1
      %s183 = ssub.s32 %s19, 1
      %p184 = scmp.gt.s32.totalorder %s183, 0
      %s185 = scalar_select %p184, %s183, 0
      %p186 = scmp.lt.s32.totalorder %s185, 31
      %s187 = scalar_select %p186, %s185, 31
      %p188 = scmp.lt.s32.totalorder %s18, 1
      %s189 = scalar_select %p188, %s18, 1
      %p190 = scmp.lt.s32.totalorder %s187, 31
      %s191 = scalar_select %p190, %s187, 31
      %s192 = smul.addr %s191, 4
      %s193 = smul.addr %s189, 128
      %s194 = sadd.s32 %s192, %s193
      %s195 = smul.addr %s194, 8
      %s196 = scalar_lea.vmem %s0, %s195
      %p197 = pneg %p59
      %p198 = pneg %p56
      %p199 = pneg %p80
      %p200 = pneg %p77
      %p201 = pneg %p101
      %p202 = pneg %p98
      %p203 = pneg %p129
      %p204 = pneg %p126
      %p205 = scmp.lt.s32.totalorder %s18, 1
      %s206 = scalar_select %p205, %s18, 1
      %p207 = scmp.lt.s32.totalorder %s19, 33
      %s208 = scalar_select %p207, %s19, 33
      %s209 = smul.addr %s208, 5
      %s210 = smul.addr %s206, 170
      %s211 = sadd.s32 %s209, %s210
      %s212 = smul.addr %s211, 4
      %s213 = scalar_lea.vmem %s3, %s212
      %s214 = ssub.s32 %s19, 1
      %p215 = scmp.gt.s32.totalorder %s214, 0
      %s216 = scalar_select %p215, %s214, 0
      %p217 = scmp.lt.s32.totalorder %s216, 31
      %s218 = scalar_select %p217, %s216, 31
      %p219 = scmp.lt.s32.totalorder %s18, 1
      %s220 = scalar_select %p219, %s18, 1
      %p221 = scmp.lt.s32.totalorder %s218, 31
      %s222 = scalar_select %p221, %s218, 31
      %s223 = smul.addr %s222, 4
      %s224 = smul.addr %s220, 128
      %s225 = sadd.s32 %s223, %s224
      %s226 = smul.addr %s225, 8
      %s227 = scalar_lea.vmem %s0, %s226
      %s228 = ssub.s32 %s19, 1
      %p229 = scmp.gt.s32.totalorder %s228, 0
      %s230 = scalar_select %p229, %s228, 0
      %p231 = scmp.lt.s32.totalorder %s230, 31
      %s232 = scalar_select %p231, %s230, 31
      %p233 = scmp.lt.s32.totalorder %s18, 1
      %s234 = scalar_select %p233, %s18, 1
      %p235 = scmp.lt.s32.totalorder %s19, 33
      %s236 = scalar_select %p235, %s19, 33
      %s237 = smul.addr %s236, 5
      %s238 = smul.addr %s234, 170
      %s239 = sadd.s32 %s237, %s238
      %s240 = smul.addr %s239, 4
      %s241 = scalar_lea.vmem %s3, %s240
      %v242 = vld [vmem:[%s227] sm:$0xff]
      %v243 = vld [vmem:[%s227 + $0x8] sm:$0xff]
      %v244 = vld [vmem:[%s227 + $0x10] sm:$0xff]
      %v245 = vld [vmem:[%s227 + $0x18] sm:$0xff]
      %v246 = vld [vmem:[%s1] sm:$0x1]
      %v248 = vlaneseq
      %v249 = vshrl.u32 %v248, 7
      %v250 = vsub.s32 0, %v249
      %v251 = vrot.slane %v246, %v250
      %v253 = vmul.f32 %v242, %v251
      %v254 = vmul.f32 %v243, %v251
      %v255 = vmul.f32 %v244, %v251
      %v256 = vmul.f32 %v245, %v251
      %v257 = vld [vmem:[%s2] sm:$0x1]
      %v259 = vlaneseq
      %v260 = vshrl.u32 %v259, 7
      %v261 = vsub.s32 0, %v260
      %v262 = vrot.slane %v257, %v261
      %v264 = vadd.f32 %v253, %v262
      %v265 = vadd.f32 %v254, %v262
      %v266 = vadd.f32 %v255, %v262
      %v267 = vadd.f32 %v256, %v262
      %v268 = vmax.f32 %v264, 0.0
      %v269 = vmax.f32 %v265, 0.0
      %v270 = vmax.f32 %v266, 0.0
      %v271 = vmax.f32 %v267, 0.0
      %vm276 = vcmask 1040384
      %v277 = vrot.slane %v268, 7
      %v278 = vrot.slane %v269, 7
      %v279 = vsel %vm276, %v277, %v278
      %v280 = vrot.slane %v270, 7
      %v281 = vsel %vm276, %v278, %v280
      %v282 = vrot.slane %v271, 7
      %v283 = vsel %vm276, %v280, %v282
      %v289 = vsel %vm276, 0.0, %v277
      %v290 = vsel %vm276, %v282, 0.0
      %p291 = scmp.ge.s32.totalorder %s19, 1
      %p292 = scmp.le.s32.totalorder %s19, 32
      %p293 = pnand %p291, %p292
      %p294 = pneg %p293
      %s295 = scalar_select %p294, 1, 0
      %s296 = scvt.s32.f32 %s295
      %v297 = vstv %s296
      %v298 = vmul.f32 %v289, %v297
      %v299 = vmul.f32 %v279, %v297
      %v300 = vmul.f32 %v281, %v297
      %v301 = vmul.f32 %v283, %v297
      %v302 = vmul.f32 %v290, %v297
      %v303 = vpack.c.bf16 %v299, %v298
      %v304 = vpack.c.bf16 %v301, %v300
      %v305 = vpack.c.bf16 %v302, %v302
      %v309 = vunpack.c.l.b16 %v303
      %v310 = vunpack.c.h.b16 %v303
      %v311 = vunpack.c.l.b16 %v304
      %v312 = vunpack.c.h.b16 %v304
      %v313 = vunpack.c.l.b16 %v305
      %v314 = vpack.c.b16 %v309, %v309
      %v315 = vpack.c.b16 %v310, %v310
      %v316 = vpack.c.b16 %v311, %v311
      %v317 = vpack.c.b16 %v312, %v312
      %v318 = vpack.c.b16 %v313, %v313
      %324 = vst [vmem:[%s241] sm:$0xf] %v314
      %325 = vst [vmem:[%s241 + $0x4] sm:$0xf] %v315
      %326 = vst [vmem:[%s241 + $0x8] sm:$0xf] %v316
      %327 = vst [vmem:[%s241 + $0xc] sm:$0xf] %v317
      %328 = vst [vmem:[%s241 + $0x10] sm:$0x1] %v318
      %p329 = scmp.lt.s32.totalorder %s18, 1
      %s330 = scalar_select %p329, %s18, 1
      %p331 = scmp.lt.s32.totalorder %s19, 33
      %s332 = scalar_select %p331, %s19, 33
      %s333 = smul.addr %s332, 5
      %s334 = smul.addr %s330, 170
      %s335 = sadd.s32 %s333, %s334
      %s336 = smul.addr %s335, 4
      %s337 = scalar_lea.vmem %s3, %s336
      // Predicated region
      $region33: #{unet_decoder_block_forward.7} parent=31 // pred_check
        %p338 = pneg %p126
      $region34: #{unet_decoder_block_forward.7} parent=31 // pred_check_branch
        %340 = sbr.rel (%p338) target = $region36
      $region35: #{unet_decoder_block_forward.7} parent=31 // pred_region
        _
      $region36: #{unet_decoder_block_forward.7} parent=31 // pred_fallthru
        _
    $region32: #{unet_decoder_block_forward.7} parent=5 // pred_fallthru
      _
    %p341 = scmp.le.s32.totalorder 2, %s9
    // Predicated region
    $region37: #{unet_decoder_block_forward.7} parent=5 // pred_check
      %p342 = pneg %p341
    $region38: #{unet_decoder_block_forward.7} parent=5 // pred_check_branch
      %344 = sbr.rel (%p342) target = $region40
    $region39: #{unet_decoder_block_forward.7} parent=5 // pred_region
      %s345 = ssub.s32 %s9, 2
      // Predicated region
      $region41: #{unet_decoder_block_forward.7} parent=39 // pred_check
        %p346 = pneg %p132
      $region42: #{unet_decoder_block_forward.7} parent=39 // pred_check_branch
        %348 = sbr.rel (%p346) target = $region44
      $region43: #{unet_decoder_block_forward.7} parent=39 // pred_region
        %p349 = scmp.lt.s32.totalorder %s20, 1
        %s350 = scalar_select %p349, %s20, 1
        %p351 = scmp.lt.s32.totalorder %s21, 33
        %s352 = scalar_select %p351, %s21, 33
        %s353 = smul.addr %s352, 5
        %s354 = smul.addr %s350, 170
        %s355 = sadd.s32 %s353, %s354
        %s356 = smul.addr %s355, 4
        %s357 = scalar_lea.vmem %s3, %s356
      $region44: #{unet_decoder_block_forward.7} parent=39 // pred_fallthru
        _
    $region40: #{unet_decoder_block_forward.7} parent=5 // pred_fallthru
      _
  $region6: #{unet_decoder_block_forward.7} parent=0 // loop_footer
    %s13 = sadd.s32 1, %s9
  $region7: #{unet_decoder_block_forward.7} parent=0 // loop_footer_branch
    %8 = sbr.rel target = $region3
  $region8: #{unet_decoder_block_forward.7} parent=0 // loop_exit
    _

// kernel: unet_decoder_block_forward.6
$region0: #{unet_decoder_block_forward.6}
  #allocation0 [shape = 'u32[]', space=smem, size = 0x4, offset = 0x4, fixed_abs, tag = 'smem constant byte address 0x4 - core index']
  #allocation1 [shape = 'u32[144,128]{1,0:T(1,128)}', space=vmem, size = 0x12000, scoped, tag = 'internal scratch']
  %s0 = inlined_call_operand.vmem [shape: bf16[2,34,34,128], index: 0, kind: input, shape index: {}, may-alias: {0,1,2}]
  %s1 = inlined_call_operand.vmem [shape: bf16[2,34,34,128], index: 1, kind: input, shape index: {}, may-alias: {0,1,2}]
  %s2 = inlined_call_operand.vmem [shape: bf16[2,34,34,128], index: 2, kind: input, shape index: {}, may-alias: {0,1,2}]
  %s3 = inlined_call_operand.vmem [shape: bf16[2,34,34,128], index: 3, kind: input, shape index: {}, may-alias: {3,4,5}]
  %s4 = inlined_call_operand.vmem [shape: bf16[2,34,34,128], index: 4, kind: input, shape index: {}, may-alias: {3,4,5}]
  %s5 = inlined_call_operand.vmem [shape: bf16[2,34,34,128], index: 5, kind: input, shape index: {}, may-alias: {3,4,5}]
  %s6 = inlined_call_operand.vmem [shape: bf16[3,3,128,128], index: 6, kind: input, shape index: {}]
  %s7 = inlined_call_operand.vmem [shape: bf16[3,3,128,128], index: 7, kind: input, shape index: {}]
  %s8 = inlined_call_operand.vmem [shape: f32[1,128], index: 8, kind: input, shape index: {}]
  %s9 = inlined_call_operand.vmem [shape: f32[2,32,32,128], index: 9, kind: output, shape index: {0}]
  %s10 = inlined_call_operand.vmem [shape: f32[2,32,2,128], index: 10, kind: output, shape index: {1}]
  %11 = xla_tuple %s9, %s10
  %s12 = sld [smem:[#allocation0]]
  $region77: #{unet_decoder_block_forward.6} parent=0
    _
  %s14 = ssub.s32 1, %s12
  %s15 = scalar_select 0, %s14, %s12
  loop: start=0, step=1, limit=66
  $region2: #{unet_decoder_block_forward.6} parent=0 // loop_pre_header
    _
  $region3: #{unet_decoder_block_forward.6} parent=0 // loop_header
    %s17 = sphi 0, %s21
    %p18 = scmp.ge.s32.totalorder %s17, 66
    %s24 = sphi 0, %s36
    %s25 = sphi 0, %s32
    %s26 = sphi 0, %s24
    %s27 = sphi 0, %s25
    %s28 = sphi 0, %s26
    %s29 = sphi 0, %s27
    %s41 = sphi 0, %s43
    %s44 = sphi 0, %s41
    %s45 = sphi 0, %s44
    %s61 = sphi 0, %s45
    %s71 = sphi 0, %s73
    %s74 = sphi 0, %s71
    %s75 = sphi 0, %s74
    %s91 = sphi 0, %s75
    %s101 = sphi 0, %s103
    %s104 = sphi 0, %s101
    %s105 = sphi 0, %s104
    %s121 = sphi 0, %s105
    %s129 = sphi 0, %s131
    %s132 = sphi 0, %s129
    %s133 = sphi 0, %s132
    %s149 = sphi 0, %s133
    %s159 = sphi 0, %s161
    %s162 = sphi 0, %s159
    %s163 = sphi 0, %s162
    %s179 = sphi 0, %s163
    %s189 = sphi 0, %s191
    %s192 = sphi 0, %s189
    %s193 = sphi 0, %s192
    %s209 = sphi 0, %s193
    %s213 = sphi 0, %s213
    %s215 = sphi 0, %s213
    %s216 = sphi 0, %s215
    %s230 = sphi 0, %s216
    %s234 = sphi 0, %s234
    %s236 = sphi 0, %s234
    %s237 = sphi 0, %s236
    %s251 = sphi 0, %s237
    %s255 = sphi 0, %s255
    %s257 = sphi 0, %s255
    %s258 = sphi 0, %s257
    %s272 = sphi 0, %s258
    %s280 = sphi 0, %s282
    %s283 = sphi 0, %s280
    %s284 = sphi 0, %s283
    %s300 = sphi 0, %s284
    %s308 = sphi 0, %s310
    %s311 = sphi 0, %s308
    %s312 = sphi 0, %s311
    %s328 = sphi 0, %s312
  $region4: #{unet_decoder_block_forward.6} parent=0 // loop_header_branch
    %20 = sbr.rel (%p18) target = $region8
  $region5: #{unet_decoder_block_forward.6} parent=0 // loop_body
    %s22 = ssub.s32 %s17, 1
    %s23 = ssub.s32 %s17, 2
    %s30 = sadd.s32 1, %s25
    %p31 = scmp.ge.s32.totalorder %s30, 32
    %s32 = scalar_select %p31, 0, %s30
    %s33 = sadd.s32 1, %s24
    %s34 = scalar_select %p31, %s33, %s24
    %p35 = scmp.ge.s32.totalorder %s34, 2
    %s36 = scalar_select %p35, 0, %s34
    %s37 = ssub.s32 %s24, %s36
    %s38 = ssub.s32 %s25, %s32
    %s39 = sor.u32 %s37, %s38
    %p40 = scmp.eq.s32.totalorder %s39, 0
    %s42 = sadd.s32 %s41, 1
    %s43 = scalar_select %p40, %s41, %s42
    %p46 = pneg %p40
    %p47 = scmp.eq.s32.totalorder %s17, 63
    %p48 = por %p46, %p47
    %p49 = scmp.ne.s32.totalorder %s41, %s44
    %p50 = scmp.eq.s32.totalorder %s17, 0
    %p51 = por %p49, %p50
    %p52 = scmp.ne.s32.totalorder %s41, %s44
    %p53 = scmp.eq.s32.totalorder %s22, 63
    %p54 = por %p52, %p53
    %p55 = scmp.ne.s32.totalorder %s44, %s45
    %p56 = scmp.eq.s32.totalorder %s22, 0
    %p57 = por %p55, %p56
    %p58 = scmp.ne.s32.totalorder %s44, %s45
    %p59 = scmp.eq.s32.totalorder %s23, 63
    %p60 = por %p58, %p59
    %p62 = scmp.ne.s32.totalorder %s45, %s61
    %p63 = scmp.eq.s32.totalorder %s23, 0
    %p64 = por %p62, %p63
    %s65 = sadd.s32 %s25, 1
    %s66 = sadd.s32 %s32, 1
    %s67 = ssub.s32 %s24, %s36
    %s68 = ssub.s32 %s65, %s66
    %s69 = sor.u32 %s67, %s68
    %p70 = scmp.eq.s32.totalorder %s69, 0
    %s72 = sadd.s32 %s71, 1
    %s73 = scalar_select %p70, %s71, %s72
    %p76 = pneg %p70
    %p77 = scmp.eq.s32.totalorder %s17, 63
    %p78 = por %p76, %p77
    %p79 = scmp.ne.s32.totalorder %s71, %s74
    %p80 = scmp.eq.s32.totalorder %s17, 0
    %p81 = por %p79, %p80
    %p82 = scmp.ne.s32.totalorder %s71, %s74
    %p83 = scmp.eq.s32.totalorder %s22, 63
    %p84 = por %p82, %p83
    %p85 = scmp.ne.s32.totalorder %s74, %s75
    %p86 = scmp.eq.s32.totalorder %s22, 0
    %p87 = por %p85, %p86
    %p88 = scmp.ne.s32.totalorder %s74, %s75
    %p89 = scmp.eq.s32.totalorder %s23, 63
    %p90 = por %p88, %p89
    %p92 = scmp.ne.s32.totalorder %s75, %s91
    %p93 = scmp.eq.s32.totalorder %s23, 0
    %p94 = por %p92, %p93
    %s95 = sadd.s32 %s25, 2
    %s96 = sadd.s32 %s32, 2
    %s97 = ssub.s32 %s24, %s36
    %s98 = ssub.s32 %s95, %s96
    %s99 = sor.u32 %s97, %s98
    %p100 = scmp.eq.s32.totalorder %s99, 0
    %s102 = sadd.s32 %s101, 1
    %s103 = scalar_select %p100, %s101, %s102
    %p106 = pneg %p100
    %p107 = scmp.eq.s32.totalorder %s17, 63
    %p108 = por %p106, %p107
    %p109 = scmp.ne.s32.totalorder %s101, %s104
    %p110 = scmp.eq.s32.totalorder %s17, 0
    %p111 = por %p109, %p110
    %p112 = scmp.ne.s32.totalorder %s101, %s104
    %p113 = scmp.eq.s32.totalorder %s22, 63
    %p114 = por %p112, %p113
    %p115 = scmp.ne.s32.totalorder %s104, %s105
    %p116 = scmp.eq.s32.totalorder %s22, 0
    %p117 = por %p115, %p116
    %p118 = scmp.ne.s32.totalorder %s104, %s105
    %p119 = scmp.eq.s32.totalorder %s23, 63
    %p120 = por %p118, %p119
    %p122 = scmp.ne.s32.totalorder %s105, %s121
    %p123 = scmp.eq.s32.totalorder %s23, 0
    %p124 = por %p122, %p123
    %s125 = ssub.s32 %s24, %s36
    %s126 = ssub.s32 %s25, %s32
    %s127 = sor.u32 %s125, %s126
    %p128 = scmp.eq.s32.totalorder %s127, 0
    %s130 = sadd.s32 %s129, 1
    %s131 = scalar_select %p128, %s129, %s130
    %p134 = pneg %p128
    %p135 = scmp.eq.s32.totalorder %s17, 63
    %p136 = por %p134, %p135
    %p137 = scmp.ne.s32.totalorder %s129, %s132
    %p138 = scmp.eq.s32.totalorder %s17, 0
    %p139 = por %p137, %p138
    %p140 = scmp.ne.s32.totalorder %s129, %s132
    %p141 = scmp.eq.s32.totalorder %s22, 63
    %p142 = por %p140, %p141
    %p143 = scmp.ne.s32.totalorder %s132, %s133
    %p144 = scmp.eq.s32.totalorder %s22, 0
    %p145 = por %p143, %p144
    %p146 = scmp.ne.s32.totalorder %s132, %s133
    %p147 = scmp.eq.s32.totalorder %s23, 63
    %p148 = por %p146, %p147
    %p150 = scmp.ne.s32.totalorder %s133, %s149
    %p151 = scmp.eq.s32.totalorder %s23, 0
    %p152 = por %p150, %p151
    %s153 = sadd.s32 %s25, 1
    %s154 = sadd.s32 %s32, 1
    %s155 = ssub.s32 %s24, %s36
    %s156 = ssub.s32 %s153, %s154
    %s157 = sor.u32 %s155, %s156
    %p158 = scmp.eq.s32.totalorder %s157, 0
    %s160 = sadd.s32 %s159, 1
    %s161 = scalar_select %p158, %s159, %s160
    %p164 = pneg %p158
    %p165 = scmp.eq.s32.totalorder %s17, 63
    %p166 = por %p164, %p165
    %p167 = scmp.ne.s32.totalorder %s159, %s162
    %p168 = scmp.eq.s32.totalorder %s17, 0
    %p169 = por %p167, %p168
    %p170 = scmp.ne.s32.totalorder %s159, %s162
    %p171 = scmp.eq.s32.totalorder %s22, 63
    %p172 = por %p170, %p171
    %p173 = scmp.ne.s32.totalorder %s162, %s163
    %p174 = scmp.eq.s32.totalorder %s22, 0
    %p175 = por %p173, %p174
    %p176 = scmp.ne.s32.totalorder %s162, %s163
    %p177 = scmp.eq.s32.totalorder %s23, 63
    %p178 = por %p176, %p177
    %p180 = scmp.ne.s32.totalorder %s163, %s179
    %p181 = scmp.eq.s32.totalorder %s23, 0
    %p182 = por %p180, %p181
    %s183 = sadd.s32 %s25, 2
    %s184 = sadd.s32 %s32, 2
    %s185 = ssub.s32 %s24, %s36
    %s186 = ssub.s32 %s183, %s184
    %s187 = sor.u32 %s185, %s186
    %p188 = scmp.eq.s32.totalorder %s187, 0
    %s190 = sadd.s32 %s189, 1
    %s191 = scalar_select %p188, %s189, %s190
    %p194 = pneg %p188
    %p195 = scmp.eq.s32.totalorder %s17, 63
    %p196 = por %p194, %p195
    %p197 = scmp.ne.s32.totalorder %s189, %s192
    %p198 = scmp.eq.s32.totalorder %s17, 0
    %p199 = por %p197, %p198
    %p200 = scmp.ne.s32.totalorder %s189, %s192
    %p201 = scmp.eq.s32.totalorder %s22, 63
    %p202 = por %p200, %p201
    %p203 = scmp.ne.s32.totalorder %s192, %s193
    %p204 = scmp.eq.s32.totalorder %s22, 0
    %p205 = por %p203, %p204
    %p206 = scmp.ne.s32.totalorder %s192, %s193
    %p207 = scmp.eq.s32.totalorder %s23, 63
    %p208 = por %p206, %p207
    %p210 = scmp.ne.s32.totalorder %s193, %s209
    %p211 = scmp.eq.s32.totalorder %s23, 0
    %p212 = por %p210, %p211
    %s214 = sadd.s32 %s213, 1
    %p217 = scmp.eq.s32.totalorder %s17, 63
    %p218 = scmp.ne.s32.totalorder %s213, %s215
    %p219 = scmp.eq.s32.totalorder %s17, 0
    %p220 = por %p218, %p219
    %p221 = scmp.ne.s32.totalorder %s213, %s215
    %p222 = scmp.eq.s32.totalorder %s22, 63
    %p223 = por %p221, %p222
    %p224 = scmp.ne.s32.totalorder %s215, %s216
    %p225 = scmp.eq.s32.totalorder %s22, 0
    %p226 = por %p224, %p225
    %p227 = scmp.ne.s32.totalorder %s215, %s216
    %p228 = scmp.eq.s32.totalorder %s23, 63
    %p229 = por %p227, %p228
    %p231 = scmp.ne.s32.totalorder %s216, %s230
    %p232 = scmp.eq.s32.totalorder %s23, 0
    %p233 = por %p231, %p232
    %s235 = sadd.s32 %s234, 1
    %p238 = scmp.eq.s32.totalorder %s17, 63
    %p239 = scmp.ne.s32.totalorder %s234, %s236
    %p240 = scmp.eq.s32.totalorder %s17, 0
    %p241 = por %p239, %p240
    %p242 = scmp.ne.s32.totalorder %s234, %s236
    %p243 = scmp.eq.s32.totalorder %s22, 63
    %p244 = por %p242, %p243
    %p245 = scmp.ne.s32.totalorder %s236, %s237
    %p246 = scmp.eq.s32.totalorder %s22, 0
    %p247 = por %p245, %p246
    %p248 = scmp.ne.s32.totalorder %s236, %s237
    %p249 = scmp.eq.s32.totalorder %s23, 63
    %p250 = por %p248, %p249
    %p252 = scmp.ne.s32.totalorder %s237, %s251
    %p253 = scmp.eq.s32.totalorder %s23, 0
    %p254 = por %p252, %p253
    %s256 = sadd.s32 %s255, 1
    %p259 = scmp.eq.s32.totalorder %s17, 63
    %p260 = scmp.ne.s32.totalorder %s255, %s257
    %p261 = scmp.eq.s32.totalorder %s17, 0
    %p262 = por %p260, %p261
    %p263 = scmp.ne.s32.totalorder %s255, %s257
    %p264 = scmp.eq.s32.totalorder %s22, 63
    %p265 = por %p263, %p264
    %p266 = scmp.ne.s32.totalorder %s257, %s258
    %p267 = scmp.eq.s32.totalorder %s22, 0
    %p268 = por %p266, %p267
    %p269 = scmp.ne.s32.totalorder %s257, %s258
    %p270 = scmp.eq.s32.totalorder %s23, 63
    %p271 = por %p269, %p270
    %p273 = scmp.ne.s32.totalorder %s258, %s272
    %p274 = scmp.eq.s32.totalorder %s23, 0
    %p275 = por %p273, %p274
    %s276 = ssub.s32 %s24, %s36
    %s277 = ssub.s32 %s25, %s32
    %s278 = sor.u32 %s276, %s277
    %p279 = scmp.eq.s32.totalorder %s278, 0
    %s281 = sadd.s32 %s280, 1
    %s282 = scalar_select %p279, %s280, %s281
    %p285 = pneg %p279
    %p286 = scmp.eq.s32.totalorder %s17, 63
    %p287 = por %p285, %p286
    %p288 = scmp.ne.s32.totalorder %s280, %s283
    %p289 = scmp.eq.s32.totalorder %s17, 0
    %p290 = por %p288, %p289
    %p291 = scmp.ne.s32.totalorder %s280, %s283
    %p292 = scmp.eq.s32.totalorder %s22, 63
    %p293 = por %p291, %p292
    %p294 = scmp.ne.s32.totalorder %s283, %s284
    %p295 = scmp.eq.s32.totalorder %s22, 0
    %p296 = por %p294, %p295
    %p297 = scmp.ne.s32.totalorder %s283, %s284
    %p298 = scmp.eq.s32.totalorder %s23, 63
    %p299 = por %p297, %p298
    %p301 = scmp.ne.s32.totalorder %s284, %s300
    %p302 = scmp.eq.s32.totalorder %s23, 0
    %p303 = por %p301, %p302
    %s304 = ssub.s32 %s24, %s36
    %s305 = ssub.s32 %s25, %s32
    %s306 = sor.u32 %s304, %s305
    %p307 = scmp.eq.s32.totalorder %s306, 0
    %s309 = sadd.s32 %s308, 1
    %s310 = scalar_select %p307, %s308, %s309
    %p313 = pneg %p307
    %p314 = scmp.eq.s32.totalorder %s17, 63
    %p315 = por %p313, %p314
    %p316 = scmp.ne.s32.totalorder %s308, %s311
    %p317 = scmp.eq.s32.totalorder %s17, 0
    %p318 = por %p316, %p317
    %p319 = scmp.ne.s32.totalorder %s308, %s311
    %p320 = scmp.eq.s32.totalorder %s22, 63
    %p321 = por %p319, %p320
    %p322 = scmp.ne.s32.totalorder %s311, %s312
    %p323 = scmp.eq.s32.totalorder %s22, 0
    %p324 = por %p322, %p323
    %p325 = scmp.ne.s32.totalorder %s311, %s312
    %p326 = scmp.eq.s32.totalorder %s23, 63
    %p327 = por %p325, %p326
    %p329 = scmp.ne.s32.totalorder %s312, %s328
    %p330 = scmp.eq.s32.totalorder %s23, 0
    %p331 = por %p329, %p330
    %p332 = scmp.le.s32.totalorder 1, %s17
    %p333 = scmp.lt.s32.totalorder %s17, 65
    %p334 = pnand %p332, %p333
    %p335 = pneg %p334
    // Predicated region
    $region9: #{unet_decoder_block_forward.6} parent=5 // pred_check
      _
    $region10: #{unet_decoder_block_forward.6} parent=5 // pred_check_branch
      %337 = sbr.rel (%p334) target = $region12
    $region11: #{unet_decoder_block_forward.6} parent=5 // pred_region
      %s338 = ssub.s32 %s17, 1
      // Predicated region
      $region13: #{unet_decoder_block_forward.6} parent=11 // pred_check
        %p339 = pneg %p226
      $region14: #{unet_decoder_block_forward.6} parent=11 // pred_check_branch
        %341 = sbr.rel (%p339) target = $region16
      $region15: #{unet_decoder_block_forward.6} parent=11 // pred_region
        _
      $region16: #{unet_decoder_block_forward.6} parent=11 // pred_fallthru
        _
      // Predicated region
      $region17: #{unet_decoder_block_forward.6} parent=11 // pred_check
        %p342 = pneg %p247
      $region18: #{unet_decoder_block_forward.6} parent=11 // pred_check_branch
        %344 = sbr.rel (%p342) target = $region20
      $region19: #{unet_decoder_block_forward.6} parent=11 // pred_region
        _
      $region20: #{unet_decoder_block_forward.6} parent=11 // pred_fallthru
        _
      // Predicated region
      $region21: #{unet_decoder_block_forward.6} parent=11 // pred_check
        %p345 = pneg %p268
      $region22: #{unet_decoder_block_forward.6} parent=11 // pred_check_branch
        %347 = sbr.rel (%p345) target = $region24
      $region23: #{unet_decoder_block_forward.6} parent=11 // pred_region
        _
      $region24: #{unet_decoder_block_forward.6} parent=11 // pred_fallthru
        _
    $region12: #{unet_decoder_block_forward.6} parent=5 // pred_fallthru
      _
    %p348 = scmp.lt.s32.totalorder %s17, 64
    // Predicated region
    $region25: #{unet_decoder_block_forward.6} parent=5 // pred_check
      %p349 = pneg %p348
    $region26: #{unet_decoder_block_forward.6} parent=5 // pred_check_branch
      %351 = sbr.rel (%p349) target = $region28
    $region27: #{unet_decoder_block_forward.6} parent=5 // pred_region
      // Predicated region
      $region29: #{unet_decoder_block_forward.6} parent=27 // pred_check
        %p352 = pneg %p51
      $region30: #{unet_decoder_block_forward.6} parent=27 // pred_check_branch
        %354 = sbr.rel (%p352) target = $region32
      $region31: #{unet_decoder_block_forward.6} parent=27 // pred_region
        %p355 = scmp.lt.s32.totalorder %s24, 1
        %s356 = scalar_select %p355, %s24, 1
        %p357 = scmp.lt.s32.totalorder %s25, 33
        %s358 = scalar_select %p357, %s25, 33
        %s359 = smul.addr %s358, 5
        %s360 = smul.addr %s356, 170
        %s361 = sadd.s32 %s359, %s360
        %s362 = smul.addr %s361, 4
        %s363 = scalar_lea.vmem %s0, %s362
      $region32: #{unet_decoder_block_forward.6} parent=27 // pred_fallthru
        _
      // Predicated region
      $region33: #{unet_decoder_block_forward.6} parent=27 // pred_check
        %p364 = pneg %p81
      $region34: #{unet_decoder_block_forward.6} parent=27 // pred_check_branch
        %366 = sbr.rel (%p364) target = $region36
      $region35: #{unet_decoder_block_forward.6} parent=27 // pred_region
        %s367 = sadd.s32 %s25, 1
        %p368 = scmp.lt.s32.totalorder %s24, 1
        %s369 = scalar_select %p368, %s24, 1
        %p370 = scmp.lt.s32.totalorder %s367, 33
        %s371 = scalar_select %p370, %s367, 33
        %s372 = smul.addr %s371, 5
        %s373 = smul.addr %s369, 170
        %s374 = sadd.s32 %s372, %s373
        %s375 = smul.addr %s374, 4
        %s376 = scalar_lea.vmem %s1, %s375
        %s377 = sadd.s32 %s25, 1
      $region36: #{unet_decoder_block_forward.6} parent=27 // pred_fallthru
        _
      // Predicated region
      $region37: #{unet_decoder_block_forward.6} parent=27 // pred_check
        %p378 = pneg %p111
      $region38: #{unet_decoder_block_forward.6} parent=27 // pred_check_branch
        %380 = sbr.rel (%p378) target = $region40
      $region39: #{unet_decoder_block_forward.6} parent=27 // pred_region
        %s381 = sadd.s32 %s25, 2
        %p382 = scmp.lt.s32.totalorder %s24, 1
        %s383 = scalar_select %p382, %s24, 1
        %p384 = scmp.lt.s32.totalorder %s381, 33
        %s385 = scalar_select %p384, %s381, 33
        %s386 = smul.addr %s385, 5
        %s387 = smul.addr %s383, 170
        %s388 = sadd.s32 %s386, %s387
        %s389 = smul.addr %s388, 4
        %s390 = scalar_lea.vmem %s2, %s389
        %s391 = sadd.s32 %s25, 2
      $region40: #{unet_decoder_block_forward.6} parent=27 // pred_fallthru
        _
      // Predicated region
      $region41: #{unet_decoder_block_forward.6} parent=27 // pred_check
        %p392 = pneg %p139
      $region42: #{unet_decoder_block_forward.6} parent=27 // pred_check_branch
        %394 = sbr.rel (%p392) target = $region44
      $region43: #{unet_decoder_block_forward.6} parent=27 // pred_region
        %p395 = scmp.lt.s32.totalorder %s24, 1
        %s396 = scalar_select %p395, %s24, 1
        %p397 = scmp.lt.s32.totalorder %s25, 33
        %s398 = scalar_select %p397, %s25, 33
        %s399 = smul.addr %s398, 5
        %s400 = smul.addr %s396, 170
        %s401 = sadd.s32 %s399, %s400
        %s402 = smul.addr %s401, 4
        %s403 = scalar_lea.vmem %s3, %s402
      $region44: #{unet_decoder_block_forward.6} parent=27 // pred_fallthru
        _
      // Predicated region
      $region45: #{unet_decoder_block_forward.6} parent=27 // pred_check
        %p404 = pneg %p169
      $region46: #{unet_decoder_block_forward.6} parent=27 // pred_check_branch
        %406 = sbr.rel (%p404) target = $region48
      $region47: #{unet_decoder_block_forward.6} parent=27 // pred_region
        %s407 = sadd.s32 %s25, 1
        %p408 = scmp.lt.s32.totalorder %s24, 1
        %s409 = scalar_select %p408, %s24, 1
        %p410 = scmp.lt.s32.totalorder %s407, 33
        %s411 = scalar_select %p410, %s407, 33
        %s412 = smul.addr %s411, 5
        %s413 = smul.addr %s409, 170
        %s414 = sadd.s32 %s412, %s413
        %s415 = smul.addr %s414, 4
        %s416 = scalar_lea.vmem %s4, %s415
        %s417 = sadd.s32 %s25, 1
      $region48: #{unet_decoder_block_forward.6} parent=27 // pred_fallthru
        _
      // Predicated region
      $region49: #{unet_decoder_block_forward.6} parent=27 // pred_check
        %p418 = pneg %p199
      $region50: #{unet_decoder_block_forward.6} parent=27 // pred_check_branch
        %420 = sbr.rel (%p418) target = $region52
      $region51: #{unet_decoder_block_forward.6} parent=27 // pred_region
        %s421 = sadd.s32 %s25, 2
        %p422 = scmp.lt.s32.totalorder %s24, 1
        %s423 = scalar_select %p422, %s24, 1
        %p424 = scmp.lt.s32.totalorder %s421, 33
        %s425 = scalar_select %p424, %s421, 33
        %s426 = smul.addr %s425, 5
        %s427 = smul.addr %s423, 170
        %s428 = sadd.s32 %s426, %s427
        %s429 = smul.addr %s428, 4
        %s430 = scalar_lea.vmem %s5, %s429
        %s431 = sadd.s32 %s25, 2
      $region52: #{unet_decoder_block_forward.6} parent=27 // pred_fallthru
        _
    $region28: #{unet_decoder_block_forward.6} parent=5 // pred_fallthru
      _
    %p432 = scmp.le.s32.totalorder 1, %s17
    %p433 = scmp.lt.s32.totalorder %s17, 65
    %p434 = pnand %p432, %p433
    %p435 = pneg %p434
    // Predicated region
    $region53: #{unet_decoder_block_forward.6} parent=5 // pred_check
      _
    $region54: #{unet_decoder_block_forward.6} parent=5 // pred_check_branch
      %437 = sbr.rel (%p434) target = $region56
    $region55: #{unet_decoder_block_forward.6} parent=5 // pred_region
      %s438 = ssub.s32 %s17, 1
      %p439 = scmp.lt.s32.totalorder %s26, 1
      %s440 = scalar_select %p439, %s26, 1
      %p441 = scmp.lt.s32.totalorder %s27, 33
      %s442 = scalar_select %p441, %s27, 33
      %s443 = smul.addr %s442, 5
      %s444 = smul.addr %s440, 170
      %s445 = sadd.s32 %s443, %s444
      %s446 = smul.addr %s445, 4
      %s447 = scalar_lea.vmem %s0, %s446
      %p448 = pneg %p57
      %p449 = pneg %p54
      %s450 = sadd.s32 %s27, 1
      %p451 = scmp.lt.s32.totalorder %s26, 1
      %s452 = scalar_select %p451, %s26, 1
      %p453 = scmp.lt.s32.totalorder %s450, 33
      %s454 = scalar_select %p453, %s450, 33
      %s455 = smul.addr %s454, 5
      %s456 = smul.addr %s452, 170
      %s457 = sadd.s32 %s455, %s456
      %s458 = smul.addr %s457, 4
      %s459 = scalar_lea.vmem %s1, %s458
      %p460 = pneg %p87
      %p461 = pneg %p84
      %s462 = sadd.s32 %s27, 2
      %p463 = scmp.lt.s32.totalorder %s26, 1
      %s464 = scalar_select %p463, %s26, 1
      %p465 = scmp.lt.s32.totalorder %s462, 33
      %s466 = scalar_select %p465, %s462, 33
      %s467 = smul.addr %s466, 5
      %s468 = smul.addr %s464, 170
      %s469 = sadd.s32 %s467, %s468
      %s470 = smul.addr %s469, 4
      %s471 = scalar_lea.vmem %s2, %s470
      %p472 = pneg %p117
      %p473 = pneg %p114
      %p474 = scmp.lt.s32.totalorder %s26, 1
      %s475 = scalar_select %p474, %s26, 1
      %p476 = scmp.lt.s32.totalorder %s27, 33
      %s477 = scalar_select %p476, %s27, 33
      %s478 = smul.addr %s477, 5
      %s479 = smul.addr %s475, 170
      %s480 = sadd.s32 %s478, %s479
      %s481 = smul.addr %s480, 4
      %s482 = scalar_lea.vmem %s3, %s481
      %p483 = pneg %p145
      %p484 = pneg %p142
      %s485 = sadd.s32 %s27, 1
      %p486 = scmp.lt.s32.totalorder %s26, 1
      %s487 = scalar_select %p486, %s26, 1
      %p488 = scmp.lt.s32.totalorder %s485, 33
      %s489 = scalar_select %p488, %s485, 33
      %s490 = smul.addr %s489, 5
      %s491 = smul.addr %s487, 170
      %s492 = sadd.s32 %s490, %s491
      %s493 = smul.addr %s492, 4
      %s494 = scalar_lea.vmem %s4, %s493
      %p495 = pneg %p175
      %p496 = pneg %p172
      %s497 = sadd.s32 %s27, 2
      %p498 = scmp.lt.s32.totalorder %s26, 1
      %s499 = scalar_select %p498, %s26, 1
      %p500 = scmp.lt.s32.totalorder %s497, 33
      %s501 = scalar_select %p500, %s497, 33
      %s502 = smul.addr %s501, 5
      %s503 = smul.addr %s499, 170
      %s504 = sadd.s32 %s502, %s503
      %s505 = smul.addr %s504, 4
      %s506 = scalar_lea.vmem %s5, %s505
      %p507 = pneg %p205
      %p508 = pneg %p202
      %p509 = pneg %p226
      %p510 = pneg %p223
      %p511 = pneg %p247
      %p512 = pneg %p244
      %p513 = pneg %p268
      %p514 = pneg %p265
      %p515 = pneg %p296
      %p516 = pneg %p293
      %p517 = scmp.lt.s32.totalorder %s26, 1
      %s518 = scalar_select %p517, %s26, 1
      %p519 = scmp.lt.s32.totalorder %s27, 31
      %s520 = scalar_select %p519, %s27, 31
      %s521 = smul.addr %s520, 4
      %s522 = smul.addr %s518, 128
      %s523 = sadd.s32 %s521, %s522
      %s524 = smul.addr %s523, 8
      %s525 = scalar_lea.vmem %s9, %s524
      %p526 = pneg %p324
      %p527 = pneg %p321
      %p528 = scmp.lt.s32.totalorder %s26, 1
      %s529 = scalar_select %p528, %s26, 1
      %p530 = scmp.lt.s32.totalorder %s27, 31
      %s531 = scalar_select %p530, %s27, 31
      %s532 = smul.addr %s529, 32
      %s533 = sadd.s32 %s531, %s532
      %s534 = smul.addr %s533, 2
      %s535 = scalar_lea.vmem %s10, %s534
      %p536 = scmp.lt.s32.totalorder %s26, 1
      %s537 = scalar_select %p536, %s26, 1
      %p538 = scmp.lt.s32.totalorder %s27, 33
      %s539 = scalar_select %p538, %s27, 33
      %s540 = smul.addr %s539, 5
      %s541 = smul.addr %s537, 170
      %s542 = sadd.s32 %s540, %s541
      %s543 = smul.addr %s542, 4
      %s544 = scalar_lea.vmem %s0, %s543
      %s545 = sadd.s32 %s27, 1
      %p546 = scmp.lt.s32.totalorder %s26, 1
      %s547 = scalar_select %p546, %s26, 1
      %p548 = scmp.lt.s32.totalorder %s545, 33
      %s549 = scalar_select %p548, %s545, 33
      %s550 = smul.addr %s549, 5
      %s551 = smul.addr %s547, 170
      %s552 = sadd.s32 %s550, %s551
      %s553 = smul.addr %s552, 4
      %s554 = scalar_lea.vmem %s1, %s553
      %s555 = sadd.s32 %s27, 1
      %s556 = sadd.s32 %s27, 2
      %p557 = scmp.lt.s32.totalorder %s26, 1
      %s558 = scalar_select %p557, %s26, 1
      %p559 = scmp.lt.s32.totalorder %s556, 33
      %s560 = scalar_select %p559, %s556, 33
      %s561 = smul.addr %s560, 5
      %s562 = smul.addr %s558, 170
      %s563 = sadd.s32 %s561, %s562
      %s564 = smul.addr %s563, 4
      %s565 = scalar_lea.vmem %s2, %s564
      %s566 = sadd.s32 %s27, 2
      %p567 = scmp.lt.s32.totalorder %s26, 1
      %s568 = scalar_select %p567, %s26, 1
      %p569 = scmp.lt.s32.totalorder %s27, 33
      %s570 = scalar_select %p569, %s27, 33
      %s571 = smul.addr %s570, 5
      %s572 = smul.addr %s568, 170
      %s573 = sadd.s32 %s571, %s572
      %s574 = smul.addr %s573, 4
      %s575 = scalar_lea.vmem %s3, %s574
      %s576 = sadd.s32 %s27, 1
      %p577 = scmp.lt.s32.totalorder %s26, 1
      %s578 = scalar_select %p577, %s26, 1
      %p579 = scmp.lt.s32.totalorder %s576, 33
      %s580 = scalar_select %p579, %s576, 33
      %s581 = smul.addr %s580, 5
      %s582 = smul.addr %s578, 170
      %s583 = sadd.s32 %s581, %s582
      %s584 = smul.addr %s583, 4
      %s585 = scalar_lea.vmem %s4, %s584
      %s586 = sadd.s32 %s27, 1
      %s587 = sadd.s32 %s27, 2
      %p588 = scmp.lt.s32.totalorder %s26, 1
      %s589 = scalar_select %p588, %s26, 1
      %p590 = scmp.lt.s32.totalorder %s587, 33
      %s591 = scalar_select %p590, %s587, 33
      %s592 = smul.addr %s591, 5
      %s593 = smul.addr %s589, 170
      %s594 = sadd.s32 %s592, %s593
      %s595 = smul.addr %s594, 4
      %s596 = scalar_lea.vmem %s5, %s595
      %s597 = sadd.s32 %s27, 2
      %p598 = scmp.lt.s32.totalorder %s26, 1
      %s599 = scalar_select %p598, %s26, 1
      %p600 = scmp.lt.s32.totalorder %s27, 31
      %s601 = scalar_select %p600, %s27, 31
      %s602 = smul.addr %s601, 4
      %s603 = smul.addr %s599, 128
      %s604 = sadd.s32 %s602, %s603
      %s605 = smul.addr %s604, 8
      %s606 = scalar_lea.vmem %s9, %s605
      %p607 = scmp.lt.s32.totalorder %s26, 1
      %s608 = scalar_select %p607, %s26, 1
      %p609 = scmp.lt.s32.totalorder %s27, 31
      %s610 = scalar_select %p609, %s27, 31
      %s611 = smul.addr %s608, 32
      %s612 = sadd.s32 %s610, %s611
      %s613 = smul.addr %s612, 2
      %s614 = scalar_lea.vmem %s10, %s613
      %v616 = vld [vmem:[%s544] sm:$0xf]
      %v617 = vld [vmem:[%s544 + $0x4] sm:$0xf]
      %v618 = vld [vmem:[%s544 + $0x8] sm:$0xf]
      %v619 = vld [vmem:[%s544 + $0xc] sm:$0xf]
      %v620 = vld [vmem:[%s544 + $0x10] sm:$0x1]
      %v621 = vld [vmem:[%s6] sm:$0xf]
      %v622 = vld [vmem:[%s6 + $0x4] sm:$0xf]
      %v623 = vld [vmem:[%s6 + $0x8] sm:$0xf]
      %v624 = vld [vmem:[%s6 + $0xc] sm:$0xf]
      %v625 = vld [vmem:[%s6 + $0x10] sm:$0xf]
      %v626 = vld [vmem:[%s6 + $0x14] sm:$0xf]
      %v627 = vld [vmem:[%s6 + $0x18] sm:$0xf]
      %v628 = vld [vmem:[%s6 + $0x1c] sm:$0xf]
      %v629 = vld [vmem:[%s6 + $0x20] sm:$0xf]
      %v630 = vld [vmem:[%s6 + $0x24] sm:$0xf]
      %v631 = vld [vmem:[%s6 + $0x28] sm:$0xf]
      %v632 = vld [vmem:[%s6 + $0x2c] sm:$0xf]
      %v633 = vld [vmem:[%s6 + $0x30] sm:$0xf]
      %v634 = vld [vmem:[%s6 + $0x34] sm:$0xf]
      %v635 = vld [vmem:[%s6 + $0x38] sm:$0xf]
      %v636 = vld [vmem:[%s6 + $0x3c] sm:$0xf]
      %s637 = scalar_lea.vmem %s6, 64
      %v638 = vld [vmem:[%s637] sm:$0xf]
      %v639 = vld [vmem:[%s637 + $0x4] sm:$0xf]
      %v640 = vld [vmem:[%s637 + $0x8] sm:$0xf]
      %v641 = vld [vmem:[%s637 + $0xc] sm:$0xf]
      %v642 = vld [vmem:[%s637 + $0x10] sm:$0xf]
      %v643 = vld [vmem:[%s637 + $0x14] sm:$0xf]
      %v644 = vld [vmem:[%s637 + $0x18] sm:$0xf]
      %v645 = vld [vmem:[%s637 + $0x1c] sm:$0xf]
      %v646 = vld [vmem:[%s637 + $0x20] sm:$0xf]
      %v647 = vld [vmem:[%s637 + $0x24] sm:$0xf]
      %v648 = vld [vmem:[%s637 + $0x28] sm:$0xf]
      %v649 = vld [vmem:[%s637 + $0x2c] sm:$0xf]
      %v650 = vld [vmem:[%s637 + $0x30] sm:$0xf]
      %v651 = vld [vmem:[%s637 + $0x34] sm:$0xf]
      %v652 = vld [vmem:[%s637 + $0x38] sm:$0xf]
      %v653 = vld [vmem:[%s637 + $0x3c] sm:$0xf]
      %v659 = vunpack.c.l.b16 %v616
      %v660 = vunpack.c.l.b16 %v617
      %v661 = vunpack.c.l.b16 %v618
      %v662 = vunpack.c.l.b16 %v619
      %v663 = vunpack.c.l.b16 %v620
      %v664 = vpack.c.b16 %v660, %v659
      %v665 = vpack.c.b16 %v662, %v661
      %v666 = vpack.c.b16 %v663, %v663
      %vm667 = vsmask.f32 7424
      %v669 = vshrl.u32 %v664, 16
      %v671 = vshll.u32 %v664, 16
      %v673 = vrot.slane %v671, 1
      %v674 = vor.u32 %v669, %v673
      %v676 = vshll.u32 %v665, 16
      %v678 = vrot.slane %v676, 1
      %v679 = vsel %vm667, %v674, %v678
      %v680 = vshrl.u32 %v665, 16
      %v682 = vor.u32 %v680, %v678
      %v684 = vshll.u32 %v666, 16
      %v686 = vrot.slane %v684, 1
      %v687 = vsel %vm667, %v682, %v686
      %v706 = vunpack.c.l.b16 %v638
      %v707 = vunpack.c.l.b16 %v639
      %v708 = vunpack.c.l.b16 %v640
      %v709 = vunpack.c.l.b16 %v641
      %v710 = vunpack.c.l.b16 %v642
      %v711 = vunpack.c.l.b16 %v643
      %v712 = vunpack.c.l.b16 %v644
      %v713 = vunpack.c.l.b16 %v645
      %v714 = vunpack.c.l.b16 %v646
      %v715 = vunpack.c.l.b16 %v647
      %v716 = vunpack.c.l.b16 %v648
      %v717 = vunpack.c.l.b16 %v649
      %v718 = vunpack.c.l.b16 %v650
      %v719 = vunpack.c.l.b16 %v651
      %v720 = vunpack.c.l.b16 %v652
      %v721 = vunpack.c.l.b16 %v653
      %v722 = vpack.c.b16 %v707, %v706
      %v723 = vpack.c.b16 %v709, %v708
      %v724 = vpack.c.b16 %v711, %v710
      %v725 = vpack.c.b16 %v713, %v712
      %v726 = vpack.c.b16 %v715, %v714
      %v727 = vpack.c.b16 %v717, %v716
      %v728 = vpack.c.b16 %v719, %v718
      %v729 = vpack.c.b16 %v721, %v720
      %738 = vmatprep.subr.bf16.mxu0 0
      %739 = vmatpush1.bf16.msra.mxu0 %v722
      %740 = vmatprep.subr.bf16.mxu0 0
      %741 = vmatpush1.bf16.msra.mxu0 %v723
      %742 = vmatprep.subr.bf16.mxu0 0
      %743 = vmatpush1.bf16.msra.mxu0 %v724
      %744 = vmatprep.subr.bf16.mxu0 0
      %745 = vmatpush1.bf16.msra.mxu0 %v725
      %746 = vmatprep.subr.bf16.mxu0 0
      %747 = vmatpush1.bf16.msra.mxu0 %v726
      %748 = vmatprep.subr.bf16.mxu0 0
      %749 = vmatpush1.bf16.msra.mxu0 %v727
      %750 = vmatprep.subr.bf16.mxu0 0
      %751 = vmatpush1.bf16.msra.mxu0 %v728
      %752 = vmatprep.subr.bf16.mxu0 0
      %753 = vmatpush1.bf16.msra.mxu0 %v729
      %754 = vmatprep.subr.bf16.mxu0 0
      %755 = vmatpush1.bf16.msra.mxu0 0
      %756 = vmatprep.subr.bf16.mxu0 0
      %757 = vmatpush1.bf16.msra.mxu0 0
      %758 = vmatprep.subr.bf16.mxu0 0
      %759 = vmatpush1.bf16.msra.mxu0 0
      %760 = vmatprep.subr.bf16.mxu0 0
      %761 = vmatpush1.bf16.msra.mxu0 0
      %762 = vmatprep.subr.bf16.mxu0 0
      %763 = vmatpush1.bf16.msra.mxu0 0
      %764 = vmatprep.subr.bf16.mxu0 0
      %765 = vmatpush1.bf16.msra.mxu0 0
      %766 = vmatprep.subr.bf16.mxu0 0
      %767 = vmatpush1.bf16.msra.mxu0 0
      %768 = vmatprep.subr.bf16.mxu0 0
      %769 = vmatpush1.bf16.msra.mxu0 0
      %770 = vmatprep.mubr.bf16.mxu0 0
      %771 = vmatmul.mubr.bf16.gmra.mrb[0].mxu0 %v679
      %v772 = vpop.f32.mrb[0].mxu0
      %v773 = vadd.f32 0.0, %v772
      %v774 = vpop.f32.mrb[0].mxu0
      %v775 = vpop.f32.mrb[0].mxu0
      %v776 = vadd.f32 0.0, %v775
      %v777 = vpop.f32.mrb[0].mxu0
      %778 = vmatprep.mubr.bf16.mxu0 0
      %779 = vmatmul.mubr.bf16.gmra.mrb[0].mxu0 %v687
      %v780 = vpop.f32.mrb[0].mxu0
      %v781 = vadd.f32 0.0, %v780
      %v782 = vpop.f32.mrb[0].mxu0
      %v783 = vpop.f32.mrb[0].mxu0
      %v784 = vadd.f32 0.0, %v783
      %v785 = vpop.f32.mrb[0].mxu0
      %786 = vdwg.mxu0
      %v805 = vunpack.c.l.b16 %v621
      %v806 = vunpack.c.l.b16 %v622
      %v807 = vunpack.c.l.b16 %v623
      %v808 = vunpack.c.l.b16 %v624
      %v809 = vunpack.c.l.b16 %v625
      %v810 = vunpack.c.l.b16 %v626
      %v811 = vunpack.c.l.b16 %v627
      %v812 = vunpack.c.l.b16 %v628
      %v813 = vunpack.c.l.b16 %v629
      %v814 = vunpack.c.l.b16 %v630
      %v815 = vunpack.c.l.b16 %v631
      %v816 = vunpack.c.l.b16 %v632
      %v817 = vunpack.c.l.b16 %v633
      %v818 = vunpack.c.l.b16 %v634
      %v819 = vunpack.c.l.b16 %v635
      %v820 = vunpack.c.l.b16 %v636
      %v821 = vpack.c.b16 %v806, %v805
      %v822 = vpack.c.b16 %v808, %v807
      %v823 = vpack.c.b16 %v810, %v809
      %v824 = vpack.c.b16 %v812, %v811
      %v825 = vpack.c.b16 %v814, %v813
      %v826 = vpack.c.b16 %v816, %v815
      %v827 = vpack.c.b16 %v818, %v817
      %v828 = vpack.c.b16 %v820, %v819
      %837 = vmatprep.subr.bf16.mxu0 0
      %838 = vmatpush1.bf16.msra.mxu0 %v821
      %839 = vmatprep.subr.bf16.mxu0 0
      %840 = vmatpush1.bf16.msra.mxu0 %v822
      %841 = vmatprep.subr.bf16.mxu0 0
      %842 = vmatpush1.bf16.msra.mxu0 %v823
      %843 = vmatprep.subr.bf16.mxu0 0
      %844 = vmatpush1.bf16.msra.mxu0 %v824
      %845 = vmatprep.subr.bf16.mxu0 0
      %846 = vmatpush1.bf16.msra.mxu0 %v825
      %847 = vmatprep.subr.bf16.mxu0 0
      %848 = vmatpush1.bf16.msra.mxu0 %v826
      %849 = vmatprep.subr.bf16.mxu0 0
      %850 = vmatpush1.bf16.msra.mxu0 %v827
      %851 = vmatprep.subr.bf16.mxu0 0
      %852 = vmatpush1.bf16.msra.mxu0 %v828
      %853 = vmatprep.subr.bf16.mxu0 0
      %854 = vmatpush1.bf16.msra.mxu0 0
      %855 = vmatprep.subr.bf16.mxu0 0
      %856 = vmatpush1.bf16.msra.mxu0 0
      %857 = vmatprep.subr.bf16.mxu0 0
      %858 = vmatpush1.bf16.msra.mxu0 0
      %859 = vmatprep.subr.bf16.mxu0 0
      %860 = vmatpush1.bf16.msra.mxu0 0
      %861 = vmatprep.subr.bf16.mxu0 0
      %862 = vmatpush1.bf16.msra.mxu0 0
      %863 = vmatprep.subr.bf16.mxu0 0
      %864 = vmatpush1.bf16.msra.mxu0 0
      %865 = vmatprep.subr.bf16.mxu0 0
      %866 = vmatpush1.bf16.msra.mxu0 0
      %867 = vmatprep.subr.bf16.mxu0 0
      %868 = vmatpush1.bf16.msra.mxu0 0
      %869 = vmatprep.mubr.bf16.mxu0 0
      %870 = vmatmul.mubr.bf16.gmra.mrb[0].mxu0 %v664
      %v871 = vpop.f32.mrb[0].mxu0
      %v872 = vadd.f32 %v773, %v871
      %v873 = vpop.f32.mrb[0].mxu0
      %v874 = vpop.f32.mrb[0].mxu0
      %v875 = vadd.f32 %v776, %v874
      %v876 = vpop.f32.mrb[0].mxu0
      %877 = vmatprep.mubr.bf16.mxu0 0
      %878 = vmatmul.mubr.bf16.gmra.mrb[0].mxu0 %v665
      %v879 = vpop.f32.mrb[0].mxu0
      %v880 = vadd.f32 %v781, %v879
      %v881 = vpop.f32.mrb[0].mxu0
      %v882 = vpop.f32.mrb[0].mxu0
      %v883 = vadd.f32 %v784, %v882
      %v884 = vpop.f32.mrb[0].mxu0
      %885 = vdwg.mxu0
      %s886 = scalar_lea.vmem %s6, 128
      %v887 = vld [vmem:[%s886] sm:$0xf]
      %v888 = vld [vmem:[%s886 + $0x4] sm:$0xf]
      %v889 = vld [vmem:[%s886 + $0x8] sm:$0xf]
      %v890 = vld [vmem:[%s886 + $0xc] sm:$0xf]
      %v891 = vld [vmem:[%s886 + $0x10] sm:$0xf]
      %v892 = vld [vmem:[%s886 + $0x14] sm:$0xf]
      %v893 = vld [vmem:[%s886 + $0x18] sm:$0xf]
      %v894 = vld [vmem:[%s886 + $0x1c] sm:$0xf]
      %v895 = vld [vmem:[%s886 + $0x20] sm:$0xf]
      %v896 = vld [vmem:[%s886 + $0x24] sm:$0xf]
      %v897 = vld [vmem:[%s886 + $0x28] sm:$0xf]
      %v898 = vld [vmem:[%s886 + $0x2c] sm:$0xf]
      %v899 = vld [vmem:[%s886 + $0x30] sm:$0xf]
      %v900 = vld [vmem:[%s886 + $0x34] sm:$0xf]
      %v901 = vld [vmem:[%s886 + $0x38] sm:$0xf]
      %v902 = vld [vmem:[%s886 + $0x3c] sm:$0xf]
      %vm903 = vcmask 1046528
      %v904 = vrot.slane %v664, 1
      %v905 = vrot.slane %v665, 1
      %v906 = vsel %vm903, %v904, %v905
      %v907 = vrot.slane %v666, 1
      %v908 = vsel %vm903, %v905, %v907
      %v927 = vunpack.c.l.b16 %v887
      %v928 = vunpack.c.l.b16 %v888
      %v929 = vunpack.c.l.b16 %v889
      %v930 = vunpack.c.l.b16 %v890
      %v931 = vunpack.c.l.b16 %v891
      %v932 = vunpack.c.l.b16 %v892
      %v933 = vunpack.c.l.b16 %v893
      %v934 = vunpack.c.l.b16 %v894
      %v935 = vunpack.c.l.b16 %v895
      %v936 = vunpack.c.l.b16 %v896
      %v937 = vunpack.c.l.b16 %v897
      %v938 = vunpack.c.l.b16 %v898
      %v939 = vunpack.c.l.b16 %v899
      %v940 = vunpack.c.l.b16 %v900
      %v941 = vunpack.c.l.b16 %v901
      %v942 = vunpack.c.l.b16 %v902
      %v943 = vpack.c.b16 %v928, %v927
      %v944 = vpack.c.b16 %v930, %v929
      %v945 = vpack.c.b16 %v932, %v931
      %v946 = vpack.c.b16 %v934, %v933
      %v947 = vpack.c.b16 %v936, %v935
      %v948 = vpack.c.b16 %v938, %v937
      %v949 = vpack.c.b16 %v940, %v939
      %v950 = vpack.c.b16 %v942, %v941
      %959 = vmatprep.subr.bf16.mxu0 0
      %960 = vmatpush1.bf16.msra.mxu0 %v943
      %961 = vmatprep.subr.bf16.mxu0 0
      %962 = vmatpush1.bf16.msra.mxu0 %v944
      %963 = vmatprep.subr.bf16.mxu0 0
      %964 = vmatpush1.bf16.msra.mxu0 %v945
      %965 = vmatprep.subr.bf16.mxu0 0
      %966 = vmatpush1.bf16.msra.mxu0 %v946
      %967 = vmatprep.subr.bf16.mxu0 0
      %968 = vmatpush1.bf16.msra.mxu0 %v947
      %969 = vmatprep.subr.bf16.mxu0 0
      %970 = vmatpush1.bf16.msra.mxu0 %v948
      %971 = vmatprep.subr.bf16.mxu0 0
      %972 = vmatpush1.bf16.msra.mxu0 %v949
      %973 = vmatprep.subr.bf16.mxu0 0
      %974 = vmatpush1.bf16.msra.mxu0 %v950
      %975 = vmatprep.subr.bf16.mxu0 0
      %976 = vmatpush1.bf16.msra.mxu0 0
      %977 = vmatprep.subr.bf16.mxu0 0
      %978 = vmatpush1.bf16.msra.mxu0 0
      %979 = vmatprep.subr.bf16.mxu0 0
      %980 = vmatpush1.bf16.msra.mxu0 0
      %981 = vmatprep.subr.bf16.mxu0 0
      %982 = vmatpush1.bf16.msra.mxu0 0
      %983 = vmatprep.subr.bf16.mxu0 0
      %984 = vmatpush1.bf16.msra.mxu0 0
      %985 = vmatprep.subr.bf16.mxu0 0
      %986 = vmatpush1.bf16.msra.mxu0 0
      %987 = vmatprep.subr.bf16.mxu0 0
      %988 = vmatpush1.bf16.msra.mxu0 0
      %989 = vmatprep.subr.bf16.mxu0 0
      %990 = vmatpush1.bf16.msra.mxu0 0
      %991 = vmatprep.mubr.bf16.mxu0 0
      %992 = vmatmul.mubr.bf16.gmra.mrb[0].mxu0 %v906
      %v993 = vpop.f32.mrb[0].mxu0
      %v994 = vadd.f32 0.0, %v993
      %v995 = vpop.f32.mrb[0].mxu0
      %v996 = vpop.f32.mrb[0].mxu0
      %v997 = vadd.f32 0.0, %v996
      %v998 = vpop.f32.mrb[0].mxu0
      %999 = vmatprep.mubr.bf16.mxu0 0
      %1000 = vmatmul.mubr.bf16.gmra.mrb[0].mxu0 %v908
      %v1001 = vpop.f32.mrb[0].mxu0
      %v1002 = vadd.f32 0.0, %v1001
      %v1003 = vpop.f32.mrb[0].mxu0
      %v1004 = vpop.f32.mrb[0].mxu0
      %v1005 = vadd.f32 0.0, %v1004
      %v1006 = vpop.f32.mrb[0].mxu0
      %1007 = vdwg.mxu0
      %v1008 = vadd.f32 %v872, %v994
      %v1009 = vadd.f32 %v875, %v997
      %v1010 = vadd.f32 %v880, %v1002
      %v1011 = vadd.f32 %v883, %v1005
      %v1012 = vld [vmem:[%s554] sm:$0xf]
      %v1013 = vld [vmem:[%s554 + $0x4] sm:$0xf]
      %v1014 = vld [vmem:[%s554 + $0x8] sm:$0xf]
      %v1015 = vld [vmem:[%s554 + $0xc] sm:$0xf]
      %v1016 = vld [vmem:[%s554 + $0x10] sm:$0x1]
      %s1017 = scalar_lea.vmem %s6, 192
      %v1018 = vld [vmem:[%s1017] sm:$0xf]
      %v1019 = vld [vmem:[%s1017 + $0x4] sm:$0xf]
      %v1020 = vld [vmem:[%s1017 + $0x8] sm:$0xf]
      %v1021 = vld [vmem:[%s1017 + $0xc] sm:$0xf]
      %v1022 = vld [vmem:[%s1017 + $0x10] sm:$0xf]
      %v1023 = vld [vmem:[%s1017 + $0x14] sm:$0xf]
      %v1024 = vld [vmem:[%s1017 + $0x18] sm:$0xf]
      %v1025 = vld [vmem:[%s1017 + $0x1c] sm:$0xf]
      %v1026 = vld [vmem:[%s1017 + $0x20] sm:$0xf]
      %v1027 = vld [vmem:[%s1017 + $0x24] sm:$0xf]
      %v1028 = vld [vmem:[%s1017 + $0x28] sm:$0xf]
      %v1029 = vld [vmem:[%s1017 + $0x2c] sm:$0xf]
      %v1030 = vld [vmem:[%s1017 + $0x30] sm:$0xf]
      %v1031 = vld [vmem:[%s1017 + $0x34] sm:$0xf]
      %v1032 = vld [vmem:[%s1017 + $0x38] sm:$0xf]
      %v1033 = vld [vmem:[%s1017 + $0x3c] sm:$0xf]
      %v1038 = vunpack.c.l.b16 %v1012
      %v1039 = vunpack.c.l.b16 %v1013
      %v1040 = vunpack.c.l.b16 %v1014
      %v1041 = vunpack.c.l.b16 %v1015
      %v1042 = vpack.c.b16 %v1039, %v1038
      %v1043 = vpack.c.b16 %v1041, %v1040
      %v1062 = vunpack.c.l.b16 %v1018
      %v1063 = vunpack.c.l.b16 %v1019
      %v1064 = vunpack.c.l.b16 %v1020
      %v1065 = vunpack.c.l.b16 %v1021
      %v1066 = vunpack.c.l.b16 %v1022
      %v1067 = vunpack.c.l.b16 %v1023
      %v1068 = vunpack.c.l.b16 %v1024
      %v1069 = vunpack.c.l.b16 %v1025
      %v1070 = vunpack.c.l.b16 %v1026
      %v1071 = vunpack.c.l.b16 %v1027
      %v1072 = vunpack.c.l.b16 %v1028
      %v1073 = vunpack.c.l.b16 %v1029
      %v1074 = vunpack.c.l.b16 %v1030
      %v1075 = vunpack.c.l.b16 %v1031
      %v1076 = vunpack.c.l.b16 %v1032
      %v1077 = vunpack.c.l.b16 %v1033
      %v1078 = vpack.c.b16 %v1063, %v1062
      %v1079 = vpack.c.b16 %v1065, %v1064
      %v1080 = vpack.c.b16 %v1067, %v1066
      %v1081 = vpack.c.b16 %v1069, %v1068
      %v1082 = vpack.c.b16 %v1071, %v1070
      %v1083 = vpack.c.b16 %v1073, %v1072
      %v1084 = vpack.c.b16 %v1075, %v1074
      %v1085 = vpack.c.b16 %v1077, %v1076
      %1094 = vmatprep.subr.bf16.mxu0 0
      %1095 = vmatpush1.bf16.msra.mxu0 %v1078
      %1096 = vmatprep.subr.bf16.mxu0 0
      %1097 = vmatpush1.bf16.msra.mxu0 %v1079
      %1098 = vmatprep.subr.bf16.mxu0 0
      %1099 = vmatpush1.bf16.msra.mxu0 %v1080
      %1100 = vmatprep.subr.bf16.mxu0 0
      %1101 = vmatpush1.bf16.msra.mxu0 %v1081
      %1102 = vmatprep.subr.bf16.mxu0 0
      %1103 = vmatpush1.bf16.msra.mxu0 %v1082
      %1104 = vmatprep.subr.bf16.mxu0 0
      %1105 = vmatpush1.bf16.msra.mxu0 %v1083
      %1106 = vmatprep.subr.bf16.mxu0 0
      %1107 = vmatpush1.bf16.msra.mxu0 %v1084
      %1108 = vmatprep.subr.bf16.mxu0 0
      %1109 = vmatpush1.bf16.msra.mxu0 %v1085
      %1110 = vmatprep.subr.bf16.mxu0 0
      %1111 = vmatpush1.bf16.msra.mxu0 0
      %1112 = vmatprep.subr.bf16.mxu0 0
      %1113 = vmatpush1.bf16.msra.mxu0 0
      %1114 = vmatprep.subr.bf16.mxu0 0
      %1115 = vmatpush1.bf16.msra.mxu0 0
      %1116 = vmatprep.subr.bf16.mxu0 0
      %1117 = vmatpush1.bf16.msra.mxu0 0
      %1118 = vmatprep.subr.bf16.mxu0 0
      %1119 = vmatpush1.bf16.msra.mxu0 0
      %1120 = vmatprep.subr.bf16.mxu0 0
      %1121 = vmatpush1.bf16.msra.mxu0 0
      %1122 = vmatprep.subr.bf16.mxu0 0
      %1123 = vmatpush1.bf16.msra.mxu0 0
      %1124 = vmatprep.subr.bf16.mxu0 0
      %1125 = vmatpush1.bf16.msra.mxu0 0
      %1126 = vmatprep.mubr.bf16.mxu0 0
      %1127 = vmatmul.mubr.bf16.gmra.mrb[0].mxu0 %v1042
      %v1128 = vpop.f32.mrb[0].mxu0
      %v1129 = vadd.f32 0.0, %v1128
      %v1130 = vpop.f32.mrb[0].mxu0
      %v1131 = vpop.f32.mrb[0].mxu0
      %v1132 = vadd.f32 0.0, %v1131
      %v1133 = vpop.f32.mrb[0].mxu0
      %1134 = vmatprep.mubr.bf16.mxu0 0
      %1135 = vmatmul.mubr.bf16.gmra.mrb[0].mxu0 %v1043
      %v1136 = vpop.f32.mrb[0].mxu0
      %v1137 = vadd.f32 0.0, %v1136
      %v1138 = vpop.f32.mrb[0].mxu0
      %v1139 = vpop.f32.mrb[0].mxu0
      %v1140 = vadd.f32 0.0, %v1139
      %v1141 = vpop.f32.mrb[0].mxu0
      %1142 = vdwg.mxu0
      %v1143 = vadd.f32 %v1008, %v1129
      %v1144 = vadd.f32 %v1009, %v1132
      %v1145 = vadd.f32 %v1010, %v1137
      %v1146 = vadd.f32 %v1011, %v1140
      %s1147 = scalar_lea.vmem %s6, 256
      %v1148 = vld [vmem:[%s1147] sm:$0xf]
      %v1149 = vld [vmem:[%s1147 + $0x4] sm:$0xf]
      %v1150 = vld [vmem:[%s1147 + $0x8] sm:$0xf]
      %v1151 = vld [vmem:[%s1147 + $0xc] sm:$0xf]
      %v1152 = vld [vmem:[%s1147 + $0x10] sm:$0xf]
      %v1153 = vld [vmem:[%s1147 + $0x14] sm:$0xf]
      %v1154 = vld [vmem:[%s1147 + $0x18] sm:$0xf]
      %v1155 = vld [vmem:[%s1147 + $0x1c] sm:$0xf]
      %v1156 = vld [vmem:[%s1147 + $0x20] sm:$0xf]
      %v1157 = vld [vmem:[%s1147 + $0x24] sm:$0xf]
      %v1158 = vld [vmem:[%s1147 + $0x28] sm:$0xf]
      %v1159 = vld [vmem:[%s1147 + $0x2c] sm:$0xf]
      %v1160 = vld [vmem:[%s1147 + $0x30] sm:$0xf]
      %v1161 = vld [vmem:[%s1147 + $0x34] sm:$0xf]
      %v1162 = vld [vmem:[%s1147 + $0x38] sm:$0xf]
      %v1163 = vld [vmem:[%s1147 + $0x3c] sm:$0xf]
      %v1165 = vunpack.c.l.b16 %v1016
      %v1166 = vpack.c.b16 %v1165, %v1165
      %v1168 = vshrl.u32 %v1042, 16
      %v1170 = vshll.u32 %v1042, 16
      %v1172 = vrot.slane %v1170, 1
      %v1173 = vor.u32 %v1168, %v1172
      %v1175 = vshll.u32 %v1043, 16
      %v1177 = vrot.slane %v1175, 1
      %v1178 = vsel %vm667, %v1173, %v1177
      %v1179 = vshrl.u32 %v1043, 16
      %v1181 = vor.u32 %v1179, %v1177
      %v1183 = vshll.u32 %v1166, 16
      %v1185 = vrot.slane %v1183, 1
      %v1186 = vsel %vm667, %v1181, %v1185
      %v1205 = vunpack.c.l.b16 %v1148
      %v1206 = vunpack.c.l.b16 %v1149
      %v1207 = vunpack.c.l.b16 %v1150
      %v1208 = vunpack.c.l.b16 %v1151
      %v1209 = vunpack.c.l.b16 %v1152
      %v1210 = vunpack.c.l.b16 %v1153
      %v1211 = vunpack.c.l.b16 %v1154
      %v1212 = vunpack.c.l.b16 %v1155
      %v1213 = vunpack.c.l.b16 %v1156
      %v1214 = vunpack.c.l.b16 %v1157
      %v1215 = vunpack.c.l.b16 %v1158
      %v1216 = vunpack.c.l.b16 %v1159
      %v1217 = vunpack.c.l.b16 %v1160
      %v1218 = vunpack.c.l.b16 %v1161
      %v1219 = vunpack.c.l.b16 %v1162
      %v1220 = vunpack.c.l.b16 %v1163
      %v1221 = vpack.c.b16 %v1206, %v1205
      %v1222 = vpack.c.b16 %v1208, %v1207
      %v1223 = vpack.c.b16 %v1210, %v1209
      %v1224 = vpack.c.b16 %v1212, %v1211
      %v1225 = vpack.c.b16 %v1214, %v1213
      %v1226 = vpack.c.b16 %v1216, %v1215
      %v1227 = vpack.c.b16 %v1218, %v1217
      %v1228 = vpack.c.b16 %v1220, %v1219
      %1237 = vmatprep.subr.bf16.mxu0 0
      %1238 = vmatpush1.bf16.msra.mxu0 %v1221
      %1239 = vmatprep.subr.bf16.mxu0 0
      %1240 = vmatpush1.bf16.msra.mxu0 %v1222
      %1241 = vmatprep.subr.bf16.mxu0 0
      %1242 = vmatpush1.bf16.msra.mxu0 %v1223
      %1243 = vmatprep.subr.bf16.mxu0 0
      %1244 = vmatpush1.bf16.msra.mxu0 %v1224
      %1245 = vmatprep.subr.bf16.mxu0 0
      %1246 = vmatpush1.bf16.msra.mxu0 %v1225
      %1247 = vmatprep.subr.bf16.mxu0 0
      %1248 = vmatpush1.bf16.msra.mxu0 %v1226
      %1249 = vmatprep.subr.bf16.mxu0 0
      %1250 = vmatpush1.bf16.msra.mxu0 %v1227
      %1251 = vmatprep.subr.bf16.mxu0 0
      %1252 = vmatpush1.bf16.msra.mxu0 %v1228
      %1253 = vmatprep.subr.bf16.mxu0 0
      %1254 = vmatpush1.bf16.msra.mxu0 0
      %1255 = vmatprep.subr.bf16.mxu0 0
      %1256 = vmatpush1.bf16.msra.mxu0 0
      %1257 = vmatprep.subr.bf16.mxu0 0
      %1258 = vmatpush1.bf16.msra.mxu0 0
      %1259 = vmatprep.subr.bf16.mxu0 0
      %1260 = vmatpush1.bf16.msra.mxu0 0
      %1261 = vmatprep.subr.bf16.mxu0 0
      %1262 = vmatpush1.bf16.msra.mxu0 0
      %1263 = vmatprep.subr.bf16.mxu0 0
      %1264 = vmatpush1.bf16.msra.mxu0 0
      %1265 = vmatprep.subr.bf16.mxu0 0
      %1266 = vmatpush1.bf16.msra.mxu0 0
      %1267 = vmatprep.subr.bf16.mxu0 0
      %1268 = vmatpush1.bf16.msra.mxu0 0
      %1269 = vmatprep.mubr.bf16.mxu0 0
      %1270 = vmatmul.mubr.bf16.gmra.mrb[0].mxu0 %v1178
      %v1271 = vpop.f32.mrb[0].mxu0
      %v1272 = vadd.f32 0.0, %v1271
      %v1273 = vpop.f32.mrb[0].mxu0
      %v1274 = vpop.f32.mrb[0].mxu0
      %v1275 = vadd.f32 0.0, %v1274
      %v1276 = vpop.f32.mrb[0].mxu0
      %1277 = vmatprep.mubr.bf16.mxu0 0
      %1278 = vmatmul.mubr.bf16.gmra.mrb[0].mxu0 %v1186
      %v1279 = vpop.f32.mrb[0].mxu0
      %v1280 = vadd.f32 0.0, %v1279
      %v1281 = vpop.f32.mrb[0].mxu0
      %v1282 = vpop.f32.mrb[0].mxu0
      %v1283 = vadd.f32 0.0, %v1282
      %v1284 = vpop.f32.mrb[0].mxu0
      %1285 = vdwg.mxu0
      %v1286 = vadd.f32 %v1143, %v1272
      %v1287 = vadd.f32 %v1144, %v1275
      %v1288 = vadd.f32 %v1145, %v1280
      %v1289 = vadd.f32 %v1146, %v1283
      %s1290 = scalar_lea.vmem %s6, 320
      %v1291 = vld [vmem:[%s1290] sm:$0xf]
      %v1292 = vld [vmem:[%s1290 + $0x4] sm:$0xf]
      %v1293 = vld [vmem:[%s1290 + $0x8] sm:$0xf]
      %v1294 = vld [vmem:[%s1290 + $0xc] sm:$0xf]
      %v1295 = vld [vmem:[%s1290 + $0x10] sm:$0xf]
      %v1296 = vld [vmem:[%s1290 + $0x14] sm:$0xf]
      %v1297 = vld [vmem:[%s1290 + $0x18] sm:$0xf]
      %v1298 = vld [vmem:[%s1290 + $0x1c] sm:$0xf]
      %v1299 = vld [vmem:[%s1290 + $0x20] sm:$0xf]
      %v1300 = vld [vmem:[%s1290 + $0x24] sm:$0xf]
      %v1301 = vld [vmem:[%s1290 + $0x28] sm:$0xf]
      %v1302 = vld [vmem:[%s1290 + $0x2c] sm:$0xf]
      %v1303 = vld [vmem:[%s1290 + $0x30] sm:$0xf]
      %v1304 = vld [vmem:[%s1290 + $0x34] sm:$0xf]
      %v1305 = vld [vmem:[%s1290 + $0x38] sm:$0xf]
      %v1306 = vld [vmem:[%s1290 + $0x3c] sm:$0xf]
      %v1307 = vrot.slane %v1042, 1
      %v1308 = vrot.slane %v1043, 1
      %v1309 = vsel %vm903, %v1307, %v1308
      %v1310 = vrot.slane %v1166, 1
      %v1311 = vsel %vm903, %v1308, %v1310
      %v1330 = vunpack.c.l.b16 %v1291
      %v1331 = vunpack.c.l.b16 %v1292
      %v1332 = vunpack.c.l.b16 %v1293
      %v1333 = vunpack.c.l.b16 %v1294
      %v1334 = vunpack.c.l.b16 %v1295
      %v1335 = vunpack.c.l.b16 %v1296
      %v1336 = vunpack.c.l.b16 %v1297
      %v1337 = vunpack.c.l.b16 %v1298
      %v1338 = vunpack.c.l.b16 %v1299
      %v1339 = vunpack.c.l.b16 %v1300
      %v1340 = vunpack.c.l.b16 %v1301
      %v1341 = vunpack.c.l.b16 %v1302
      %v1342 = vunpack.c.l.b16 %v1303
      %v1343 = vunpack.c.l.b16 %v1304
      %v1344 = vunpack.c.l.b16 %v1305
      %v1345 = vunpack.c.l.b16 %v1306
      %v1346 = vpack.c.b16 %v1331, %v1330
      %v1347 = vpack.c.b16 %v1333, %v1332
      %v1348 = vpack.c.b16 %v1335, %v1334
      %v1349 = vpack.c.b16 %v1337, %v1336
      %v1350 = vpack.c.b16 %v1339, %v1338
      %v1351 = vpack.c.b16 %v1341, %v1340
      %v1352 = vpack.c.b16 %v1343, %v1342
      %v1353 = vpack.c.b16 %v1345, %v1344
      %1362 = vmatprep.subr.bf16.mxu0 0
      %1363 = vmatpush1.bf16.msra.mxu0 %v1346
      %1364 = vmatprep.subr.bf16.mxu0 0
      %1365 = vmatpush1.bf16.msra.mxu0 %v1347
      %1366 = vmatprep.subr.bf16.mxu0 0
      %1367 = vmatpush1.bf16.msra.mxu0 %v1348
      %1368 = vmatprep.subr.bf16.mxu0 0
      %1369 = vmatpush1.bf16.msra.mxu0 %v1349
      %1370 = vmatprep.subr.bf16.mxu0 0
      %1371 = vmatpush1.bf16.msra.mxu0 %v1350
      %1372 = vmatprep.subr.bf16.mxu0 0
      %1373 = vmatpush1.bf16.msra.mxu0 %v1351
      %1374 = vmatprep.subr.bf16.mxu0 0
      %1375 = vmatpush1.bf16.msra.mxu0 %v1352
      %1376 = vmatprep.subr.bf16.mxu0 0
      %1377 = vmatpush1.bf16.msra.mxu0 %v1353
      %1378 = vmatprep.subr.bf16.mxu0 0
      %1379 = vmatpush1.bf16.msra.mxu0 0
      %1380 = vmatprep.subr.bf16.mxu0 0
      %1381 = vmatpush1.bf16.msra.mxu0 0
      %1382 = vmatprep.subr.bf16.mxu0 0
      %1383 = vmatpush1.bf16.msra.mxu0 0
      %1384 = vmatprep.subr.bf16.mxu0 0
      %1385 = vmatpush1.bf16.msra.mxu0 0
      %1386 = vmatprep.subr.bf16.mxu0 0
      %1387 = vmatpush1.bf16.msra.mxu0 0
      %1388 = vmatprep.subr.bf16.mxu0 0
      %1389 = vmatpush1.bf16.msra.mxu0 0
      %1390 = vmatprep.subr.bf16.mxu0 0
      %1391 = vmatpush1.bf16.msra.mxu0 0
      %1392 = vmatprep.subr.bf16.mxu0 0
      %1393 = vmatpush1.bf16.msra.mxu0 0
      %1394 = vmatprep.mubr.bf16.mxu0 0
      %1395 = vmatmul.mubr.bf16.gmra.mrb[0].mxu0 %v1309
      %v1396 = vpop.f32.mrb[0].mxu0
      %v1397 = vadd.f32 0.0, %v1396
      %v1398 = vpop.f32.mrb[0].mxu0
      %v1399 = vpop.f32.mrb[0].mxu0
      %v1400 = vadd.f32 0.0, %v1399
      %v1401 = vpop.f32.mrb[0].mxu0
      %1402 = vmatprep.mubr.bf16.mxu0 0
      %1403 = vmatmul.mubr.bf16.gmra.mrb[0].mxu0 %v1311
      %v1404 = vpop.f32.mrb[0].mxu0
      %v1405 = vadd.f32 0.0, %v1404
      %v1406 = vpop.f32.mrb[0].mxu0
      %v1407 = vpop.f32.mrb[0].mxu0
      %v1408 = vadd.f32 0.0, %v1407
      %v1409 = vpop.f32.mrb[0].mxu0
      %1410 = vdwg.mxu0
      %v1411 = vadd.f32 %v1286, %v1397
      %v1412 = vadd.f32 %v1287, %v1400
      %v1413 = vadd.f32 %v1288, %v1405
      %v1414 = vadd.f32 %v1289, %v1408
      %v1415 = vld [vmem:[%s565] sm:$0xf]
      %v1416 = vld [vmem:[%s565 + $0x4] sm:$0xf]
      %v1417 = vld [vmem:[%s565 + $0x8] sm:$0xf]
      %v1418 = vld [vmem:[%s565 + $0xc] sm:$0xf]
      %v1419 = vld [vmem:[%s565 + $0x10] sm:$0x1]
      %s1420 = scalar_lea.vmem %s6, 384
      %v1421 = vld [vmem:[%s1420] sm:$0xf]
      %v1422 = vld [vmem:[%s1420 + $0x4] sm:$0xf]
      %v1423 = vld [vmem:[%s1420 + $0x8] sm:$0xf]
      %v1424 = vld [vmem:[%s1420 + $0xc] sm:$0xf]
      %v1425 = vld [vmem:[%s1420 + $0x10] sm:$0xf]
      %v1426 = vld [vmem:[%s1420 + $0x14] sm:$0xf]
      %v1427 = vld [vmem:[%s1420 + $0x18] sm:$0xf]
      %v1428 = vld [vmem:[%s1420 + $0x1c] sm:$0xf]
      %v1429 = vld [vmem:[%s1420 + $0x20] sm:$0xf]
      %v1430 = vld [vmem:[%s1420 + $0x24] sm:$0xf]
      %v1431 = vld [vmem:[%s1420 + $0x28] sm:$0xf]
      %v1432 = vld [vmem:[%s1420 + $0x2c] sm:$0xf]
      %v1433 = vld [vmem:[%s1420 + $0x30] sm:$0xf]
      %v1434 = vld [vmem:[%s1420 + $0x34] sm:$0xf]
      %v1435 = vld [vmem:[%s1420 + $0x38] sm:$0xf]
      %v1436 = vld [vmem:[%s1420 + $0x3c] sm:$0xf]
      %v1441 = vunpack.c.l.b16 %v1415
      %v1442 = vunpack.c.l.b16 %v1416
      %v1443 = vunpack.c.l.b16 %v1417
      %v1444 = vunpack.c.l.b16 %v1418
      %v1445 = vpack.c.b16 %v1442, %v1441
      %v1446 = vpack.c.b16 %v1444, %v1443
      %v1465 = vunpack.c.l.b16 %v1421
      %v1466 = vunpack.c.l.b16 %v1422
      %v1467 = vunpack.c.l.b16 %v1423
      %v1468 = vunpack.c.l.b16 %v1424
      %v1469 = vunpack.c.l.b16 %v1425
      %v1470 = vunpack.c.l.b16 %v1426
      %v1471 = vunpack.c.l.b16 %v1427
      %v1472 = vunpack.c.l.b16 %v1428
      %v1473 = vunpack.c.l.b16 %v1429
      %v1474 = vunpack.c.l.b16 %v1430
      %v1475 = vunpack.c.l.b16 %v1431
      %v1476 = vunpack.c.l.b16 %v1432
      %v1477 = vunpack.c.l.b16 %v1433
      %v1478 = vunpack.c.l.b16 %v1434
      %v1479 = vunpack.c.l.b16 %v1435
      %v1480 = vunpack.c.l.b16 %v1436
      %v1481 = vpack.c.b16 %v1466, %v1465
      %v1482 = vpack.c.b16 %v1468, %v1467
      %v1483 = vpack.c.b16 %v1470, %v1469
      %v1484 = vpack.c.b16 %v1472, %v1471
      %v1485 = vpack.c.b16 %v1474, %v1473
      %v1486 = vpack.c.b16 %v1476, %v1475
      %v1487 = vpack.c.b16 %v1478, %v1477
      %v1488 = vpack.c.b16 %v1480, %v1479
      %1497 = vmatprep.subr.bf16.mxu0 0
      %1498 = vmatpush1.bf16.msra.mxu0 %v1481
      %1499 = vmatprep.subr.bf16.mxu0 0
      %1500 = vmatpush1.bf16.msra.mxu0 %v1482
      %1501 = vmatprep.subr.bf16.mxu0 0
      %1502 = vmatpush1.bf16.msra.mxu0 %v1483
      %1503 = vmatprep.subr.bf16.mxu0 0
      %1504 = vmatpush1.bf16.msra.mxu0 %v1484
      %1505 = vmatprep.subr.bf16.mxu0 0
      %1506 = vmatpush1.bf16.msra.mxu0 %v1485
      %1507 = vmatprep.subr.bf16.mxu0 0
      %1508 = vmatpush1.bf16.msra.mxu0 %v1486
      %1509 = vmatprep.subr.bf16.mxu0 0
      %1510 = vmatpush1.bf16.msra.mxu0 %v1487
      %1511 = vmatprep.subr.bf16.mxu0 0
      %1512 = vmatpush1.bf16.msra.mxu0 %v1488
      %1513 = vmatprep.subr.bf16.mxu0 0
      %1514 = vmatpush1.bf16.msra.mxu0 0
      %1515 = vmatprep.subr.bf16.mxu0 0
      %1516 = vmatpush1.bf16.msra.mxu0 0
      %1517 = vmatprep.subr.bf16.mxu0 0
      %1518 = vmatpush1.bf16.msra.mxu0 0
      %1519 = vmatprep.subr.bf16.mxu0 0
      %1520 = vmatpush1.bf16.msra.mxu0 0
      %1521 = vmatprep.subr.bf16.mxu0 0
      %1522 = vmatpush1.bf16.msra.mxu0 0
      %1523 = vmatprep.subr.bf16.mxu0 0
      %1524 = vmatpush1.bf16.msra.mxu0 0
      %1525 = vmatprep.subr.bf16.mxu0 0
      %1526 = vmatpush1.bf16.msra.mxu0 0
      %1527 = vmatprep.subr.bf16.mxu0 0
      %1528 = vmatpush1.bf16.msra.mxu0 0
      %1529 = vmatprep.mubr.bf16.mxu0 0
      %1530 = vmatmul.mubr.bf16.gmra.mrb[0].mxu0 %v1445
      %v1531 = vpop.f32.mrb[0].mxu0
      %v1532 = vadd.f32 0.0, %v1531
      %v1533 = vpop.f32.mrb[0].mxu0
      %v1534 = vpop.f32.mrb[0].mxu0
      %v1535 = vadd.f32 0.0, %v1534
      %v1536 = vpop.f32.mrb[0].mxu0
      %1537 = vmatprep.mubr.bf16.mxu0 0
      %1538 = vmatmul.mubr.bf16.gmra.mrb[0].mxu0 %v1446
      %v1539 = vpop.f32.mrb[0].mxu0
      %v1540 = vadd.f32 0.0, %v1539
      %v1541 = vpop.f32.mrb[0].mxu0
      %v1542 = vpop.f32.mrb[0].mxu0
      %v1543 = vadd.f32 0.0, %v1542
      %v1544 = vpop.f32.mrb[0].mxu0
      %1545 = vdwg.mxu0
      %v1546 = vadd.f32 %v1411, %v1532
      %v1547 = vadd.f32 %v1412, %v1535
      %v1548 = vadd.f32 %v1413, %v1540
      %v1549 = vadd.f32 %v1414, %v1543
      %s1550 = scalar_lea.vmem %s6, 448
      %v1551 = vld [vmem:[%s1550] sm:$0xf]
      %v1552 = vld [vmem:[%s1550 + $0x4] sm:$0xf]
      %v1553 = vld [vmem:[%s1550 + $0x8] sm:$0xf]
      %v1554 = vld [vmem:[%s1550 + $0xc] sm:$0xf]
      %v1555 = vld [vmem:[%s1550 + $0x10] sm:$0xf]
      %v1556 = vld [vmem:[%s1550 + $0x14] sm:$0xf]
      %v1557 = vld [vmem:[%s1550 + $0x18] sm:$0xf]
      %v1558 = vld [vmem:[%s1550 + $0x1c] sm:$0xf]
      %v1559 = vld [vmem:[%s1550 + $0x20] sm:$0xf]
      %v1560 = vld [vmem:[%s1550 + $0x24] sm:$0xf]
      %v1561 = vld [vmem:[%s1550 + $0x28] sm:$0xf]
      %v1562 = vld [vmem:[%s1550 + $0x2c] sm:$0xf]
      %v1563 = vld [vmem:[%s1550 + $0x30] sm:$0xf]
      %v1564 = vld [vmem:[%s1550 + $0x34] sm:$0xf]
      %v1565 = vld [vmem:[%s1550 + $0x38] sm:$0xf]
      %v1566 = vld [vmem:[%s1550 + $0x3c] sm:$0xf]
      %v1568 = vunpack.c.l.b16 %v1419
      %v1569 = vpack.c.b16 %v1568, %v1568
      %v1571 = vshrl.u32 %v1445, 16
      %v1573 = vshll.u32 %v1445, 16
      %v1575 = vrot.slane %v1573, 1
      %v1576 = vor.u32 %v1571, %v1575
      %v1578 = vshll.u32 %v1446, 16
      %v1580 = vrot.slane %v1578, 1
      %v1581 = vsel %vm667, %v1576, %v1580
      %v1582 = vshrl.u32 %v1446, 16
      %v1584 = vor.u32 %v1582, %v1580
      %v1586 = vshll.u32 %v1569, 16
      %v1588 = vrot.slane %v1586, 1
      %v1589 = vsel %vm667, %v1584, %v1588
      %v1608 = vunpack.c.l.b16 %v1551
      %v1609 = vunpack.c.l.b16 %v1552
      %v1610 = vunpack.c.l.b16 %v1553
      %v1611 = vunpack.c.l.b16 %v1554
      %v1612 = vunpack.c.l.b16 %v1555
      %v1613 = vunpack.c.l.b16 %v1556
      %v1614 = vunpack.c.l.b16 %v1557
      %v1615 = vunpack.c.l.b16 %v1558
      %v1616 = vunpack.c.l.b16 %v1559
      %v1617 = vunpack.c.l.b16 %v1560
      %v1618 = vunpack.c.l.b16 %v1561
      %v1619 = vunpack.c.l.b16 %v1562
      %v1620 = vunpack.c.l.b16 %v1563
      %v1621 = vunpack.c.l.b16 %v1564
      %v1622 = vunpack.c.l.b16 %v1565
      %v1623 = vunpack.c.l.b16 %v1566
      %v1624 = vpack.c.b16 %v1609, %v1608
      %v1625 = vpack.c.b16 %v1611, %v1610
      %v1626 = vpack.c.b16 %v1613, %v1612
      %v1627 = vpack.c.b16 %v1615, %v1614
      %v1628 = vpack.c.b16 %v1617, %v1616
      %v1629 = vpack.c.b16 %v1619, %v1618
      %v1630 = vpack.c.b16 %v1621, %v1620
      %v1631 = vpack.c.b16 %v1623, %v1622
      %1640 = vmatprep.subr.bf16.mxu0 0
      %1641 = vmatpush1.bf16.msra.mxu0 %v1624
      %1642 = vmatprep.subr.bf16.mxu0 0
      %1643 = vmatpush1.bf16.msra.mxu0 %v1625
      %1644 = vmatprep.subr.bf16.mxu0 0
      %1645 = vmatpush1.bf16.msra.mxu0 %v1626
      %1646 = vmatprep.subr.bf16.mxu0 0
      %1647 = vmatpush1.bf16.msra.mxu0 %v1627
      %1648 = vmatprep.subr.bf16.mxu0 0
      %1649 = vmatpush1.bf16.msra.mxu0 %v1628
      %1650 = vmatprep.subr.bf16.mxu0 0
      %1651 = vmatpush1.bf16.msra.mxu0 %v1629
      %1652 = vmatprep.subr.bf16.mxu0 0
      %1653 = vmatpush1.bf16.msra.mxu0 %v1630
      %1654 = vmatprep.subr.bf16.mxu0 0
      %1655 = vmatpush1.bf16.msra.mxu0 %v1631
      %1656 = vmatprep.subr.bf16.mxu0 0
      %1657 = vmatpush1.bf16.msra.mxu0 0
      %1658 = vmatprep.subr.bf16.mxu0 0
      %1659 = vmatpush1.bf16.msra.mxu0 0
      %1660 = vmatprep.subr.bf16.mxu0 0
      %1661 = vmatpush1.bf16.msra.mxu0 0
      %1662 = vmatprep.subr.bf16.mxu0 0
      %1663 = vmatpush1.bf16.msra.mxu0 0
      %1664 = vmatprep.subr.bf16.mxu0 0
      %1665 = vmatpush1.bf16.msra.mxu0 0
      %1666 = vmatprep.subr.bf16.mxu0 0
      %1667 = vmatpush1.bf16.msra.mxu0 0
      %1668 = vmatprep.subr.bf16.mxu0 0
      %1669 = vmatpush1.bf16.msra.mxu0 0
      %1670 = vmatprep.subr.bf16.mxu0 0
      %1671 = vmatpush1.bf16.msra.mxu0 0
      %1672 = vmatprep.mubr.bf16.mxu0 0
      %1673 = vmatmul.mubr.bf16.gmra.mrb[0].mxu0 %v1581
      %v1674 = vpop.f32.mrb[0].mxu0
      %v1675 = vadd.f32 0.0, %v1674
      %v1676 = vpop.f32.mrb[0].mxu0
      %v1677 = vpop.f32.mrb[0].mxu0
      %v1678 = vadd.f32 0.0, %v1677
      %v1679 = vpop.f32.mrb[0].mxu0
      %1680 = vmatprep.mubr.bf16.mxu0 0
      %1681 = vmatmul.mubr.bf16.gmra.mrb[0].mxu0 %v1589
      %v1682 = vpop.f32.mrb[0].mxu0
      %v1683 = vadd.f32 0.0, %v1682
      %v1684 = vpop.f32.mrb[0].mxu0
      %v1685 = vpop.f32.mrb[0].mxu0
      %v1686 = vadd.f32 0.0, %v1685
      %v1687 = vpop.f32.mrb[0].mxu0
      %1688 = vdwg.mxu0
      %v1689 = vadd.f32 %v1546, %v1675
      %v1690 = vadd.f32 %v1547, %v1678
      %v1691 = vadd.f32 %v1548, %v1683
      %v1692 = vadd.f32 %v1549, %v1686
      %s1693 = scalar_lea.vmem %s6, 512
      %v1694 = vld [vmem:[%s1693] sm:$0xf]
      %v1695 = vld [vmem:[%s1693 + $0x4] sm:$0xf]
      %v1696 = vld [vmem:[%s1693 + $0x8] sm:$0xf]
      %v1697 = vld [vmem:[%s1693 + $0xc] sm:$0xf]
      %v1698 = vld [vmem:[%s1693 + $0x10] sm:$0xf]
      %v1699 = vld [vmem:[%s1693 + $0x14] sm:$0xf]
      %v1700 = vld [vmem:[%s1693 + $0x18] sm:$0xf]
      %v1701 = vld [vmem:[%s1693 + $0x1c] sm:$0xf]
      %v1702 = vld [vmem:[%s1693 + $0x20] sm:$0xf]
      %v1703 = vld [vmem:[%s1693 + $0x24] sm:$0xf]
      %v1704 = vld [vmem:[%s1693 + $0x28] sm:$0xf]
      %v1705 = vld [vmem:[%s1693 + $0x2c] sm:$0xf]
      %v1706 = vld [vmem:[%s1693 + $0x30] sm:$0xf]
      %v1707 = vld [vmem:[%s1693 + $0x34] sm:$0xf]
      %v1708 = vld [vmem:[%s1693 + $0x38] sm:$0xf]
      %v1709 = vld [vmem:[%s1693 + $0x3c] sm:$0xf]
      %v1710 = vrot.slane %v1445, 1
      %v1711 = vrot.slane %v1446, 1
      %v1712 = vsel %vm903, %v1710, %v1711
      %v1713 = vrot.slane %v1569, 1
      %v1714 = vsel %vm903, %v1711, %v1713
      %v1733 = vunpack.c.l.b16 %v1694
      %v1734 = vunpack.c.l.b16 %v1695
      %v1735 = vunpack.c.l.b16 %v1696
      %v1736 = vunpack.c.l.b16 %v1697
      %v1737 = vunpack.c.l.b16 %v1698
      %v1738 = vunpack.c.l.b16 %v1699
      %v1739 = vunpack.c.l.b16 %v1700
      %v1740 = vunpack.c.l.b16 %v1701
      %v1741 = vunpack.c.l.b16 %v1702
      %v1742 = vunpack.c.l.b16 %v1703
      %v1743 = vunpack.c.l.b16 %v1704
      %v1744 = vunpack.c.l.b16 %v1705
      %v1745 = vunpack.c.l.b16 %v1706
      %v1746 = vunpack.c.l.b16 %v1707
      %v1747 = vunpack.c.l.b16 %v1708
      %v1748 = vunpack.c.l.b16 %v1709
      %v1749 = vpack.c.b16 %v1734, %v1733
      %v1750 = vpack.c.b16 %v1736, %v1735
      %v1751 = vpack.c.b16 %v1738, %v1737
      %v1752 = vpack.c.b16 %v1740, %v1739
      %v1753 = vpack.c.b16 %v1742, %v1741
      %v1754 = vpack.c.b16 %v1744, %v1743
      %v1755 = vpack.c.b16 %v1746, %v1745
      %v1756 = vpack.c.b16 %v1748, %v1747
      %1765 = vmatprep.subr.bf16.mxu0 0
      %1766 = vmatpush1.bf16.msra.mxu0 %v1749
      %1767 = vmatprep.subr.bf16.mxu0 0
      %1768 = vmatpush1.bf16.msra.mxu0 %v1750
      %1769 = vmatprep.subr.bf16.mxu0 0
      %1770 = vmatpush1.bf16.msra.mxu0 %v1751
      %1771 = vmatprep.subr.bf16.mxu0 0
      %1772 = vmatpush1.bf16.msra.mxu0 %v1752
      %1773 = vmatprep.subr.bf16.mxu0 0
      %1774 = vmatpush1.bf16.msra.mxu0 %v1753
      %1775 = vmatprep.subr.bf16.mxu0 0
      %1776 = vmatpush1.bf16.msra.mxu0 %v1754
      %1777 = vmatprep.subr.bf16.mxu0 0
      %1778 = vmatpush1.bf16.msra.mxu0 %v1755
      %1779 = vmatprep.subr.bf16.mxu0 0
      %1780 = vmatpush1.bf16.msra.mxu0 %v1756
      %1781 = vmatprep.subr.bf16.mxu0 0
      %1782 = vmatpush1.bf16.msra.mxu0 0
      %1783 = vmatprep.subr.bf16.mxu0 0
      %1784 = vmatpush1.bf16.msra.mxu0 0
      %1785 = vmatprep.subr.bf16.mxu0 0
      %1786 = vmatpush1.bf16.msra.mxu0 0
      %1787 = vmatprep.subr.bf16.mxu0 0
      %1788 = vmatpush1.bf16.msra.mxu0 0
      %1789 = vmatprep.subr.bf16.mxu0 0
      %1790 = vmatpush1.bf16.msra.mxu0 0
      %1791 = vmatprep.subr.bf16.mxu0 0
      %1792 = vmatpush1.bf16.msra.mxu0 0
      %1793 = vmatprep.subr.bf16.mxu0 0
      %1794 = vmatpush1.bf16.msra.mxu0 0
      %1795 = vmatprep.subr.bf16.mxu0 0
      %1796 = vmatpush1.bf16.msra.mxu0 0
      %1797 = vmatprep.mubr.bf16.mxu0 0
      %1798 = vmatmul.mubr.bf16.gmra.mrb[0].mxu0 %v1712
      %v1799 = vpop.f32.mrb[0].mxu0
      %v1800 = vadd.f32 0.0, %v1799
      %v1801 = vpop.f32.mrb[0].mxu0
      %v1802 = vpop.f32.mrb[0].mxu0
      %v1803 = vadd.f32 0.0, %v1802
      %v1804 = vpop.f32.mrb[0].mxu0
      %1805 = vmatprep.mubr.bf16.mxu0 0
      %1806 = vmatmul.mubr.bf16.gmra.mrb[0].mxu0 %v1714
      %v1807 = vpop.f32.mrb[0].mxu0
      %v1808 = vadd.f32 0.0, %v1807
      %v1809 = vpop.f32.mrb[0].mxu0
      %v1810 = vpop.f32.mrb[0].mxu0
      %v1811 = vadd.f32 0.0, %v1810
      %v1812 = vpop.f32.mrb[0].mxu0
      %1813 = vdwg.mxu0
      %v1814 = vadd.f32 %v1689, %v1800
      %v1815 = vadd.f32 %v1690, %v1803
      %v1816 = vadd.f32 %v1691, %v1808
      %v1817 = vadd.f32 %v1692, %v1811
      %v1818 = vld [vmem:[%s575] sm:$0xf]
      %v1819 = vld [vmem:[%s575 + $0x4] sm:$0xf]
      %v1820 = vld [vmem:[%s575 + $0x8] sm:$0xf]
      %v1821 = vld [vmem:[%s575 + $0xc] sm:$0xf]
      %v1822 = vld [vmem:[%s575 + $0x10] sm:$0x1]
      %v1823 = vld [vmem:[%s7] sm:$0xf]
      %v1824 = vld [vmem:[%s7 + $0x4] sm:$0xf]
      %v1825 = vld [vmem:[%s7 + $0x8] sm:$0xf]
      %v1826 = vld [vmem:[%s7 + $0xc] sm:$0xf]
      %v1827 = vld [vmem:[%s7 + $0x10] sm:$0xf]
      %v1828 = vld [vmem:[%s7 + $0x14] sm:$0xf]
      %v1829 = vld [vmem:[%s7 + $0x18] sm:$0xf]
      %v1830 = vld [vmem:[%s7 + $0x1c] sm:$0xf]
      %v1831 = vld [vmem:[%s7 + $0x20] sm:$0xf]
      %v1832 = vld [vmem:[%s7 + $0x24] sm:$0xf]
      %v1833 = vld [vmem:[%s7 + $0x28] sm:$0xf]
      %v1834 = vld [vmem:[%s7 + $0x2c] sm:$0xf]
      %v1835 = vld [vmem:[%s7 + $0x30] sm:$0xf]
      %v1836 = vld [vmem:[%s7 + $0x34] sm:$0xf]
      %v1837 = vld [vmem:[%s7 + $0x38] sm:$0xf]
      %v1838 = vld [vmem:[%s7 + $0x3c] sm:$0xf]
      %v1843 = vunpack.c.l.b16 %v1818
      %v1844 = vunpack.c.l.b16 %v1819
      %v1845 = vunpack.c.l.b16 %v1820
      %v1846 = vunpack.c.l.b16 %v1821
      %v1847 = vpack.c.b16 %v1844, %v1843
      %v1848 = vpack.c.b16 %v1846, %v1845
      %v1867 = vunpack.c.l.b16 %v1823
      %v1868 = vunpack.c.l.b16 %v1824
      %v1869 = vunpack.c.l.b16 %v1825
      %v1870 = vunpack.c.l.b16 %v1826
      %v1871 = vunpack.c.l.b16 %v1827
      %v1872 = vunpack.c.l.b16 %v1828
      %v1873 = vunpack.c.l.b16 %v1829
      %v1874 = vunpack.c.l.b16 %v1830
      %v1875 = vunpack.c.l.b16 %v1831
      %v1876 = vunpack.c.l.b16 %v1832
      %v1877 = vunpack.c.l.b16 %v1833
      %v1878 = vunpack.c.l.b16 %v1834
      %v1879 = vunpack.c.l.b16 %v1835
      %v1880 = vunpack.c.l.b16 %v1836
      %v1881 = vunpack.c.l.b16 %v1837
      %v1882 = vunpack.c.l.b16 %v1838
      %v1883 = vpack.c.b16 %v1868, %v1867
      %v1884 = vpack.c.b16 %v1870, %v1869
      %v1885 = vpack.c.b16 %v1872, %v1871
      %v1886 = vpack.c.b16 %v1874, %v1873
      %v1887 = vpack.c.b16 %v1876, %v1875
      %v1888 = vpack.c.b16 %v1878, %v1877
      %v1889 = vpack.c.b16 %v1880, %v1879
      %v1890 = vpack.c.b16 %v1882, %v1881
      %1899 = vmatprep.subr.bf16.mxu0 0
      %1900 = vmatpush1.bf16.msra.mxu0 %v1883
      %1901 = vmatprep.subr.bf16.mxu0 0
      %1902 = vmatpush1.bf16.msra.mxu0 %v1884
      %1903 = vmatprep.subr.bf16.mxu0 0
      %1904 = vmatpush1.bf16.msra.mxu0 %v1885
      %1905 = vmatprep.subr.bf16.mxu0 0
      %1906 = vmatpush1.bf16.msra.mxu0 %v1886
      %1907 = vmatprep.subr.bf16.mxu0 0
      %1908 = vmatpush1.bf16.msra.mxu0 %v1887
      %1909 = vmatprep.subr.bf16.mxu0 0
      %1910 = vmatpush1.bf16.msra.mxu0 %v1888
      %1911 = vmatprep.subr.bf16.mxu0 0
      %1912 = vmatpush1.bf16.msra.mxu0 %v1889
      %1913 = vmatprep.subr.bf16.mxu0 0
      %1914 = vmatpush1.bf16.msra.mxu0 %v1890
      %1915 = vmatprep.subr.bf16.mxu0 0
      %1916 = vmatpush1.bf16.msra.mxu0 0
      %1917 = vmatprep.subr.bf16.mxu0 0
      %1918 = vmatpush1.bf16.msra.mxu0 0
      %1919 = vmatprep.subr.bf16.mxu0 0
      %1920 = vmatpush1.bf16.msra.mxu0 0
      %1921 = vmatprep.subr.bf16.mxu0 0
      %1922 = vmatpush1.bf16.msra.mxu0 0
      %1923 = vmatprep.subr.bf16.mxu0 0
      %1924 = vmatpush1.bf16.msra.mxu0 0
      %1925 = vmatprep.subr.bf16.mxu0 0
      %1926 = vmatpush1.bf16.msra.mxu0 0
      %1927 = vmatprep.subr.bf16.mxu0 0
      %1928 = vmatpush1.bf16.msra.mxu0 0
      %1929 = vmatprep.subr.bf16.mxu0 0
      %1930 = vmatpush1.bf16.msra.mxu0 0
      %1931 = vmatprep.mubr.bf16.mxu0 0
      %1932 = vmatmul.mubr.bf16.gmra.mrb[0].mxu0 %v1847
      %v1933 = vpop.f32.mrb[0].mxu0
      %v1934 = vadd.f32 0.0, %v1933
      %v1935 = vpop.f32.mrb[0].mxu0
      %v1936 = vpop.f32.mrb[0].mxu0
      %v1937 = vadd.f32 0.0, %v1936
      %v1938 = vpop.f32.mrb[0].mxu0
      %1939 = vmatprep.mubr.bf16.mxu0 0
      %1940 = vmatmul.mubr.bf16.gmra.mrb[0].mxu0 %v1848
      %v1941 = vpop.f32.mrb[0].mxu0
      %v1942 = vadd.f32 0.0, %v1941
      %v1943 = vpop.f32.mrb[0].mxu0
      %v1944 = vpop.f32.mrb[0].mxu0
      %v1945 = vadd.f32 0.0, %v1944
      %v1946 = vpop.f32.mrb[0].mxu0
      %1947 = vdwg.mxu0
      %v1948 = vadd.f32 %v1814, %v1934
      %v1949 = vadd.f32 %v1815, %v1937
      %v1950 = vadd.f32 %v1816, %v1942
      %v1951 = vadd.f32 %v1817, %v1945
      %s1952 = scalar_lea.vmem %s7, 64
      %v1953 = vld [vmem:[%s1952] sm:$0xf]
      %v1954 = vld [vmem:[%s1952 + $0x4] sm:$0xf]
      %v1955 = vld [vmem:[%s1952 + $0x8] sm:$0xf]
      %v1956 = vld [vmem:[%s1952 + $0xc] sm:$0xf]
      %v1957 = vld [vmem:[%s1952 + $0x10] sm:$0xf]
      %v1958 = vld [vmem:[%s1952 + $0x14] sm:$0xf]
      %v1959 = vld [vmem:[%s1952 + $0x18] sm:$0xf]
      %v1960 = vld [vmem:[%s1952 + $0x1c] sm:$0xf]
      %v1961 = vld [vmem:[%s1952 + $0x20] sm:$0xf]
      %v1962 = vld [vmem:[%s1952 + $0x24] sm:$0xf]
      %v1963 = vld [vmem:[%s1952 + $0x28] sm:$0xf]
      %v1964 = vld [vmem:[%s1952 + $0x2c] sm:$0xf]
      %v1965 = vld [vmem:[%s1952 + $0x30] sm:$0xf]
      %v1966 = vld [vmem:[%s1952 + $0x34] sm:$0xf]
      %v1967 = vld [vmem:[%s1952 + $0x38] sm:$0xf]
      %v1968 = vld [vmem:[%s1952 + $0x3c] sm:$0xf]
      %v1970 = vunpack.c.l.b16 %v1822
      %v1971 = vpack.c.b16 %v1970, %v1970
      %v1973 = vshrl.u32 %v1847, 16
      %v1975 = vshll.u32 %v1847, 16
      %v1977 = vrot.slane %v1975, 1
      %v1978 = vor.u32 %v1973, %v1977
      %v1980 = vshll.u32 %v1848, 16
      %v1982 = vrot.slane %v1980, 1
      %v1983 = vsel %vm667, %v1978, %v1982
      %v1984 = vshrl.u32 %v1848, 16
      %v1986 = vor.u32 %v1984, %v1982
      %v1988 = vshll.u32 %v1971, 16
      %v1990 = vrot.slane %v1988, 1
      %v1991 = vsel %vm667, %v1986, %v1990
      %v2010 = vunpack.c.l.b16 %v1953
      %v2011 = vunpack.c.l.b16 %v1954
      %v2012 = vunpack.c.l.b16 %v1955
      %v2013 = vunpack.c.l.b16 %v1956
      %v2014 = vunpack.c.l.b16 %v1957
      %v2015 = vunpack.c.l.b16 %v1958
      %v2016 = vunpack.c.l.b16 %v1959
      %v2017 = vunpack.c.l.b16 %v1960
      %v2018 = vunpack.c.l.b16 %v1961
      %v2019 = vunpack.c.l.b16 %v1962
      %v2020 = vunpack.c.l.b16 %v1963
      %v2021 = vunpack.c.l.b16 %v1964
      %v2022 = vunpack.c.l.b16 %v1965
      %v2023 = vunpack.c.l.b16 %v1966
      %v2024 = vunpack.c.l.b16 %v1967
      %v2025 = vunpack.c.l.b16 %v1968
      %v2026 = vpack.c.b16 %v2011, %v2010
      %v2027 = vpack.c.b16 %v2013, %v2012
      %v2028 = vpack.c.b16 %v2015, %v2014
      %v2029 = vpack.c.b16 %v2017, %v2016
      %v2030 = vpack.c.b16 %v2019, %v2018
      %v2031 = vpack.c.b16 %v2021, %v2020
      %v2032 = vpack.c.b16 %v2023, %v2022
      %v2033 = vpack.c.b16 %v2025, %v2024
      %2042 = vmatprep.subr.bf16.mxu0 0
      %2043 = vmatpush1.bf16.msra.mxu0 %v2026
      %2044 = vmatprep.subr.bf16.mxu0 0
      %2045 = vmatpush1.bf16.msra.mxu0 %v2027
      %2046 = vmatprep.subr.bf16.mxu0 0
      %2047 = vmatpush1.bf16.msra.mxu0 %v2028
      %2048 = vmatprep.subr.bf16.mxu0 0
      %2049 = vmatpush1.bf16.msra.mxu0 %v2029
      %2050 = vmatprep.subr.bf16.mxu0 0
      %2051 = vmatpush1.bf16.msra.mxu0 %v2030
      %2052 = vmatprep.subr.bf16.mxu0 0
      %2053 = vmatpush1.bf16.msra.mxu0 %v2031
      %2054 = vmatprep.subr.bf16.mxu0 0
      %2055 = vmatpush1.bf16.msra.mxu0 %v2032
      %2056 = vmatprep.subr.bf16.mxu0 0
      %2057 = vmatpush1.bf16.msra.mxu0 %v2033
      %2058 = vmatprep.subr.bf16.mxu0 0
      %2059 = vmatpush1.bf16.msra.mxu0 0
      %2060 = vmatprep.subr.bf16.mxu0 0
      %2061 = vmatpush1.bf16.msra.mxu0 0
      %2062 = vmatprep.subr.bf16.mxu0 0
      %2063 = vmatpush1.bf16.msra.mxu0 0
      %2064 = vmatprep.subr.bf16.mxu0 0
      %2065 = vmatpush1.bf16.msra.mxu0 0
      %2066 = vmatprep.subr.bf16.mxu0 0
      %2067 = vmatpush1.bf16.msra.mxu0 0
      %2068 = vmatprep.subr.bf16.mxu0 0
      %2069 = vmatpush1.bf16.msra.mxu0 0
      %2070 = vmatprep.subr.bf16.mxu0 0
      %2071 = vmatpush1.bf16.msra.mxu0 0
      %2072 = vmatprep.subr.bf16.mxu0 0
      %2073 = vmatpush1.bf16.msra.mxu0 0
      %2074 = vmatprep.mubr.bf16.mxu0 0
      %2075 = vmatmul.mubr.bf16.gmra.mrb[0].mxu0 %v1983
      %v2076 = vpop.f32.mrb[0].mxu0
      %v2077 = vadd.f32 0.0, %v2076
      %v2078 = vpop.f32.mrb[0].mxu0
      %v2079 = vpop.f32.mrb[0].mxu0
      %v2080 = vadd.f32 0.0, %v2079
      %v2081 = vpop.f32.mrb[0].mxu0
      %2082 = vmatprep.mubr.bf16.mxu0 0
      %2083 = vmatmul.mubr.bf16.gmra.mrb[0].mxu0 %v1991
      %v2084 = vpop.f32.mrb[0].mxu0
      %v2085 = vadd.f32 0.0, %v2084
      %v2086 = vpop.f32.mrb[0].mxu0
      %v2087 = vpop.f32.mrb[0].mxu0
      %v2088 = vadd.f32 0.0, %v2087
      %v2089 = vpop.f32.mrb[0].mxu0
      %2090 = vdwg.mxu0
      %v2091 = vadd.f32 %v1948, %v2077
      %v2092 = vadd.f32 %v1949, %v2080
      %v2093 = vadd.f32 %v1950, %v2085
      %v2094 = vadd.f32 %v1951, %v2088
      %s2095 = scalar_lea.vmem %s7, 128
      %v2096 = vld [vmem:[%s2095] sm:$0xf]
      %v2097 = vld [vmem:[%s2095 + $0x4] sm:$0xf]
      %v2098 = vld [vmem:[%s2095 + $0x8] sm:$0xf]
      %v2099 = vld [vmem:[%s2095 + $0xc] sm:$0xf]
      %v2100 = vld [vmem:[%s2095 + $0x10] sm:$0xf]
      %v2101 = vld [vmem:[%s2095 + $0x14] sm:$0xf]
      %v2102 = vld [vmem:[%s2095 + $0x18] sm:$0xf]
      %v2103 = vld [vmem:[%s2095 + $0x1c] sm:$0xf]
      %v2104 = vld [vmem:[%s2095 + $0x20] sm:$0xf]
      %v2105 = vld [vmem:[%s2095 + $0x24] sm:$0xf]
      %v2106 = vld [vmem:[%s2095 + $0x28] sm:$0xf]
      %v2107 = vld [vmem:[%s2095 + $0x2c] sm:$0xf]
      %v2108 = vld [vmem:[%s2095 + $0x30] sm:$0xf]
      %v2109 = vld [vmem:[%s2095 + $0x34] sm:$0xf]
      %v2110 = vld [vmem:[%s2095 + $0x38] sm:$0xf]
      %v2111 = vld [vmem:[%s2095 + $0x3c] sm:$0xf]
      %v2112 = vrot.slane %v1847, 1
      %v2113 = vrot.slane %v1848, 1
      %v2114 = vsel %vm903, %v2112, %v2113
      %v2115 = vrot.slane %v1971, 1
      %v2116 = vsel %vm903, %v2113, %v2115
      %v2135 = vunpack.c.l.b16 %v2096
      %v2136 = vunpack.c.l.b16 %v2097
      %v2137 = vunpack.c.l.b16 %v2098
      %v2138 = vunpack.c.l.b16 %v2099
      %v2139 = vunpack.c.l.b16 %v2100
      %v2140 = vunpack.c.l.b16 %v2101
      %v2141 = vunpack.c.l.b16 %v2102
      %v2142 = vunpack.c.l.b16 %v2103
      %v2143 = vunpack.c.l.b16 %v2104
      %v2144 = vunpack.c.l.b16 %v2105
      %v2145 = vunpack.c.l.b16 %v2106
      %v2146 = vunpack.c.l.b16 %v2107
      %v2147 = vunpack.c.l.b16 %v2108
      %v2148 = vunpack.c.l.b16 %v2109
      %v2149 = vunpack.c.l.b16 %v2110
      %v2150 = vunpack.c.l.b16 %v2111
      %v2151 = vpack.c.b16 %v2136, %v2135
      %v2152 = vpack.c.b16 %v2138, %v2137
      %v2153 = vpack.c.b16 %v2140, %v2139
      %v2154 = vpack.c.b16 %v2142, %v2141
      %v2155 = vpack.c.b16 %v2144, %v2143
      %v2156 = vpack.c.b16 %v2146, %v2145
      %v2157 = vpack.c.b16 %v2148, %v2147
      %v2158 = vpack.c.b16 %v2150, %v2149
      %2167 = vmatprep.subr.bf16.mxu0 0
      %2168 = vmatpush1.bf16.msra.mxu0 %v2151
      %2169 = vmatprep.subr.bf16.mxu0 0
      %2170 = vmatpush1.bf16.msra.mxu0 %v2152
      %2171 = vmatprep.subr.bf16.mxu0 0
      %2172 = vmatpush1.bf16.msra.mxu0 %v2153
      %2173 = vmatprep.subr.bf16.mxu0 0
      %2174 = vmatpush1.bf16.msra.mxu0 %v2154
      %2175 = vmatprep.subr.bf16.mxu0 0
      %2176 = vmatpush1.bf16.msra.mxu0 %v2155
      %2177 = vmatprep.subr.bf16.mxu0 0
      %2178 = vmatpush1.bf16.msra.mxu0 %v2156
      %2179 = vmatprep.subr.bf16.mxu0 0
      %2180 = vmatpush1.bf16.msra.mxu0 %v2157
      %2181 = vmatprep.subr.bf16.mxu0 0
      %2182 = vmatpush1.bf16.msra.mxu0 %v2158
      %2183 = vmatprep.subr.bf16.mxu0 0
      %2184 = vmatpush1.bf16.msra.mxu0 0
      %2185 = vmatprep.subr.bf16.mxu0 0
      %2186 = vmatpush1.bf16.msra.mxu0 0
      %2187 = vmatprep.subr.bf16.mxu0 0
      %2188 = vmatpush1.bf16.msra.mxu0 0
      %2189 = vmatprep.subr.bf16.mxu0 0
      %2190 = vmatpush1.bf16.msra.mxu0 0
      %2191 = vmatprep.subr.bf16.mxu0 0
      %2192 = vmatpush1.bf16.msra.mxu0 0
      %2193 = vmatprep.subr.bf16.mxu0 0
      %2194 = vmatpush1.bf16.msra.mxu0 0
      %2195 = vmatprep.subr.bf16.mxu0 0
      %2196 = vmatpush1.bf16.msra.mxu0 0
      %2197 = vmatprep.subr.bf16.mxu0 0
      %2198 = vmatpush1.bf16.msra.mxu0 0
      %2199 = vmatprep.mubr.bf16.mxu0 0
      %2200 = vmatmul.mubr.bf16.gmra.mrb[0].mxu0 %v2114
      %v2201 = vpop.f32.mrb[0].mxu0
      %v2202 = vadd.f32 0.0, %v2201
      %v2203 = vpop.f32.mrb[0].mxu0
      %v2204 = vpop.f32.mrb[0].mxu0
      %v2205 = vadd.f32 0.0, %v2204
      %v2206 = vpop.f32.mrb[0].mxu0
      %2207 = vmatprep.mubr.bf16.mxu0 0
      %2208 = vmatmul.mubr.bf16.gmra.mrb[0].mxu0 %v2116
      %v2209 = vpop.f32.mrb[0].mxu0
      %v2210 = vadd.f32 0.0, %v2209
      %v2211 = vpop.f32.mrb[0].mxu0
      %v2212 = vpop.f32.mrb[0].mxu0
      %v2213 = vadd.f32 0.0, %v2212
      %v2214 = vpop.f32.mrb[0].mxu0
      %2215 = vdwg.mxu0
      %v2216 = vadd.f32 %v2091, %v2202
      %v2217 = vadd.f32 %v2092, %v2205
      %v2218 = vadd.f32 %v2093, %v2210
      %v2219 = vadd.f32 %v2094, %v2213
      %v2220 = vld [vmem:[%s585] sm:$0xf]
      %v2221 = vld [vmem:[%s585 + $0x4] sm:$0xf]
      %v2222 = vld [vmem:[%s585 + $0x8] sm:$0xf]
      %v2223 = vld [vmem:[%s585 + $0xc] sm:$0xf]
      %v2224 = vld [vmem:[%s585 + $0x10] sm:$0x1]
      %s2225 = scalar_lea.vmem %s7, 192
      %v2226 = vld [vmem:[%s2225] sm:$0xf]
      %v2227 = vld [vmem:[%s2225 + $0x4] sm:$0xf]
      %v2228 = vld [vmem:[%s2225 + $0x8] sm:$0xf]
      %v2229 = vld [vmem:[%s2225 + $0xc] sm:$0xf]
      %v2230 = vld [vmem:[%s2225 + $0x10] sm:$0xf]
      %v2231 = vld [vmem:[%s2225 + $0x14] sm:$0xf]
      %v2232 = vld [vmem:[%s2225 + $0x18] sm:$0xf]
      %v2233 = vld [vmem:[%s2225 + $0x1c] sm:$0xf]
      %v2234 = vld [vmem:[%s2225 + $0x20] sm:$0xf]
      %v2235 = vld [vmem:[%s2225 + $0x24] sm:$0xf]
      %v2236 = vld [vmem:[%s2225 + $0x28] sm:$0xf]
      %v2237 = vld [vmem:[%s2225 + $0x2c] sm:$0xf]
      %v2238 = vld [vmem:[%s2225 + $0x30] sm:$0xf]
      %v2239 = vld [vmem:[%s2225 + $0x34] sm:$0xf]
      %v2240 = vld [vmem:[%s2225 + $0x38] sm:$0xf]
      %v2241 = vld [vmem:[%s2225 + $0x3c] sm:$0xf]
      %v2246 = vunpack.c.l.b16 %v2220
      %v2247 = vunpack.c.l.b16 %v2221
      %v2248 = vunpack.c.l.b16 %v2222
      %v2249 = vunpack.c.l.b16 %v2223
      %v2250 = vpack.c.b16 %v2247, %v2246
      %v2251 = vpack.c.b16 %v2249, %v2248
      %v2270 = vunpack.c.l.b16 %v2226
      %v2271 = vunpack.c.l.b16 %v2227
      %v2272 = vunpack.c.l.b16 %v2228
      %v2273 = vunpack.c.l.b16 %v2229
      %v2274 = vunpack.c.l.b16 %v2230
      %v2275 = vunpack.c.l.b16 %v2231
      %v2276 = vunpack.c.l.b16 %v2232
      %v2277 = vunpack.c.l.b16 %v2233
      %v2278 = vunpack.c.l.b16 %v2234
      %v2279 = vunpack.c.l.b16 %v2235
      %v2280 = vunpack.c.l.b16 %v2236
      %v2281 = vunpack.c.l.b16 %v2237
      %v2282 = vunpack.c.l.b16 %v2238
      %v2283 = vunpack.c.l.b16 %v2239
      %v2284 = vunpack.c.l.b16 %v2240
      %v2285 = vunpack.c.l.b16 %v2241
      %v2286 = vpack.c.b16 %v2271, %v2270
      %v2287 = vpack.c.b16 %v2273, %v2272
      %v2288 = vpack.c.b16 %v2275, %v2274
      %v2289 = vpack.c.b16 %v2277, %v2276
      %v2290 = vpack.c.b16 %v2279, %v2278
      %v2291 = vpack.c.b16 %v2281, %v2280
      %v2292 = vpack.c.b16 %v2283, %v2282
      %v2293 = vpack.c.b16 %v2285, %v2284
      %2302 = vmatprep.subr.bf16.mxu0 0
      %2303 = vmatpush1.bf16.msra.mxu0 %v2286
      %2304 = vmatprep.subr.bf16.mxu0 0
      %2305 = vmatpush1.bf16.msra.mxu0 %v2287
      %2306 = vmatprep.subr.bf16.mxu0 0
      %2307 = vmatpush1.bf16.msra.mxu0 %v2288
      %2308 = vmatprep.subr.bf16.mxu0 0
      %2309 = vmatpush1.bf16.msra.mxu0 %v2289
      %2310 = vmatprep.subr.bf16.mxu0 0
      %2311 = vmatpush1.bf16.msra.mxu0 %v2290
      %2312 = vmatprep.subr.bf16.mxu0 0
      %2313 = vmatpush1.bf16.msra.mxu0 %v2291
      %2314 = vmatprep.subr.bf16.mxu0 0
      %2315 = vmatpush1.bf16.msra.mxu0 %v2292
      %2316 = vmatprep.subr.bf16.mxu0 0
      %2317 = vmatpush1.bf16.msra.mxu0 %v2293
      %2318 = vmatprep.subr.bf16.mxu0 0
      %2319 = vmatpush1.bf16.msra.mxu0 0
      %2320 = vmatprep.subr.bf16.mxu0 0
      %2321 = vmatpush1.bf16.msra.mxu0 0
      %2322 = vmatprep.subr.bf16.mxu0 0
      %2323 = vmatpush1.bf16.msra.mxu0 0
      %2324 = vmatprep.subr.bf16.mxu0 0
      %2325 = vmatpush1.bf16.msra.mxu0 0
      %2326 = vmatprep.subr.bf16.mxu0 0
      %2327 = vmatpush1.bf16.msra.mxu0 0
      %2328 = vmatprep.subr.bf16.mxu0 0
      %2329 = vmatpush1.bf16.msra.mxu0 0
      %2330 = vmatprep.subr.bf16.mxu0 0
      %2331 = vmatpush1.bf16.msra.mxu0 0
      %2332 = vmatprep.subr.bf16.mxu0 0
      %2333 = vmatpush1.bf16.msra.mxu0 0
      %2334 = vmatprep.mubr.bf16.mxu0 0
      %2335 = vmatmul.mubr.bf16.gmra.mrb[0].mxu0 %v2250
      %v2336 = vpop.f32.mrb[0].mxu0
      %v2337 = vadd.f32 0.0, %v2336
      %v2338 = vpop.f32.mrb[0].mxu0
      %v2339 = vpop.f32.mrb[0].mxu0
      %v2340 = vadd.f32 0.0, %v2339
      %v2341 = vpop.f32.mrb[0].mxu0
      %2342 = vmatprep.mubr.bf16.mxu0 0
      %2343 = vmatmul.mubr.bf16.gmra.mrb[0].mxu0 %v2251
      %v2344 = vpop.f32.mrb[0].mxu0
      %v2345 = vadd.f32 0.0, %v2344
      %v2346 = vpop.f32.mrb[0].mxu0
      %v2347 = vpop.f32.mrb[0].mxu0
      %v2348 = vadd.f32 0.0, %v2347
      %v2349 = vpop.f32.mrb[0].mxu0
      %2350 = vdwg.mxu0
      %v2351 = vadd.f32 %v2216, %v2337
      %v2352 = vadd.f32 %v2217, %v2340
      %v2353 = vadd.f32 %v2218, %v2345
      %v2354 = vadd.f32 %v2219, %v2348
      %s2355 = scalar_lea.vmem %s7, 256
      %v2356 = vld [vmem:[%s2355] sm:$0xf]
      %v2357 = vld [vmem:[%s2355 + $0x4] sm:$0xf]
      %v2358 = vld [vmem:[%s2355 + $0x8] sm:$0xf]
      %v2359 = vld [vmem:[%s2355 + $0xc] sm:$0xf]
      %v2360 = vld [vmem:[%s2355 + $0x10] sm:$0xf]
      %v2361 = vld [vmem:[%s2355 + $0x14] sm:$0xf]
      %v2362 = vld [vmem:[%s2355 + $0x18] sm:$0xf]
      %v2363 = vld [vmem:[%s2355 + $0x1c] sm:$0xf]
      %v2364 = vld [vmem:[%s2355 + $0x20] sm:$0xf]
      %v2365 = vld [vmem:[%s2355 + $0x24] sm:$0xf]
      %v2366 = vld [vmem:[%s2355 + $0x28] sm:$0xf]
      %v2367 = vld [vmem:[%s2355 + $0x2c] sm:$0xf]
      %v2368 = vld [vmem:[%s2355 + $0x30] sm:$0xf]
      %v2369 = vld [vmem:[%s2355 + $0x34] sm:$0xf]
      %v2370 = vld [vmem:[%s2355 + $0x38] sm:$0xf]
      %v2371 = vld [vmem:[%s2355 + $0x3c] sm:$0xf]
      %v2373 = vunpack.c.l.b16 %v2224
      %v2374 = vpack.c.b16 %v2373, %v2373
      %v2376 = vshrl.u32 %v2250, 16
      %v2378 = vshll.u32 %v2250, 16
      %v2380 = vrot.slane %v2378, 1
      %v2381 = vor.u32 %v2376, %v2380
      %v2383 = vshll.u32 %v2251, 16
      %v2385 = vrot.slane %v2383, 1
      %v2386 = vsel %vm667, %v2381, %v2385
      %v2387 = vshrl.u32 %v2251, 16
      %v2389 = vor.u32 %v2387, %v2385
      %v2391 = vshll.u32 %v2374, 16
      %v2393 = vrot.slane %v2391, 1
      %v2394 = vsel %vm667, %v2389, %v2393
      %v2413 = vunpack.c.l.b16 %v2356
      %v2414 = vunpack.c.l.b16 %v2357
      %v2415 = vunpack.c.l.b16 %v2358
      %v2416 = vunpack.c.l.b16 %v2359
      %v2417 = vunpack.c.l.b16 %v2360
      %v2418 = vunpack.c.l.b16 %v2361
      %v2419 = vunpack.c.l.b16 %v2362
      %v2420 = vunpack.c.l.b16 %v2363
      %v2421 = vunpack.c.l.b16 %v2364
      %v2422 = vunpack.c.l.b16 %v2365
      %v2423 = vunpack.c.l.b16 %v2366
      %v2424 = vunpack.c.l.b16 %v2367
      %v2425 = vunpack.c.l.b16 %v2368
      %v2426 = vunpack.c.l.b16 %v2369
      %v2427 = vunpack.c.l.b16 %v2370
      %v2428 = vunpack.c.l.b16 %v2371
      %v2429 = vpack.c.b16 %v2414, %v2413
      %v2430 = vpack.c.b16 %v2416, %v2415
      %v2431 = vpack.c.b16 %v2418, %v2417
      %v2432 = vpack.c.b16 %v2420, %v2419
      %v2433 = vpack.c.b16 %v2422, %v2421
      %v2434 = vpack.c.b16 %v2424, %v2423
      %v2435 = vpack.c.b16 %v2426, %v2425
      %v2436 = vpack.c.b16 %v2428, %v2427
      %2445 = vmatprep.subr.bf16.mxu0 0
      %2446 = vmatpush1.bf16.msra.mxu0 %v2429
      %2447 = vmatprep.subr.bf16.mxu0 0
      %2448 = vmatpush1.bf16.msra.mxu0 %v2430
      %2449 = vmatprep.subr.bf16.mxu0 0
      %2450 = vmatpush1.bf16.msra.mxu0 %v2431
      %2451 = vmatprep.subr.bf16.mxu0 0
      %2452 = vmatpush1.bf16.msra.mxu0 %v2432
      %2453 = vmatprep.subr.bf16.mxu0 0
      %2454 = vmatpush1.bf16.msra.mxu0 %v2433
      %2455 = vmatprep.subr.bf16.mxu0 0
      %2456 = vmatpush1.bf16.msra.mxu0 %v2434
      %2457 = vmatprep.subr.bf16.mxu0 0
      %2458 = vmatpush1.bf16.msra.mxu0 %v2435
      %2459 = vmatprep.subr.bf16.mxu0 0
      %2460 = vmatpush1.bf16.msra.mxu0 %v2436
      %2461 = vmatprep.subr.bf16.mxu0 0
      %2462 = vmatpush1.bf16.msra.mxu0 0
      %2463 = vmatprep.subr.bf16.mxu0 0
      %2464 = vmatpush1.bf16.msra.mxu0 0
      %2465 = vmatprep.subr.bf16.mxu0 0
      %2466 = vmatpush1.bf16.msra.mxu0 0
      %2467 = vmatprep.subr.bf16.mxu0 0
      %2468 = vmatpush1.bf16.msra.mxu0 0
      %2469 = vmatprep.subr.bf16.mxu0 0
      %2470 = vmatpush1.bf16.msra.mxu0 0
      %2471 = vmatprep.subr.bf16.mxu0 0
      %2472 = vmatpush1.bf16.msra.mxu0 0
      %2473 = vmatprep.subr.bf16.mxu0 0
      %2474 = vmatpush1.bf16.msra.mxu0 0
      %2475 = vmatprep.subr.bf16.mxu0 0
      %2476 = vmatpush1.bf16.msra.mxu0 0
      %2477 = vmatprep.mubr.bf16.mxu0 0
      %2478 = vmatmul.mubr.bf16.gmra.mrb[0].mxu0 %v2386
      %v2479 = vpop.f32.mrb[0].mxu0
      %v2480 = vadd.f32 0.0, %v2479
      %v2481 = vpop.f32.mrb[0].mxu0
      %v2482 = vpop.f32.mrb[0].mxu0
      %v2483 = vadd.f32 0.0, %v2482
      %v2484 = vpop.f32.mrb[0].mxu0
      %2485 = vmatprep.mubr.bf16.mxu0 0
      %2486 = vmatmul.mubr.bf16.gmra.mrb[0].mxu0 %v2394
      %v2487 = vpop.f32.mrb[0].mxu0
      %v2488 = vadd.f32 0.0, %v2487
      %v2489 = vpop.f32.mrb[0].mxu0
      %v2490 = vpop.f32.mrb[0].mxu0
      %v2491 = vadd.f32 0.0, %v2490
      %v2492 = vpop.f32.mrb[0].mxu0
      %2493 = vdwg.mxu0
      %v2494 = vadd.f32 %v2351, %v2480
      %v2495 = vadd.f32 %v2352, %v2483
      %v2496 = vadd.f32 %v2353, %v2488
      %v2497 = vadd.f32 %v2354, %v2491
      %s2498 = scalar_lea.vmem %s7, 320
      %v2499 = vld [vmem:[%s2498] sm:$0xf]
      %v2500 = vld [vmem:[%s2498 + $0x4] sm:$0xf]
      %v2501 = vld [vmem:[%s2498 + $0x8] sm:$0xf]
      %v2502 = vld [vmem:[%s2498 + $0xc] sm:$0xf]
      %v2503 = vld [vmem:[%s2498 + $0x10] sm:$0xf]
      %v2504 = vld [vmem:[%s2498 + $0x14] sm:$0xf]
      %v2505 = vld [vmem:[%s2498 + $0x18] sm:$0xf]
      %v2506 = vld [vmem:[%s2498 + $0x1c] sm:$0xf]
      %v2507 = vld [vmem:[%s2498 + $0x20] sm:$0xf]
      %v2508 = vld [vmem:[%s2498 + $0x24] sm:$0xf]
      %v2509 = vld [vmem:[%s2498 + $0x28] sm:$0xf]
      %v2510 = vld [vmem:[%s2498 + $0x2c] sm:$0xf]
      %v2511 = vld [vmem:[%s2498 + $0x30] sm:$0xf]
      %v2512 = vld [vmem:[%s2498 + $0x34] sm:$0xf]
      %v2513 = vld [vmem:[%s2498 + $0x38] sm:$0xf]
      %v2514 = vld [vmem:[%s2498 + $0x3c] sm:$0xf]
      %v2515 = vrot.slane %v2250, 1
      %v2516 = vrot.slane %v2251, 1
      %v2517 = vsel %vm903, %v2515, %v2516
      %v2518 = vrot.slane %v2374, 1
      %v2519 = vsel %vm903, %v2516, %v2518
      %v2538 = vunpack.c.l.b16 %v2499
      %v2539 = vunpack.c.l.b16 %v2500
      %v2540 = vunpack.c.l.b16 %v2501
      %v2541 = vunpack.c.l.b16 %v2502
      %v2542 = vunpack.c.l.b16 %v2503
      %v2543 = vunpack.c.l.b16 %v2504
      %v2544 = vunpack.c.l.b16 %v2505
      %v2545 = vunpack.c.l.b16 %v2506
      %v2546 = vunpack.c.l.b16 %v2507
      %v2547 = vunpack.c.l.b16 %v2508
      %v2548 = vunpack.c.l.b16 %v2509
      %v2549 = vunpack.c.l.b16 %v2510
      %v2550 = vunpack.c.l.b16 %v2511
      %v2551 = vunpack.c.l.b16 %v2512
      %v2552 = vunpack.c.l.b16 %v2513
      %v2553 = vunpack.c.l.b16 %v2514
      %v2554 = vpack.c.b16 %v2539, %v2538
      %v2555 = vpack.c.b16 %v2541, %v2540
      %v2556 = vpack.c.b16 %v2543, %v2542
      %v2557 = vpack.c.b16 %v2545, %v2544
      %v2558 = vpack.c.b16 %v2547, %v2546
      %v2559 = vpack.c.b16 %v2549, %v2548
      %v2560 = vpack.c.b16 %v2551, %v2550
      %v2561 = vpack.c.b16 %v2553, %v2552
      %2570 = vmatprep.subr.bf16.mxu0 0
      %2571 = vmatpush1.bf16.msra.mxu0 %v2554
      %2572 = vmatprep.subr.bf16.mxu0 0
      %2573 = vmatpush1.bf16.msra.mxu0 %v2555
      %2574 = vmatprep.subr.bf16.mxu0 0
      %2575 = vmatpush1.bf16.msra.mxu0 %v2556
      %2576 = vmatprep.subr.bf16.mxu0 0
      %2577 = vmatpush1.bf16.msra.mxu0 %v2557
      %2578 = vmatprep.subr.bf16.mxu0 0
      %2579 = vmatpush1.bf16.msra.mxu0 %v2558
      %2580 = vmatprep.subr.bf16.mxu0 0
      %2581 = vmatpush1.bf16.msra.mxu0 %v2559
      %2582 = vmatprep.subr.bf16.mxu0 0
      %2583 = vmatpush1.bf16.msra.mxu0 %v2560
      %2584 = vmatprep.subr.bf16.mxu0 0
      %2585 = vmatpush1.bf16.msra.mxu0 %v2561
      %2586 = vmatprep.subr.bf16.mxu0 0
      %2587 = vmatpush1.bf16.msra.mxu0 0
      %2588 = vmatprep.subr.bf16.mxu0 0
      %2589 = vmatpush1.bf16.msra.mxu0 0
      %2590 = vmatprep.subr.bf16.mxu0 0
      %2591 = vmatpush1.bf16.msra.mxu0 0
      %2592 = vmatprep.subr.bf16.mxu0 0
      %2593 = vmatpush1.bf16.msra.mxu0 0
      %2594 = vmatprep.subr.bf16.mxu0 0
      %2595 = vmatpush1.bf16.msra.mxu0 0
      %2596 = vmatprep.subr.bf16.mxu0 0
      %2597 = vmatpush1.bf16.msra.mxu0 0
      %2598 = vmatprep.subr.bf16.mxu0 0
      %2599 = vmatpush1.bf16.msra.mxu0 0
      %2600 = vmatprep.subr.bf16.mxu0 0
      %2601 = vmatpush1.bf16.msra.mxu0 0
      %2602 = vmatprep.mubr.bf16.mxu0 0
      %2603 = vmatmul.mubr.bf16.gmra.mrb[0].mxu0 %v2517
      %v2604 = vpop.f32.mrb[0].mxu0
      %v2605 = vadd.f32 0.0, %v2604
      %v2606 = vpop.f32.mrb[0].mxu0
      %v2607 = vpop.f32.mrb[0].mxu0
      %v2608 = vadd.f32 0.0, %v2607
      %v2609 = vpop.f32.mrb[0].mxu0
      %2610 = vmatprep.mubr.bf16.mxu0 0
      %2611 = vmatmul.mubr.bf16.gmra.mrb[0].mxu0 %v2519
      %v2612 = vpop.f32.mrb[0].mxu0
      %v2613 = vadd.f32 0.0, %v2612
      %v2614 = vpop.f32.mrb[0].mxu0
      %v2615 = vpop.f32.mrb[0].mxu0
      %v2616 = vadd.f32 0.0, %v2615
      %v2617 = vpop.f32.mrb[0].mxu0
      %2618 = vdwg.mxu0
      %v2619 = vadd.f32 %v2494, %v2605
      %v2620 = vadd.f32 %v2495, %v2608
      %v2621 = vadd.f32 %v2496, %v2613
      %v2622 = vadd.f32 %v2497, %v2616
      %v2623 = vld [vmem:[%s596] sm:$0xf]
      %v2624 = vld [vmem:[%s596 + $0x4] sm:$0xf]
      %v2625 = vld [vmem:[%s596 + $0x8] sm:$0xf]
      %v2626 = vld [vmem:[%s596 + $0xc] sm:$0xf]
      %v2627 = vld [vmem:[%s596 + $0x10] sm:$0x1]
      %s2628 = scalar_lea.vmem %s7, 384
      %v2629 = vld [vmem:[%s2628] sm:$0xf]
      %v2630 = vld [vmem:[%s2628 + $0x4] sm:$0xf]
      %v2631 = vld [vmem:[%s2628 + $0x8] sm:$0xf]
      %v2632 = vld [vmem:[%s2628 + $0xc] sm:$0xf]
      %v2633 = vld [vmem:[%s2628 + $0x10] sm:$0xf]
      %v2634 = vld [vmem:[%s2628 + $0x14] sm:$0xf]
      %v2635 = vld [vmem:[%s2628 + $0x18] sm:$0xf]
      %v2636 = vld [vmem:[%s2628 + $0x1c] sm:$0xf]
      %v2637 = vld [vmem:[%s2628 + $0x20] sm:$0xf]
      %v2638 = vld [vmem:[%s2628 + $0x24] sm:$0xf]
      %v2639 = vld [vmem:[%s2628 + $0x28] sm:$0xf]
      %v2640 = vld [vmem:[%s2628 + $0x2c] sm:$0xf]
      %v2641 = vld [vmem:[%s2628 + $0x30] sm:$0xf]
      %v2642 = vld [vmem:[%s2628 + $0x34] sm:$0xf]
      %v2643 = vld [vmem:[%s2628 + $0x38] sm:$0xf]
      %v2644 = vld [vmem:[%s2628 + $0x3c] sm:$0xf]
      %v2649 = vunpack.c.l.b16 %v2623
      %v2650 = vunpack.c.l.b16 %v2624
      %v2651 = vunpack.c.l.b16 %v2625
      %v2652 = vunpack.c.l.b16 %v2626
      %v2653 = vpack.c.b16 %v2650, %v2649
      %v2654 = vpack.c.b16 %v2652, %v2651
      %v2673 = vunpack.c.l.b16 %v2629
      %v2674 = vunpack.c.l.b16 %v2630
      %v2675 = vunpack.c.l.b16 %v2631
      %v2676 = vunpack.c.l.b16 %v2632
      %v2677 = vunpack.c.l.b16 %v2633
      %v2678 = vunpack.c.l.b16 %v2634
      %v2679 = vunpack.c.l.b16 %v2635
      %v2680 = vunpack.c.l.b16 %v2636
      %v2681 = vunpack.c.l.b16 %v2637
      %v2682 = vunpack.c.l.b16 %v2638
      %v2683 = vunpack.c.l.b16 %v2639
      %v2684 = vunpack.c.l.b16 %v2640
      %v2685 = vunpack.c.l.b16 %v2641
      %v2686 = vunpack.c.l.b16 %v2642
      %v2687 = vunpack.c.l.b16 %v2643
      %v2688 = vunpack.c.l.b16 %v2644
      %v2689 = vpack.c.b16 %v2674, %v2673
      %v2690 = vpack.c.b16 %v2676, %v2675
      %v2691 = vpack.c.b16 %v2678, %v2677
      %v2692 = vpack.c.b16 %v2680, %v2679
      %v2693 = vpack.c.b16 %v2682, %v2681
      %v2694 = vpack.c.b16 %v2684, %v2683
      %v2695 = vpack.c.b16 %v2686, %v2685
      %v2696 = vpack.c.b16 %v2688, %v2687
      %2705 = vmatprep.subr.bf16.mxu0 0
      %2706 = vmatpush1.bf16.msra.mxu0 %v2689
      %2707 = vmatprep.subr.bf16.mxu0 0
      %2708 = vmatpush1.bf16.msra.mxu0 %v2690
      %2709 = vmatprep.subr.bf16.mxu0 0
      %2710 = vmatpush1.bf16.msra.mxu0 %v2691
      %2711 = vmatprep.subr.bf16.mxu0 0
      %2712 = vmatpush1.bf16.msra.mxu0 %v2692
      %2713 = vmatprep.subr.bf16.mxu0 0
      %2714 = vmatpush1.bf16.msra.mxu0 %v2693
      %2715 = vmatprep.subr.bf16.mxu0 0
      %2716 = vmatpush1.bf16.msra.mxu0 %v2694
      %2717 = vmatprep.subr.bf16.mxu0 0
      %2718 = vmatpush1.bf16.msra.mxu0 %v2695
      %2719 = vmatprep.subr.bf16.mxu0 0
      %2720 = vmatpush1.bf16.msra.mxu0 %v2696
      %2721 = vmatprep.subr.bf16.mxu0 0
      %2722 = vmatpush1.bf16.msra.mxu0 0
      %2723 = vmatprep.subr.bf16.mxu0 0
      %2724 = vmatpush1.bf16.msra.mxu0 0
      %2725 = vmatprep.subr.bf16.mxu0 0
      %2726 = vmatpush1.bf16.msra.mxu0 0
      %2727 = vmatprep.subr.bf16.mxu0 0
      %2728 = vmatpush1.bf16.msra.mxu0 0
      %2729 = vmatprep.subr.bf16.mxu0 0
      %2730 = vmatpush1.bf16.msra.mxu0 0
      %2731 = vmatprep.subr.bf16.mxu0 0
      %2732 = vmatpush1.bf16.msra.mxu0 0
      %2733 = vmatprep.subr.bf16.mxu0 0
      %2734 = vmatpush1.bf16.msra.mxu0 0
      %2735 = vmatprep.subr.bf16.mxu0 0
      %2736 = vmatpush1.bf16.msra.mxu0 0
      %2737 = vmatprep.mubr.bf16.mxu0 0
      %2738 = vmatmul.mubr.bf16.gmra.mrb[0].mxu0 %v2653
      %v2739 = vpop.f32.mrb[0].mxu0
      %v2740 = vadd.f32 0.0, %v2739
      %v2741 = vpop.f32.mrb[0].mxu0
      %v2742 = vpop.f32.mrb[0].mxu0
      %v2743 = vadd.f32 0.0, %v2742
      %v2744 = vpop.f32.mrb[0].mxu0
      %2745 = vmatprep.mubr.bf16.mxu0 0
      %2746 = vmatmul.mubr.bf16.gmra.mrb[0].mxu0 %v2654
      %v2747 = vpop.f32.mrb[0].mxu0
      %v2748 = vadd.f32 0.0, %v2747
      %v2749 = vpop.f32.mrb[0].mxu0
      %v2750 = vpop.f32.mrb[0].mxu0
      %v2751 = vadd.f32 0.0, %v2750
      %v2752 = vpop.f32.mrb[0].mxu0
      %2753 = vdwg.mxu0
      %v2754 = vadd.f32 %v2619, %v2740
      %v2755 = vadd.f32 %v2620, %v2743
      %v2756 = vadd.f32 %v2621, %v2748
      %v2757 = vadd.f32 %v2622, %v2751
      %s2758 = scalar_lea.vmem %s7, 448
      %v2759 = vld [vmem:[%s2758] sm:$0xf]
      %v2760 = vld [vmem:[%s2758 + $0x4] sm:$0xf]
      %v2761 = vld [vmem:[%s2758 + $0x8] sm:$0xf]
      %v2762 = vld [vmem:[%s2758 + $0xc] sm:$0xf]
      %v2763 = vld [vmem:[%s2758 + $0x10] sm:$0xf]
      %v2764 = vld [vmem:[%s2758 + $0x14] sm:$0xf]
      %v2765 = vld [vmem:[%s2758 + $0x18] sm:$0xf]
      %v2766 = vld [vmem:[%s2758 + $0x1c] sm:$0xf]
      %v2767 = vld [vmem:[%s2758 + $0x20] sm:$0xf]
      %v2768 = vld [vmem:[%s2758 + $0x24] sm:$0xf]
      %v2769 = vld [vmem:[%s2758 + $0x28] sm:$0xf]
      %v2770 = vld [vmem:[%s2758 + $0x2c] sm:$0xf]
      %v2771 = vld [vmem:[%s2758 + $0x30] sm:$0xf]
      %v2772 = vld [vmem:[%s2758 + $0x34] sm:$0xf]
      %v2773 = vld [vmem:[%s2758 + $0x38] sm:$0xf]
      %v2774 = vld [vmem:[%s2758 + $0x3c] sm:$0xf]
      %v2776 = vunpack.c.l.b16 %v2627
      %v2777 = vpack.c.b16 %v2776, %v2776
      %v2779 = vshrl.u32 %v2653, 16
      %v2781 = vshll.u32 %v2653, 16
      %v2783 = vrot.slane %v2781, 1
      %v2784 = vor.u32 %v2779, %v2783
      %v2786 = vshll.u32 %v2654, 16
      %v2788 = vrot.slane %v2786, 1
      %v2789 = vsel %vm667, %v2784, %v2788
      %v2790 = vshrl.u32 %v2654, 16
      %v2792 = vor.u32 %v2790, %v2788
      %v2794 = vshll.u32 %v2777, 16
      %v2796 = vrot.slane %v2794, 1
      %v2797 = vsel %vm667, %v2792, %v2796
      %v2816 = vunpack.c.l.b16 %v2759
      %v2817 = vunpack.c.l.b16 %v2760
      %v2818 = vunpack.c.l.b16 %v2761
      %v2819 = vunpack.c.l.b16 %v2762
      %v2820 = vunpack.c.l.b16 %v2763
      %v2821 = vunpack.c.l.b16 %v2764
      %v2822 = vunpack.c.l.b16 %v2765
      %v2823 = vunpack.c.l.b16 %v2766
      %v2824 = vunpack.c.l.b16 %v2767
      %v2825 = vunpack.c.l.b16 %v2768
      %v2826 = vunpack.c.l.b16 %v2769
      %v2827 = vunpack.c.l.b16 %v2770
      %v2828 = vunpack.c.l.b16 %v2771
      %v2829 = vunpack.c.l.b16 %v2772
      %v2830 = vunpack.c.l.b16 %v2773
      %v2831 = vunpack.c.l.b16 %v2774
      %v2832 = vpack.c.b16 %v2817, %v2816
      %v2833 = vpack.c.b16 %v2819, %v2818
      %v2834 = vpack.c.b16 %v2821, %v2820
      %v2835 = vpack.c.b16 %v2823, %v2822
      %v2836 = vpack.c.b16 %v2825, %v2824
      %v2837 = vpack.c.b16 %v2827, %v2826
      %v2838 = vpack.c.b16 %v2829, %v2828
      %v2839 = vpack.c.b16 %v2831, %v2830
      %2848 = vmatprep.subr.bf16.mxu0 0
      %2849 = vmatpush1.bf16.msra.mxu0 %v2832
      %2850 = vmatprep.subr.bf16.mxu0 0
      %2851 = vmatpush1.bf16.msra.mxu0 %v2833
      %2852 = vmatprep.subr.bf16.mxu0 0
      %2853 = vmatpush1.bf16.msra.mxu0 %v2834
      %2854 = vmatprep.subr.bf16.mxu0 0
      %2855 = vmatpush1.bf16.msra.mxu0 %v2835
      %2856 = vmatprep.subr.bf16.mxu0 0
      %2857 = vmatpush1.bf16.msra.mxu0 %v2836
      %2858 = vmatprep.subr.bf16.mxu0 0
      %2859 = vmatpush1.bf16.msra.mxu0 %v2837
      %2860 = vmatprep.subr.bf16.mxu0 0
      %2861 = vmatpush1.bf16.msra.mxu0 %v2838
      %2862 = vmatprep.subr.bf16.mxu0 0
      %2863 = vmatpush1.bf16.msra.mxu0 %v2839
      %2864 = vmatprep.subr.bf16.mxu0 0
      %2865 = vmatpush1.bf16.msra.mxu0 0
      %2866 = vmatprep.subr.bf16.mxu0 0
      %2867 = vmatpush1.bf16.msra.mxu0 0
      %2868 = vmatprep.subr.bf16.mxu0 0
      %2869 = vmatpush1.bf16.msra.mxu0 0
      %2870 = vmatprep.subr.bf16.mxu0 0
      %2871 = vmatpush1.bf16.msra.mxu0 0
      %2872 = vmatprep.subr.bf16.mxu0 0
      %2873 = vmatpush1.bf16.msra.mxu0 0
      %2874 = vmatprep.subr.bf16.mxu0 0
      %2875 = vmatpush1.bf16.msra.mxu0 0
      %2876 = vmatprep.subr.bf16.mxu0 0
      %2877 = vmatpush1.bf16.msra.mxu0 0
      %2878 = vmatprep.subr.bf16.mxu0 0
      %2879 = vmatpush1.bf16.msra.mxu0 0
      %2880 = vmatprep.mubr.bf16.mxu0 0
      %2881 = vmatmul.mubr.bf16.gmra.mrb[0].mxu0 %v2789
      %v2882 = vpop.f32.mrb[0].mxu0
      %v2883 = vadd.f32 0.0, %v2882
      %v2884 = vpop.f32.mrb[0].mxu0
      %v2885 = vpop.f32.mrb[0].mxu0
      %v2886 = vadd.f32 0.0, %v2885
      %v2887 = vpop.f32.mrb[0].mxu0
      %2888 = vmatprep.mubr.bf16.mxu0 0
      %2889 = vmatmul.mubr.bf16.gmra.mrb[0].mxu0 %v2797
      %v2890 = vpop.f32.mrb[0].mxu0
      %v2891 = vadd.f32 0.0, %v2890
      %v2892 = vpop.f32.mrb[0].mxu0
      %v2893 = vpop.f32.mrb[0].mxu0
      %v2894 = vadd.f32 0.0, %v2893
      %v2895 = vpop.f32.mrb[0].mxu0
      %2896 = vdwg.mxu0
      %v2897 = vadd.f32 %v2754, %v2883
      %v2898 = vadd.f32 %v2755, %v2886
      %v2899 = vadd.f32 %v2756, %v2891
      %v2900 = vadd.f32 %v2757, %v2894
      %s2901 = scalar_lea.vmem %s7, 512
      %v2902 = vld [vmem:[%s2901] sm:$0xf]
      %v2903 = vld [vmem:[%s2901 + $0x4] sm:$0xf]
      %v2904 = vld [vmem:[%s2901 + $0x8] sm:$0xf]
      %v2905 = vld [vmem:[%s2901 + $0xc] sm:$0xf]
      %v2906 = vld [vmem:[%s2901 + $0x10] sm:$0xf]
      %v2907 = vld [vmem:[%s2901 + $0x14] sm:$0xf]
      %v2908 = vld [vmem:[%s2901 + $0x18] sm:$0xf]
      %v2909 = vld [vmem:[%s2901 + $0x1c] sm:$0xf]
      %v2910 = vld [vmem:[%s2901 + $0x20] sm:$0xf]
      %v2911 = vld [vmem:[%s2901 + $0x24] sm:$0xf]
      %v2912 = vld [vmem:[%s2901 + $0x28] sm:$0xf]
      %v2913 = vld [vmem:[%s2901 + $0x2c] sm:$0xf]
      %v2914 = vld [vmem:[%s2901 + $0x30] sm:$0xf]
      %v2915 = vld [vmem:[%s2901 + $0x34] sm:$0xf]
      %v2916 = vld [vmem:[%s2901 + $0x38] sm:$0xf]
      %v2917 = vld [vmem:[%s2901 + $0x3c] sm:$0xf]
      %v2918 = vrot.slane %v2653, 1
      %v2919 = vrot.slane %v2654, 1
      %v2920 = vsel %vm903, %v2918, %v2919
      %v2921 = vrot.slane %v2777, 1
      %v2922 = vsel %vm903, %v2919, %v2921
      %v2941 = vunpack.c.l.b16 %v2902
      %v2942 = vunpack.c.l.b16 %v2903
      %v2943 = vunpack.c.l.b16 %v2904
      %v2944 = vunpack.c.l.b16 %v2905
      %v2945 = vunpack.c.l.b16 %v2906
      %v2946 = vunpack.c.l.b16 %v2907
      %v2947 = vunpack.c.l.b16 %v2908
      %v2948 = vunpack.c.l.b16 %v2909
      %v2949 = vunpack.c.l.b16 %v2910
      %v2950 = vunpack.c.l.b16 %v2911
      %v2951 = vunpack.c.l.b16 %v2912
      %v2952 = vunpack.c.l.b16 %v2913
      %v2953 = vunpack.c.l.b16 %v2914
      %v2954 = vunpack.c.l.b16 %v2915
      %v2955 = vunpack.c.l.b16 %v2916
      %v2956 = vunpack.c.l.b16 %v2917
      %v2957 = vpack.c.b16 %v2942, %v2941
      %v2958 = vpack.c.b16 %v2944, %v2943
      %v2959 = vpack.c.b16 %v2946, %v2945
      %v2960 = vpack.c.b16 %v2948, %v2947
      %v2961 = vpack.c.b16 %v2950, %v2949
      %v2962 = vpack.c.b16 %v2952, %v2951
      %v2963 = vpack.c.b16 %v2954, %v2953
      %v2964 = vpack.c.b16 %v2956, %v2955
      %2973 = vmatprep.subr.bf16.mxu0 0
      %2974 = vmatpush1.bf16.msra.mxu0 %v2957
      %2975 = vmatprep.subr.bf16.mxu0 0
      %2976 = vmatpush1.bf16.msra.mxu0 %v2958
      %2977 = vmatprep.subr.bf16.mxu0 0
      %2978 = vmatpush1.bf16.msra.mxu0 %v2959
      %2979 = vmatprep.subr.bf16.mxu0 0
      %2980 = vmatpush1.bf16.msra.mxu0 %v2960
      %2981 = vmatprep.subr.bf16.mxu0 0
      %2982 = vmatpush1.bf16.msra.mxu0 %v2961
      %2983 = vmatprep.subr.bf16.mxu0 0
      %2984 = vmatpush1.bf16.msra.mxu0 %v2962
      %2985 = vmatprep.subr.bf16.mxu0 0
      %2986 = vmatpush1.bf16.msra.mxu0 %v2963
      %2987 = vmatprep.subr.bf16.mxu0 0
      %2988 = vmatpush1.bf16.msra.mxu0 %v2964
      %2989 = vmatprep.subr.bf16.mxu0 0
      %2990 = vmatpush1.bf16.msra.mxu0 0
      %2991 = vmatprep.subr.bf16.mxu0 0
      %2992 = vmatpush1.bf16.msra.mxu0 0
      %2993 = vmatprep.subr.bf16.mxu0 0
      %2994 = vmatpush1.bf16.msra.mxu0 0
      %2995 = vmatprep.subr.bf16.mxu0 0
      %2996 = vmatpush1.bf16.msra.mxu0 0
      %2997 = vmatprep.subr.bf16.mxu0 0
      %2998 = vmatpush1.bf16.msra.mxu0 0
      %2999 = vmatprep.subr.bf16.mxu0 0
      %3000 = vmatpush1.bf16.msra.mxu0 0
      %3001 = vmatprep.subr.bf16.mxu0 0
      %3002 = vmatpush1.bf16.msra.mxu0 0
      %3003 = vmatprep.subr.bf16.mxu0 0
      %3004 = vmatpush1.bf16.msra.mxu0 0
      %3005 = vmatprep.mubr.bf16.mxu0 0
      %3006 = vmatmul.mubr.bf16.gmra.mrb[0].mxu0 %v2920
      %v3007 = vpop.f32.mrb[0].mxu0
      %v3008 = vadd.f32 0.0, %v3007
      %v3009 = vpop.f32.mrb[0].mxu0
      %v3010 = vpop.f32.mrb[0].mxu0
      %v3011 = vadd.f32 0.0, %v3010
      %v3012 = vpop.f32.mrb[0].mxu0
      %3013 = vmatprep.mubr.bf16.mxu0 0
      %3014 = vmatmul.mubr.bf16.gmra.mrb[0].mxu0 %v2922
      %v3015 = vpop.f32.mrb[0].mxu0
      %v3016 = vadd.f32 0.0, %v3015
      %v3017 = vpop.f32.mrb[0].mxu0
      %v3018 = vpop.f32.mrb[0].mxu0
      %v3019 = vadd.f32 0.0, %v3018
      %v3020 = vpop.f32.mrb[0].mxu0
      %3021 = vdwg.mxu0
      %v3022 = vadd.f32 %v2897, %v3008
      %v3023 = vadd.f32 %v2898, %v3011
      %v3024 = vadd.f32 %v2899, %v3016
      %v3025 = vadd.f32 %v2900, %v3019
      %v3026 = vld [vmem:[%s8] sm:$0x1]
      %v3028 = vlaneseq
      %v3029 = vshrl.u32 %v3028, 7
      %v3030 = vsub.s32 0, %v3029
      %v3031 = vrot.slane %v3026, %v3030
      %v3033 = vadd.f32 %v3022, %v3031
      %v3034 = vadd.f32 %v3023, %v3031
      %v3035 = vadd.f32 %v3024, %v3031
      %v3036 = vadd.f32 %v3025, %v3031
      %3037 = vst [vmem:[%s606] sm:$0xff] %v3033
      %3038 = vst [vmem:[%s606 + $0x8] sm:$0xff] %v3034
      %3039 = vst [vmem:[%s606 + $0x10] sm:$0xff] %v3035
      %3040 = vst [vmem:[%s606 + $0x18] sm:$0xff] %v3036
      %v3041 = vadd.f32 %v3033, %v3034
      %v3042 = vadd.f32 %v3041, %v3035
      %v3043 = vadd.f32 %v3042, %v3036
      %v3044 = vrot.slane %v3043, 4
      %v3045 = vadd.f32 %v3043, %v3044
      %v3046 = vrot.slane %v3045, 2
      %v3047 = vadd.f32 %v3045, %v3046
      %v3048 = vrot.slane %v3047, 1
      %v3049 = vadd.f32 %v3047, %v3048
      %v3050 = vmul.f32 %v3033, %v3033
      %v3051 = vmul.f32 %v3034, %v3034
      %v3052 = vmul.f32 %v3035, %v3035
      %v3053 = vmul.f32 %v3036, %v3036
      %v3054 = vadd.f32 %v3050, %v3051
      %v3055 = vadd.f32 %v3054, %v3052
      %v3056 = vadd.f32 %v3055, %v3053
      %v3057 = vrot.slane %v3056, 4
      %v3058 = vadd.f32 %v3056, %v3057
      %v3059 = vrot.slane %v3058, 2
      %v3060 = vadd.f32 %v3058, %v3059
      %v3061 = vrot.slane %v3060, 1
      %v3062 = vadd.f32 %v3060, %v3061
      %vm3063 = vcmask 1040384
      %v3064 = vsel %vm3063, %v3049, %v3062
      %3065 = vst [vmem:[%s614] sm:$0x3] %v3064
      %p3066 = scmp.lt.s32.totalorder %s26, 1
      %s3067 = scalar_select %p3066, %s26, 1
      %p3068 = scmp.lt.s32.totalorder %s27, 31
      %s3069 = scalar_select %p3068, %s27, 31
      %s3070 = smul.addr %s3069, 4
      %s3071 = smul.addr %s3067, 128
      %s3072 = sadd.s32 %s3070, %s3071
      %s3073 = smul.addr %s3072, 8
      %s3074 = scalar_lea.vmem %s9, %s3073
      %p3075 = scmp.lt.s32.totalorder %s26, 1
      %s3076 = scalar_select %p3075, %s26, 1
      %p3077 = scmp.lt.s32.totalorder %s27, 31
      %s3078 = scalar_select %p3077, %s27, 31
      %s3079 = smul.addr %s3076, 32
      %s3080 = sadd.s32 %s3078, %s3079
      %s3081 = smul.addr %s3080, 2
      %s3082 = scalar_lea.vmem %s10, %s3081
      // Predicated region
      $region57: #{unet_decoder_block_forward.6} parent=55 // pred_check
        %p3083 = pneg %p293
      $region58: #{unet_decoder_block_forward.6} parent=55 // pred_check_branch
        %3085 = sbr.rel (%p3083) target = $region60
      $region59: #{unet_decoder_block_forward.6} parent=55 // pred_region
        _
      $region60: #{unet_decoder_block_forward.6} parent=55 // pred_fallthru
        _
      // Predicated region
      $region61: #{unet_decoder_block_forward.6} parent=55 // pred_check
        %p3086 = pneg %p321
      $region62: #{unet_decoder_block_forward.6} parent=55 // pred_check_branch
        %3088 = sbr.rel (%p3086) target = $region64
      $region63: #{unet_decoder_block_forward.6} parent=55 // pred_region
        _
      $region64: #{unet_decoder_block_forward.6} parent=55 // pred_fallthru
        _
    $region56: #{unet_decoder_block_forward.6} parent=5 // pred_fallthru
      _
    %p3089 = scmp.le.s32.totalorder 2, %s17
    // Predicated region
    $region65: #{unet_decoder_block_forward.6} parent=5 // pred_check
      %p3090 = pneg %p3089
    $region66: #{unet_decoder_block_forward.6} parent=5 // pred_check_branch
      %3092 = sbr.rel (%p3090) target = $region68
    $region67: #{unet_decoder_block_forward.6} parent=5 // pred_region
      %s3093 = ssub.s32 %s17, 2
      // Predicated region
      $region69: #{unet_decoder_block_forward.6} parent=67 // pred_check
        %p3094 = pneg %p299
      $region70: #{unet_decoder_block_forward.6} parent=67 // pred_check_branch
        %3096 = sbr.rel (%p3094) target = $region72
      $region71: #{unet_decoder_block_forward.6} parent=67 // pred_region
        %p3097 = scmp.lt.s32.totalorder %s28, 1
        %s3098 = scalar_select %p3097, %s28, 1
        %p3099 = scmp.lt.s32.totalorder %s29, 31
        %s3100 = scalar_select %p3099, %s29, 31
        %s3101 = smul.addr %s3100, 4
        %s3102 = smul.addr %s3098, 128
        %s3103 = sadd.s32 %s3101, %s3102
        %s3104 = smul.addr %s3103, 8
        %s3105 = scalar_lea.vmem %s9, %s3104
      $region72: #{unet_decoder_block_forward.6} parent=67 // pred_fallthru
        _
      // Predicated region
      $region73: #{unet_decoder_block_forward.6} parent=67 // pred_check
        %p3106 = pneg %p327
      $region74: #{unet_decoder_block_forward.6} parent=67 // pred_check_branch
        %3108 = sbr.rel (%p3106) target = $region76
      $region75: #{unet_decoder_block_forward.6} parent=67 // pred_region
        %p3109 = scmp.lt.s32.totalorder %s28, 1
        %s3110 = scalar_select %p3109, %s28, 1
        %p3111 = scmp.lt.s32.totalorder %s29, 31
        %s3112 = scalar_select %p3111, %s29, 31
        %s3113 = smul.addr %s3110, 32
        %s3114 = sadd.s32 %s3112, %s3113
        %s3115 = smul.addr %s3114, 2
        %s3116 = scalar_lea.vmem %s10, %s3115
      $region76: #{unet_decoder_block_forward.6} parent=67 // pred_fallthru
        _
    $region68: #{unet_decoder_block_forward.6} parent=5 // pred_fallthru
      _
  $region6: #{unet_decoder_block_forward.6} parent=0 // loop_footer
    %s21 = sadd.s32 1, %s17
  $region7: #{unet_decoder_block_forward.6} parent=0 // loop_footer_branch
    %16 = sbr.rel target = $region3
  $region8: #{unet_decoder_block_forward.6} parent=0 // loop_exit
    _

// kernel: unet_decoder_block_forward.9
$region0: #{unet_decoder_block_forward.9}
  #allocation0 [shape = 'u32[]', space=smem, size = 0x4, offset = 0x4, fixed_abs, tag = 'smem constant byte address 0x4 - core index']
  #allocation1 [shape = 'u32[144,128]{1,0:T(1,128)}', space=vmem, size = 0x12000, scoped, tag = 'internal scratch']
  %s0 = inlined_call_operand.vmem [shape: f32[2,32,32,128], index: 0, kind: input, shape index: {}]
  %s1 = inlined_call_operand.vmem [shape: f32[1,128], index: 1, kind: input, shape index: {}]
  %s2 = inlined_call_operand.vmem [shape: f32[1,128], index: 2, kind: input, shape index: {}]
  %s3 = inlined_call_operand.vmem [shape: f32[2,32,32,128], index: 3, kind: output, shape index: {}]
  %s4 = sld [smem:[#allocation0]]
  $region45: #{unet_decoder_block_forward.9} parent=0
    _
  %s6 = ssub.s32 1, %s4
  %s7 = scalar_select 0, %s6, %s4
  loop: start=0, step=1, limit=66
  $region2: #{unet_decoder_block_forward.9} parent=0 // loop_pre_header
    _
  $region3: #{unet_decoder_block_forward.9} parent=0 // loop_header
    %s9 = sphi 0, %s13
    %p10 = scmp.ge.s32.totalorder %s9, 66
    %s16 = sphi 0, %s28
    %s17 = sphi 0, %s24
    %s18 = sphi 0, %s16
    %s19 = sphi 0, %s17
    %s20 = sphi 0, %s18
    %s21 = sphi 0, %s19
    %s33 = sphi 0, %s35
    %s36 = sphi 0, %s33
    %s37 = sphi 0, %s36
    %s53 = sphi 0, %s37
    %s57 = sphi 0, %s57
    %s59 = sphi 0, %s57
    %s60 = sphi 0, %s59
    %s74 = sphi 0, %s60
    %s78 = sphi 0, %s78
    %s80 = sphi 0, %s78
    %s81 = sphi 0, %s80
    %s95 = sphi 0, %s81
    %s103 = sphi 0, %s105
    %s106 = sphi 0, %s103
    %s107 = sphi 0, %s106
    %s123 = sphi 0, %s107
  $region4: #{unet_decoder_block_forward.9} parent=0 // loop_header_branch
    %12 = sbr.rel (%p10) target = $region8
  $region5: #{unet_decoder_block_forward.9} parent=0 // loop_body
    %s14 = ssub.s32 %s9, 1
    %s15 = ssub.s32 %s9, 2
    %s22 = sadd.s32 1, %s17
    %p23 = scmp.ge.s32.totalorder %s22, 32
    %s24 = scalar_select %p23, 0, %s22
    %s25 = sadd.s32 1, %s16
    %s26 = scalar_select %p23, %s25, %s16
    %p27 = scmp.ge.s32.totalorder %s26, 2
    %s28 = scalar_select %p27, 0, %s26
    %s29 = ssub.s32 %s16, %s28
    %s30 = ssub.s32 %s17, %s24
    %s31 = sor.u32 %s29, %s30
    %p32 = scmp.eq.s32.totalorder %s31, 0
    %s34 = sadd.s32 %s33, 1
    %s35 = scalar_select %p32, %s33, %s34
    %p38 = pneg %p32
    %p39 = scmp.eq.s32.totalorder %s9, 63
    %p40 = por %p38, %p39
    %p41 = scmp.ne.s32.totalorder %s33, %s36
    %p42 = scmp.eq.s32.totalorder %s9, 0
    %p43 = por %p41, %p42
    %p44 = scmp.ne.s32.totalorder %s33, %s36
    %p45 = scmp.eq.s32.totalorder %s14, 63
    %p46 = por %p44, %p45
    %p47 = scmp.ne.s32.totalorder %s36, %s37
    %p48 = scmp.eq.s32.totalorder %s14, 0
    %p49 = por %p47, %p48
    %p50 = scmp.ne.s32.totalorder %s36, %s37
    %p51 = scmp.eq.s32.totalorder %s15, 63
    %p52 = por %p50, %p51
    %p54 = scmp.ne.s32.totalorder %s37, %s53
    %p55 = scmp.eq.s32.totalorder %s15, 0
    %p56 = por %p54, %p55
    %s58 = sadd.s32 %s57, 1
    %p61 = scmp.eq.s32.totalorder %s9, 63
    %p62 = scmp.ne.s32.totalorder %s57, %s59
    %p63 = scmp.eq.s32.totalorder %s9, 0
    %p64 = por %p62, %p63
    %p65 = scmp.ne.s32.totalorder %s57, %s59
    %p66 = scmp.eq.s32.totalorder %s14, 63
    %p67 = por %p65, %p66
    %p68 = scmp.ne.s32.totalorder %s59, %s60
    %p69 = scmp.eq.s32.totalorder %s14, 0
    %p70 = por %p68, %p69
    %p71 = scmp.ne.s32.totalorder %s59, %s60
    %p72 = scmp.eq.s32.totalorder %s15, 63
    %p73 = por %p71, %p72
    %p75 = scmp.ne.s32.totalorder %s60, %s74
    %p76 = scmp.eq.s32.totalorder %s15, 0
    %p77 = por %p75, %p76
    %s79 = sadd.s32 %s78, 1
    %p82 = scmp.eq.s32.totalorder %s9, 63
    %p83 = scmp.ne.s32.totalorder %s78, %s80
    %p84 = scmp.eq.s32.totalorder %s9, 0
    %p85 = por %p83, %p84
    %p86 = scmp.ne.s32.totalorder %s78, %s80
    %p87 = scmp.eq.s32.totalorder %s14, 63
    %p88 = por %p86, %p87
    %p89 = scmp.ne.s32.totalorder %s80, %s81
    %p90 = scmp.eq.s32.totalorder %s14, 0
    %p91 = por %p89, %p90
    %p92 = scmp.ne.s32.totalorder %s80, %s81
    %p93 = scmp.eq.s32.totalorder %s15, 63
    %p94 = por %p92, %p93
    %p96 = scmp.ne.s32.totalorder %s81, %s95
    %p97 = scmp.eq.s32.totalorder %s15, 0
    %p98 = por %p96, %p97
    %s99 = ssub.s32 %s16, %s28
    %s100 = ssub.s32 %s17, %s24
    %s101 = sor.u32 %s99, %s100
    %p102 = scmp.eq.s32.totalorder %s101, 0
    %s104 = sadd.s32 %s103, 1
    %s105 = scalar_select %p102, %s103, %s104
    %p108 = pneg %p102
    %p109 = scmp.eq.s32.totalorder %s9, 63
    %p110 = por %p108, %p109
    %p111 = scmp.ne.s32.totalorder %s103, %s106
    %p112 = scmp.eq.s32.totalorder %s9, 0
    %p113 = por %p111, %p112
    %p114 = scmp.ne.s32.totalorder %s103, %s106
    %p115 = scmp.eq.s32.totalorder %s14, 63
    %p116 = por %p114, %p115
    %p117 = scmp.ne.s32.totalorder %s106, %s107
    %p118 = scmp.eq.s32.totalorder %s14, 0
    %p119 = por %p117, %p118
    %p120 = scmp.ne.s32.totalorder %s106, %s107
    %p121 = scmp.eq.s32.totalorder %s15, 63
    %p122 = por %p120, %p121
    %p124 = scmp.ne.s32.totalorder %s107, %s123
    %p125 = scmp.eq.s32.totalorder %s15, 0
    %p126 = por %p124, %p125
    %p127 = scmp.le.s32.totalorder 1, %s9
    %p128 = scmp.lt.s32.totalorder %s9, 65
    %p129 = pnand %p127, %p128
    %p130 = pneg %p129
    // Predicated region
    $region9: #{unet_decoder_block_forward.9} parent=5 // pred_check
      _
    $region10: #{unet_decoder_block_forward.9} parent=5 // pred_check_branch
      %132 = sbr.rel (%p129) target = $region12
    $region11: #{unet_decoder_block_forward.9} parent=5 // pred_region
      %s133 = ssub.s32 %s9, 1
      // Predicated region
      $region13: #{unet_decoder_block_forward.9} parent=11 // pred_check
        %p134 = pneg %p70
      $region14: #{unet_decoder_block_forward.9} parent=11 // pred_check_branch
        %136 = sbr.rel (%p134) target = $region16
      $region15: #{unet_decoder_block_forward.9} parent=11 // pred_region
        _
      $region16: #{unet_decoder_block_forward.9} parent=11 // pred_fallthru
        _
      // Predicated region
      $region17: #{unet_decoder_block_forward.9} parent=11 // pred_check
        %p137 = pneg %p91
      $region18: #{unet_decoder_block_forward.9} parent=11 // pred_check_branch
        %139 = sbr.rel (%p137) target = $region20
      $region19: #{unet_decoder_block_forward.9} parent=11 // pred_region
        _
      $region20: #{unet_decoder_block_forward.9} parent=11 // pred_fallthru
        _
    $region12: #{unet_decoder_block_forward.9} parent=5 // pred_fallthru
      _
    %p140 = scmp.lt.s32.totalorder %s9, 64
    // Predicated region
    $region21: #{unet_decoder_block_forward.9} parent=5 // pred_check
      %p141 = pneg %p140
    $region22: #{unet_decoder_block_forward.9} parent=5 // pred_check_branch
      %143 = sbr.rel (%p141) target = $region24
    $region23: #{unet_decoder_block_forward.9} parent=5 // pred_region
      // Predicated region
      $region25: #{unet_decoder_block_forward.9} parent=23 // pred_check
        %p144 = pneg %p43
      $region26: #{unet_decoder_block_forward.9} parent=23 // pred_check_branch
        %146 = sbr.rel (%p144) target = $region28
      $region27: #{unet_decoder_block_forward.9} parent=23 // pred_region
        %p147 = scmp.lt.s32.totalorder %s16, 1
        %s148 = scalar_select %p147, %s16, 1
        %p149 = scmp.lt.s32.totalorder %s17, 31
        %s150 = scalar_select %p149, %s17, 31
        %s151 = smul.addr %s150, 4
        %s152 = smul.addr %s148, 128
        %s153 = sadd.s32 %s151, %s152
        %s154 = smul.addr %s153, 8
        %s155 = scalar_lea.vmem %s0, %s154
      $region28: #{unet_decoder_block_forward.9} parent=23 // pred_fallthru
        _
    $region24: #{unet_decoder_block_forward.9} parent=5 // pred_fallthru
      _
    %p156 = scmp.le.s32.totalorder 1, %s9
    %p157 = scmp.lt.s32.totalorder %s9, 65
    %p158 = pnand %p156, %p157
    %p159 = pneg %p158
    // Predicated region
    $region29: #{unet_decoder_block_forward.9} parent=5 // pred_check
      _
    $region30: #{unet_decoder_block_forward.9} parent=5 // pred_check_branch
      %161 = sbr.rel (%p158) target = $region32
    $region31: #{unet_decoder_block_forward.9} parent=5 // pred_region
      %s162 = ssub.s32 %s9, 1
      %p163 = scmp.lt.s32.totalorder %s18, 1
      %s164 = scalar_select %p163, %s18, 1
      %p165 = scmp.lt.s32.totalorder %s19, 31
      %s166 = scalar_select %p165, %s19, 31
      %s167 = smul.addr %s166, 4
      %s168 = smul.addr %s164, 128
      %s169 = sadd.s32 %s167, %s168
      %s170 = smul.addr %s169, 8
      %s171 = scalar_lea.vmem %s0, %s170
      %p172 = pneg %p49
      %p173 = pneg %p46
      %p174 = pneg %p70
      %p175 = pneg %p67
      %p176 = pneg %p91
      %p177 = pneg %p88
      %p178 = pneg %p119
      %p179 = pneg %p116
      %p180 = scmp.lt.s32.totalorder %s18, 1
      %s181 = scalar_select %p180, %s18, 1
      %p182 = scmp.lt.s32.totalorder %s19, 31
      %s183 = scalar_select %p182, %s19, 31
      %s184 = smul.addr %s183, 4
      %s185 = smul.addr %s181, 128
      %s186 = sadd.s32 %s184, %s185
      %s187 = smul.addr %s186, 8
      %s188 = scalar_lea.vmem %s3, %s187
      %p189 = scmp.lt.s32.totalorder %s18, 1
      %s190 = scalar_select %p189, %s18, 1
      %p191 = scmp.lt.s32.totalorder %s19, 31
      %s192 = scalar_select %p191, %s19, 31
      %s193 = smul.addr %s192, 4
      %s194 = smul.addr %s190, 128
      %s195 = sadd.s32 %s193, %s194
      %s196 = smul.addr %s195, 8
      %s197 = scalar_lea.vmem %s0, %s196
      %p198 = scmp.lt.s32.totalorder %s18, 1
      %s199 = scalar_select %p198, %s18, 1
      %p200 = scmp.lt.s32.totalorder %s19, 31
      %s201 = scalar_select %p200, %s19, 31
      %s202 = smul.addr %s201, 4
      %s203 = smul.addr %s199, 128
      %s204 = sadd.s32 %s202, %s203
      %s205 = smul.addr %s204, 8
      %s206 = scalar_lea.vmem %s3, %s205
      %v207 = vld [vmem:[%s197] sm:$0xff]
      %v208 = vld [vmem:[%s197 + $0x8] sm:$0xff]
      %v209 = vld [vmem:[%s197 + $0x10] sm:$0xff]
      %v210 = vld [vmem:[%s197 + $0x18] sm:$0xff]
      %v211 = vld [vmem:[%s1] sm:$0x1]
      %v213 = vlaneseq
      %v214 = vshrl.u32 %v213, 7
      %v215 = vsub.s32 0, %v214
      %v216 = vrot.slane %v211, %v215
      %v218 = vmul.f32 %v207, %v216
      %v219 = vmul.f32 %v208, %v216
      %v220 = vmul.f32 %v209, %v216
      %v221 = vmul.f32 %v210, %v216
      %v222 = vld [vmem:[%s2] sm:$0x1]
      %v224 = vlaneseq
      %v225 = vshrl.u32 %v224, 7
      %v226 = vsub.s32 0, %v225
      %v227 = vrot.slane %v222, %v226
      %v229 = vadd.f32 %v218, %v227
      %v230 = vadd.f32 %v219, %v227
      %v231 = vadd.f32 %v220, %v227
      %v232 = vadd.f32 %v221, %v227
      %v233 = vmax.f32 %v229, 0.0
      %v234 = vmax.f32 %v230, 0.0
      %v235 = vmax.f32 %v231, 0.0
      %v236 = vmax.f32 %v232, 0.0
      %237 = vst [vmem:[%s206] sm:$0xff] %v233
      %238 = vst [vmem:[%s206 + $0x8] sm:$0xff] %v234
      %239 = vst [vmem:[%s206 + $0x10] sm:$0xff] %v235
      %240 = vst [vmem:[%s206 + $0x18] sm:$0xff] %v236
      %p241 = scmp.lt.s32.totalorder %s18, 1
      %s242 = scalar_select %p241, %s18, 1
      %p243 = scmp.lt.s32.totalorder %s19, 31
      %s244 = scalar_select %p243, %s19, 31
      %s245 = smul.addr %s244, 4
      %s246 = smul.addr %s242, 128
      %s247 = sadd.s32 %s245, %s246
      %s248 = smul.addr %s247, 8
      %s249 = scalar_lea.vmem %s3, %s248
      // Predicated region
      $region33: #{unet_decoder_block_forward.9} parent=31 // pred_check
        %p250 = pneg %p116
      $region34: #{unet_decoder_block_forward.9} parent=31 // pred_check_branch
        %252 = sbr.rel (%p250) target = $region36
      $region35: #{unet_decoder_block_forward.9} parent=31 // pred_region
        _
      $region36: #{unet_decoder_block_forward.9} parent=31 // pred_fallthru
        _
    $region32: #{unet_decoder_block_forward.9} parent=5 // pred_fallthru
      _
    %p253 = scmp.le.s32.totalorder 2, %s9
    // Predicated region
    $region37: #{unet_decoder_block_forward.9} parent=5 // pred_check
      %p254 = pneg %p253
    $region38: #{unet_decoder_block_forward.9} parent=5 // pred_check_branch
      %256 = sbr.rel (%p254) target = $region40
    $region39: #{unet_decoder_block_forward.9} parent=5 // pred_region
      %s257 = ssub.s32 %s9, 2
      // Predicated region
      $region41: #{unet_decoder_block_forward.9} parent=39 // pred_check
        %p258 = pneg %p122
      $region42: #{unet_decoder_block_forward.9} parent=39 // pred_check_branch
        %260 = sbr.rel (%p258) target = $region44
      $region43: #{unet_decoder_block_forward.9} parent=39 // pred_region
        %p261 = scmp.lt.s32.totalorder %s20, 1
        %s262 = scalar_select %p261, %s20, 1
        %p263 = scmp.lt.s32.totalorder %s21, 31
        %s264 = scalar_select %p263, %s21, 31
        %s265 = smul.addr %s264, 4
        %s266 = smul.addr %s262, 128
        %s267 = sadd.s32 %s265, %s266
        %s268 = smul.addr %s267, 8
        %s269 = scalar_lea.vmem %s3, %s268
      $region44: #{unet_decoder_block_forward.9} parent=39 // pred_fallthru
        _
    $region40: #{unet_decoder_block_forward.9} parent=5 // pred_fallthru
      _
  $region6: #{unet_decoder_block_forward.9} parent=0 // loop_footer
    %s13 = sadd.s32 1, %s9
  $region7: #{unet_decoder_block_forward.9} parent=0 // loop_footer_branch
    %8 = sbr.rel target = $region3
  $region8: #{unet_decoder_block_forward.9} parent=0 // loop_exit
    _

// kernel: unet_decoder_block_forward.8
$region0: #{unet_decoder_block_forward.8}
  #allocation0 [shape = 'u32[]', space=smem, size = 0x4, offset = 0x4, fixed_abs, tag = 'smem constant byte address 0x4 - core index']
  #allocation1 [shape = 'u32[144,128]{1,0:T(1,128)}', space=vmem, size = 0x12000, scoped, tag = 'internal scratch']
  %s0 = inlined_call_operand.vmem [shape: bf16[2,34,34,128], index: 0, kind: input, shape index: {}, may-alias: {0,1,2}]
  %s1 = inlined_call_operand.vmem [shape: bf16[2,34,34,128], index: 1, kind: input, shape index: {}, may-alias: {0,1,2}]
  %s2 = inlined_call_operand.vmem [shape: bf16[2,34,34,128], index: 2, kind: input, shape index: {}, may-alias: {0,1,2}]
  %s3 = inlined_call_operand.vmem [shape: bf16[3,3,128,128], index: 3, kind: input, shape index: {}]
  %s4 = inlined_call_operand.vmem [shape: f32[1,128], index: 4, kind: input, shape index: {}]
  %s5 = inlined_call_operand.vmem [shape: f32[2,32,32,128], index: 5, kind: output, shape index: {0}]
  %s6 = inlined_call_operand.vmem [shape: f32[2,32,2,128], index: 6, kind: output, shape index: {1}]
  %7 = xla_tuple %s5, %s6
  %s8 = sld [smem:[#allocation0]]
  $region61: #{unet_decoder_block_forward.8} parent=0
    _
  %s10 = ssub.s32 1, %s8
  %s11 = scalar_select 0, %s10, %s8
  loop: start=0, step=1, limit=66
  $region2: #{unet_decoder_block_forward.8} parent=0 // loop_pre_header
    _
  $region3: #{unet_decoder_block_forward.8} parent=0 // loop_header
    %s13 = sphi 0, %s17
    %p14 = scmp.ge.s32.totalorder %s13, 66
    %s20 = sphi 0, %s32
    %s21 = sphi 0, %s28
    %s22 = sphi 0, %s20
    %s23 = sphi 0, %s21
    %s24 = sphi 0, %s22
    %s25 = sphi 0, %s23
    %s37 = sphi 0, %s39
    %s40 = sphi 0, %s37
    %s41 = sphi 0, %s40
    %s57 = sphi 0, %s41
    %s67 = sphi 0, %s69
    %s70 = sphi 0, %s67
    %s71 = sphi 0, %s70
    %s87 = sphi 0, %s71
    %s97 = sphi 0, %s99
    %s100 = sphi 0, %s97
    %s101 = sphi 0, %s100
    %s117 = sphi 0, %s101
    %s121 = sphi 0, %s121
    %s123 = sphi 0, %s121
    %s124 = sphi 0, %s123
    %s138 = sphi 0, %s124
    %s142 = sphi 0, %s142
    %s144 = sphi 0, %s142
    %s145 = sphi 0, %s144
    %s159 = sphi 0, %s145
    %s167 = sphi 0, %s169
    %s170 = sphi 0, %s167
    %s171 = sphi 0, %s170
    %s187 = sphi 0, %s171
    %s195 = sphi 0, %s197
    %s198 = sphi 0, %s195
    %s199 = sphi 0, %s198
    %s215 = sphi 0, %s199
  $region4: #{unet_decoder_block_forward.8} parent=0 // loop_header_branch
    %16 = sbr.rel (%p14) target = $region8
  $region5: #{unet_decoder_block_forward.8} parent=0 // loop_body
    %s18 = ssub.s32 %s13, 1
    %s19 = ssub.s32 %s13, 2
    %s26 = sadd.s32 1, %s21
    %p27 = scmp.ge.s32.totalorder %s26, 32
    %s28 = scalar_select %p27, 0, %s26
    %s29 = sadd.s32 1, %s20
    %s30 = scalar_select %p27, %s29, %s20
    %p31 = scmp.ge.s32.totalorder %s30, 2
    %s32 = scalar_select %p31, 0, %s30
    %s33 = ssub.s32 %s20, %s32
    %s34 = ssub.s32 %s21, %s28
    %s35 = sor.u32 %s33, %s34
    %p36 = scmp.eq.s32.totalorder %s35, 0
    %s38 = sadd.s32 %s37, 1
    %s39 = scalar_select %p36, %s37, %s38
    %p42 = pneg %p36
    %p43 = scmp.eq.s32.totalorder %s13, 63
    %p44 = por %p42, %p43
    %p45 = scmp.ne.s32.totalorder %s37, %s40
    %p46 = scmp.eq.s32.totalorder %s13, 0
    %p47 = por %p45, %p46
    %p48 = scmp.ne.s32.totalorder %s37, %s40
    %p49 = scmp.eq.s32.totalorder %s18, 63
    %p50 = por %p48, %p49
    %p51 = scmp.ne.s32.totalorder %s40, %s41
    %p52 = scmp.eq.s32.totalorder %s18, 0
    %p53 = por %p51, %p52
    %p54 = scmp.ne.s32.totalorder %s40, %s41
    %p55 = scmp.eq.s32.totalorder %s19, 63
    %p56 = por %p54, %p55
    %p58 = scmp.ne.s32.totalorder %s41, %s57
    %p59 = scmp.eq.s32.totalorder %s19, 0
    %p60 = por %p58, %p59
    %s61 = sadd.s32 %s21, 1
    %s62 = sadd.s32 %s28, 1
    %s63 = ssub.s32 %s20, %s32
    %s64 = ssub.s32 %s61, %s62
    %s65 = sor.u32 %s63, %s64
    %p66 = scmp.eq.s32.totalorder %s65, 0
    %s68 = sadd.s32 %s67, 1
    %s69 = scalar_select %p66, %s67, %s68
    %p72 = pneg %p66
    %p73 = scmp.eq.s32.totalorder %s13, 63
    %p74 = por %p72, %p73
    %p75 = scmp.ne.s32.totalorder %s67, %s70
    %p76 = scmp.eq.s32.totalorder %s13, 0
    %p77 = por %p75, %p76
    %p78 = scmp.ne.s32.totalorder %s67, %s70
    %p79 = scmp.eq.s32.totalorder %s18, 63
    %p80 = por %p78, %p79
    %p81 = scmp.ne.s32.totalorder %s70, %s71
    %p82 = scmp.eq.s32.totalorder %s18, 0
    %p83 = por %p81, %p82
    %p84 = scmp.ne.s32.totalorder %s70, %s71
    %p85 = scmp.eq.s32.totalorder %s19, 63
    %p86 = por %p84, %p85
    %p88 = scmp.ne.s32.totalorder %s71, %s87
    %p89 = scmp.eq.s32.totalorder %s19, 0
    %p90 = por %p88, %p89
    %s91 = sadd.s32 %s21, 2
    %s92 = sadd.s32 %s28, 2
    %s93 = ssub.s32 %s20, %s32
    %s94 = ssub.s32 %s91, %s92
    %s95 = sor.u32 %s93, %s94
    %p96 = scmp.eq.s32.totalorder %s95, 0
    %s98 = sadd.s32 %s97, 1
    %s99 = scalar_select %p96, %s97, %s98
    %p102 = pneg %p96
    %p103 = scmp.eq.s32.totalorder %s13, 63
    %p104 = por %p102, %p103
    %p105 = scmp.ne.s32.totalorder %s97, %s100
    %p106 = scmp.eq.s32.totalorder %s13, 0
    %p107 = por %p105, %p106
    %p108 = scmp.ne.s32.totalorder %s97, %s100
    %p109 = scmp.eq.s32.totalorder %s18, 63
    %p110 = por %p108, %p109
    %p111 = scmp.ne.s32.totalorder %s100, %s101
    %p112 = scmp.eq.s32.totalorder %s18, 0
    %p113 = por %p111, %p112
    %p114 = scmp.ne.s32.totalorder %s100, %s101
    %p115 = scmp.eq.s32.totalorder %s19, 63
    %p116 = por %p114, %p115
    %p118 = scmp.ne.s32.totalorder %s101, %s117
    %p119 = scmp.eq.s32.totalorder %s19, 0
    %p120 = por %p118, %p119
    %s122 = sadd.s32 %s121, 1
    %p125 = scmp.eq.s32.totalorder %s13, 63
    %p126 = scmp.ne.s32.totalorder %s121, %s123
    %p127 = scmp.eq.s32.totalorder %s13, 0
    %p128 = por %p126, %p127
    %p129 = scmp.ne.s32.totalorder %s121, %s123
    %p130 = scmp.eq.s32.totalorder %s18, 63
    %p131 = por %p129, %p130
    %p132 = scmp.ne.s32.totalorder %s123, %s124
    %p133 = scmp.eq.s32.totalorder %s18, 0
    %p134 = por %p132, %p133
    %p135 = scmp.ne.s32.totalorder %s123, %s124
    %p136 = scmp.eq.s32.totalorder %s19, 63
    %p137 = por %p135, %p136
    %p139 = scmp.ne.s32.totalorder %s124, %s138
    %p140 = scmp.eq.s32.totalorder %s19, 0
    %p141 = por %p139, %p140
    %s143 = sadd.s32 %s142, 1
    %p146 = scmp.eq.s32.totalorder %s13, 63
    %p147 = scmp.ne.s32.totalorder %s142, %s144
    %p148 = scmp.eq.s32.totalorder %s13, 0
    %p149 = por %p147, %p148
    %p150 = scmp.ne.s32.totalorder %s142, %s144
    %p151 = scmp.eq.s32.totalorder %s18, 63
    %p152 = por %p150, %p151
    %p153 = scmp.ne.s32.totalorder %s144, %s145
    %p154 = scmp.eq.s32.totalorder %s18, 0
    %p155 = por %p153, %p154
    %p156 = scmp.ne.s32.totalorder %s144, %s145
    %p157 = scmp.eq.s32.totalorder %s19, 63
    %p158 = por %p156, %p157
    %p160 = scmp.ne.s32.totalorder %s145, %s159
    %p161 = scmp.eq.s32.totalorder %s19, 0
    %p162 = por %p160, %p161
    %s163 = ssub.s32 %s20, %s32
    %s164 = ssub.s32 %s21, %s28
    %s165 = sor.u32 %s163, %s164
    %p166 = scmp.eq.s32.totalorder %s165, 0
    %s168 = sadd.s32 %s167, 1
    %s169 = scalar_select %p166, %s167, %s168
    %p172 = pneg %p166
    %p173 = scmp.eq.s32.totalorder %s13, 63
    %p174 = por %p172, %p173
    %p175 = scmp.ne.s32.totalorder %s167, %s170
    %p176 = scmp.eq.s32.totalorder %s13, 0
    %p177 = por %p175, %p176
    %p178 = scmp.ne.s32.totalorder %s167, %s170
    %p179 = scmp.eq.s32.totalorder %s18, 63
    %p180 = por %p178, %p179
    %p181 = scmp.ne.s32.totalorder %s170, %s171
    %p182 = scmp.eq.s32.totalorder %s18, 0
    %p183 = por %p181, %p182
    %p184 = scmp.ne.s32.totalorder %s170, %s171
    %p185 = scmp.eq.s32.totalorder %s19, 63
    %p186 = por %p184, %p185
    %p188 = scmp.ne.s32.totalorder %s171, %s187
    %p189 = scmp.eq.s32.totalorder %s19, 0
    %p190 = por %p188, %p189
    %s191 = ssub.s32 %s20, %s32
    %s192 = ssub.s32 %s21, %s28
    %s193 = sor.u32 %s191, %s192
    %p194 = scmp.eq.s32.totalorder %s193, 0
    %s196 = sadd.s32 %s195, 1
    %s197 = scalar_select %p194, %s195, %s196
    %p200 = pneg %p194
    %p201 = scmp.eq.s32.totalorder %s13, 63
    %p202 = por %p200, %p201
    %p203 = scmp.ne.s32.totalorder %s195, %s198
    %p204 = scmp.eq.s32.totalorder %s13, 0
    %p205 = por %p203, %p204
    %p206 = scmp.ne.s32.totalorder %s195, %s198
    %p207 = scmp.eq.s32.totalorder %s18, 63
    %p208 = por %p206, %p207
    %p209 = scmp.ne.s32.totalorder %s198, %s199
    %p210 = scmp.eq.s32.totalorder %s18, 0
    %p211 = por %p209, %p210
    %p212 = scmp.ne.s32.totalorder %s198, %s199
    %p213 = scmp.eq.s32.totalorder %s19, 63
    %p214 = por %p212, %p213
    %p216 = scmp.ne.s32.totalorder %s199, %s215
    %p217 = scmp.eq.s32.totalorder %s19, 0
    %p218 = por %p216, %p217
    %p219 = scmp.le.s32.totalorder 1, %s13
    %p220 = scmp.lt.s32.totalorder %s13, 65
    %p221 = pnand %p219, %p220
    %p222 = pneg %p221
    // Predicated region
    $region9: #{unet_decoder_block_forward.8} parent=5 // pred_check
      _
    $region10: #{unet_decoder_block_forward.8} parent=5 // pred_check_branch
      %224 = sbr.rel (%p221) target = $region12
    $region11: #{unet_decoder_block_forward.8} parent=5 // pred_region
      %s225 = ssub.s32 %s13, 1
      // Predicated region
      $region13: #{unet_decoder_block_forward.8} parent=11 // pred_check
        %p226 = pneg %p134
      $region14: #{unet_decoder_block_forward.8} parent=11 // pred_check_branch
        %228 = sbr.rel (%p226) target = $region16
      $region15: #{unet_decoder_block_forward.8} parent=11 // pred_region
        _
      $region16: #{unet_decoder_block_forward.8} parent=11 // pred_fallthru
        _
      // Predicated region
      $region17: #{unet_decoder_block_forward.8} parent=11 // pred_check
        %p229 = pneg %p155
      $region18: #{unet_decoder_block_forward.8} parent=11 // pred_check_branch
        %231 = sbr.rel (%p229) target = $region20
      $region19: #{unet_decoder_block_forward.8} parent=11 // pred_region
        _
      $region20: #{unet_decoder_block_forward.8} parent=11 // pred_fallthru
        _
    $region12: #{unet_decoder_block_forward.8} parent=5 // pred_fallthru
      _
    %p232 = scmp.lt.s32.totalorder %s13, 64
    // Predicated region
    $region21: #{unet_decoder_block_forward.8} parent=5 // pred_check
      %p233 = pneg %p232
    $region22: #{unet_decoder_block_forward.8} parent=5 // pred_check_branch
      %235 = sbr.rel (%p233) target = $region24
    $region23: #{unet_decoder_block_forward.8} parent=5 // pred_region
      // Predicated region
      $region25: #{unet_decoder_block_forward.8} parent=23 // pred_check
        %p236 = pneg %p47
      $region26: #{unet_decoder_block_forward.8} parent=23 // pred_check_branch
        %238 = sbr.rel (%p236) target = $region28
      $region27: #{unet_decoder_block_forward.8} parent=23 // pred_region
        %p239 = scmp.lt.s32.totalorder %s20, 1
        %s240 = scalar_select %p239, %s20, 1
        %p241 = scmp.lt.s32.totalorder %s21, 33
        %s242 = scalar_select %p241, %s21, 33
        %s243 = smul.addr %s242, 5
        %s244 = smul.addr %s240, 170
        %s245 = sadd.s32 %s243, %s244
        %s246 = smul.addr %s245, 4
        %s247 = scalar_lea.vmem %s0, %s246
      $region28: #{unet_decoder_block_forward.8} parent=23 // pred_fallthru
        _
      // Predicated region
      $region29: #{unet_decoder_block_forward.8} parent=23 // pred_check
        %p248 = pneg %p77
      $region30: #{unet_decoder_block_forward.8} parent=23 // pred_check_branch
        %250 = sbr.rel (%p248) target = $region32
      $region31: #{unet_decoder_block_forward.8} parent=23 // pred_region
        %s251 = sadd.s32 %s21, 1
        %p252 = scmp.lt.s32.totalorder %s20, 1
        %s253 = scalar_select %p252, %s20, 1
        %p254 = scmp.lt.s32.totalorder %s251, 33
        %s255 = scalar_select %p254, %s251, 33
        %s256 = smul.addr %s255, 5
        %s257 = smul.addr %s253, 170
        %s258 = sadd.s32 %s256, %s257
        %s259 = smul.addr %s258, 4
        %s260 = scalar_lea.vmem %s1, %s259
        %s261 = sadd.s32 %s21, 1
      $region32: #{unet_decoder_block_forward.8} parent=23 // pred_fallthru
        _
      // Predicated region
      $region33: #{unet_decoder_block_forward.8} parent=23 // pred_check
        %p262 = pneg %p107
      $region34: #{unet_decoder_block_forward.8} parent=23 // pred_check_branch
        %264 = sbr.rel (%p262) target = $region36
      $region35: #{unet_decoder_block_forward.8} parent=23 // pred_region
        %s265 = sadd.s32 %s21, 2
        %p266 = scmp.lt.s32.totalorder %s20, 1
        %s267 = scalar_select %p266, %s20, 1
        %p268 = scmp.lt.s32.totalorder %s265, 33
        %s269 = scalar_select %p268, %s265, 33
        %s270 = smul.addr %s269, 5
        %s271 = smul.addr %s267, 170
        %s272 = sadd.s32 %s270, %s271
        %s273 = smul.addr %s272, 4
        %s274 = scalar_lea.vmem %s2, %s273
        %s275 = sadd.s32 %s21, 2
      $region36: #{unet_decoder_block_forward.8} parent=23 // pred_fallthru
        _
    $region24: #{unet_decoder_block_forward.8} parent=5 // pred_fallthru
      _
    %p276 = scmp.le.s32.totalorder 1, %s13
    %p277 = scmp.lt.s32.totalorder %s13, 65
    %p278 = pnand %p276, %p277
    %p279 = pneg %p278
    // Predicated region
    $region37: #{unet_decoder_block_forward.8} parent=5 // pred_check
      _
    $region38: #{unet_decoder_block_forward.8} parent=5 // pred_check_branch
      %281 = sbr.rel (%p278) target = $region40
    $region39: #{unet_decoder_block_forward.8} parent=5 // pred_region
      %s282 = ssub.s32 %s13, 1
      %p283 = scmp.lt.s32.totalorder %s22, 1
      %s284 = scalar_select %p283, %s22, 1
      %p285 = scmp.lt.s32.totalorder %s23, 33
      %s286 = scalar_select %p285, %s23, 33
      %s287 = smul.addr %s286, 5
      %s288 = smul.addr %s284, 170
      %s289 = sadd.s32 %s287, %s288
      %s290 = smul.addr %s289, 4
      %s291 = scalar_lea.vmem %s0, %s290
      %p292 = pneg %p53
      %p293 = pneg %p50
      %s294 = sadd.s32 %s23, 1
      %p295 = scmp.lt.s32.totalorder %s22, 1
      %s296 = scalar_select %p295, %s22, 1
      %p297 = scmp.lt.s32.totalorder %s294, 33
      %s298 = scalar_select %p297, %s294, 33
      %s299 = smul.addr %s298, 5
      %s300 = smul.addr %s296, 170
      %s301 = sadd.s32 %s299, %s300
      %s302 = smul.addr %s301, 4
      %s303 = scalar_lea.vmem %s1, %s302
      %p304 = pneg %p83
      %p305 = pneg %p80
      %s306 = sadd.s32 %s23, 2
      %p307 = scmp.lt.s32.totalorder %s22, 1
      %s308 = scalar_select %p307, %s22, 1
      %p309 = scmp.lt.s32.totalorder %s306, 33
      %s310 = scalar_select %p309, %s306, 33
      %s311 = smul.addr %s310, 5
      %s312 = smul.addr %s308, 170
      %s313 = sadd.s32 %s311, %s312
      %s314 = smul.addr %s313, 4
      %s315 = scalar_lea.vmem %s2, %s314
      %p316 = pneg %p113
      %p317 = pneg %p110
      %p318 = pneg %p134
      %p319 = pneg %p131
      %p320 = pneg %p155
      %p321 = pneg %p152
      %p322 = pneg %p183
      %p323 = pneg %p180
      %p324 = scmp.lt.s32.totalorder %s22, 1
      %s325 = scalar_select %p324, %s22, 1
      %p326 = scmp.lt.s32.totalorder %s23, 31
      %s327 = scalar_select %p326, %s23, 31
      %s328 = smul.addr %s327, 4
      %s329 = smul.addr %s325, 128
      %s330 = sadd.s32 %s328, %s329
      %s331 = smul.addr %s330, 8
      %s332 = scalar_lea.vmem %s5, %s331
      %p333 = pneg %p211
      %p334 = pneg %p208
      %p335 = scmp.lt.s32.totalorder %s22, 1
      %s336 = scalar_select %p335, %s22, 1
      %p337 = scmp.lt.s32.totalorder %s23, 31
      %s338 = scalar_select %p337, %s23, 31
      %s339 = smul.addr %s336, 32
      %s340 = sadd.s32 %s338, %s339
      %s341 = smul.addr %s340, 2
      %s342 = scalar_lea.vmem %s6, %s341
      %p343 = scmp.lt.s32.totalorder %s22, 1
      %s344 = scalar_select %p343, %s22, 1
      %p345 = scmp.lt.s32.totalorder %s23, 33
      %s346 = scalar_select %p345, %s23, 33
      %s347 = smul.addr %s346, 5
      %s348 = smul.addr %s344, 170
      %s349 = sadd.s32 %s347, %s348
      %s350 = smul.addr %s349, 4
      %s351 = scalar_lea.vmem %s0, %s350
      %s352 = sadd.s32 %s23, 1
      %p353 = scmp.lt.s32.totalorder %s22, 1
      %s354 = scalar_select %p353, %s22, 1
      %p355 = scmp.lt.s32.totalorder %s352, 33
      %s356 = scalar_select %p355, %s352, 33
      %s357 = smul.addr %s356, 5
      %s358 = smul.addr %s354, 170
      %s359 = sadd.s32 %s357, %s358
      %s360 = smul.addr %s359, 4
      %s361 = scalar_lea.vmem %s1, %s360
      %s362 = sadd.s32 %s23, 1
      %s363 = sadd.s32 %s23, 2
      %p364 = scmp.lt.s32.totalorder %s22, 1
      %s365 = scalar_select %p364, %s22, 1
      %p366 = scmp.lt.s32.totalorder %s363, 33
      %s367 = scalar_select %p366, %s363, 33
      %s368 = smul.addr %s367, 5
      %s369 = smul.addr %s365, 170
      %s370 = sadd.s32 %s368, %s369
      %s371 = smul.addr %s370, 4
      %s372 = scalar_lea.vmem %s2, %s371
      %s373 = sadd.s32 %s23, 2
      %p374 = scmp.lt.s32.totalorder %s22, 1
      %s375 = scalar_select %p374, %s22, 1
      %p376 = scmp.lt.s32.totalorder %s23, 31
      %s377 = scalar_select %p376, %s23, 31
      %s378 = smul.addr %s377, 4
      %s379 = smul.addr %s375, 128
      %s380 = sadd.s32 %s378, %s379
      %s381 = smul.addr %s380, 8
      %s382 = scalar_lea.vmem %s5, %s381
      %p383 = scmp.lt.s32.totalorder %s22, 1
      %s384 = scalar_select %p383, %s22, 1
      %p385 = scmp.lt.s32.totalorder %s23, 31
      %s386 = scalar_select %p385, %s23, 31
      %s387 = smul.addr %s384, 32
      %s388 = sadd.s32 %s386, %s387
      %s389 = smul.addr %s388, 2
      %s390 = scalar_lea.vmem %s6, %s389
      %v392 = vld [vmem:[%s351] sm:$0xf]
      %v393 = vld [vmem:[%s351 + $0x4] sm:$0xf]
      %v394 = vld [vmem:[%s351 + $0x8] sm:$0xf]
      %v395 = vld [vmem:[%s351 + $0xc] sm:$0xf]
      %v396 = vld [vmem:[%s351 + $0x10] sm:$0x1]
      %v397 = vld [vmem:[%s3] sm:$0xf]
      %v398 = vld [vmem:[%s3 + $0x4] sm:$0xf]
      %v399 = vld [vmem:[%s3 + $0x8] sm:$0xf]
      %v400 = vld [vmem:[%s3 + $0xc] sm:$0xf]
      %v401 = vld [vmem:[%s3 + $0x10] sm:$0xf]
      %v402 = vld [vmem:[%s3 + $0x14] sm:$0xf]
      %v403 = vld [vmem:[%s3 + $0x18] sm:$0xf]
      %v404 = vld [vmem:[%s3 + $0x1c] sm:$0xf]
      %v405 = vld [vmem:[%s3 + $0x20] sm:$0xf]
      %v406 = vld [vmem:[%s3 + $0x24] sm:$0xf]
      %v407 = vld [vmem:[%s3 + $0x28] sm:$0xf]
      %v408 = vld [vmem:[%s3 + $0x2c] sm:$0xf]
      %v409 = vld [vmem:[%s3 + $0x30] sm:$0xf]
      %v410 = vld [vmem:[%s3 + $0x34] sm:$0xf]
      %v411 = vld [vmem:[%s3 + $0x38] sm:$0xf]
      %v412 = vld [vmem:[%s3 + $0x3c] sm:$0xf]
      %s413 = scalar_lea.vmem %s3, 64
      %v414 = vld [vmem:[%s413] sm:$0xf]
      %v415 = vld [vmem:[%s413 + $0x4] sm:$0xf]
      %v416 = vld [vmem:[%s413 + $0x8] sm:$0xf]
      %v417 = vld [vmem:[%s413 + $0xc] sm:$0xf]
      %v418 = vld [vmem:[%s413 + $0x10] sm:$0xf]
      %v419 = vld [vmem:[%s413 + $0x14] sm:$0xf]
      %v420 = vld [vmem:[%s413 + $0x18] sm:$0xf]
      %v421 = vld [vmem:[%s413 + $0x1c] sm:$0xf]
      %v422 = vld [vmem:[%s413 + $0x20] sm:$0xf]
      %v423 = vld [vmem:[%s413 + $0x24] sm:$0xf]
      %v424 = vld [vmem:[%s413 + $0x28] sm:$0xf]
      %v425 = vld [vmem:[%s413 + $0x2c] sm:$0xf]
      %v426 = vld [vmem:[%s413 + $0x30] sm:$0xf]
      %v427 = vld [vmem:[%s413 + $0x34] sm:$0xf]
      %v428 = vld [vmem:[%s413 + $0x38] sm:$0xf]
      %v429 = vld [vmem:[%s413 + $0x3c] sm:$0xf]
      %v435 = vunpack.c.l.b16 %v392
      %v436 = vunpack.c.l.b16 %v393
      %v437 = vunpack.c.l.b16 %v394
      %v438 = vunpack.c.l.b16 %v395
      %v439 = vunpack.c.l.b16 %v396
      %v440 = vpack.c.b16 %v436, %v435
      %v441 = vpack.c.b16 %v438, %v437
      %v442 = vpack.c.b16 %v439, %v439
      %vm443 = vsmask.f32 7424
      %v445 = vshrl.u32 %v440, 16
      %v447 = vshll.u32 %v440, 16
      %v449 = vrot.slane %v447, 1
      %v450 = vor.u32 %v445, %v449
      %v452 = vshll.u32 %v441, 16
      %v454 = vrot.slane %v452, 1
      %v455 = vsel %vm443, %v450, %v454
      %v456 = vshrl.u32 %v441, 16
      %v458 = vor.u32 %v456, %v454
      %v460 = vshll.u32 %v442, 16
      %v462 = vrot.slane %v460, 1
      %v463 = vsel %vm443, %v458, %v462
      %v482 = vunpack.c.l.b16 %v414
      %v483 = vunpack.c.l.b16 %v415
      %v484 = vunpack.c.l.b16 %v416
      %v485 = vunpack.c.l.b16 %v417
      %v486 = vunpack.c.l.b16 %v418
      %v487 = vunpack.c.l.b16 %v419
      %v488 = vunpack.c.l.b16 %v420
      %v489 = vunpack.c.l.b16 %v421
      %v490 = vunpack.c.l.b16 %v422
      %v491 = vunpack.c.l.b16 %v423
      %v492 = vunpack.c.l.b16 %v424
      %v493 = vunpack.c.l.b16 %v425
      %v494 = vunpack.c.l.b16 %v426
      %v495 = vunpack.c.l.b16 %v427
      %v496 = vunpack.c.l.b16 %v428
      %v497 = vunpack.c.l.b16 %v429
      %v498 = vpack.c.b16 %v483, %v482
      %v499 = vpack.c.b16 %v485, %v484
      %v500 = vpack.c.b16 %v487, %v486
      %v501 = vpack.c.b16 %v489, %v488
      %v502 = vpack.c.b16 %v491, %v490
      %v503 = vpack.c.b16 %v493, %v492
      %v504 = vpack.c.b16 %v495, %v494
      %v505 = vpack.c.b16 %v497, %v496
      %514 = vmatprep.subr.bf16.mxu0 0
      %515 = vmatpush1.bf16.msra.mxu0 %v498
      %516 = vmatprep.subr.bf16.mxu0 0
      %517 = vmatpush1.bf16.msra.mxu0 %v499
      %518 = vmatprep.subr.bf16.mxu0 0
      %519 = vmatpush1.bf16.msra.mxu0 %v500
      %520 = vmatprep.subr.bf16.mxu0 0
      %521 = vmatpush1.bf16.msra.mxu0 %v501
      %522 = vmatprep.subr.bf16.mxu0 0
      %523 = vmatpush1.bf16.msra.mxu0 %v502
      %524 = vmatprep.subr.bf16.mxu0 0
      %525 = vmatpush1.bf16.msra.mxu0 %v503
      %526 = vmatprep.subr.bf16.mxu0 0
      %527 = vmatpush1.bf16.msra.mxu0 %v504
      %528 = vmatprep.subr.bf16.mxu0 0
      %529 = vmatpush1.bf16.msra.mxu0 %v505
      %530 = vmatprep.subr.bf16.mxu0 0
      %531 = vmatpush1.bf16.msra.mxu0 0
      %532 = vmatprep.subr.bf16.mxu0 0
      %533 = vmatpush1.bf16.msra.mxu0 0
      %534 = vmatprep.subr.bf16.mxu0 0
      %535 = vmatpush1.bf16.msra.mxu0 0
      %536 = vmatprep.subr.bf16.mxu0 0
      %537 = vmatpush1.bf16.msra.mxu0 0
      %538 = vmatprep.subr.bf16.mxu0 0
      %539 = vmatpush1.bf16.msra.mxu0 0
      %540 = vmatprep.subr.bf16.mxu0 0
      %541 = vmatpush1.bf16.msra.mxu0 0
      %542 = vmatprep.subr.bf16.mxu0 0
      %543 = vmatpush1.bf16.msra.mxu0 0
      %544 = vmatprep.subr.bf16.mxu0 0
      %545 = vmatpush1.bf16.msra.mxu0 0
      %546 = vmatprep.mubr.bf16.mxu0 0
      %547 = vmatmul.mubr.bf16.gmra.mrb[0].mxu0 %v455
      %v548 = vpop.f32.mrb[0].mxu0
      %v549 = vadd.f32 0.0, %v548
      %v550 = vpop.f32.mrb[0].mxu0
      %v551 = vpop.f32.mrb[0].mxu0
      %v552 = vadd.f32 0.0, %v551
      %v553 = vpop.f32.mrb[0].mxu0
      %554 = vmatprep.mubr.bf16.mxu0 0
      %555 = vmatmul.mubr.bf16.gmra.mrb[0].mxu0 %v463
      %v556 = vpop.f32.mrb[0].mxu0
      %v557 = vadd.f32 0.0, %v556
      %v558 = vpop.f32.mrb[0].mxu0
      %v559 = vpop.f32.mrb[0].mxu0
      %v560 = vadd.f32 0.0, %v559
      %v561 = vpop.f32.mrb[0].mxu0
      %562 = vdwg.mxu0
      %v581 = vunpack.c.l.b16 %v397
      %v582 = vunpack.c.l.b16 %v398
      %v583 = vunpack.c.l.b16 %v399
      %v584 = vunpack.c.l.b16 %v400
      %v585 = vunpack.c.l.b16 %v401
      %v586 = vunpack.c.l.b16 %v402
      %v587 = vunpack.c.l.b16 %v403
      %v588 = vunpack.c.l.b16 %v404
      %v589 = vunpack.c.l.b16 %v405
      %v590 = vunpack.c.l.b16 %v406
      %v591 = vunpack.c.l.b16 %v407
      %v592 = vunpack.c.l.b16 %v408
      %v593 = vunpack.c.l.b16 %v409
      %v594 = vunpack.c.l.b16 %v410
      %v595 = vunpack.c.l.b16 %v411
      %v596 = vunpack.c.l.b16 %v412
      %v597 = vpack.c.b16 %v582, %v581
      %v598 = vpack.c.b16 %v584, %v583
      %v599 = vpack.c.b16 %v586, %v585
      %v600 = vpack.c.b16 %v588, %v587
      %v601 = vpack.c.b16 %v590, %v589
      %v602 = vpack.c.b16 %v592, %v591
      %v603 = vpack.c.b16 %v594, %v593
      %v604 = vpack.c.b16 %v596, %v595
      %613 = vmatprep.subr.bf16.mxu0 0
      %614 = vmatpush1.bf16.msra.mxu0 %v597
      %615 = vmatprep.subr.bf16.mxu0 0
      %616 = vmatpush1.bf16.msra.mxu0 %v598
      %617 = vmatprep.subr.bf16.mxu0 0
      %618 = vmatpush1.bf16.msra.mxu0 %v599
      %619 = vmatprep.subr.bf16.mxu0 0
      %620 = vmatpush1.bf16.msra.mxu0 %v600
      %621 = vmatprep.subr.bf16.mxu0 0
      %622 = vmatpush1.bf16.msra.mxu0 %v601
      %623 = vmatprep.subr.bf16.mxu0 0
      %624 = vmatpush1.bf16.msra.mxu0 %v602
      %625 = vmatprep.subr.bf16.mxu0 0
      %626 = vmatpush1.bf16.msra.mxu0 %v603
      %627 = vmatprep.subr.bf16.mxu0 0
      %628 = vmatpush1.bf16.msra.mxu0 %v604
      %629 = vmatprep.subr.bf16.mxu0 0
      %630 = vmatpush1.bf16.msra.mxu0 0
      %631 = vmatprep.subr.bf16.mxu0 0
      %632 = vmatpush1.bf16.msra.mxu0 0
      %633 = vmatprep.subr.bf16.mxu0 0
      %634 = vmatpush1.bf16.msra.mxu0 0
      %635 = vmatprep.subr.bf16.mxu0 0
      %636 = vmatpush1.bf16.msra.mxu0 0
      %637 = vmatprep.subr.bf16.mxu0 0
      %638 = vmatpush1.bf16.msra.mxu0 0
      %639 = vmatprep.subr.bf16.mxu0 0
      %640 = vmatpush1.bf16.msra.mxu0 0
      %641 = vmatprep.subr.bf16.mxu0 0
      %642 = vmatpush1.bf16.msra.mxu0 0
      %643 = vmatprep.subr.bf16.mxu0 0
      %644 = vmatpush1.bf16.msra.mxu0 0
      %645 = vmatprep.mubr.bf16.mxu0 0
      %646 = vmatmul.mubr.bf16.gmra.mrb[0].mxu0 %v440
      %v647 = vpop.f32.mrb[0].mxu0
      %v648 = vadd.f32 %v549, %v647
      %v649 = vpop.f32.mrb[0].mxu0
      %v650 = vpop.f32.mrb[0].mxu0
      %v651 = vadd.f32 %v552, %v650
      %v652 = vpop.f32.mrb[0].mxu0
      %653 = vmatprep.mubr.bf16.mxu0 0
      %654 = vmatmul.mubr.bf16.gmra.mrb[0].mxu0 %v441
      %v655 = vpop.f32.mrb[0].mxu0
      %v656 = vadd.f32 %v557, %v655
      %v657 = vpop.f32.mrb[0].mxu0
      %v658 = vpop.f32.mrb[0].mxu0
      %v659 = vadd.f32 %v560, %v658
      %v660 = vpop.f32.mrb[0].mxu0
      %661 = vdwg.mxu0
      %s662 = scalar_lea.vmem %s3, 128
      %v663 = vld [vmem:[%s662] sm:$0xf]
      %v664 = vld [vmem:[%s662 + $0x4] sm:$0xf]
      %v665 = vld [vmem:[%s662 + $0x8] sm:$0xf]
      %v666 = vld [vmem:[%s662 + $0xc] sm:$0xf]
      %v667 = vld [vmem:[%s662 + $0x10] sm:$0xf]
      %v668 = vld [vmem:[%s662 + $0x14] sm:$0xf]
      %v669 = vld [vmem:[%s662 + $0x18] sm:$0xf]
      %v670 = vld [vmem:[%s662 + $0x1c] sm:$0xf]
      %v671 = vld [vmem:[%s662 + $0x20] sm:$0xf]
      %v672 = vld [vmem:[%s662 + $0x24] sm:$0xf]
      %v673 = vld [vmem:[%s662 + $0x28] sm:$0xf]
      %v674 = vld [vmem:[%s662 + $0x2c] sm:$0xf]
      %v675 = vld [vmem:[%s662 + $0x30] sm:$0xf]
      %v676 = vld [vmem:[%s662 + $0x34] sm:$0xf]
      %v677 = vld [vmem:[%s662 + $0x38] sm:$0xf]
      %v678 = vld [vmem:[%s662 + $0x3c] sm:$0xf]
      %vm679 = vcmask 1046528
      %v680 = vrot.slane %v440, 1
      %v681 = vrot.slane %v441, 1
      %v682 = vsel %vm679, %v680, %v681
      %v683 = vrot.slane %v442, 1
      %v684 = vsel %vm679, %v681, %v683
      %v703 = vunpack.c.l.b16 %v663
      %v704 = vunpack.c.l.b16 %v664
      %v705 = vunpack.c.l.b16 %v665
      %v706 = vunpack.c.l.b16 %v666
      %v707 = vunpack.c.l.b16 %v667
      %v708 = vunpack.c.l.b16 %v668
      %v709 = vunpack.c.l.b16 %v669
      %v710 = vunpack.c.l.b16 %v670
      %v711 = vunpack.c.l.b16 %v671
      %v712 = vunpack.c.l.b16 %v672
      %v713 = vunpack.c.l.b16 %v673
      %v714 = vunpack.c.l.b16 %v674
      %v715 = vunpack.c.l.b16 %v675
      %v716 = vunpack.c.l.b16 %v676
      %v717 = vunpack.c.l.b16 %v677
      %v718 = vunpack.c.l.b16 %v678
      %v719 = vpack.c.b16 %v704, %v703
      %v720 = vpack.c.b16 %v706, %v705
      %v721 = vpack.c.b16 %v708, %v707
      %v722 = vpack.c.b16 %v710, %v709
      %v723 = vpack.c.b16 %v712, %v711
      %v724 = vpack.c.b16 %v714, %v713
      %v725 = vpack.c.b16 %v716, %v715
      %v726 = vpack.c.b16 %v718, %v717
      %735 = vmatprep.subr.bf16.mxu0 0
      %736 = vmatpush1.bf16.msra.mxu0 %v719
      %737 = vmatprep.subr.bf16.mxu0 0
      %738 = vmatpush1.bf16.msra.mxu0 %v720
      %739 = vmatprep.subr.bf16.mxu0 0
      %740 = vmatpush1.bf16.msra.mxu0 %v721
      %741 = vmatprep.subr.bf16.mxu0 0
      %742 = vmatpush1.bf16.msra.mxu0 %v722
      %743 = vmatprep.subr.bf16.mxu0 0
      %744 = vmatpush1.bf16.msra.mxu0 %v723
      %745 = vmatprep.subr.bf16.mxu0 0
      %746 = vmatpush1.bf16.msra.mxu0 %v724
      %747 = vmatprep.subr.bf16.mxu0 0
      %748 = vmatpush1.bf16.msra.mxu0 %v725
      %749 = vmatprep.subr.bf16.mxu0 0
      %750 = vmatpush1.bf16.msra.mxu0 %v726
      %751 = vmatprep.subr.bf16.mxu0 0
      %752 = vmatpush1.bf16.msra.mxu0 0
      %753 = vmatprep.subr.bf16.mxu0 0
      %754 = vmatpush1.bf16.msra.mxu0 0
      %755 = vmatprep.subr.bf16.mxu0 0
      %756 = vmatpush1.bf16.msra.mxu0 0
      %757 = vmatprep.subr.bf16.mxu0 0
      %758 = vmatpush1.bf16.msra.mxu0 0
      %759 = vmatprep.subr.bf16.mxu0 0
      %760 = vmatpush1.bf16.msra.mxu0 0
      %761 = vmatprep.subr.bf16.mxu0 0
      %762 = vmatpush1.bf16.msra.mxu0 0
      %763 = vmatprep.subr.bf16.mxu0 0
      %764 = vmatpush1.bf16.msra.mxu0 0
      %765 = vmatprep.subr.bf16.mxu0 0
      %766 = vmatpush1.bf16.msra.mxu0 0
      %767 = vmatprep.mubr.bf16.mxu0 0
      %768 = vmatmul.mubr.bf16.gmra.mrb[0].mxu0 %v682
      %v769 = vpop.f32.mrb[0].mxu0
      %v770 = vadd.f32 0.0, %v769
      %v771 = vpop.f32.mrb[0].mxu0
      %v772 = vpop.f32.mrb[0].mxu0
      %v773 = vadd.f32 0.0, %v772
      %v774 = vpop.f32.mrb[0].mxu0
      %775 = vmatprep.mubr.bf16.mxu0 0
      %776 = vmatmul.mubr.bf16.gmra.mrb[0].mxu0 %v684
      %v777 = vpop.f32.mrb[0].mxu0
      %v778 = vadd.f32 0.0, %v777
      %v779 = vpop.f32.mrb[0].mxu0
      %v780 = vpop.f32.mrb[0].mxu0
      %v781 = vadd.f32 0.0, %v780
      %v782 = vpop.f32.mrb[0].mxu0
      %783 = vdwg.mxu0
      %v784 = vadd.f32 %v648, %v770
      %v785 = vadd.f32 %v651, %v773
      %v786 = vadd.f32 %v656, %v778
      %v787 = vadd.f32 %v659, %v781
      %v788 = vld [vmem:[%s361] sm:$0xf]
      %v789 = vld [vmem:[%s361 + $0x4] sm:$0xf]
      %v790 = vld [vmem:[%s361 + $0x8] sm:$0xf]
      %v791 = vld [vmem:[%s361 + $0xc] sm:$0xf]
      %v792 = vld [vmem:[%s361 + $0x10] sm:$0x1]
      %s793 = scalar_lea.vmem %s3, 192
      %v794 = vld [vmem:[%s793] sm:$0xf]
      %v795 = vld [vmem:[%s793 + $0x4] sm:$0xf]
      %v796 = vld [vmem:[%s793 + $0x8] sm:$0xf]
      %v797 = vld [vmem:[%s793 + $0xc] sm:$0xf]
      %v798 = vld [vmem:[%s793 + $0x10] sm:$0xf]
      %v799 = vld [vmem:[%s793 + $0x14] sm:$0xf]
      %v800 = vld [vmem:[%s793 + $0x18] sm:$0xf]
      %v801 = vld [vmem:[%s793 + $0x1c] sm:$0xf]
      %v802 = vld [vmem:[%s793 + $0x20] sm:$0xf]
      %v803 = vld [vmem:[%s793 + $0x24] sm:$0xf]
      %v804 = vld [vmem:[%s793 + $0x28] sm:$0xf]
      %v805 = vld [vmem:[%s793 + $0x2c] sm:$0xf]
      %v806 = vld [vmem:[%s793 + $0x30] sm:$0xf]
      %v807 = vld [vmem:[%s793 + $0x34] sm:$0xf]
      %v808 = vld [vmem:[%s793 + $0x38] sm:$0xf]
      %v809 = vld [vmem:[%s793 + $0x3c] sm:$0xf]
      %v814 = vunpack.c.l.b16 %v788
      %v815 = vunpack.c.l.b16 %v789
      %v816 = vunpack.c.l.b16 %v790
      %v817 = vunpack.c.l.b16 %v791
      %v818 = vpack.c.b16 %v815, %v814
      %v819 = vpack.c.b16 %v817, %v816
      %v838 = vunpack.c.l.b16 %v794
      %v839 = vunpack.c.l.b16 %v795
      %v840 = vunpack.c.l.b16 %v796
      %v841 = vunpack.c.l.b16 %v797
      %v842 = vunpack.c.l.b16 %v798
      %v843 = vunpack.c.l.b16 %v799
      %v844 = vunpack.c.l.b16 %v800
      %v845 = vunpack.c.l.b16 %v801
      %v846 = vunpack.c.l.b16 %v802
      %v847 = vunpack.c.l.b16 %v803
      %v848 = vunpack.c.l.b16 %v804
      %v849 = vunpack.c.l.b16 %v805
      %v850 = vunpack.c.l.b16 %v806
      %v851 = vunpack.c.l.b16 %v807
      %v852 = vunpack.c.l.b16 %v808
      %v853 = vunpack.c.l.b16 %v809
      %v854 = vpack.c.b16 %v839, %v838
      %v855 = vpack.c.b16 %v841, %v840
      %v856 = vpack.c.b16 %v843, %v842
      %v857 = vpack.c.b16 %v845, %v844
      %v858 = vpack.c.b16 %v847, %v846
      %v859 = vpack.c.b16 %v849, %v848
      %v860 = vpack.c.b16 %v851, %v850
      %v861 = vpack.c.b16 %v853, %v852
      %870 = vmatprep.subr.bf16.mxu0 0
      %871 = vmatpush1.bf16.msra.mxu0 %v854
      %872 = vmatprep.subr.bf16.mxu0 0
      %873 = vmatpush1.bf16.msra.mxu0 %v855
      %874 = vmatprep.subr.bf16.mxu0 0
      %875 = vmatpush1.bf16.msra.mxu0 %v856
      %876 = vmatprep.subr.bf16.mxu0 0
      %877 = vmatpush1.bf16.msra.mxu0 %v857
      %878 = vmatprep.subr.bf16.mxu0 0
      %879 = vmatpush1.bf16.msra.mxu0 %v858
      %880 = vmatprep.subr.bf16.mxu0 0
      %881 = vmatpush1.bf16.msra.mxu0 %v859
      %882 = vmatprep.subr.bf16.mxu0 0
      %883 = vmatpush1.bf16.msra.mxu0 %v860
      %884 = vmatprep.subr.bf16.mxu0 0
      %885 = vmatpush1.bf16.msra.mxu0 %v861
      %886 = vmatprep.subr.bf16.mxu0 0
      %887 = vmatpush1.bf16.msra.mxu0 0
      %888 = vmatprep.subr.bf16.mxu0 0
      %889 = vmatpush1.bf16.msra.mxu0 0
      %890 = vmatprep.subr.bf16.mxu0 0
      %891 = vmatpush1.bf16.msra.mxu0 0
      %892 = vmatprep.subr.bf16.mxu0 0
      %893 = vmatpush1.bf16.msra.mxu0 0
      %894 = vmatprep.subr.bf16.mxu0 0
      %895 = vmatpush1.bf16.msra.mxu0 0
      %896 = vmatprep.subr.bf16.mxu0 0
      %897 = vmatpush1.bf16.msra.mxu0 0
      %898 = vmatprep.subr.bf16.mxu0 0
      %899 = vmatpush1.bf16.msra.mxu0 0
      %900 = vmatprep.subr.bf16.mxu0 0
      %901 = vmatpush1.bf16.msra.mxu0 0
      %902 = vmatprep.mubr.bf16.mxu0 0
      %903 = vmatmul.mubr.bf16.gmra.mrb[0].mxu0 %v818
      %v904 = vpop.f32.mrb[0].mxu0
      %v905 = vadd.f32 0.0, %v904
      %v906 = vpop.f32.mrb[0].mxu0
      %v907 = vpop.f32.mrb[0].mxu0
      %v908 = vadd.f32 0.0, %v907
      %v909 = vpop.f32.mrb[0].mxu0
      %910 = vmatprep.mubr.bf16.mxu0 0
      %911 = vmatmul.mubr.bf16.gmra.mrb[0].mxu0 %v819
      %v912 = vpop.f32.mrb[0].mxu0
      %v913 = vadd.f32 0.0, %v912
      %v914 = vpop.f32.mrb[0].mxu0
      %v915 = vpop.f32.mrb[0].mxu0
      %v916 = vadd.f32 0.0, %v915
      %v917 = vpop.f32.mrb[0].mxu0
      %918 = vdwg.mxu0
      %v919 = vadd.f32 %v784, %v905
      %v920 = vadd.f32 %v785, %v908
      %v921 = vadd.f32 %v786, %v913
      %v922 = vadd.f32 %v787, %v916
      %s923 = scalar_lea.vmem %s3, 256
      %v924 = vld [vmem:[%s923] sm:$0xf]
      %v925 = vld [vmem:[%s923 + $0x4] sm:$0xf]
      %v926 = vld [vmem:[%s923 + $0x8] sm:$0xf]
      %v927 = vld [vmem:[%s923 + $0xc] sm:$0xf]
      %v928 = vld [vmem:[%s923 + $0x10] sm:$0xf]
      %v929 = vld [vmem:[%s923 + $0x14] sm:$0xf]
      %v930 = vld [vmem:[%s923 + $0x18] sm:$0xf]
      %v931 = vld [vmem:[%s923 + $0x1c] sm:$0xf]
      %v932 = vld [vmem:[%s923 + $0x20] sm:$0xf]
      %v933 = vld [vmem:[%s923 + $0x24] sm:$0xf]
      %v934 = vld [vmem:[%s923 + $0x28] sm:$0xf]
      %v935 = vld [vmem:[%s923 + $0x2c] sm:$0xf]
      %v936 = vld [vmem:[%s923 + $0x30] sm:$0xf]
      %v937 = vld [vmem:[%s923 + $0x34] sm:$0xf]
      %v938 = vld [vmem:[%s923 + $0x38] sm:$0xf]
      %v939 = vld [vmem:[%s923 + $0x3c] sm:$0xf]
      %v941 = vunpack.c.l.b16 %v792
      %v942 = vpack.c.b16 %v941, %v941
      %v944 = vshrl.u32 %v818, 16
      %v946 = vshll.u32 %v818, 16
      %v948 = vrot.slane %v946, 1
      %v949 = vor.u32 %v944, %v948
      %v951 = vshll.u32 %v819, 16
      %v953 = vrot.slane %v951, 1
      %v954 = vsel %vm443, %v949, %v953
      %v955 = vshrl.u32 %v819, 16
      %v957 = vor.u32 %v955, %v953
      %v959 = vshll.u32 %v942, 16
      %v961 = vrot.slane %v959, 1
      %v962 = vsel %vm443, %v957, %v961
      %v981 = vunpack.c.l.b16 %v924
      %v982 = vunpack.c.l.b16 %v925
      %v983 = vunpack.c.l.b16 %v926
      %v984 = vunpack.c.l.b16 %v927
      %v985 = vunpack.c.l.b16 %v928
      %v986 = vunpack.c.l.b16 %v929
      %v987 = vunpack.c.l.b16 %v930
      %v988 = vunpack.c.l.b16 %v931
      %v989 = vunpack.c.l.b16 %v932
      %v990 = vunpack.c.l.b16 %v933
      %v991 = vunpack.c.l.b16 %v934
      %v992 = vunpack.c.l.b16 %v935
      %v993 = vunpack.c.l.b16 %v936
      %v994 = vunpack.c.l.b16 %v937
      %v995 = vunpack.c.l.b16 %v938
      %v996 = vunpack.c.l.b16 %v939
      %v997 = vpack.c.b16 %v982, %v981
      %v998 = vpack.c.b16 %v984, %v983
      %v999 = vpack.c.b16 %v986, %v985
      %v1000 = vpack.c.b16 %v988, %v987
      %v1001 = vpack.c.b16 %v990, %v989
      %v1002 = vpack.c.b16 %v992, %v991
      %v1003 = vpack.c.b16 %v994, %v993
      %v1004 = vpack.c.b16 %v996, %v995
      %1013 = vmatprep.subr.bf16.mxu0 0
      %1014 = vmatpush1.bf16.msra.mxu0 %v997
      %1015 = vmatprep.subr.bf16.mxu0 0
      %1016 = vmatpush1.bf16.msra.mxu0 %v998
      %1017 = vmatprep.subr.bf16.mxu0 0
      %1018 = vmatpush1.bf16.msra.mxu0 %v999
      %1019 = vmatprep.subr.bf16.mxu0 0
      %1020 = vmatpush1.bf16.msra.mxu0 %v1000
      %1021 = vmatprep.subr.bf16.mxu0 0
      %1022 = vmatpush1.bf16.msra.mxu0 %v1001
      %1023 = vmatprep.subr.bf16.mxu0 0
      %1024 = vmatpush1.bf16.msra.mxu0 %v1002
      %1025 = vmatprep.subr.bf16.mxu0 0
      %1026 = vmatpush1.bf16.msra.mxu0 %v1003
      %1027 = vmatprep.subr.bf16.mxu0 0
      %1028 = vmatpush1.bf16.msra.mxu0 %v1004
      %1029 = vmatprep.subr.bf16.mxu0 0
      %1030 = vmatpush1.bf16.msra.mxu0 0
      %1031 = vmatprep.subr.bf16.mxu0 0
      %1032 = vmatpush1.bf16.msra.mxu0 0
      %1033 = vmatprep.subr.bf16.mxu0 0
      %1034 = vmatpush1.bf16.msra.mxu0 0
      %1035 = vmatprep.subr.bf16.mxu0 0
      %1036 = vmatpush1.bf16.msra.mxu0 0
      %1037 = vmatprep.subr.bf16.mxu0 0
      %1038 = vmatpush1.bf16.msra.mxu0 0
      %1039 = vmatprep.subr.bf16.mxu0 0
      %1040 = vmatpush1.bf16.msra.mxu0 0
      %1041 = vmatprep.subr.bf16.mxu0 0
      %1042 = vmatpush1.bf16.msra.mxu0 0
      %1043 = vmatprep.subr.bf16.mxu0 0
      %1044 = vmatpush1.bf16.msra.mxu0 0
      %1045 = vmatprep.mubr.bf16.mxu0 0
      %1046 = vmatmul.mubr.bf16.gmra.mrb[0].mxu0 %v954
      %v1047 = vpop.f32.mrb[0].mxu0
      %v1048 = vadd.f32 0.0, %v1047
      %v1049 = vpop.f32.mrb[0].mxu0
      %v1050 = vpop.f32.mrb[0].mxu0
      %v1051 = vadd.f32 0.0, %v1050
      %v1052 = vpop.f32.mrb[0].mxu0
      %1053 = vmatprep.mubr.bf16.mxu0 0
      %1054 = vmatmul.mubr.bf16.gmra.mrb[0].mxu0 %v962
      %v1055 = vpop.f32.mrb[0].mxu0
      %v1056 = vadd.f32 0.0, %v1055
      %v1057 = vpop.f32.mrb[0].mxu0
      %v1058 = vpop.f32.mrb[0].mxu0
      %v1059 = vadd.f32 0.0, %v1058
      %v1060 = vpop.f32.mrb[0].mxu0
      %1061 = vdwg.mxu0
      %v1062 = vadd.f32 %v919, %v1048
      %v1063 = vadd.f32 %v920, %v1051
      %v1064 = vadd.f32 %v921, %v1056
      %v1065 = vadd.f32 %v922, %v1059
      %s1066 = scalar_lea.vmem %s3, 320
      %v1067 = vld [vmem:[%s1066] sm:$0xf]
      %v1068 = vld [vmem:[%s1066 + $0x4] sm:$0xf]
      %v1069 = vld [vmem:[%s1066 + $0x8] sm:$0xf]
      %v1070 = vld [vmem:[%s1066 + $0xc] sm:$0xf]
      %v1071 = vld [vmem:[%s1066 + $0x10] sm:$0xf]
      %v1072 = vld [vmem:[%s1066 + $0x14] sm:$0xf]
      %v1073 = vld [vmem:[%s1066 + $0x18] sm:$0xf]
      %v1074 = vld [vmem:[%s1066 + $0x1c] sm:$0xf]
      %v1075 = vld [vmem:[%s1066 + $0x20] sm:$0xf]
      %v1076 = vld [vmem:[%s1066 + $0x24] sm:$0xf]
      %v1077 = vld [vmem:[%s1066 + $0x28] sm:$0xf]
      %v1078 = vld [vmem:[%s1066 + $0x2c] sm:$0xf]
      %v1079 = vld [vmem:[%s1066 + $0x30] sm:$0xf]
      %v1080 = vld [vmem:[%s1066 + $0x34] sm:$0xf]
      %v1081 = vld [vmem:[%s1066 + $0x38] sm:$0xf]
      %v1082 = vld [vmem:[%s1066 + $0x3c] sm:$0xf]
      %v1083 = vrot.slane %v818, 1
      %v1084 = vrot.slane %v819, 1
      %v1085 = vsel %vm679, %v1083, %v1084
      %v1086 = vrot.slane %v942, 1
      %v1087 = vsel %vm679, %v1084, %v1086
      %v1106 = vunpack.c.l.b16 %v1067
      %v1107 = vunpack.c.l.b16 %v1068
      %v1108 = vunpack.c.l.b16 %v1069
      %v1109 = vunpack.c.l.b16 %v1070
      %v1110 = vunpack.c.l.b16 %v1071
      %v1111 = vunpack.c.l.b16 %v1072
      %v1112 = vunpack.c.l.b16 %v1073
      %v1113 = vunpack.c.l.b16 %v1074
      %v1114 = vunpack.c.l.b16 %v1075
      %v1115 = vunpack.c.l.b16 %v1076
      %v1116 = vunpack.c.l.b16 %v1077
      %v1117 = vunpack.c.l.b16 %v1078
      %v1118 = vunpack.c.l.b16 %v1079
      %v1119 = vunpack.c.l.b16 %v1080
      %v1120 = vunpack.c.l.b16 %v1081
      %v1121 = vunpack.c.l.b16 %v1082
      %v1122 = vpack.c.b16 %v1107, %v1106
      %v1123 = vpack.c.b16 %v1109, %v1108
      %v1124 = vpack.c.b16 %v1111, %v1110
      %v1125 = vpack.c.b16 %v1113, %v1112
      %v1126 = vpack.c.b16 %v1115, %v1114
      %v1127 = vpack.c.b16 %v1117, %v1116
      %v1128 = vpack.c.b16 %v1119, %v1118
      %v1129 = vpack.c.b16 %v1121, %v1120
      %1138 = vmatprep.subr.bf16.mxu0 0
      %1139 = vmatpush1.bf16.msra.mxu0 %v1122
      %1140 = vmatprep.subr.bf16.mxu0 0
      %1141 = vmatpush1.bf16.msra.mxu0 %v1123
      %1142 = vmatprep.subr.bf16.mxu0 0
      %1143 = vmatpush1.bf16.msra.mxu0 %v1124
      %1144 = vmatprep.subr.bf16.mxu0 0
      %1145 = vmatpush1.bf16.msra.mxu0 %v1125
      %1146 = vmatprep.subr.bf16.mxu0 0
      %1147 = vmatpush1.bf16.msra.mxu0 %v1126
      %1148 = vmatprep.subr.bf16.mxu0 0
      %1149 = vmatpush1.bf16.msra.mxu0 %v1127
      %1150 = vmatprep.subr.bf16.mxu0 0
      %1151 = vmatpush1.bf16.msra.mxu0 %v1128
      %1152 = vmatprep.subr.bf16.mxu0 0
      %1153 = vmatpush1.bf16.msra.mxu0 %v1129
      %1154 = vmatprep.subr.bf16.mxu0 0
      %1155 = vmatpush1.bf16.msra.mxu0 0
      %1156 = vmatprep.subr.bf16.mxu0 0
      %1157 = vmatpush1.bf16.msra.mxu0 0
      %1158 = vmatprep.subr.bf16.mxu0 0
      %1159 = vmatpush1.bf16.msra.mxu0 0
      %1160 = vmatprep.subr.bf16.mxu0 0
      %1161 = vmatpush1.bf16.msra.mxu0 0
      %1162 = vmatprep.subr.bf16.mxu0 0
      %1163 = vmatpush1.bf16.msra.mxu0 0
      %1164 = vmatprep.subr.bf16.mxu0 0
      %1165 = vmatpush1.bf16.msra.mxu0 0
      %1166 = vmatprep.subr.bf16.mxu0 0
      %1167 = vmatpush1.bf16.msra.mxu0 0
      %1168 = vmatprep.subr.bf16.mxu0 0
      %1169 = vmatpush1.bf16.msra.mxu0 0
      %1170 = vmatprep.mubr.bf16.mxu0 0
      %1171 = vmatmul.mubr.bf16.gmra.mrb[0].mxu0 %v1085
      %v1172 = vpop.f32.mrb[0].mxu0
      %v1173 = vadd.f32 0.0, %v1172
      %v1174 = vpop.f32.mrb[0].mxu0
      %v1175 = vpop.f32.mrb[0].mxu0
      %v1176 = vadd.f32 0.0, %v1175
      %v1177 = vpop.f32.mrb[0].mxu0
      %1178 = vmatprep.mubr.bf16.mxu0 0
      %1179 = vmatmul.mubr.bf16.gmra.mrb[0].mxu0 %v1087
      %v1180 = vpop.f32.mrb[0].mxu0
      %v1181 = vadd.f32 0.0, %v1180
      %v1182 = vpop.f32.mrb[0].mxu0
      %v1183 = vpop.f32.mrb[0].mxu0
      %v1184 = vadd.f32 0.0, %v1183
      %v1185 = vpop.f32.mrb[0].mxu0
      %1186 = vdwg.mxu0
      %v1187 = vadd.f32 %v1062, %v1173
      %v1188 = vadd.f32 %v1063, %v1176
      %v1189 = vadd.f32 %v1064, %v1181
      %v1190 = vadd.f32 %v1065, %v1184
      %v1191 = vld [vmem:[%s372] sm:$0xf]
      %v1192 = vld [vmem:[%s372 + $0x4] sm:$0xf]
      %v1193 = vld [vmem:[%s372 + $0x8] sm:$0xf]
      %v1194 = vld [vmem:[%s372 + $0xc] sm:$0xf]
      %v1195 = vld [vmem:[%s372 + $0x10] sm:$0x1]
      %s1196 = scalar_lea.vmem %s3, 384
      %v1197 = vld [vmem:[%s1196] sm:$0xf]
      %v1198 = vld [vmem:[%s1196 + $0x4] sm:$0xf]
      %v1199 = vld [vmem:[%s1196 + $0x8] sm:$0xf]
      %v1200 = vld [vmem:[%s1196 + $0xc] sm:$0xf]
      %v1201 = vld [vmem:[%s1196 + $0x10] sm:$0xf]
      %v1202 = vld [vmem:[%s1196 + $0x14] sm:$0xf]
      %v1203 = vld [vmem:[%s1196 + $0x18] sm:$0xf]
      %v1204 = vld [vmem:[%s1196 + $0x1c] sm:$0xf]
      %v1205 = vld [vmem:[%s1196 + $0x20] sm:$0xf]
      %v1206 = vld [vmem:[%s1196 + $0x24] sm:$0xf]
      %v1207 = vld [vmem:[%s1196 + $0x28] sm:$0xf]
      %v1208 = vld [vmem:[%s1196 + $0x2c] sm:$0xf]
      %v1209 = vld [vmem:[%s1196 + $0x30] sm:$0xf]
      %v1210 = vld [vmem:[%s1196 + $0x34] sm:$0xf]
      %v1211 = vld [vmem:[%s1196 + $0x38] sm:$0xf]
      %v1212 = vld [vmem:[%s1196 + $0x3c] sm:$0xf]
      %v1217 = vunpack.c.l.b16 %v1191
      %v1218 = vunpack.c.l.b16 %v1192
      %v1219 = vunpack.c.l.b16 %v1193
      %v1220 = vunpack.c.l.b16 %v1194
      %v1221 = vpack.c.b16 %v1218, %v1217
      %v1222 = vpack.c.b16 %v1220, %v1219
      %v1241 = vunpack.c.l.b16 %v1197
      %v1242 = vunpack.c.l.b16 %v1198
      %v1243 = vunpack.c.l.b16 %v1199
      %v1244 = vunpack.c.l.b16 %v1200
      %v1245 = vunpack.c.l.b16 %v1201
      %v1246 = vunpack.c.l.b16 %v1202
      %v1247 = vunpack.c.l.b16 %v1203
      %v1248 = vunpack.c.l.b16 %v1204
      %v1249 = vunpack.c.l.b16 %v1205
      %v1250 = vunpack.c.l.b16 %v1206
      %v1251 = vunpack.c.l.b16 %v1207
      %v1252 = vunpack.c.l.b16 %v1208
      %v1253 = vunpack.c.l.b16 %v1209
      %v1254 = vunpack.c.l.b16 %v1210
      %v1255 = vunpack.c.l.b16 %v1211
      %v1256 = vunpack.c.l.b16 %v1212
      %v1257 = vpack.c.b16 %v1242, %v1241
      %v1258 = vpack.c.b16 %v1244, %v1243
      %v1259 = vpack.c.b16 %v1246, %v1245
      %v1260 = vpack.c.b16 %v1248, %v1247
      %v1261 = vpack.c.b16 %v1250, %v1249
      %v1262 = vpack.c.b16 %v1252, %v1251
      %v1263 = vpack.c.b16 %v1254, %v1253
      %v1264 = vpack.c.b16 %v1256, %v1255
      %1273 = vmatprep.subr.bf16.mxu0 0
      %1274 = vmatpush1.bf16.msra.mxu0 %v1257
      %1275 = vmatprep.subr.bf16.mxu0 0
      %1276 = vmatpush1.bf16.msra.mxu0 %v1258
      %1277 = vmatprep.subr.bf16.mxu0 0
      %1278 = vmatpush1.bf16.msra.mxu0 %v1259
      %1279 = vmatprep.subr.bf16.mxu0 0
      %1280 = vmatpush1.bf16.msra.mxu0 %v1260
      %1281 = vmatprep.subr.bf16.mxu0 0
      %1282 = vmatpush1.bf16.msra.mxu0 %v1261
      %1283 = vmatprep.subr.bf16.mxu0 0
      %1284 = vmatpush1.bf16.msra.mxu0 %v1262
      %1285 = vmatprep.subr.bf16.mxu0 0
      %1286 = vmatpush1.bf16.msra.mxu0 %v1263
      %1287 = vmatprep.subr.bf16.mxu0 0
      %1288 = vmatpush1.bf16.msra.mxu0 %v1264
      %1289 = vmatprep.subr.bf16.mxu0 0
      %1290 = vmatpush1.bf16.msra.mxu0 0
      %1291 = vmatprep.subr.bf16.mxu0 0
      %1292 = vmatpush1.bf16.msra.mxu0 0
      %1293 = vmatprep.subr.bf16.mxu0 0
      %1294 = vmatpush1.bf16.msra.mxu0 0
      %1295 = vmatprep.subr.bf16.mxu0 0
      %1296 = vmatpush1.bf16.msra.mxu0 0
      %1297 = vmatprep.subr.bf16.mxu0 0
      %1298 = vmatpush1.bf16.msra.mxu0 0
      %1299 = vmatprep.subr.bf16.mxu0 0
      %1300 = vmatpush1.bf16.msra.mxu0 0
      %1301 = vmatprep.subr.bf16.mxu0 0
      %1302 = vmatpush1.bf16.msra.mxu0 0
      %1303 = vmatprep.subr.bf16.mxu0 0
      %1304 = vmatpush1.bf16.msra.mxu0 0
      %1305 = vmatprep.mubr.bf16.mxu0 0
      %1306 = vmatmul.mubr.bf16.gmra.mrb[0].mxu0 %v1221
      %v1307 = vpop.f32.mrb[0].mxu0
      %v1308 = vadd.f32 0.0, %v1307
      %v1309 = vpop.f32.mrb[0].mxu0
      %v1310 = vpop.f32.mrb[0].mxu0
      %v1311 = vadd.f32 0.0, %v1310
      %v1312 = vpop.f32.mrb[0].mxu0
      %1313 = vmatprep.mubr.bf16.mxu0 0
      %1314 = vmatmul.mubr.bf16.gmra.mrb[0].mxu0 %v1222
      %v1315 = vpop.f32.mrb[0].mxu0
      %v1316 = vadd.f32 0.0, %v1315
      %v1317 = vpop.f32.mrb[0].mxu0
      %v1318 = vpop.f32.mrb[0].mxu0
      %v1319 = vadd.f32 0.0, %v1318
      %v1320 = vpop.f32.mrb[0].mxu0
      %1321 = vdwg.mxu0
      %v1322 = vadd.f32 %v1187, %v1308
      %v1323 = vadd.f32 %v1188, %v1311
      %v1324 = vadd.f32 %v1189, %v1316
      %v1325 = vadd.f32 %v1190, %v1319
      %s1326 = scalar_lea.vmem %s3, 448
      %v1327 = vld [vmem:[%s1326] sm:$0xf]
      %v1328 = vld [vmem:[%s1326 + $0x4] sm:$0xf]
      %v1329 = vld [vmem:[%s1326 + $0x8] sm:$0xf]
      %v1330 = vld [vmem:[%s1326 + $0xc] sm:$0xf]
      %v1331 = vld [vmem:[%s1326 + $0x10] sm:$0xf]
      %v1332 = vld [vmem:[%s1326 + $0x14] sm:$0xf]
      %v1333 = vld [vmem:[%s1326 + $0x18] sm:$0xf]
      %v1334 = vld [vmem:[%s1326 + $0x1c] sm:$0xf]
      %v1335 = vld [vmem:[%s1326 + $0x20] sm:$0xf]
      %v1336 = vld [vmem:[%s1326 + $0x24] sm:$0xf]
      %v1337 = vld [vmem:[%s1326 + $0x28] sm:$0xf]
      %v1338 = vld [vmem:[%s1326 + $0x2c] sm:$0xf]
      %v1339 = vld [vmem:[%s1326 + $0x30] sm:$0xf]
      %v1340 = vld [vmem:[%s1326 + $0x34] sm:$0xf]
      %v1341 = vld [vmem:[%s1326 + $0x38] sm:$0xf]
      %v1342 = vld [vmem:[%s1326 + $0x3c] sm:$0xf]
      %v1344 = vunpack.c.l.b16 %v1195
      %v1345 = vpack.c.b16 %v1344, %v1344
      %v1347 = vshrl.u32 %v1221, 16
      %v1349 = vshll.u32 %v1221, 16
      %v1351 = vrot.slane %v1349, 1
      %v1352 = vor.u32 %v1347, %v1351
      %v1354 = vshll.u32 %v1222, 16
      %v1356 = vrot.slane %v1354, 1
      %v1357 = vsel %vm443, %v1352, %v1356
      %v1358 = vshrl.u32 %v1222, 16
      %v1360 = vor.u32 %v1358, %v1356
      %v1362 = vshll.u32 %v1345, 16
      %v1364 = vrot.slane %v1362, 1
      %v1365 = vsel %vm443, %v1360, %v1364
      %v1384 = vunpack.c.l.b16 %v1327
      %v1385 = vunpack.c.l.b16 %v1328
      %v1386 = vunpack.c.l.b16 %v1329
      %v1387 = vunpack.c.l.b16 %v1330
      %v1388 = vunpack.c.l.b16 %v1331
      %v1389 = vunpack.c.l.b16 %v1332
      %v1390 = vunpack.c.l.b16 %v1333
      %v1391 = vunpack.c.l.b16 %v1334
      %v1392 = vunpack.c.l.b16 %v1335
      %v1393 = vunpack.c.l.b16 %v1336
      %v1394 = vunpack.c.l.b16 %v1337
      %v1395 = vunpack.c.l.b16 %v1338
      %v1396 = vunpack.c.l.b16 %v1339
      %v1397 = vunpack.c.l.b16 %v1340
      %v1398 = vunpack.c.l.b16 %v1341
      %v1399 = vunpack.c.l.b16 %v1342
      %v1400 = vpack.c.b16 %v1385, %v1384
      %v1401 = vpack.c.b16 %v1387, %v1386
      %v1402 = vpack.c.b16 %v1389, %v1388
      %v1403 = vpack.c.b16 %v1391, %v1390
      %v1404 = vpack.c.b16 %v1393, %v1392
      %v1405 = vpack.c.b16 %v1395, %v1394
      %v1406 = vpack.c.b16 %v1397, %v1396
      %v1407 = vpack.c.b16 %v1399, %v1398
      %1416 = vmatprep.subr.bf16.mxu0 0
      %1417 = vmatpush1.bf16.msra.mxu0 %v1400
      %1418 = vmatprep.subr.bf16.mxu0 0
      %1419 = vmatpush1.bf16.msra.mxu0 %v1401
      %1420 = vmatprep.subr.bf16.mxu0 0
      %1421 = vmatpush1.bf16.msra.mxu0 %v1402
      %1422 = vmatprep.subr.bf16.mxu0 0
      %1423 = vmatpush1.bf16.msra.mxu0 %v1403
      %1424 = vmatprep.subr.bf16.mxu0 0
      %1425 = vmatpush1.bf16.msra.mxu0 %v1404
      %1426 = vmatprep.subr.bf16.mxu0 0
      %1427 = vmatpush1.bf16.msra.mxu0 %v1405
      %1428 = vmatprep.subr.bf16.mxu0 0
      %1429 = vmatpush1.bf16.msra.mxu0 %v1406
      %1430 = vmatprep.subr.bf16.mxu0 0
      %1431 = vmatpush1.bf16.msra.mxu0 %v1407
      %1432 = vmatprep.subr.bf16.mxu0 0
      %1433 = vmatpush1.bf16.msra.mxu0 0
      %1434 = vmatprep.subr.bf16.mxu0 0
      %1435 = vmatpush1.bf16.msra.mxu0 0
      %1436 = vmatprep.subr.bf16.mxu0 0
      %1437 = vmatpush1.bf16.msra.mxu0 0
      %1438 = vmatprep.subr.bf16.mxu0 0
      %1439 = vmatpush1.bf16.msra.mxu0 0
      %1440 = vmatprep.subr.bf16.mxu0 0
      %1441 = vmatpush1.bf16.msra.mxu0 0
      %1442 = vmatprep.subr.bf16.mxu0 0
      %1443 = vmatpush1.bf16.msra.mxu0 0
      %1444 = vmatprep.subr.bf16.mxu0 0
      %1445 = vmatpush1.bf16.msra.mxu0 0
      %1446 = vmatprep.subr.bf16.mxu0 0
      %1447 = vmatpush1.bf16.msra.mxu0 0
      %1448 = vmatprep.mubr.bf16.mxu0 0
      %1449 = vmatmul.mubr.bf16.gmra.mrb[0].mxu0 %v1357
      %v1450 = vpop.f32.mrb[0].mxu0
      %v1451 = vadd.f32 0.0, %v1450
      %v1452 = vpop.f32.mrb[0].mxu0
      %v1453 = vpop.f32.mrb[0].mxu0
      %v1454 = vadd.f32 0.0, %v1453
      %v1455 = vpop.f32.mrb[0].mxu0
      %1456 = vmatprep.mubr.bf16.mxu0 0
      %1457 = vmatmul.mubr.bf16.gmra.mrb[0].mxu0 %v1365
      %v1458 = vpop.f32.mrb[0].mxu0
      %v1459 = vadd.f32 0.0, %v1458
      %v1460 = vpop.f32.mrb[0].mxu0
      %v1461 = vpop.f32.mrb[0].mxu0
      %v1462 = vadd.f32 0.0, %v1461
      %v1463 = vpop.f32.mrb[0].mxu0
      %1464 = vdwg.mxu0
      %v1465 = vadd.f32 %v1322, %v1451
      %v1466 = vadd.f32 %v1323, %v1454
      %v1467 = vadd.f32 %v1324, %v1459
      %v1468 = vadd.f32 %v1325, %v1462
      %s1469 = scalar_lea.vmem %s3, 512
      %v1470 = vld [vmem:[%s1469] sm:$0xf]
      %v1471 = vld [vmem:[%s1469 + $0x4] sm:$0xf]
      %v1472 = vld [vmem:[%s1469 + $0x8] sm:$0xf]
      %v1473 = vld [vmem:[%s1469 + $0xc] sm:$0xf]
      %v1474 = vld [vmem:[%s1469 + $0x10] sm:$0xf]
      %v1475 = vld [vmem:[%s1469 + $0x14] sm:$0xf]
      %v1476 = vld [vmem:[%s1469 + $0x18] sm:$0xf]
      %v1477 = vld [vmem:[%s1469 + $0x1c] sm:$0xf]
      %v1478 = vld [vmem:[%s1469 + $0x20] sm:$0xf]
      %v1479 = vld [vmem:[%s1469 + $0x24] sm:$0xf]
      %v1480 = vld [vmem:[%s1469 + $0x28] sm:$0xf]
      %v1481 = vld [vmem:[%s1469 + $0x2c] sm:$0xf]
      %v1482 = vld [vmem:[%s1469 + $0x30] sm:$0xf]
      %v1483 = vld [vmem:[%s1469 + $0x34] sm:$0xf]
      %v1484 = vld [vmem:[%s1469 + $0x38] sm:$0xf]
      %v1485 = vld [vmem:[%s1469 + $0x3c] sm:$0xf]
      %v1486 = vrot.slane %v1221, 1
      %v1487 = vrot.slane %v1222, 1
      %v1488 = vsel %vm679, %v1486, %v1487
      %v1489 = vrot.slane %v1345, 1
      %v1490 = vsel %vm679, %v1487, %v1489
      %v1509 = vunpack.c.l.b16 %v1470
      %v1510 = vunpack.c.l.b16 %v1471
      %v1511 = vunpack.c.l.b16 %v1472
      %v1512 = vunpack.c.l.b16 %v1473
      %v1513 = vunpack.c.l.b16 %v1474
      %v1514 = vunpack.c.l.b16 %v1475
      %v1515 = vunpack.c.l.b16 %v1476
      %v1516 = vunpack.c.l.b16 %v1477
      %v1517 = vunpack.c.l.b16 %v1478
      %v1518 = vunpack.c.l.b16 %v1479
      %v1519 = vunpack.c.l.b16 %v1480
      %v1520 = vunpack.c.l.b16 %v1481
      %v1521 = vunpack.c.l.b16 %v1482
      %v1522 = vunpack.c.l.b16 %v1483
      %v1523 = vunpack.c.l.b16 %v1484
      %v1524 = vunpack.c.l.b16 %v1485
      %v1525 = vpack.c.b16 %v1510, %v1509
      %v1526 = vpack.c.b16 %v1512, %v1511
      %v1527 = vpack.c.b16 %v1514, %v1513
      %v1528 = vpack.c.b16 %v1516, %v1515
      %v1529 = vpack.c.b16 %v1518, %v1517
      %v1530 = vpack.c.b16 %v1520, %v1519
      %v1531 = vpack.c.b16 %v1522, %v1521
      %v1532 = vpack.c.b16 %v1524, %v1523
      %1541 = vmatprep.subr.bf16.mxu0 0
      %1542 = vmatpush1.bf16.msra.mxu0 %v1525
      %1543 = vmatprep.subr.bf16.mxu0 0
      %1544 = vmatpush1.bf16.msra.mxu0 %v1526
      %1545 = vmatprep.subr.bf16.mxu0 0
      %1546 = vmatpush1.bf16.msra.mxu0 %v1527
      %1547 = vmatprep.subr.bf16.mxu0 0
      %1548 = vmatpush1.bf16.msra.mxu0 %v1528
      %1549 = vmatprep.subr.bf16.mxu0 0
      %1550 = vmatpush1.bf16.msra.mxu0 %v1529
      %1551 = vmatprep.subr.bf16.mxu0 0
      %1552 = vmatpush1.bf16.msra.mxu0 %v1530
      %1553 = vmatprep.subr.bf16.mxu0 0
      %1554 = vmatpush1.bf16.msra.mxu0 %v1531
      %1555 = vmatprep.subr.bf16.mxu0 0
      %1556 = vmatpush1.bf16.msra.mxu0 %v1532
      %1557 = vmatprep.subr.bf16.mxu0 0
      %1558 = vmatpush1.bf16.msra.mxu0 0
      %1559 = vmatprep.subr.bf16.mxu0 0
      %1560 = vmatpush1.bf16.msra.mxu0 0
      %1561 = vmatprep.subr.bf16.mxu0 0
      %1562 = vmatpush1.bf16.msra.mxu0 0
      %1563 = vmatprep.subr.bf16.mxu0 0
      %1564 = vmatpush1.bf16.msra.mxu0 0
      %1565 = vmatprep.subr.bf16.mxu0 0
      %1566 = vmatpush1.bf16.msra.mxu0 0
      %1567 = vmatprep.subr.bf16.mxu0 0
      %1568 = vmatpush1.bf16.msra.mxu0 0
      %1569 = vmatprep.subr.bf16.mxu0 0
      %1570 = vmatpush1.bf16.msra.mxu0 0
      %1571 = vmatprep.subr.bf16.mxu0 0
      %1572 = vmatpush1.bf16.msra.mxu0 0
      %1573 = vmatprep.mubr.bf16.mxu0 0
      %1574 = vmatmul.mubr.bf16.gmra.mrb[0].mxu0 %v1488
      %v1575 = vpop.f32.mrb[0].mxu0
      %v1576 = vadd.f32 0.0, %v1575
      %v1577 = vpop.f32.mrb[0].mxu0
      %v1578 = vpop.f32.mrb[0].mxu0
      %v1579 = vadd.f32 0.0, %v1578
      %v1580 = vpop.f32.mrb[0].mxu0
      %1581 = vmatprep.mubr.bf16.mxu0 0
      %1582 = vmatmul.mubr.bf16.gmra.mrb[0].mxu0 %v1490
      %v1583 = vpop.f32.mrb[0].mxu0
      %v1584 = vadd.f32 0.0, %v1583
      %v1585 = vpop.f32.mrb[0].mxu0
      %v1586 = vpop.f32.mrb[0].mxu0
      %v1587 = vadd.f32 0.0, %v1586
      %v1588 = vpop.f32.mrb[0].mxu0
      %1589 = vdwg.mxu0
      %v1590 = vadd.f32 %v1465, %v1576
      %v1591 = vadd.f32 %v1466, %v1579
      %v1592 = vadd.f32 %v1467, %v1584
      %v1593 = vadd.f32 %v1468, %v1587
      %v1594 = vld [vmem:[%s4] sm:$0x1]
      %v1596 = vlaneseq
      %v1597 = vshrl.u32 %v1596, 7
      %v1598 = vsub.s32 0, %v1597
      %v1599 = vrot.slane %v1594, %v1598
      %v1601 = vadd.f32 %v1590, %v1599
      %v1602 = vadd.f32 %v1591, %v1599
      %v1603 = vadd.f32 %v1592, %v1599
      %v1604 = vadd.f32 %v1593, %v1599
      %1605 = vst [vmem:[%s382] sm:$0xff] %v1601
      %1606 = vst [vmem:[%s382 + $0x8] sm:$0xff] %v1602
      %1607 = vst [vmem:[%s382 + $0x10] sm:$0xff] %v1603
      %1608 = vst [vmem:[%s382 + $0x18] sm:$0xff] %v1604
      %v1609 = vadd.f32 %v1601, %v1602
      %v1610 = vadd.f32 %v1609, %v1603
      %v1611 = vadd.f32 %v1610, %v1604
      %v1612 = vrot.slane %v1611, 4
      %v1613 = vadd.f32 %v1611, %v1612
      %v1614 = vrot.slane %v1613, 2
      %v1615 = vadd.f32 %v1613, %v1614
      %v1616 = vrot.slane %v1615, 1
      %v1617 = vadd.f32 %v1615, %v1616
      %v1618 = vmul.f32 %v1601, %v1601
      %v1619 = vmul.f32 %v1602, %v1602
      %v1620 = vmul.f32 %v1603, %v1603
      %v1621 = vmul.f32 %v1604, %v1604
      %v1622 = vadd.f32 %v1618, %v1619
      %v1623 = vadd.f32 %v1622, %v1620
      %v1624 = vadd.f32 %v1623, %v1621
      %v1625 = vrot.slane %v1624, 4
      %v1626 = vadd.f32 %v1624, %v1625
      %v1627 = vrot.slane %v1626, 2
      %v1628 = vadd.f32 %v1626, %v1627
      %v1629 = vrot.slane %v1628, 1
      %v1630 = vadd.f32 %v1628, %v1629
      %vm1631 = vcmask 1040384
      %v1632 = vsel %vm1631, %v1617, %v1630
      %1633 = vst [vmem:[%s390] sm:$0x3] %v1632
      %p1634 = scmp.lt.s32.totalorder %s22, 1
      %s1635 = scalar_select %p1634, %s22, 1
      %p1636 = scmp.lt.s32.totalorder %s23, 31
      %s1637 = scalar_select %p1636, %s23, 31
      %s1638 = smul.addr %s1637, 4
      %s1639 = smul.addr %s1635, 128
      %s1640 = sadd.s32 %s1638, %s1639
      %s1641 = smul.addr %s1640, 8
      %s1642 = scalar_lea.vmem %s5, %s1641
      %p1643 = scmp.lt.s32.totalorder %s22, 1
      %s1644 = scalar_select %p1643, %s22, 1
      %p1645 = scmp.lt.s32.totalorder %s23, 31
      %s1646 = scalar_select %p1645, %s23, 31
      %s1647 = smul.addr %s1644, 32
      %s1648 = sadd.s32 %s1646, %s1647
      %s1649 = smul.addr %s1648, 2
      %s1650 = scalar_lea.vmem %s6, %s1649
      // Predicated region
      $region41: #{unet_decoder_block_forward.8} parent=39 // pred_check
        %p1651 = pneg %p180
      $region42: #{unet_decoder_block_forward.8} parent=39 // pred_check_branch
        %1653 = sbr.rel (%p1651) target = $region44
      $region43: #{unet_decoder_block_forward.8} parent=39 // pred_region
        _
      $region44: #{unet_decoder_block_forward.8} parent=39 // pred_fallthru
        _
      // Predicated region
      $region45: #{unet_decoder_block_forward.8} parent=39 // pred_check
        %p1654 = pneg %p208
      $region46: #{unet_decoder_block_forward.8} parent=39 // pred_check_branch
        %1656 = sbr.rel (%p1654) target = $region48
      $region47: #{unet_decoder_block_forward.8} parent=39 // pred_region
        _
      $region48: #{unet_decoder_block_forward.8} parent=39 // pred_fallthru
        _
    $region40: #{unet_decoder_block_forward.8} parent=5 // pred_fallthru
      _
    %p1657 = scmp.le.s32.totalorder 2, %s13
    // Predicated region
    $region49: #{unet_decoder_block_forward.8} parent=5 // pred_check
      %p1658 = pneg %p1657
    $region50: #{unet_decoder_block_forward.8} parent=5 // pred_check_branch
      %1660 = sbr.rel (%p1658) target = $region52
    $region51: #{unet_decoder_block_forward.8} parent=5 // pred_region
      %s1661 = ssub.s32 %s13, 2
      // Predicated region
      $region53: #{unet_decoder_block_forward.8} parent=51 // pred_check
        %p1662 = pneg %p186
      $region54: #{unet_decoder_block_forward.8} parent=51 // pred_check_branch
        %1664 = sbr.rel (%p1662) target = $region56
      $region55: #{unet_decoder_block_forward.8} parent=51 // pred_region
        %p1665 = scmp.lt.s32.totalorder %s24, 1
        %s1666 = scalar_select %p1665, %s24, 1
        %p1667 = scmp.lt.s32.totalorder %s25, 31
        %s1668 = scalar_select %p1667, %s25, 31
        %s1669 = smul.addr %s1668, 4
        %s1670 = smul.addr %s1666, 128
        %s1671 = sadd.s32 %s1669, %s1670
        %s1672 = smul.addr %s1671, 8
        %s1673 = scalar_lea.vmem %s5, %s1672
      $region56: #{unet_decoder_block_forward.8} parent=51 // pred_fallthru
        _
      // Predicated region
      $region57: #{unet_decoder_block_forward.8} parent=51 // pred_check
        %p1674 = pneg %p214
      $region58: #{unet_decoder_block_forward.8} parent=51 // pred_check_branch
        %1676 = sbr.rel (%p1674) target = $region60
      $region59: #{unet_decoder_block_forward.8} parent=51 // pred_region
        %p1677 = scmp.lt.s32.totalorder %s24, 1
        %s1678 = scalar_select %p1677, %s24, 1
        %p1679 = scmp.lt.s32.totalorder %s25, 31
        %s1680 = scalar_select %p1679, %s25, 31
        %s1681 = smul.addr %s1678, 32
        %s1682 = sadd.s32 %s1680, %s1681
        %s1683 = smul.addr %s1682, 2
        %s1684 = scalar_lea.vmem %s6, %s1683
      $region60: #{unet_decoder_block_forward.8} parent=51 // pred_fallthru
        _
    $region52: #{unet_decoder_block_forward.8} parent=5 // pred_fallthru
      _
  $region6: #{unet_decoder_block_forward.8} parent=0 // loop_footer
    %s17 = sadd.s32 1, %s13
  $region7: #{unet_decoder_block_forward.8} parent=0 // loop_footer_branch
    %12 = sbr.rel target = $region3
  $region8: #{unet_decoder_block_forward.8} parent=0 // loop_exit
    _

</llo_original>
